<compile_context>
chip_gen: v7x
topology: tpu7x:2x2x1
jax: 0.10.0
libtpu: 0.0.40
codegen_flags: <defaults>
</compile_context>

<pallas_src>
import functools

import numpy as np
import jax
import jax.numpy as jnp
from jax.experimental import pallas as pl
from jax.experimental.pallas import tpu as pltpu


def _make_compiler_params():
    vmem_cap = 64 * 1024 * 1024
    try:
        vmem_cap = int(pltpu.get_tpu_info().vmem_capacity_bytes)
    except Exception:
        pass
    return pltpu.CompilerParams(
        dimension_semantics=("parallel",),
        vmem_limit_bytes=min(int(vmem_cap * 3 // 4), 100 * 1024 * 1024),
    )


_PARAMS = _make_compiler_params()


# ----------------------------------------------------------------------------
# In-kernel helpers (channel-major (C, H*W) slabs).
# ----------------------------------------------------------------------------
def _tap_stack(x, H, W):
    """x: (Cin, H*W) f32 -> padded tap stack (3*Cin, (H+2)*W) bf16.

    Rows [0:Cin]      = x shifted so row f holds x[f-1]  (dx=-1 / kw=0 tap),
    rows [Cin:2Cin]   = x                                 (kw=1),
    rows [2Cin:3Cin]  = x shifted so row f holds x[f+1]  (kw=2),
    with left/right image-border taps zeroed once, plus one zero image-row of
    padding top and bottom so the dy (kh) shifts become plain lane slices.
    """
    Cin, HW = x.shape
    col = jax.lax.broadcasted_iota(jnp.int32, (1, HW), 1) % W
    zc = jnp.zeros((Cin, 1), x.dtype)
    xm1 = jnp.where(col == 0, 0.0,
                    jnp.concatenate([zc, x[:, :HW - 1]], axis=1))
    xp1 = jnp.where(col == W - 1, 0.0,
                    jnp.concatenate([x[:, 1:], zc], axis=1))
    x3 = jnp.concatenate([xm1, x, xp1], axis=0)             # (3Cin, HW)
    zr = jnp.zeros((3 * Cin, W), x.dtype)
    return jnp.concatenate([zr, x3, zr], axis=1).astype(jnp.bfloat16)


def _conv3x3(xs, w_rows, bias, H, W, relu=True):
    """3x3 'same' conv + bias (+ReLU) in (C, H*W) layout.

    xs:      list of (Cin_i, H*W) f32 inputs (several == implicit channel cat)
    w_rows:  list of (3, Cout, 3*Cin_i) bf16 row-packed weights
    bias:    (Cout, 1) f32.   Returns (Cout, H*W) f32.
    """
    HW = H * W
    Cout = w_rows[0].shape[1]
    acc = jnp.zeros((Cout, HW), jnp.float32)
    for x, wr in zip(xs, w_rows):
        xpad = _tap_stack(x, H, W)                          # (3Cin, (H+2)W)
        for kh in range(3):                                 # dy = kh - 1
            rhs = xpad[:, kh * W:kh * W + HW]               # static lane slice
            acc = acc + jnp.dot(wr[kh], rhs,
                                preferred_element_type=jnp.float32)
    acc = acc + bias
    if relu:
        acc = jnp.maximum(acc, 0.0)
    return acc


# ----------------------------------------------------------------------------
# Fused convBlock kernel: [upsample] -> conv3x3+ReLU -> conv3x3+ReLU
#                         -> [maxpool 2x2] / [end 1x1 projection]
# ----------------------------------------------------------------------------
def _conv_block_kernel(*refs, H, W, num_in, upsample_second, pool, end_proj):
    n_out = 2 if pool else 1
    out_refs = refs[-n_out:]
    refs = refs[:-n_out]

    idx = 0
    x_refs = refs[idx:idx + num_in]; idx += num_in
    w1_refs = refs[idx:idx + num_in]; idx += num_in
    b1_ref = refs[idx]; idx += 1
    w2_ref = refs[idx]; idx += 1
    b2_ref = refs[idx]; idx += 1
    up_ref = None
    if upsample_second:
        up_ref = refs[idx]; idx += 1
    pool_ref = None
    if pool:
        pool_ref = refs[idx]; idx += 1
    if end_proj:
        ew_ref = refs[idx]; eb_ref = refs[idx + 1]; idx += 2

    xs = []
    for i, xr in enumerate(x_refs):
        v = xr[0].astype(jnp.float32)                       # (Cin_i, hw_i)
        if upsample_second and i == 1:
            # Fused bilinear 2x upsample (align_corners=True): one MXU matmul
            # with the constant (hw, HW) Kronecker interpolation matrix.
            v = jnp.dot(v, up_ref[...], preferred_element_type=jnp.float32)
        xs.append(v)
    w1s = [w1_refs[i][...] for i in range(num_in)]

    mid = _conv3x3(xs, w1s, b1_ref[...], H, W, relu=True)   # (Cmid, HW)
    out = _conv3x3([mid], [w2_ref[...]], b2_ref[...], H, W, relu=True)

    if end_proj:
        # Folded endconv1+endconv2 (two 1x1 convs, no activation in between).
        proj = jnp.dot(ew_ref[...], out,
                       preferred_element_type=jnp.float32) + eb_ref[...]
        out_refs[0][0] = proj.astype(out_refs[0].dtype)     # (1, HW) lane-dense
    else:
        out_refs[0][0] = out.astype(out_refs[0].dtype)      # (Cout, HW)

    if pool:
        # Fused 2x2 maxpool: gather the 4 window elements with constant 0/1
        # selection matmuls (MXU, lane-dense result) and take the max.
        P = pool_ref[...]                                   # (4, HW, Ho*Wo) f32
        p0 = jnp.dot(out, P[0], preferred_element_type=jnp.float32)
        p1 = jnp.dot(out, P[1], preferred_element_type=jnp.float32)
        p2 = jnp.dot(out, P[2], preferred_element_type=jnp.float32)
        p3 = jnp.dot(out, P[3], preferred_element_type=jnp.float32)
        pooled = jnp.maximum(jnp.maximum(p0, p1), jnp.maximum(p2, p3))
        out_refs[1][0] = pooled.astype(out_refs[1].dtype)


# ----------------------------------------------------------------------------
# Wrapper-side constant builders
# ----------------------------------------------------------------------------
def _interp_matrix_np(n_in, n_out):
    # PyTorch bilinear, align_corners=True: src = dst * (n_in-1)/(n_out-1)
    if n_in == 1:
        return np.ones((n_out, 1), np.float32)
    m = np.zeros((n_out, n_in), np.float32)
    for j in range(n_out):
        src = j * (n_in - 1) / (n_out - 1)
        j0 = min(int(np.floor(src)), n_in - 2)
        f = src - j0
        m[j, j0] += 1.0 - f
        m[j, j0 + 1] += f
    return m


def _upsample_matrix_np(h, w, H, W):
    # M[y*w+x, Y*W+X] = A_row[Y, y] * A_col[X, x]   (so  up = x_small @ M)
    return np.kron(_interp_matrix_np(h, H), _interp_matrix_np(w, W)).T.copy()


def _pool_select_np(H, W):
    # P[k, 2*ho*W + 2*wo + off_k, ho*Wo + wo] = 1,  off = [0, 1, W, W+1]
    Ho, Wo = H // 2, W // 2
    P = np.zeros((4, H * W, Ho * Wo), np.float32)
    offs = (0, 1, W, W + 1)
    for ho in range(Ho):
        for wo in range(Wo):
            base = 2 * ho * W + 2 * wo
            q = ho * Wo + wo
            for k, off in enumerate(offs):
                P[k, base + off, q] = 1.0
    return P


def _pack_w(w):
    # (9, Cin, Cout) tap-major -> (3, Cout, 3*Cin) bf16 row-packed:
    # packed[kh, co, kw*Cin + ci] = w[kh*3+kw, ci, co]
    Cin, Cout = w.shape[1], w.shape[2]
    return (w.reshape(3, 3, Cin, Cout)
             .transpose(0, 3, 1, 2)
             .reshape(3, Cout, 3 * Cin)
             .astype(jnp.bfloat16))


# ----------------------------------------------------------------------------
# Fused convBlock wrapper (one pallas_call per block)
# ----------------------------------------------------------------------------
def conv_block(x_list, w1_list, b1, w2, b2, H, W,
               upsample_second=False, pool=False, end_wb=None):
    num_in = len(x_list)
    N = x_list[0].shape[0]
    Cmid = w1_list[0].shape[2]
    Cout = w2.shape[2]
    HW = H * W

    w1p = [_pack_w(w) for w in w1_list]
    w2p = _pack_w(w2)

    args = list(x_list) + w1p + [b1.reshape(Cmid, 1).astype(jnp.float32),
                                 w2p,
                                 b2.reshape(Cout, 1).astype(jnp.float32)]
    in_specs = []
    for x in x_list:
        in_specs.append(pl.BlockSpec((1,) + x.shape[1:], lambda n: (n, 0, 0)))
    for wp in w1p:
        in_specs.append(pl.BlockSpec(wp.shape, lambda n: (0, 0, 0)))
    in_specs += [pl.BlockSpec((Cmid, 1), lambda n: (0, 0)),
                 pl.BlockSpec(w2p.shape, lambda n: (0, 0, 0)),
                 pl.BlockSpec((Cout, 1), lambda n: (0, 0))]

    if upsample_second:
        h, w = H // 2, W // 2
        M = jnp.asarray(_upsample_matrix_np(h, w, H, W), jnp.float32)
        args.append(M)
        in_specs.append(pl.BlockSpec(M.shape, lambda n: (0, 0)))
    if pool:
        P = jnp.asarray(_pool_select_np(H, W), jnp.float32)
        args.append(P)
        in_specs.append(pl.BlockSpec(P.shape, lambda n: (0, 0, 0)))
    if end_wb is not None:
        ew, eb = end_wb                    # (1, Cout) f32, (1, 1) f32
        args += [ew, eb]
        in_specs += [pl.BlockSpec(ew.shape, lambda n: (0, 0)),
                     pl.BlockSpec(eb.shape, lambda n: (0, 0))]

    c_last = 1 if end_wb is not None else Cout
    out_shapes = [jax.ShapeDtypeStruct((N, c_last, HW), x_list[0].dtype)]
    out_specs = [pl.BlockSpec((1, c_last, HW), lambda n: (n, 0, 0))]
    if pool:
        Ho, Wo = H // 2, W // 2
        out_shapes.append(
            jax.ShapeDtypeStruct((N, Cout, Ho * Wo), x_list[0].dtype))
        out_specs.append(pl.BlockSpec((1, Cout, Ho * Wo), lambda n: (n, 0, 0)))

    kernel = functools.partial(
        _conv_block_kernel, H=H, W=W, num_in=num_in,
        upsample_second=upsample_second, pool=pool,
        end_proj=end_wb is not None)

    return pl.pallas_call(
        kernel,
        out_shape=tuple(out_shapes) if pool else out_shapes[0],
        grid=(N,),
        in_specs=in_specs,
        out_specs=tuple(out_specs) if pool else out_specs[0],
        compiler_params=_PARAMS,
    )(*args)


# ----------------------------------------------------------------------------
# Parameter init (deterministic, PyTorch-like fan_in uniform scaling)
# ----------------------------------------------------------------------------
def _conv_init(key, cin, cout, k):
    kw, kb = jax.random.split(key)
    scale = 1.0 / float(cin * k * k) ** 0.5
    if k == 1:
        w = jax.random.uniform(kw, (cin, cout), jnp.float32, -scale, scale)
    else:
        w = jax.random.uniform(kw, (9, cin, cout), jnp.float32, -scale, scale)
    b = jax.random.uniform(kb, (cout,), jnp.float32, -scale, scale)
    return w, b


def init_unet_params(key, in_channels=1, channels=32, numlayers=2):
    state = {"key": key}

    def nk():
        state["key"], sub = jax.random.split(state["key"])
        return sub

    def block(cin, cout):
        w1, b1 = _conv_init(nk(), cin, cout, 3)
        w2, b2 = _conv_init(nk(), cout, cout, 3)
        return {"w1": w1, "b1": b1, "w2": w2, "b2": b2}

    params = {"down": [], "up": []}
    params["down"].append(block(in_channels, channels))
    cur = channels
    for _ in range(numlayers - 1):
        params["down"].append(block(cur, cur * 2))
        cur *= 2
    params["center"] = block(cur, cur)
    for _ in range(numlayers - 1):
        params["up"].append(block(cur * 2, cur // 2))
        cur //= 2
    params["up"].append(block(cur * 2, cur))
    params["end1_w"], params["end1_b"] = _conv_init(nk(), cur, cur // 2, 1)
    cur //= 2
    params["end2_w"], params["end2_b"] = _conv_init(nk(), cur, 1, 1)
    return params


# ----------------------------------------------------------------------------
# UNet forward (matches the PyTorch module's forward semantics, inormflag=0)
# ----------------------------------------------------------------------------
def unet_forward(x_nchw, params, acs=0):
    N, cin, H, W = x_nchw.shape
    out = x_nchw.reshape(N, cin, H * W)          # channel-major: free view
    h, w = H, W
    stack = []
    for p in params["down"]:
        full, pooled = conv_block([out], [p["w1"]], p["b1"], p["w2"], p["b2"],
                                  h, w, pool=True)
        stack.append((full, h, w))
        out = pooled
        h, w = h // 2, w // 2

    p = params["center"]
    out = conv_block([out], [p["w1"]], p["b1"], p["w2"], p["b2"], h, w)

    # Folded endconv1 + endconv2 (two 1x1 convs, no activation in between).
    ew = (params["end1_w"] @ params["end2_w"]).T.astype(jnp.float32)  # (1, C)
    eb = (params["end1_b"] @ params["end2_w"]
          + params["end2_b"]).reshape(1, 1).astype(jnp.float32)

    n_up = len(params["up"])
    for i, p in enumerate(params["up"]):
        skip, sh, sw = stack.pop()
        cs = skip.shape[1]
        # torch.cat((skip, upsampled), dim=1) + conv == split w1 over Cin.
        w1a, w1b = p["w1"][:, :cs, :], p["w1"][:, cs:, :]
        out = conv_block([skip, out], [w1a, w1b], p["b1"], p["w2"], p["b2"],
                         sh, sw, upsample_second=True,
                         end_wb=(ew, eb) if i == n_up - 1 else None)
        h, w = sh, sw

    out_nchw = out.reshape(N, 1, h, w)           # (N,1,HW) -> NCHW, free
    loss_out = out_nchw[:, :, :, acs]
    return out_nchw, loss_out


if __name__ == "__main__":
    key = jax.random.PRNGKey(0)
    kparams, kx = jax.random.split(key)
    params = init_unet_params(kparams, in_channels=1, channels=32, numlayers=2)
    x = jax.random.normal(kx, (2, 1, 16, 16), jnp.float32)

    fwd = jax.jit(lambda xx, pp: unet_forward(xx, pp, acs=0))
    out, loss_out = fwd(x, params)
    jax.block_until_ready((out, loss_out))

    assert out.shape == (2, 1, 16, 16), out.shape
    assert loss_out.shape == (2, 1, 16), loss_out.shape
    assert bool(jnp.all(jnp.isfinite(out)))
    print("KERNEL_OK")
</pallas_src>

<mosaic_0001>
module attributes {stable_mosaic.version = 11 : i64} {
  func.func @_conv_block_kernel(%arg0: i32, %arg1: memref<1x1x256xf32, #tpu.memory_space<vmem>>, %arg2: memref<3x32x3xbf16, #tpu.memory_space<vmem>>, %arg3: memref<32x1xf32, #tpu.memory_space<vmem>>, %arg4: memref<3x32x96xbf16, #tpu.memory_space<vmem>>, %arg5: memref<32x1xf32, #tpu.memory_space<vmem>>, %arg6: memref<4x256x64xf32, #tpu.memory_space<vmem>>, %arg7: memref<1x32x256xf32, #tpu.memory_space<vmem>>, %arg8: memref<1x32x64xf32, #tpu.memory_space<vmem>>) attributes {dimension_semantics = [#tpu.dimension_semantics<parallel>], iteration_bounds = array<i64: 2>, scalar_prefetch = 0 : i64, scratch_operands = 0 : i64, tpu.core_type = #tpu.core_type<tc>, window_params = [{transform_indices = @transform_0, window_bounds = array<i64: 1, 1, 256>}, {pipeline_mode = #tpu.pipeline_mode<synchronous>, transform_indices = @transform_1, window_bounds = array<i64: 3, 32, 3>}, {pipeline_mode = #tpu.pipeline_mode<synchronous>, transform_indices = @transform_2, window_bounds = array<i64: 32, 1>}, {pipeline_mode = #tpu.pipeline_mode<synchronous>, transform_indices = @transform_3, window_bounds = array<i64: 3, 32, 96>}, {pipeline_mode = #tpu.pipeline_mode<synchronous>, transform_indices = @transform_4, window_bounds = array<i64: 32, 1>}, {pipeline_mode = #tpu.pipeline_mode<synchronous>, transform_indices = @transform_5, window_bounds = array<i64: 4, 256, 64>}, {transform_indices = @transform_6, window_bounds = array<i64: 1, 32, 256>}, {transform_indices = @transform_7, window_bounds = array<i64: 1, 32, 64>}]} {
    %c0 = arith.constant 0 : index
    %c0_0 = arith.constant 0 : index
    %c0_1 = arith.constant 0 : index
    %0 = vector.load %arg1[%c0, %c0_0, %c0_1] : memref<1x1x256xf32, #tpu.memory_space<vmem>>, vector<1x1x256xf32>
    %1 = vector.shape_cast %0 : vector<1x1x256xf32> to vector<1x256xf32>
    %c0_2 = arith.constant 0 : index
    %c0_3 = arith.constant 0 : index
    %c0_4 = arith.constant 0 : index
    %2 = vector.load %arg2[%c0_2, %c0_3, %c0_4] : memref<3x32x3xbf16, #tpu.memory_space<vmem>>, vector<3x32x3xbf16>
    %c0_5 = arith.constant 0 : index
    %c0_6 = arith.constant 0 : index
    %3 = vector.load %arg3[%c0_5, %c0_6] : memref<32x1xf32, #tpu.memory_space<vmem>>, vector<32x1xf32>
    %cst = arith.constant 0.000000e+00 : f32
    %4 = vector.broadcast %cst : f32 to vector<32x256xf32>
    %5 = tpu.iota {dimensions = array<i32: 1>} : vector<1x256xi32>
    %c16_i32 = arith.constant 16 : i32
    %c0_i32 = arith.constant 0 : i32
    %6 = arith.cmpi eq, %c16_i32, %c0_i32 : i32
    %c1_i32 = arith.constant 1 : i32
    %7 = arith.select %6, %c1_i32, %c16_i32 : i32
    %8 = vector.broadcast %7 : i32 to vector<1x256xi32>
    %9 = arith.remsi %5, %8 : vector<1x256xi32>
    %c0_i32_7 = arith.constant 0 : i32
    %10 = vector.broadcast %c0_i32_7 : i32 to vector<1x256xi32>
    %11 = arith.cmpi ne, %9, %10 : vector<1x256xi32>
    %c0_i32_8 = arith.constant 0 : i32
    %12 = vector.broadcast %c0_i32_8 : i32 to vector<1x256xi32>
    %13 = arith.cmpi slt, %9, %12 : vector<1x256xi32>
    %c0_i32_9 = arith.constant 0 : i32
    %14 = arith.cmpi slt, %7, %c0_i32_9 : i32
    %15 = vector.broadcast %14 : i1 to vector<1x256xi1>
    %16 = vector.broadcast %15 : vector<1x256xi1> to vector<1x256xi1>
    %17 = arith.xori %13, %16 : vector<1x256xi1>
    %18 = arith.andi %17, %11 : vector<1x256xi1>
    %19 = vector.broadcast %7 : i32 to vector<1x256xi32>
    %20 = arith.addi %9, %19 : vector<1x256xi32>
    %21 = arith.select %18, %20, %9 : vector<1x256xi1>, vector<1x256xi32>
    %cst_10 = arith.constant 0.000000e+00 : f32
    %22 = vector.broadcast %cst_10 : f32 to vector<1x1xf32>
    %c0_i32_11 = arith.constant 0 : i32
    %23 = vector.broadcast %c0_i32_11 : i32 to vector<1x256xi32>
    %24 = arith.cmpi eq, %21, %23 : vector<1x256xi32>
    %25 = vector.extract_strided_slice %1 {offsets = [0, 0], sizes = [1, 255], strides = [1, 1]} : vector<1x256xf32> to vector<1x255xf32>
    %26 = tpu.concatenate %22, %25 in 1 : vector<1x1xf32>, vector<1x255xf32> -> vector<1x256xf32>
    %cst_12 = arith.constant 0.000000e+00 : f32
    %27 = vector.broadcast %cst_12 : f32 to vector<1x256xf32>
    %28 = arith.select %24, %27, %26 : vector<1x256xi1>, vector<1x256xf32>
    %c15_i32 = arith.constant 15 : i32
    %29 = vector.broadcast %c15_i32 : i32 to vector<1x256xi32>
    %30 = arith.cmpi eq, %21, %29 : vector<1x256xi32>
    %31 = vector.extract_strided_slice %1 {offsets = [0, 1], sizes = [1, 255], strides = [1, 1]} : vector<1x256xf32> to vector<1x255xf32>
    %32 = tpu.concatenate %31, %22 in 1 : vector<1x255xf32>, vector<1x1xf32> -> vector<1x256xf32>
    %cst_13 = arith.constant 0.000000e+00 : f32
    %33 = vector.broadcast %cst_13 : f32 to vector<1x256xf32>
    %34 = arith.select %30, %33, %32 : vector<1x256xi1>, vector<1x256xf32>
    %35 = tpu.concatenate %28, %1, %34 in 0 : vector<1x256xf32>, vector<1x256xf32>, vector<1x256xf32> -> vector<3x256xf32>
    %cst_14 = arith.constant 0.000000e+00 : f32
    %36 = vector.broadcast %cst_14 : f32 to vector<3x16xf32>
    %37 = tpu.concatenate %36, %35, %36 in 1 : vector<3x16xf32>, vector<3x256xf32>, vector<3x16xf32> -> vector<3x288xf32>
    %38 = arith.truncf %37 : vector<3x288xf32> to vector<3x288xbf16>
    %39 = vector.extract_strided_slice %38 {offsets = [0, 0], sizes = [3, 256], strides = [1, 1]} : vector<3x288xbf16> to vector<3x256xbf16>
    %40 = vector.extract_strided_slice %2 {offsets = [0, 0, 0], sizes = [1, 32, 3], strides = [1, 1, 1]} : vector<3x32x3xbf16> to vector<1x32x3xbf16>
    %41 = vector.shape_cast %40 : vector<1x32x3xbf16> to vector<32x3xbf16>
    %cst_15 = arith.constant dense<0.000000e+00> : vector<32x256xf32>
    %42 = tpu.matmul %41, %39, %cst_15 {dimension_numbers = #tpu.dot_dimension_numbers<[1], [0], [0], [1], [0, 0, 1, 1], [], []>} : vector<32x3xbf16>, vector<3x256xbf16>, vector<32x256xf32> -> vector<32x256xf32>
    %43 = arith.addf %4, %42 : vector<32x256xf32>
    %44 = vector.extract_strided_slice %38 {offsets = [0, 16], sizes = [3, 256], strides = [1, 1]} : vector<3x288xbf16> to vector<3x256xbf16>
    %45 = vector.extract_strided_slice %2 {offsets = [1, 0, 0], sizes = [1, 32, 3], strides = [1, 1, 1]} : vector<3x32x3xbf16> to vector<1x32x3xbf16>
    %46 = vector.shape_cast %45 : vector<1x32x3xbf16> to vector<32x3xbf16>
    %cst_16 = arith.constant dense<0.000000e+00> : vector<32x256xf32>
    %47 = tpu.matmul %46, %44, %cst_16 {dimension_numbers = #tpu.dot_dimension_numbers<[1], [0], [0], [1], [0, 0, 1, 1], [], []>} : vector<32x3xbf16>, vector<3x256xbf16>, vector<32x256xf32> -> vector<32x256xf32>
    %48 = arith.addf %43, %47 : vector<32x256xf32>
    %49 = vector.extract_strided_slice %38 {offsets = [0, 32], sizes = [3, 256], strides = [1, 1]} : vector<3x288xbf16> to vector<3x256xbf16>
    %50 = vector.extract_strided_slice %2 {offsets = [2, 0, 0], sizes = [1, 32, 3], strides = [1, 1, 1]} : vector<3x32x3xbf16> to vector<1x32x3xbf16>
    %51 = vector.shape_cast %50 : vector<1x32x3xbf16> to vector<32x3xbf16>
    %cst_17 = arith.constant dense<0.000000e+00> : vector<32x256xf32>
    %52 = tpu.matmul %51, %49, %cst_17 {dimension_numbers = #tpu.dot_dimension_numbers<[1], [0], [0], [1], [0, 0, 1, 1], [], []>} : vector<32x3xbf16>, vector<3x256xbf16>, vector<32x256xf32> -> vector<32x256xf32>
    %53 = arith.addf %48, %52 : vector<32x256xf32>
    %54 = vector.broadcast %3 : vector<32x1xf32> to vector<32x256xf32>
    %55 = arith.addf %53, %54 : vector<32x256xf32>
    %cst_18 = arith.constant 0.000000e+00 : f32
    %56 = vector.broadcast %cst_18 : f32 to vector<32x256xf32>
    %57 = arith.maximumf %55, %56 : vector<32x256xf32>
    %c0_19 = arith.constant 0 : index
    %c0_20 = arith.constant 0 : index
    %c0_21 = arith.constant 0 : index
    %58 = vector.load %arg4[%c0_19, %c0_20, %c0_21] : memref<3x32x96xbf16, #tpu.memory_space<vmem>>, vector<3x32x96xbf16>
    %c0_22 = arith.constant 0 : index
    %c0_23 = arith.constant 0 : index
    %59 = vector.load %arg5[%c0_22, %c0_23] : memref<32x1xf32, #tpu.memory_space<vmem>>, vector<32x1xf32>
    %cst_24 = arith.constant 0.000000e+00 : f32
    %60 = vector.broadcast %cst_24 : f32 to vector<32x256xf32>
    %61 = tpu.iota {dimensions = array<i32: 1>} : vector<1x256xi32>
    %c16_i32_25 = arith.constant 16 : i32
    %c0_i32_26 = arith.constant 0 : i32
    %62 = arith.cmpi eq, %c16_i32_25, %c0_i32_26 : i32
    %c1_i32_27 = arith.constant 1 : i32
    %63 = arith.select %62, %c1_i32_27, %c16_i32_25 : i32
    %64 = vector.broadcast %63 : i32 to vector<1x256xi32>
    %65 = arith.remsi %61, %64 : vector<1x256xi32>
    %c0_i32_28 = arith.constant 0 : i32
    %66 = vector.broadcast %c0_i32_28 : i32 to vector<1x256xi32>
    %67 = arith.cmpi ne, %65, %66 : vector<1x256xi32>
    %c0_i32_29 = arith.constant 0 : i32
    %68 = vector.broadcast %c0_i32_29 : i32 to vector<1x256xi32>
    %69 = arith.cmpi slt, %65, %68 : vector<1x256xi32>
    %c0_i32_30 = arith.constant 0 : i32
    %70 = arith.cmpi slt, %63, %c0_i32_30 : i32
    %71 = vector.broadcast %70 : i1 to vector<1x256xi1>
    %72 = vector.broadcast %71 : vector<1x256xi1> to vector<1x256xi1>
    %73 = arith.xori %69, %72 : vector<1x256xi1>
    %74 = arith.andi %73, %67 : vector<1x256xi1>
    %75 = vector.broadcast %63 : i32 to vector<1x256xi32>
    %76 = arith.addi %65, %75 : vector<1x256xi32>
    %77 = arith.select %74, %76, %65 : vector<1x256xi1>, vector<1x256xi32>
    %cst_31 = arith.constant 0.000000e+00 : f32
    %78 = vector.broadcast %cst_31 : f32 to vector<32x1xf32>
    %c0_i32_32 = arith.constant 0 : i32
    %79 = vector.broadcast %c0_i32_32 : i32 to vector<1x256xi32>
    %80 = arith.cmpi eq, %77, %79 : vector<1x256xi32>
    %81 = vector.extract_strided_slice %57 {offsets = [0, 0], sizes = [32, 255], strides = [1, 1]} : vector<32x256xf32> to vector<32x255xf32>
    %82 = tpu.concatenate %78, %81 in 1 : vector<32x1xf32>, vector<32x255xf32> -> vector<32x256xf32>
    %cst_33 = arith.constant 0.000000e+00 : f32
    %83 = vector.shape_cast %80 : vector<1x256xi1> to vector<1x256xi1>
    %84 = vector.broadcast %83 : vector<1x256xi1> to vector<32x256xi1>
    %85 = vector.broadcast %cst_33 : f32 to vector<32x256xf32>
    %86 = arith.select %84, %85, %82 : vector<32x256xi1>, vector<32x256xf32>
    %c15_i32_34 = arith.constant 15 : i32
    %87 = vector.broadcast %c15_i32_34 : i32 to vector<1x256xi32>
    %88 = arith.cmpi eq, %77, %87 : vector<1x256xi32>
    %89 = vector.extract_strided_slice %57 {offsets = [0, 1], sizes = [32, 255], strides = [1, 1]} : vector<32x256xf32> to vector<32x255xf32>
    %90 = tpu.concatenate %89, %78 in 1 : vector<32x255xf32>, vector<32x1xf32> -> vector<32x256xf32>
    %cst_35 = arith.constant 0.000000e+00 : f32
    %91 = vector.shape_cast %88 : vector<1x256xi1> to vector<1x256xi1>
    %92 = vector.broadcast %91 : vector<1x256xi1> to vector<32x256xi1>
    %93 = vector.broadcast %cst_35 : f32 to vector<32x256xf32>
    %94 = arith.select %92, %93, %90 : vector<32x256xi1>, vector<32x256xf32>
    %95 = tpu.concatenate %86, %57, %94 in 0 : vector<32x256xf32>, vector<32x256xf32>, vector<32x256xf32> -> vector<96x256xf32>
    %cst_36 = arith.constant 0.000000e+00 : f32
    %96 = vector.broadcast %cst_36 : f32 to vector<96x16xf32>
    %97 = tpu.concatenate %96, %95, %96 in 1 : vector<96x16xf32>, vector<96x256xf32>, vector<96x16xf32> -> vector<96x288xf32>
    %98 = arith.truncf %97 : vector<96x288xf32> to vector<96x288xbf16>
    %99 = vector.extract_strided_slice %98 {offsets = [0, 0], sizes = [96, 256], strides = [1, 1]} : vector<96x288xbf16> to vector<96x256xbf16>
    %100 = vector.extract_strided_slice %58 {offsets = [0, 0, 0], sizes = [1, 32, 96], strides = [1, 1, 1]} : vector<3x32x96xbf16> to vector<1x32x96xbf16>
    %101 = vector.shape_cast %100 : vector<1x32x96xbf16> to vector<32x96xbf16>
    %cst_37 = arith.constant dense<0.000000e+00> : vector<32x256xf32>
    %102 = tpu.matmul %101, %99, %cst_37 {dimension_numbers = #tpu.dot_dimension_numbers<[1], [0], [0], [1], [0, 0, 1, 1], [], []>} : vector<32x96xbf16>, vector<96x256xbf16>, vector<32x256xf32> -> vector<32x256xf32>
    %103 = arith.addf %60, %102 : vector<32x256xf32>
    %104 = vector.extract_strided_slice %98 {offsets = [0, 16], sizes = [96, 256], strides = [1, 1]} : vector<96x288xbf16> to vector<96x256xbf16>
    %105 = vector.extract_strided_slice %58 {offsets = [1, 0, 0], sizes = [1, 32, 96], strides = [1, 1, 1]} : vector<3x32x96xbf16> to vector<1x32x96xbf16>
    %106 = vector.shape_cast %105 : vector<1x32x96xbf16> to vector<32x96xbf16>
    %cst_38 = arith.constant dense<0.000000e+00> : vector<32x256xf32>
    %107 = tpu.matmul %106, %104, %cst_38 {dimension_numbers = #tpu.dot_dimension_numbers<[1], [0], [0], [1], [0, 0, 1, 1], [], []>} : vector<32x96xbf16>, vector<96x256xbf16>, vector<32x256xf32> -> vector<32x256xf32>
    %108 = arith.addf %103, %107 : vector<32x256xf32>
    %109 = vector.extract_strided_slice %98 {offsets = [0, 32], sizes = [96, 256], strides = [1, 1]} : vector<96x288xbf16> to vector<96x256xbf16>
    %110 = vector.extract_strided_slice %58 {offsets = [2, 0, 0], sizes = [1, 32, 96], strides = [1, 1, 1]} : vector<3x32x96xbf16> to vector<1x32x96xbf16>
    %111 = vector.shape_cast %110 : vector<1x32x96xbf16> to vector<32x96xbf16>
    %cst_39 = arith.constant dense<0.000000e+00> : vector<32x256xf32>
    %112 = tpu.matmul %111, %109, %cst_39 {dimension_numbers = #tpu.dot_dimension_numbers<[1], [0], [0], [1], [0, 0, 1, 1], [], []>} : vector<32x96xbf16>, vector<96x256xbf16>, vector<32x256xf32> -> vector<32x256xf32>
    %113 = arith.addf %108, %112 : vector<32x256xf32>
    %114 = vector.broadcast %59 : vector<32x1xf32> to vector<32x256xf32>
    %115 = arith.addf %113, %114 : vector<32x256xf32>
    %cst_40 = arith.constant 0.000000e+00 : f32
    %116 = vector.broadcast %cst_40 : f32 to vector<32x256xf32>
    %117 = arith.maximumf %115, %116 : vector<32x256xf32>
    %c0_41 = arith.constant 0 : index
    %c0_42 = arith.constant 0 : index
    %c0_43 = arith.constant 0 : index
    %118 = vector.load %arg7[%c0_41, %c0_42, %c0_43] : memref<1x32x256xf32, #tpu.memory_space<vmem>>, vector<1x32x256xf32>
    %119 = vector.shape_cast %118 : vector<1x32x256xf32> to vector<32x256xf32>
    %120 = vector.shape_cast %117 : vector<32x256xf32> to vector<1x32x256xf32>
    tpu.vector_store %arg7[%c0_41, %c0_42, %c0_43], %120 {strides = array<i32>} : memref<1x32x256xf32, #tpu.memory_space<vmem>>, vector<1x32x256xf32>,
    %c0_44 = arith.constant 0 : index
    %c0_45 = arith.constant 0 : index
    %c0_46 = arith.constant 0 : index
    %121 = vector.load %arg6[%c0_44, %c0_45, %c0_46] : memref<4x256x64xf32, #tpu.memory_space<vmem>>, vector<4x256x64xf32>
    %122 = vector.extract_strided_slice %121 {offsets = [0, 0, 0], sizes = [1, 256, 64], strides = [1, 1, 1]} : vector<4x256x64xf32> to vector<1x256x64xf32>
    %123 = vector.shape_cast %122 : vector<1x256x64xf32> to vector<256x64xf32>
    %cst_47 = arith.constant dense<0.000000e+00> : vector<32x64xf32>
    %124 = tpu.matmul %117, %123, %cst_47 {dimension_numbers = #tpu.dot_dimension_numbers<[1], [0], [0], [1], [0, 0, 1, 1], [], []>} : vector<32x256xf32>, vector<256x64xf32>, vector<32x64xf32> -> vector<32x64xf32>
    %125 = vector.extract_strided_slice %121 {offsets = [1, 0, 0], sizes = [1, 256, 64], strides = [1, 1, 1]} : vector<4x256x64xf32> to vector<1x256x64xf32>
    %126 = vector.shape_cast %125 : vector<1x256x64xf32> to vector<256x64xf32>
    %cst_48 = arith.constant dense<0.000000e+00> : vector<32x64xf32>
    %127 = tpu.matmul %117, %126, %cst_48 {dimension_numbers = #tpu.dot_dimension_numbers<[1], [0], [0], [1], [0, 0, 1, 1], [], []>} : vector<32x256xf32>, vector<256x64xf32>, vector<32x64xf32> -> vector<32x64xf32>
    %128 = vector.extract_strided_slice %121 {offsets = [2, 0, 0], sizes = [1, 256, 64], strides = [1, 1, 1]} : vector<4x256x64xf32> to vector<1x256x64xf32>
    %129 = vector.shape_cast %128 : vector<1x256x64xf32> to vector<256x64xf32>
    %cst_49 = arith.constant dense<0.000000e+00> : vector<32x64xf32>
    %130 = tpu.matmul %117, %129, %cst_49 {dimension_numbers = #tpu.dot_dimension_numbers<[1], [0], [0], [1], [0, 0, 1, 1], [], []>} : vector<32x256xf32>, vector<256x64xf32>, vector<32x64xf32> -> vector<32x64xf32>
    %131 = vector.extract_strided_slice %121 {offsets = [3, 0, 0], sizes = [1, 256, 64], strides = [1, 1, 1]} : vector<4x256x64xf32> to vector<1x256x64xf32>
    %132 = vector.shape_cast %131 : vector<1x256x64xf32> to vector<256x64xf32>
    %cst_50 = arith.constant dense<0.000000e+00> : vector<32x64xf32>
    %133 = tpu.matmul %117, %132, %cst_50 {dimension_numbers = #tpu.dot_dimension_numbers<[1], [0], [0], [1], [0, 0, 1, 1], [], []>} : vector<32x256xf32>, vector<256x64xf32>, vector<32x64xf32> -> vector<32x64xf32>
    %134 = arith.maximumf %124, %127 : vector<32x64xf32>
    %135 = arith.maximumf %130, %133 : vector<32x64xf32>
    %136 = arith.maximumf %134, %135 : vector<32x64xf32>
    %c0_51 = arith.constant 0 : index
    %c0_52 = arith.constant 0 : index
    %c0_53 = arith.constant 0 : index
    %137 = vector.load %arg8[%c0_51, %c0_52, %c0_53] : memref<1x32x64xf32, #tpu.memory_space<vmem>>, vector<1x32x64xf32>
    %138 = vector.shape_cast %137 : vector<1x32x64xf32> to vector<32x64xf32>
    %139 = vector.shape_cast %136 : vector<32x64xf32> to vector<1x32x64xf32>
    tpu.vector_store %arg8[%c0_51, %c0_52, %c0_53], %139 {strides = array<i32>} : memref<1x32x64xf32, #tpu.memory_space<vmem>>, vector<1x32x64xf32>,
    return
  }
  func.func @transform_0(%arg0: i32) -> (i32, i32, i32) {
    %c0_i32 = arith.constant 0 : i32
    %c0_i32_0 = arith.constant 0 : i32
    %c0_i32_1 = arith.constant 0 : i32
    return %arg0, %c0_i32, %c0_i32_0 : i32, i32, i32
  }
  func.func @transform_1(%arg0: i32) -> (i32, i32, i32) {
    %c0_i32 = arith.constant 0 : i32
    %c0_i32_0 = arith.constant 0 : i32
    %c0_i32_1 = arith.constant 0 : i32
    %c0_i32_2 = arith.constant 0 : i32
    return %c0_i32, %c0_i32_0, %c0_i32_1 : i32, i32, i32
  }
  func.func @transform_2(%arg0: i32) -> (i32, i32) {
    %c0_i32 = arith.constant 0 : i32
    %c0_i32_0 = arith.constant 0 : i32
    %c0_i32_1 = arith.constant 0 : i32
    return %c0_i32, %c0_i32_0 : i32, i32
  }
  func.func @transform_3(%arg0: i32) -> (i32, i32, i32) {
    %c0_i32 = arith.constant 0 : i32
    %c0_i32_0 = arith.constant 0 : i32
    %c0_i32_1 = arith.constant 0 : i32
    %c0_i32_2 = arith.constant 0 : i32
    return %c0_i32, %c0_i32_0, %c0_i32_1 : i32, i32, i32
  }
  func.func @transform_4(%arg0: i32) -> (i32, i32) {
    %c0_i32 = arith.constant 0 : i32
    %c0_i32_0 = arith.constant 0 : i32
    %c0_i32_1 = arith.constant 0 : i32
    return %c0_i32, %c0_i32_0 : i32, i32
  }
  func.func @transform_5(%arg0: i32) -> (i32, i32, i32) {
    %c0_i32 = arith.constant 0 : i32
    %c0_i32_0 = arith.constant 0 : i32
    %c0_i32_1 = arith.constant 0 : i32
    %c0_i32_2 = arith.constant 0 : i32
    return %c0_i32, %c0_i32_0, %c0_i32_1 : i32, i32, i32
  }
  func.func @transform_6(%arg0: i32) -> (i32, i32, i32) {
    %c0_i32 = arith.constant 0 : i32
    %c0_i32_0 = arith.constant 0 : i32
    %c0_i32_1 = arith.constant 0 : i32
    return %arg0, %c0_i32, %c0_i32_0 : i32, i32, i32
  }
  func.func @transform_7(%arg0: i32) -> (i32, i32, i32) {
    %c0_i32 = arith.constant 0 : i32
    %c0_i32_0 = arith.constant 0 : i32
    %c0_i32_1 = arith.constant 0 : i32
    return %arg0, %c0_i32, %c0_i32_0 : i32, i32, i32
  }
}

module attributes {stable_mosaic.version = 11 : i64} {
  func.func @_conv_block_kernel(%arg0: i32, %arg1: memref<1x32x64xf32, #tpu.memory_space<vmem>>, %arg2: memref<3x64x96xbf16, #tpu.memory_space<vmem>>, %arg3: memref<64x1xf32, #tpu.memory_space<vmem>>, %arg4: memref<3x64x192xbf16, #tpu.memory_space<vmem>>, %arg5: memref<64x1xf32, #tpu.memory_space<vmem>>, %arg6: memref<4x64x16xf32, #tpu.memory_space<vmem>>, %arg7: memref<1x64x64xf32, #tpu.memory_space<vmem>>, %arg8: memref<1x64x16xf32, #tpu.memory_space<vmem>>) attributes {dimension_semantics = [#tpu.dimension_semantics<parallel>], iteration_bounds = array<i64: 2>, scalar_prefetch = 0 : i64, scratch_operands = 0 : i64, tpu.core_type = #tpu.core_type<tc>, window_params = [{transform_indices = @transform_0, window_bounds = array<i64: 1, 32, 64>}, {pipeline_mode = #tpu.pipeline_mode<synchronous>, transform_indices = @transform_1, window_bounds = array<i64: 3, 64, 96>}, {pipeline_mode = #tpu.pipeline_mode<synchronous>, transform_indices = @transform_2, window_bounds = array<i64: 64, 1>}, {pipeline_mode = #tpu.pipeline_mode<synchronous>, transform_indices = @transform_3, window_bounds = array<i64: 3, 64, 192>}, {pipeline_mode = #tpu.pipeline_mode<synchronous>, transform_indices = @transform_4, window_bounds = array<i64: 64, 1>}, {pipeline_mode = #tpu.pipeline_mode<synchronous>, transform_indices = @transform_5, window_bounds = array<i64: 4, 64, 16>}, {transform_indices = @transform_6, window_bounds = array<i64: 1, 64, 64>}, {transform_indices = @transform_7, window_bounds = array<i64: 1, 64, 16>}]} {
    %c0 = arith.constant 0 : index
    %c0_0 = arith.constant 0 : index
    %c0_1 = arith.constant 0 : index
    %0 = vector.load %arg1[%c0, %c0_0, %c0_1] : memref<1x32x64xf32, #tpu.memory_space<vmem>>, vector<1x32x64xf32>
    %1 = vector.shape_cast %0 : vector<1x32x64xf32> to vector<32x64xf32>
    %c0_2 = arith.constant 0 : index
    %c0_3 = arith.constant 0 : index
    %c0_4 = arith.constant 0 : index
    %2 = vector.load %arg2[%c0_2, %c0_3, %c0_4] : memref<3x64x96xbf16, #tpu.memory_space<vmem>>, vector<3x64x96xbf16>
    %c0_5 = arith.constant 0 : index
    %c0_6 = arith.constant 0 : index
    %3 = vector.load %arg3[%c0_5, %c0_6] : memref<64x1xf32, #tpu.memory_space<vmem>>, vector<64x1xf32>
    %cst = arith.constant 0.000000e+00 : f32
    %4 = vector.broadcast %cst : f32 to vector<64x64xf32>
    %5 = tpu.iota {dimensions = array<i32: 1>} : vector<1x64xi32>
    %c8_i32 = arith.constant 8 : i32
    %c0_i32 = arith.constant 0 : i32
    %6 = arith.cmpi eq, %c8_i32, %c0_i32 : i32
    %c1_i32 = arith.constant 1 : i32
    %7 = arith.select %6, %c1_i32, %c8_i32 : i32
    %8 = vector.broadcast %7 : i32 to vector<1x64xi32>
    %9 = arith.remsi %5, %8 : vector<1x64xi32>
    %c0_i32_7 = arith.constant 0 : i32
    %10 = vector.broadcast %c0_i32_7 : i32 to vector<1x64xi32>
    %11 = arith.cmpi ne, %9, %10 : vector<1x64xi32>
    %c0_i32_8 = arith.constant 0 : i32
    %12 = vector.broadcast %c0_i32_8 : i32 to vector<1x64xi32>
    %13 = arith.cmpi slt, %9, %12 : vector<1x64xi32>
    %c0_i32_9 = arith.constant 0 : i32
    %14 = arith.cmpi slt, %7, %c0_i32_9 : i32
    %15 = vector.broadcast %14 : i1 to vector<1x64xi1>
    %16 = vector.broadcast %15 : vector<1x64xi1> to vector<1x64xi1>
    %17 = arith.xori %13, %16 : vector<1x64xi1>
    %18 = arith.andi %17, %11 : vector<1x64xi1>
    %19 = vector.broadcast %7 : i32 to vector<1x64xi32>
    %20 = arith.addi %9, %19 : vector<1x64xi32>
    %21 = arith.select %18, %20, %9 : vector<1x64xi1>, vector<1x64xi32>
    %cst_10 = arith.constant 0.000000e+00 : f32
    %22 = vector.broadcast %cst_10 : f32 to vector<32x1xf32>
    %c0_i32_11 = arith.constant 0 : i32
    %23 = vector.broadcast %c0_i32_11 : i32 to vector<1x64xi32>
    %24 = arith.cmpi eq, %21, %23 : vector<1x64xi32>
    %25 = vector.extract_strided_slice %1 {offsets = [0, 0], sizes = [32, 63], strides = [1, 1]} : vector<32x64xf32> to vector<32x63xf32>
    %26 = tpu.concatenate %22, %25 in 1 : vector<32x1xf32>, vector<32x63xf32> -> vector<32x64xf32>
    %cst_12 = arith.constant 0.000000e+00 : f32
    %27 = vector.shape_cast %24 : vector<1x64xi1> to vector<1x64xi1>
    %28 = vector.broadcast %27 : vector<1x64xi1> to vector<32x64xi1>
    %29 = vector.broadcast %cst_12 : f32 to vector<32x64xf32>
    %30 = arith.select %28, %29, %26 : vector<32x64xi1>, vector<32x64xf32>
    %c7_i32 = arith.constant 7 : i32
    %31 = vector.broadcast %c7_i32 : i32 to vector<1x64xi32>
    %32 = arith.cmpi eq, %21, %31 : vector<1x64xi32>
    %33 = vector.extract_strided_slice %1 {offsets = [0, 1], sizes = [32, 63], strides = [1, 1]} : vector<32x64xf32> to vector<32x63xf32>
    %34 = tpu.concatenate %33, %22 in 1 : vector<32x63xf32>, vector<32x1xf32> -> vector<32x64xf32>
    %cst_13 = arith.constant 0.000000e+00 : f32
    %35 = vector.shape_cast %32 : vector<1x64xi1> to vector<1x64xi1>
    %36 = vector.broadcast %35 : vector<1x64xi1> to vector<32x64xi1>
    %37 = vector.broadcast %cst_13 : f32 to vector<32x64xf32>
    %38 = arith.select %36, %37, %34 : vector<32x64xi1>, vector<32x64xf32>
    %39 = tpu.concatenate %30, %1, %38 in 0 : vector<32x64xf32>, vector<32x64xf32>, vector<32x64xf32> -> vector<96x64xf32>
    %cst_14 = arith.constant 0.000000e+00 : f32
    %40 = vector.broadcast %cst_14 : f32 to vector<96x8xf32>
    %41 = tpu.concatenate %40, %39, %40 in 1 : vector<96x8xf32>, vector<96x64xf32>, vector<96x8xf32> -> vector<96x80xf32>
    %42 = arith.truncf %41 : vector<96x80xf32> to vector<96x80xbf16>
    %43 = vector.extract_strided_slice %42 {offsets = [0, 0], sizes = [96, 64], strides = [1, 1]} : vector<96x80xbf16> to vector<96x64xbf16>
    %44 = vector.extract_strided_slice %2 {offsets = [0, 0, 0], sizes = [1, 64, 96], strides = [1, 1, 1]} : vector<3x64x96xbf16> to vector<1x64x96xbf16>
    %45 = vector.shape_cast %44 : vector<1x64x96xbf16> to vector<64x96xbf16>
    %cst_15 = arith.constant dense<0.000000e+00> : vector<64x64xf32>
    %46 = tpu.matmul %45, %43, %cst_15 {dimension_numbers = #tpu.dot_dimension_numbers<[1], [0], [0], [1], [0, 0, 1, 1], [], []>} : vector<64x96xbf16>, vector<96x64xbf16>, vector<64x64xf32> -> vector<64x64xf32>
    %47 = arith.addf %4, %46 : vector<64x64xf32>
    %48 = vector.extract_strided_slice %42 {offsets = [0, 8], sizes = [96, 64], strides = [1, 1]} : vector<96x80xbf16> to vector<96x64xbf16>
    %49 = vector.extract_strided_slice %2 {offsets = [1, 0, 0], sizes = [1, 64, 96], strides = [1, 1, 1]} : vector<3x64x96xbf16> to vector<1x64x96xbf16>
    %50 = vector.shape_cast %49 : vector<1x64x96xbf16> to vector<64x96xbf16>
    %cst_16 = arith.constant dense<0.000000e+00> : vector<64x64xf32>
    %51 = tpu.matmul %50, %48, %cst_16 {dimension_numbers = #tpu.dot_dimension_numbers<[1], [0], [0], [1], [0, 0, 1, 1], [], []>} : vector<64x96xbf16>, vector<96x64xbf16>, vector<64x64xf32> -> vector<64x64xf32>
    %52 = arith.addf %47, %51 : vector<64x64xf32>
    %53 = vector.extract_strided_slice %42 {offsets = [0, 16], sizes = [96, 64], strides = [1, 1]} : vector<96x80xbf16> to vector<96x64xbf16>
    %54 = vector.extract_strided_slice %2 {offsets = [2, 0, 0], sizes = [1, 64, 96], strides = [1, 1, 1]} : vector<3x64x96xbf16> to vector<1x64x96xbf16>
    %55 = vector.shape_cast %54 : vector<1x64x96xbf16> to vector<64x96xbf16>
    %cst_17 = arith.constant dense<0.000000e+00> : vector<64x64xf32>
    %56 = tpu.matmul %55, %53, %cst_17 {dimension_numbers = #tpu.dot_dimension_numbers<[1], [0], [0], [1], [0, 0, 1, 1], [], []>} : vector<64x96xbf16>, vector<96x64xbf16>, vector<64x64xf32> -> vector<64x64xf32>
    %57 = arith.addf %52, %56 : vector<64x64xf32>
    %58 = vector.broadcast %3 : vector<64x1xf32> to vector<64x64xf32>
    %59 = arith.addf %57, %58 : vector<64x64xf32>
    %cst_18 = arith.constant 0.000000e+00 : f32
    %60 = vector.broadcast %cst_18 : f32 to vector<64x64xf32>
    %61 = arith.maximumf %59, %60 : vector<64x64xf32>
    %c0_19 = arith.constant 0 : index
    %c0_20 = arith.constant 0 : index
    %c0_21 = arith.constant 0 : index
    %62 = vector.load %arg4[%c0_19, %c0_20, %c0_21] : memref<3x64x192xbf16, #tpu.memory_space<vmem>>, vector<3x64x192xbf16>
    %c0_22 = arith.constant 0 : index
    %c0_23 = arith.constant 0 : index
    %63 = vector.load %arg5[%c0_22, %c0_23] : memref<64x1xf32, #tpu.memory_space<vmem>>, vector<64x1xf32>
    %cst_24 = arith.constant 0.000000e+00 : f32
    %64 = vector.broadcast %cst_24 : f32 to vector<64x64xf32>
    %65 = tpu.iota {dimensions = array<i32: 1>} : vector<1x64xi32>
    %c8_i32_25 = arith.constant 8 : i32
    %c0_i32_26 = arith.constant 0 : i32
    %66 = arith.cmpi eq, %c8_i32_25, %c0_i32_26 : i32
    %c1_i32_27 = arith.constant 1 : i32
    %67 = arith.select %66, %c1_i32_27, %c8_i32_25 : i32
    %68 = vector.broadcast %67 : i32 to vector<1x64xi32>
    %69 = arith.remsi %65, %68 : vector<1x64xi32>
    %c0_i32_28 = arith.constant 0 : i32
    %70 = vector.broadcast %c0_i32_28 : i32 to vector<1x64xi32>
    %71 = arith.cmpi ne, %69, %70 : vector<1x64xi32>
    %c0_i32_29 = arith.constant 0 : i32
    %72 = vector.broadcast %c0_i32_29 : i32 to vector<1x64xi32>
    %73 = arith.cmpi slt, %69, %72 : vector<1x64xi32>
    %c0_i32_30 = arith.constant 0 : i32
    %74 = arith.cmpi slt, %67, %c0_i32_30 : i32
    %75 = vector.broadcast %74 : i1 to vector<1x64xi1>
    %76 = vector.broadcast %75 : vector<1x64xi1> to vector<1x64xi1>
    %77 = arith.xori %73, %76 : vector<1x64xi1>
    %78 = arith.andi %77, %71 : vector<1x64xi1>
    %79 = vector.broadcast %67 : i32 to vector<1x64xi32>
    %80 = arith.addi %69, %79 : vector<1x64xi32>
    %81 = arith.select %78, %80, %69 : vector<1x64xi1>, vector<1x64xi32>
    %cst_31 = arith.constant 0.000000e+00 : f32
    %82 = vector.broadcast %cst_31 : f32 to vector<64x1xf32>
    %c0_i32_32 = arith.constant 0 : i32
    %83 = vector.broadcast %c0_i32_32 : i32 to vector<1x64xi32>
    %84 = arith.cmpi eq, %81, %83 : vector<1x64xi32>
    %85 = vector.extract_strided_slice %61 {offsets = [0, 0], sizes = [64, 63], strides = [1, 1]} : vector<64x64xf32> to vector<64x63xf32>
    %86 = tpu.concatenate %82, %85 in 1 : vector<64x1xf32>, vector<64x63xf32> -> vector<64x64xf32>
    %cst_33 = arith.constant 0.000000e+00 : f32
    %87 = vector.shape_cast %84 : vector<1x64xi1> to vector<1x64xi1>
    %88 = vector.broadcast %87 : vector<1x64xi1> to vector<64x64xi1>
    %89 = vector.broadcast %cst_33 : f32 to vector<64x64xf32>
    %90 = arith.select %88, %89, %86 : vector<64x64xi1>, vector<64x64xf32>
    %c7_i32_34 = arith.constant 7 : i32
    %91 = vector.broadcast %c7_i32_34 : i32 to vector<1x64xi32>
    %92 = arith.cmpi eq, %81, %91 : vector<1x64xi32>
    %93 = vector.extract_strided_slice %61 {offsets = [0, 1], sizes = [64, 63], strides = [1, 1]} : vector<64x64xf32> to vector<64x63xf32>
    %94 = tpu.concatenate %93, %82 in 1 : vector<64x63xf32>, vector<64x1xf32> -> vector<64x64xf32>
    %cst_35 = arith.constant 0.000000e+00 : f32
    %95 = vector.shape_cast %92 : vector<1x64xi1> to vector<1x64xi1>
    %96 = vector.broadcast %95 : vector<1x64xi1> to vector<64x64xi1>
    %97 = vector.broadcast %cst_35 : f32 to vector<64x64xf32>
    %98 = arith.select %96, %97, %94 : vector<64x64xi1>, vector<64x64xf32>
    %99 = tpu.concatenate %90, %61, %98 in 0 : vector<64x64xf32>, vector<64x64xf32>, vector<64x64xf32> -> vector<192x64xf32>
    %cst_36 = arith.constant 0.000000e+00 : f32
    %100 = vector.broadcast %cst_36 : f32 to vector<192x8xf32>
    %101 = tpu.concatenate %100, %99, %100 in 1 : vector<192x8xf32>, vector<192x64xf32>, vector<192x8xf32> -> vector<192x80xf32>
    %102 = arith.truncf %101 : vector<192x80xf32> to vector<192x80xbf16>
    %103 = vector.extract_strided_slice %102 {offsets = [0, 0], sizes = [192, 64], strides = [1, 1]} : vector<192x80xbf16> to vector<192x64xbf16>
    %104 = vector.extract_strided_slice %62 {offsets = [0, 0, 0], sizes = [1, 64, 192], strides = [1, 1, 1]} : vector<3x64x192xbf16> to vector<1x64x192xbf16>
    %105 = vector.shape_cast %104 : vector<1x64x192xbf16> to vector<64x192xbf16>
    %cst_37 = arith.constant dense<0.000000e+00> : vector<64x64xf32>
    %106 = tpu.matmul %105, %103, %cst_37 {dimension_numbers = #tpu.dot_dimension_numbers<[1], [0], [0], [1], [0, 0, 1, 1], [], []>} : vector<64x192xbf16>, vector<192x64xbf16>, vector<64x64xf32> -> vector<64x64xf32>
    %107 = arith.addf %64, %106 : vector<64x64xf32>
    %108 = vector.extract_strided_slice %102 {offsets = [0, 8], sizes = [192, 64], strides = [1, 1]} : vector<192x80xbf16> to vector<192x64xbf16>
    %109 = vector.extract_strided_slice %62 {offsets = [1, 0, 0], sizes = [1, 64, 192], strides = [1, 1, 1]} : vector<3x64x192xbf16> to vector<1x64x192xbf16>
    %110 = vector.shape_cast %109 : vector<1x64x192xbf16> to vector<64x192xbf16>
    %cst_38 = arith.constant dense<0.000000e+00> : vector<64x64xf32>
    %111 = tpu.matmul %110, %108, %cst_38 {dimension_numbers = #tpu.dot_dimension_numbers<[1], [0], [0], [1], [0, 0, 1, 1], [], []>} : vector<64x192xbf16>, vector<192x64xbf16>, vector<64x64xf32> -> vector<64x64xf32>
    %112 = arith.addf %107, %111 : vector<64x64xf32>
    %113 = vector.extract_strided_slice %102 {offsets = [0, 16], sizes = [192, 64], strides = [1, 1]} : vector<192x80xbf16> to vector<192x64xbf16>
    %114 = vector.extract_strided_slice %62 {offsets = [2, 0, 0], sizes = [1, 64, 192], strides = [1, 1, 1]} : vector<3x64x192xbf16> to vector<1x64x192xbf16>
    %115 = vector.shape_cast %114 : vector<1x64x192xbf16> to vector<64x192xbf16>
    %cst_39 = arith.constant dense<0.000000e+00> : vector<64x64xf32>
    %116 = tpu.matmul %115, %113, %cst_39 {dimension_numbers = #tpu.dot_dimension_numbers<[1], [0], [0], [1], [0, 0, 1, 1], [], []>} : vector<64x192xbf16>, vector<192x64xbf16>, vector<64x64xf32> -> vector<64x64xf32>
    %117 = arith.addf %112, %116 : vector<64x64xf32>
    %118 = vector.broadcast %63 : vector<64x1xf32> to vector<64x64xf32>
    %119 = arith.addf %117, %118 : vector<64x64xf32>
    %cst_40 = arith.constant 0.000000e+00 : f32
    %120 = vector.broadcast %cst_40 : f32 to vector<64x64xf32>
    %121 = arith.maximumf %119, %120 : vector<64x64xf32>
    %c0_41 = arith.constant 0 : index
    %c0_42 = arith.constant 0 : index
    %c0_43 = arith.constant 0 : index
    %122 = vector.load %arg7[%c0_41, %c0_42, %c0_43] : memref<1x64x64xf32, #tpu.memory_space<vmem>>, vector<1x64x64xf32>
    %123 = vector.shape_cast %122 : vector<1x64x64xf32> to vector<64x64xf32>
    %124 = vector.shape_cast %121 : vector<64x64xf32> to vector<1x64x64xf32>
    tpu.vector_store %arg7[%c0_41, %c0_42, %c0_43], %124 {strides = array<i32>} : memref<1x64x64xf32, #tpu.memory_space<vmem>>, vector<1x64x64xf32>,
    %c0_44 = arith.constant 0 : index
    %c0_45 = arith.constant 0 : index
    %c0_46 = arith.constant 0 : index
    %125 = vector.load %arg6[%c0_44, %c0_45, %c0_46] : memref<4x64x16xf32, #tpu.memory_space<vmem>>, vector<4x64x16xf32>
    %126 = vector.extract_strided_slice %125 {offsets = [0, 0, 0], sizes = [1, 64, 16], strides = [1, 1, 1]} : vector<4x64x16xf32> to vector<1x64x16xf32>
    %127 = vector.shape_cast %126 : vector<1x64x16xf32> to vector<64x16xf32>
    %cst_47 = arith.constant dense<0.000000e+00> : vector<64x16xf32>
    %128 = tpu.matmul %121, %127, %cst_47 {dimension_numbers = #tpu.dot_dimension_numbers<[1], [0], [0], [1], [0, 0, 1, 1], [], []>} : vector<64x64xf32>, vector<64x16xf32>, vector<64x16xf32> -> vector<64x16xf32>
    %129 = vector.extract_strided_slice %125 {offsets = [1, 0, 0], sizes = [1, 64, 16], strides = [1, 1, 1]} : vector<4x64x16xf32> to vector<1x64x16xf32>
    %130 = vector.shape_cast %129 : vector<1x64x16xf32> to vector<64x16xf32>
    %cst_48 = arith.constant dense<0.000000e+00> : vector<64x16xf32>
    %131 = tpu.matmul %121, %130, %cst_48 {dimension_numbers = #tpu.dot_dimension_numbers<[1], [0], [0], [1], [0, 0, 1, 1], [], []>} : vector<64x64xf32>, vector<64x16xf32>, vector<64x16xf32> -> vector<64x16xf32>
    %132 = vector.extract_strided_slice %125 {offsets = [2, 0, 0], sizes = [1, 64, 16], strides = [1, 1, 1]} : vector<4x64x16xf32> to vector<1x64x16xf32>
    %133 = vector.shape_cast %132 : vector<1x64x16xf32> to vector<64x16xf32>
    %cst_49 = arith.constant dense<0.000000e+00> : vector<64x16xf32>
    %134 = tpu.matmul %121, %133, %cst_49 {dimension_numbers = #tpu.dot_dimension_numbers<[1], [0], [0], [1], [0, 0, 1, 1], [], []>} : vector<64x64xf32>, vector<64x16xf32>, vector<64x16xf32> -> vector<64x16xf32>
    %135 = vector.extract_strided_slice %125 {offsets = [3, 0, 0], sizes = [1, 64, 16], strides = [1, 1, 1]} : vector<4x64x16xf32> to vector<1x64x16xf32>
    %136 = vector.shape_cast %135 : vector<1x64x16xf32> to vector<64x16xf32>
    %cst_50 = arith.constant dense<0.000000e+00> : vector<64x16xf32>
    %137 = tpu.matmul %121, %136, %cst_50 {dimension_numbers = #tpu.dot_dimension_numbers<[1], [0], [0], [1], [0, 0, 1, 1], [], []>} : vector<64x64xf32>, vector<64x16xf32>, vector<64x16xf32> -> vector<64x16xf32>
    %138 = arith.maximumf %128, %131 : vector<64x16xf32>
    %139 = arith.maximumf %134, %137 : vector<64x16xf32>
    %140 = arith.maximumf %138, %139 : vector<64x16xf32>
    %c0_51 = arith.constant 0 : index
    %c0_52 = arith.constant 0 : index
    %c0_53 = arith.constant 0 : index
    %141 = vector.load %arg8[%c0_51, %c0_52, %c0_53] : memref<1x64x16xf32, #tpu.memory_space<vmem>>, vector<1x64x16xf32>
    %142 = vector.shape_cast %141 : vector<1x64x16xf32> to vector<64x16xf32>
    %143 = vector.shape_cast %140 : vector<64x16xf32> to vector<1x64x16xf32>
    tpu.vector_store %arg8[%c0_51, %c0_52, %c0_53], %143 {strides = array<i32>} : memref<1x64x16xf32, #tpu.memory_space<vmem>>, vector<1x64x16xf32>,
    return
  }
  func.func @transform_0(%arg0: i32) -> (i32, i32, i32) {
    %c0_i32 = arith.constant 0 : i32
    %c0_i32_0 = arith.constant 0 : i32
    %c0_i32_1 = arith.constant 0 : i32
    return %arg0, %c0_i32, %c0_i32_0 : i32, i32, i32
  }
  func.func @transform_1(%arg0: i32) -> (i32, i32, i32) {
    %c0_i32 = arith.constant 0 : i32
    %c0_i32_0 = arith.constant 0 : i32
    %c0_i32_1 = arith.constant 0 : i32
    %c0_i32_2 = arith.constant 0 : i32
    return %c0_i32, %c0_i32_0, %c0_i32_1 : i32, i32, i32
  }
  func.func @transform_2(%arg0: i32) -> (i32, i32) {
    %c0_i32 = arith.constant 0 : i32
    %c0_i32_0 = arith.constant 0 : i32
    %c0_i32_1 = arith.constant 0 : i32
    return %c0_i32, %c0_i32_0 : i32, i32
  }
  func.func @transform_3(%arg0: i32) -> (i32, i32, i32) {
    %c0_i32 = arith.constant 0 : i32
    %c0_i32_0 = arith.constant 0 : i32
    %c0_i32_1 = arith.constant 0 : i32
    %c0_i32_2 = arith.constant 0 : i32
    return %c0_i32, %c0_i32_0, %c0_i32_1 : i32, i32, i32
  }
  func.func @transform_4(%arg0: i32) -> (i32, i32) {
    %c0_i32 = arith.constant 0 : i32
    %c0_i32_0 = arith.constant 0 : i32
    %c0_i32_1 = arith.constant 0 : i32
    return %c0_i32, %c0_i32_0 : i32, i32
  }
  func.func @transform_5(%arg0: i32) -> (i32, i32, i32) {
    %c0_i32 = arith.constant 0 : i32
    %c0_i32_0 = arith.constant 0 : i32
    %c0_i32_1 = arith.constant 0 : i32
    %c0_i32_2 = arith.constant 0 : i32
    return %c0_i32, %c0_i32_0, %c0_i32_1 : i32, i32, i32
  }
  func.func @transform_6(%arg0: i32) -> (i32, i32, i32) {
    %c0_i32 = arith.constant 0 : i32
    %c0_i32_0 = arith.constant 0 : i32
    %c0_i32_1 = arith.constant 0 : i32
    return %arg0, %c0_i32, %c0_i32_0 : i32, i32, i32
  }
  func.func @transform_7(%arg0: i32) -> (i32, i32, i32) {
    %c0_i32 = arith.constant 0 : i32
    %c0_i32_0 = arith.constant 0 : i32
    %c0_i32_1 = arith.constant 0 : i32
    return %arg0, %c0_i32, %c0_i32_0 : i32, i32, i32
  }
}

module attributes {stable_mosaic.version = 11 : i64} {
  func.func @_conv_block_kernel(%arg0: i32, %arg1: memref<1x64x16xf32, #tpu.memory_space<vmem>>, %arg2: memref<3x64x192xbf16, #tpu.memory_space<vmem>>, %arg3: memref<64x1xf32, #tpu.memory_space<vmem>>, %arg4: memref<3x64x192xbf16, #tpu.memory_space<vmem>>, %arg5: memref<64x1xf32, #tpu.memory_space<vmem>>, %arg6: memref<1x64x16xf32, #tpu.memory_space<vmem>>) attributes {dimension_semantics = [#tpu.dimension_semantics<parallel>], iteration_bounds = array<i64: 2>, scalar_prefetch = 0 : i64, scratch_operands = 0 : i64, tpu.core_type = #tpu.core_type<tc>, window_params = [{transform_indices = @transform_0, window_bounds = array<i64: 1, 64, 16>}, {pipeline_mode = #tpu.pipeline_mode<synchronous>, transform_indices = @transform_1, window_bounds = array<i64: 3, 64, 192>}, {pipeline_mode = #tpu.pipeline_mode<synchronous>, transform_indices = @transform_2, window_bounds = array<i64: 64, 1>}, {pipeline_mode = #tpu.pipeline_mode<synchronous>, transform_indices = @transform_3, window_bounds = array<i64: 3, 64, 192>}, {pipeline_mode = #tpu.pipeline_mode<synchronous>, transform_indices = @transform_4, window_bounds = array<i64: 64, 1>}, {transform_indices = @transform_5, window_bounds = array<i64: 1, 64, 16>}]} {
    %c0 = arith.constant 0 : index
    %c0_0 = arith.constant 0 : index
    %c0_1 = arith.constant 0 : index
    %0 = vector.load %arg1[%c0, %c0_0, %c0_1] : memref<1x64x16xf32, #tpu.memory_space<vmem>>, vector<1x64x16xf32>
    %1 = vector.shape_cast %0 : vector<1x64x16xf32> to vector<64x16xf32>
    %c0_2 = arith.constant 0 : index
    %c0_3 = arith.constant 0 : index
    %c0_4 = arith.constant 0 : index
    %2 = vector.load %arg2[%c0_2, %c0_3, %c0_4] : memref<3x64x192xbf16, #tpu.memory_space<vmem>>, vector<3x64x192xbf16>
    %c0_5 = arith.constant 0 : index
    %c0_6 = arith.constant 0 : index
    %3 = vector.load %arg3[%c0_5, %c0_6] : memref<64x1xf32, #tpu.memory_space<vmem>>, vector<64x1xf32>
    %cst = arith.constant 0.000000e+00 : f32
    %4 = vector.broadcast %cst : f32 to vector<64x16xf32>
    %5 = tpu.iota {dimensions = array<i32: 1>} : vector<1x16xi32>
    %c4_i32 = arith.constant 4 : i32
    %c0_i32 = arith.constant 0 : i32
    %6 = arith.cmpi eq, %c4_i32, %c0_i32 : i32
    %c1_i32 = arith.constant 1 : i32
    %7 = arith.select %6, %c1_i32, %c4_i32 : i32
    %8 = vector.broadcast %7 : i32 to vector<1x16xi32>
    %9 = arith.remsi %5, %8 : vector<1x16xi32>
    %c0_i32_7 = arith.constant 0 : i32
    %10 = vector.broadcast %c0_i32_7 : i32 to vector<1x16xi32>
    %11 = arith.cmpi ne, %9, %10 : vector<1x16xi32>
    %c0_i32_8 = arith.constant 0 : i32
    %12 = vector.broadcast %c0_i32_8 : i32 to vector<1x16xi32>
    %13 = arith.cmpi slt, %9, %12 : vector<1x16xi32>
    %c0_i32_9 = arith.constant 0 : i32
    %14 = arith.cmpi slt, %7, %c0_i32_9 : i32
    %15 = vector.broadcast %14 : i1 to vector<1x16xi1>
    %16 = vector.broadcast %15 : vector<1x16xi1> to vector<1x16xi1>
    %17 = arith.xori %13, %16 : vector<1x16xi1>
    %18 = arith.andi %17, %11 : vector<1x16xi1>
    %19 = vector.broadcast %7 : i32 to vector<1x16xi32>
    %20 = arith.addi %9, %19 : vector<1x16xi32>
    %21 = arith.select %18, %20, %9 : vector<1x16xi1>, vector<1x16xi32>
    %cst_10 = arith.constant 0.000000e+00 : f32
    %22 = vector.broadcast %cst_10 : f32 to vector<64x1xf32>
    %c0_i32_11 = arith.constant 0 : i32
    %23 = vector.broadcast %c0_i32_11 : i32 to vector<1x16xi32>
    %24 = arith.cmpi eq, %21, %23 : vector<1x16xi32>
    %25 = vector.extract_strided_slice %1 {offsets = [0, 0], sizes = [64, 15], strides = [1, 1]} : vector<64x16xf32> to vector<64x15xf32>
    %26 = tpu.concatenate %22, %25 in 1 : vector<64x1xf32>, vector<64x15xf32> -> vector<64x16xf32>
    %cst_12 = arith.constant 0.000000e+00 : f32
    %27 = vector.shape_cast %24 : vector<1x16xi1> to vector<1x16xi1>
    %28 = vector.broadcast %27 : vector<1x16xi1> to vector<64x16xi1>
    %29 = vector.broadcast %cst_12 : f32 to vector<64x16xf32>
    %30 = arith.select %28, %29, %26 : vector<64x16xi1>, vector<64x16xf32>
    %c3_i32 = arith.constant 3 : i32
    %31 = vector.broadcast %c3_i32 : i32 to vector<1x16xi32>
    %32 = arith.cmpi eq, %21, %31 : vector<1x16xi32>
    %33 = vector.extract_strided_slice %1 {offsets = [0, 1], sizes = [64, 15], strides = [1, 1]} : vector<64x16xf32> to vector<64x15xf32>
    %34 = tpu.concatenate %33, %22 in 1 : vector<64x15xf32>, vector<64x1xf32> -> vector<64x16xf32>
    %cst_13 = arith.constant 0.000000e+00 : f32
    %35 = vector.shape_cast %32 : vector<1x16xi1> to vector<1x16xi1>
    %36 = vector.broadcast %35 : vector<1x16xi1> to vector<64x16xi1>
    %37 = vector.broadcast %cst_13 : f32 to vector<64x16xf32>
    %38 = arith.select %36, %37, %34 : vector<64x16xi1>, vector<64x16xf32>
    %39 = tpu.concatenate %30, %1, %38 in 0 : vector<64x16xf32>, vector<64x16xf32>, vector<64x16xf32> -> vector<192x16xf32>
    %cst_14 = arith.constant 0.000000e+00 : f32
    %40 = vector.broadcast %cst_14 : f32 to vector<192x4xf32>
    %41 = tpu.concatenate %40, %39, %40 in 1 : vector<192x4xf32>, vector<192x16xf32>, vector<192x4xf32> -> vector<192x24xf32>
    %42 = arith.truncf %41 : vector<192x24xf32> to vector<192x24xbf16>
    %43 = vector.extract_strided_slice %42 {offsets = [0, 0], sizes = [192, 16], strides = [1, 1]} : vector<192x24xbf16> to vector<192x16xbf16>
    %44 = vector.extract_strided_slice %2 {offsets = [0, 0, 0], sizes = [1, 64, 192], strides = [1, 1, 1]} : vector<3x64x192xbf16> to vector<1x64x192xbf16>
    %45 = vector.shape_cast %44 : vector<1x64x192xbf16> to vector<64x192xbf16>
    %cst_15 = arith.constant dense<0.000000e+00> : vector<64x16xf32>
    %46 = tpu.matmul %45, %43, %cst_15 {dimension_numbers = #tpu.dot_dimension_numbers<[1], [0], [0], [1], [0, 0, 1, 1], [], []>} : vector<64x192xbf16>, vector<192x16xbf16>, vector<64x16xf32> -> vector<64x16xf32>
    %47 = arith.addf %4, %46 : vector<64x16xf32>
    %48 = vector.extract_strided_slice %42 {offsets = [0, 4], sizes = [192, 16], strides = [1, 1]} : vector<192x24xbf16> to vector<192x16xbf16>
    %49 = vector.extract_strided_slice %2 {offsets = [1, 0, 0], sizes = [1, 64, 192], strides = [1, 1, 1]} : vector<3x64x192xbf16> to vector<1x64x192xbf16>
    %50 = vector.shape_cast %49 : vector<1x64x192xbf16> to vector<64x192xbf16>
    %cst_16 = arith.constant dense<0.000000e+00> : vector<64x16xf32>
    %51 = tpu.matmul %50, %48, %cst_16 {dimension_numbers = #tpu.dot_dimension_numbers<[1], [0], [0], [1], [0, 0, 1, 1], [], []>} : vector<64x192xbf16>, vector<192x16xbf16>, vector<64x16xf32> -> vector<64x16xf32>
    %52 = arith.addf %47, %51 : vector<64x16xf32>
    %53 = vector.extract_strided_slice %42 {offsets = [0, 8], sizes = [192, 16], strides = [1, 1]} : vector<192x24xbf16> to vector<192x16xbf16>
    %54 = vector.extract_strided_slice %2 {offsets = [2, 0, 0], sizes = [1, 64, 192], strides = [1, 1, 1]} : vector<3x64x192xbf16> to vector<1x64x192xbf16>
    %55 = vector.shape_cast %54 : vector<1x64x192xbf16> to vector<64x192xbf16>
    %cst_17 = arith.constant dense<0.000000e+00> : vector<64x16xf32>
    %56 = tpu.matmul %55, %53, %cst_17 {dimension_numbers = #tpu.dot_dimension_numbers<[1], [0], [0], [1], [0, 0, 1, 1], [], []>} : vector<64x192xbf16>, vector<192x16xbf16>, vector<64x16xf32> -> vector<64x16xf32>
    %57 = arith.addf %52, %56 : vector<64x16xf32>
    %58 = vector.broadcast %3 : vector<64x1xf32> to vector<64x16xf32>
    %59 = arith.addf %57, %58 : vector<64x16xf32>
    %cst_18 = arith.constant 0.000000e+00 : f32
    %60 = vector.broadcast %cst_18 : f32 to vector<64x16xf32>
    %61 = arith.maximumf %59, %60 : vector<64x16xf32>
    %c0_19 = arith.constant 0 : index
    %c0_20 = arith.constant 0 : index
    %c0_21 = arith.constant 0 : index
    %62 = vector.load %arg4[%c0_19, %c0_20, %c0_21] : memref<3x64x192xbf16, #tpu.memory_space<vmem>>, vector<3x64x192xbf16>
    %c0_22 = arith.constant 0 : index
    %c0_23 = arith.constant 0 : index
    %63 = vector.load %arg5[%c0_22, %c0_23] : memref<64x1xf32, #tpu.memory_space<vmem>>, vector<64x1xf32>
    %cst_24 = arith.constant 0.000000e+00 : f32
    %64 = vector.broadcast %cst_24 : f32 to vector<64x16xf32>
    %65 = tpu.iota {dimensions = array<i32: 1>} : vector<1x16xi32>
    %c4_i32_25 = arith.constant 4 : i32
    %c0_i32_26 = arith.constant 0 : i32
    %66 = arith.cmpi eq, %c4_i32_25, %c0_i32_26 : i32
    %c1_i32_27 = arith.constant 1 : i32
    %67 = arith.select %66, %c1_i32_27, %c4_i32_25 : i32
    %68 = vector.broadcast %67 : i32 to vector<1x16xi32>
    %69 = arith.remsi %65, %68 : vector<1x16xi32>
    %c0_i32_28 = arith.constant 0 : i32
    %70 = vector.broadcast %c0_i32_28 : i32 to vector<1x16xi32>
    %71 = arith.cmpi ne, %69, %70 : vector<1x16xi32>
    %c0_i32_29 = arith.constant 0 : i32
    %72 = vector.broadcast %c0_i32_29 : i32 to vector<1x16xi32>
    %73 = arith.cmpi slt, %69, %72 : vector<1x16xi32>
    %c0_i32_30 = arith.constant 0 : i32
    %74 = arith.cmpi slt, %67, %c0_i32_30 : i32
    %75 = vector.broadcast %74 : i1 to vector<1x16xi1>
    %76 = vector.broadcast %75 : vector<1x16xi1> to vector<1x16xi1>
    %77 = arith.xori %73, %76 : vector<1x16xi1>
    %78 = arith.andi %77, %71 : vector<1x16xi1>
    %79 = vector.broadcast %67 : i32 to vector<1x16xi32>
    %80 = arith.addi %69, %79 : vector<1x16xi32>
    %81 = arith.select %78, %80, %69 : vector<1x16xi1>, vector<1x16xi32>
    %cst_31 = arith.constant 0.000000e+00 : f32
    %82 = vector.broadcast %cst_31 : f32 to vector<64x1xf32>
    %c0_i32_32 = arith.constant 0 : i32
    %83 = vector.broadcast %c0_i32_32 : i32 to vector<1x16xi32>
    %84 = arith.cmpi eq, %81, %83 : vector<1x16xi32>
    %85 = vector.extract_strided_slice %61 {offsets = [0, 0], sizes = [64, 15], strides = [1, 1]} : vector<64x16xf32> to vector<64x15xf32>
    %86 = tpu.concatenate %82, %85 in 1 : vector<64x1xf32>, vector<64x15xf32> -> vector<64x16xf32>
    %cst_33 = arith.constant 0.000000e+00 : f32
    %87 = vector.shape_cast %84 : vector<1x16xi1> to vector<1x16xi1>
    %88 = vector.broadcast %87 : vector<1x16xi1> to vector<64x16xi1>
    %89 = vector.broadcast %cst_33 : f32 to vector<64x16xf32>
    %90 = arith.select %88, %89, %86 : vector<64x16xi1>, vector<64x16xf32>
    %c3_i32_34 = arith.constant 3 : i32
    %91 = vector.broadcast %c3_i32_34 : i32 to vector<1x16xi32>
    %92 = arith.cmpi eq, %81, %91 : vector<1x16xi32>
    %93 = vector.extract_strided_slice %61 {offsets = [0, 1], sizes = [64, 15], strides = [1, 1]} : vector<64x16xf32> to vector<64x15xf32>
    %94 = tpu.concatenate %93, %82 in 1 : vector<64x15xf32>, vector<64x1xf32> -> vector<64x16xf32>
    %cst_35 = arith.constant 0.000000e+00 : f32
    %95 = vector.shape_cast %92 : vector<1x16xi1> to vector<1x16xi1>
    %96 = vector.broadcast %95 : vector<1x16xi1> to vector<64x16xi1>
    %97 = vector.broadcast %cst_35 : f32 to vector<64x16xf32>
    %98 = arith.select %96, %97, %94 : vector<64x16xi1>, vector<64x16xf32>
    %99 = tpu.concatenate %90, %61, %98 in 0 : vector<64x16xf32>, vector<64x16xf32>, vector<64x16xf32> -> vector<192x16xf32>
    %cst_36 = arith.constant 0.000000e+00 : f32
    %100 = vector.broadcast %cst_36 : f32 to vector<192x4xf32>
    %101 = tpu.concatenate %100, %99, %100 in 1 : vector<192x4xf32>, vector<192x16xf32>, vector<192x4xf32> -> vector<192x24xf32>
    %102 = arith.truncf %101 : vector<192x24xf32> to vector<192x24xbf16>
    %103 = vector.extract_strided_slice %102 {offsets = [0, 0], sizes = [192, 16], strides = [1, 1]} : vector<192x24xbf16> to vector<192x16xbf16>
    %104 = vector.extract_strided_slice %62 {offsets = [0, 0, 0], sizes = [1, 64, 192], strides = [1, 1, 1]} : vector<3x64x192xbf16> to vector<1x64x192xbf16>
    %105 = vector.shape_cast %104 : vector<1x64x192xbf16> to vector<64x192xbf16>
    %cst_37 = arith.constant dense<0.000000e+00> : vector<64x16xf32>
    %106 = tpu.matmul %105, %103, %cst_37 {dimension_numbers = #tpu.dot_dimension_numbers<[1], [0], [0], [1], [0, 0, 1, 1], [], []>} : vector<64x192xbf16>, vector<192x16xbf16>, vector<64x16xf32> -> vector<64x16xf32>
    %107 = arith.addf %64, %106 : vector<64x16xf32>
    %108 = vector.extract_strided_slice %102 {offsets = [0, 4], sizes = [192, 16], strides = [1, 1]} : vector<192x24xbf16> to vector<192x16xbf16>
    %109 = vector.extract_strided_slice %62 {offsets = [1, 0, 0], sizes = [1, 64, 192], strides = [1, 1, 1]} : vector<3x64x192xbf16> to vector<1x64x192xbf16>
    %110 = vector.shape_cast %109 : vector<1x64x192xbf16> to vector<64x192xbf16>
    %cst_38 = arith.constant dense<0.000000e+00> : vector<64x16xf32>
    %111 = tpu.matmul %110, %108, %cst_38 {dimension_numbers = #tpu.dot_dimension_numbers<[1], [0], [0], [1], [0, 0, 1, 1], [], []>} : vector<64x192xbf16>, vector<192x16xbf16>, vector<64x16xf32> -> vector<64x16xf32>
    %112 = arith.addf %107, %111 : vector<64x16xf32>
    %113 = vector.extract_strided_slice %102 {offsets = [0, 8], sizes = [192, 16], strides = [1, 1]} : vector<192x24xbf16> to vector<192x16xbf16>
    %114 = vector.extract_strided_slice %62 {offsets = [2, 0, 0], sizes = [1, 64, 192], strides = [1, 1, 1]} : vector<3x64x192xbf16> to vector<1x64x192xbf16>
    %115 = vector.shape_cast %114 : vector<1x64x192xbf16> to vector<64x192xbf16>
    %cst_39 = arith.constant dense<0.000000e+00> : vector<64x16xf32>
    %116 = tpu.matmul %115, %113, %cst_39 {dimension_numbers = #tpu.dot_dimension_numbers<[1], [0], [0], [1], [0, 0, 1, 1], [], []>} : vector<64x192xbf16>, vector<192x16xbf16>, vector<64x16xf32> -> vector<64x16xf32>
    %117 = arith.addf %112, %116 : vector<64x16xf32>
    %118 = vector.broadcast %63 : vector<64x1xf32> to vector<64x16xf32>
    %119 = arith.addf %117, %118 : vector<64x16xf32>
    %cst_40 = arith.constant 0.000000e+00 : f32
    %120 = vector.broadcast %cst_40 : f32 to vector<64x16xf32>
    %121 = arith.maximumf %119, %120 : vector<64x16xf32>
    %c0_41 = arith.constant 0 : index
    %c0_42 = arith.constant 0 : index
    %c0_43 = arith.constant 0 : index
    %122 = vector.load %arg6[%c0_41, %c0_42, %c0_43] : memref<1x64x16xf32, #tpu.memory_space<vmem>>, vector<1x64x16xf32>
    %123 = vector.shape_cast %122 : vector<1x64x16xf32> to vector<64x16xf32>
    %124 = vector.shape_cast %121 : vector<64x16xf32> to vector<1x64x16xf32>
    tpu.vector_store %arg6[%c0_41, %c0_42, %c0_43], %124 {strides = array<i32>} : memref<1x64x16xf32, #tpu.memory_space<vmem>>, vector<1x64x16xf32>,
    return
  }
  func.func @transform_0(%arg0: i32) -> (i32, i32, i32) {
    %c0_i32 = arith.constant 0 : i32
    %c0_i32_0 = arith.constant 0 : i32
    %c0_i32_1 = arith.constant 0 : i32
    return %arg0, %c0_i32, %c0_i32_0 : i32, i32, i32
  }
  func.func @transform_1(%arg0: i32) -> (i32, i32, i32) {
    %c0_i32 = arith.constant 0 : i32
    %c0_i32_0 = arith.constant 0 : i32
    %c0_i32_1 = arith.constant 0 : i32
    %c0_i32_2 = arith.constant 0 : i32
    return %c0_i32, %c0_i32_0, %c0_i32_1 : i32, i32, i32
  }
  func.func @transform_2(%arg0: i32) -> (i32, i32) {
    %c0_i32 = arith.constant 0 : i32
    %c0_i32_0 = arith.constant 0 : i32
    %c0_i32_1 = arith.constant 0 : i32
    return %c0_i32, %c0_i32_0 : i32, i32
  }
  func.func @transform_3(%arg0: i32) -> (i32, i32, i32) {
    %c0_i32 = arith.constant 0 : i32
    %c0_i32_0 = arith.constant 0 : i32
    %c0_i32_1 = arith.constant 0 : i32
    %c0_i32_2 = arith.constant 0 : i32
    return %c0_i32, %c0_i32_0, %c0_i32_1 : i32, i32, i32
  }
  func.func @transform_4(%arg0: i32) -> (i32, i32) {
    %c0_i32 = arith.constant 0 : i32
    %c0_i32_0 = arith.constant 0 : i32
    %c0_i32_1 = arith.constant 0 : i32
    return %c0_i32, %c0_i32_0 : i32, i32
  }
  func.func @transform_5(%arg0: i32) -> (i32, i32, i32) {
    %c0_i32 = arith.constant 0 : i32
    %c0_i32_0 = arith.constant 0 : i32
    %c0_i32_1 = arith.constant 0 : i32
    return %arg0, %c0_i32, %c0_i32_0 : i32, i32, i32
  }
}

module attributes {stable_mosaic.version = 11 : i64} {
  func.func @_conv_block_kernel(%arg0: i32, %arg1: memref<1x64x64xf32, #tpu.memory_space<vmem>>, %arg2: memref<1x64x16xf32, #tpu.memory_space<vmem>>, %arg3: memref<3x32x192xbf16, #tpu.memory_space<vmem>>, %arg4: memref<3x32x192xbf16, #tpu.memory_space<vmem>>, %arg5: memref<32x1xf32, #tpu.memory_space<vmem>>, %arg6: memref<3x32x96xbf16, #tpu.memory_space<vmem>>, %arg7: memref<32x1xf32, #tpu.memory_space<vmem>>, %arg8: memref<16x64xf32, #tpu.memory_space<vmem>>, %arg9: memref<1x32x64xf32, #tpu.memory_space<vmem>>) attributes {dimension_semantics = [#tpu.dimension_semantics<parallel>], iteration_bounds = array<i64: 2>, scalar_prefetch = 0 : i64, scratch_operands = 0 : i64, tpu.core_type = #tpu.core_type<tc>, window_params = [{transform_indices = @transform_0, window_bounds = array<i64: 1, 64, 64>}, {transform_indices = @transform_1, window_bounds = array<i64: 1, 64, 16>}, {pipeline_mode = #tpu.pipeline_mode<synchronous>, transform_indices = @transform_2, window_bounds = array<i64: 3, 32, 192>}, {pipeline_mode = #tpu.pipeline_mode<synchronous>, transform_indices = @transform_3, window_bounds = array<i64: 3, 32, 192>}, {pipeline_mode = #tpu.pipeline_mode<synchronous>, transform_indices = @transform_4, window_bounds = array<i64: 32, 1>}, {pipeline_mode = #tpu.pipeline_mode<synchronous>, transform_indices = @transform_5, window_bounds = array<i64: 3, 32, 96>}, {pipeline_mode = #tpu.pipeline_mode<synchronous>, transform_indices = @transform_6, window_bounds = array<i64: 32, 1>}, {pipeline_mode = #tpu.pipeline_mode<synchronous>, transform_indices = @transform_7, window_bounds = array<i64: 16, 64>}, {transform_indices = @transform_8, window_bounds = array<i64: 1, 32, 64>}]} {
    %c0 = arith.constant 0 : index
    %c0_0 = arith.constant 0 : index
    %c0_1 = arith.constant 0 : index
    %0 = vector.load %arg1[%c0, %c0_0, %c0_1] : memref<1x64x64xf32, #tpu.memory_space<vmem>>, vector<1x64x64xf32>
    %1 = vector.shape_cast %0 : vector<1x64x64xf32> to vector<64x64xf32>
    %c0_2 = arith.constant 0 : index
    %c0_3 = arith.constant 0 : index
    %c0_4 = arith.constant 0 : index
    %2 = vector.load %arg2[%c0_2, %c0_3, %c0_4] : memref<1x64x16xf32, #tpu.memory_space<vmem>>, vector<1x64x16xf32>
    %3 = vector.shape_cast %2 : vector<1x64x16xf32> to vector<64x16xf32>
    %c0_5 = arith.constant 0 : index
    %c0_6 = arith.constant 0 : index
    %4 = vector.load %arg8[%c0_5, %c0_6] : memref<16x64xf32, #tpu.memory_space<vmem>>, vector<16x64xf32>
    %cst = arith.constant dense<0.000000e+00> : vector<64x64xf32>
    %5 = tpu.matmul %3, %4, %cst {dimension_numbers = #tpu.dot_dimension_numbers<[1], [0], [0], [1], [0, 0, 1, 1], [], []>} : vector<64x16xf32>, vector<16x64xf32>, vector<64x64xf32> -> vector<64x64xf32>
    %c0_7 = arith.constant 0 : index
    %c0_8 = arith.constant 0 : index
    %c0_9 = arith.constant 0 : index
    %6 = vector.load %arg3[%c0_7, %c0_8, %c0_9] : memref<3x32x192xbf16, #tpu.memory_space<vmem>>, vector<3x32x192xbf16>
    %c0_10 = arith.constant 0 : index
    %c0_11 = arith.constant 0 : index
    %c0_12 = arith.constant 0 : index
    %7 = vector.load %arg4[%c0_10, %c0_11, %c0_12] : memref<3x32x192xbf16, #tpu.memory_space<vmem>>, vector<3x32x192xbf16>
    %c0_13 = arith.constant 0 : index
    %c0_14 = arith.constant 0 : index
    %8 = vector.load %arg5[%c0_13, %c0_14] : memref<32x1xf32, #tpu.memory_space<vmem>>, vector<32x1xf32>
    %cst_15 = arith.constant 0.000000e+00 : f32
    %9 = vector.broadcast %cst_15 : f32 to vector<32x64xf32>
    %10 = tpu.iota {dimensions = array<i32: 1>} : vector<1x64xi32>
    %c8_i32 = arith.constant 8 : i32
    %c0_i32 = arith.constant 0 : i32
    %11 = arith.cmpi eq, %c8_i32, %c0_i32 : i32
    %c1_i32 = arith.constant 1 : i32
    %12 = arith.select %11, %c1_i32, %c8_i32 : i32
    %13 = vector.broadcast %12 : i32 to vector<1x64xi32>
    %14 = arith.remsi %10, %13 : vector<1x64xi32>
    %c0_i32_16 = arith.constant 0 : i32
    %15 = vector.broadcast %c0_i32_16 : i32 to vector<1x64xi32>
    %16 = arith.cmpi ne, %14, %15 : vector<1x64xi32>
    %c0_i32_17 = arith.constant 0 : i32
    %17 = vector.broadcast %c0_i32_17 : i32 to vector<1x64xi32>
    %18 = arith.cmpi slt, %14, %17 : vector<1x64xi32>
    %c0_i32_18 = arith.constant 0 : i32
    %19 = arith.cmpi slt, %12, %c0_i32_18 : i32
    %20 = vector.broadcast %19 : i1 to vector<1x64xi1>
    %21 = vector.broadcast %20 : vector<1x64xi1> to vector<1x64xi1>
    %22 = arith.xori %18, %21 : vector<1x64xi1>
    %23 = arith.andi %22, %16 : vector<1x64xi1>
    %24 = vector.broadcast %12 : i32 to vector<1x64xi32>
    %25 = arith.addi %14, %24 : vector<1x64xi32>
    %26 = arith.select %23, %25, %14 : vector<1x64xi1>, vector<1x64xi32>
    %cst_19 = arith.constant 0.000000e+00 : f32
    %27 = vector.broadcast %cst_19 : f32 to vector<64x1xf32>
    %c0_i32_20 = arith.constant 0 : i32
    %28 = vector.broadcast %c0_i32_20 : i32 to vector<1x64xi32>
    %29 = arith.cmpi eq, %26, %28 : vector<1x64xi32>
    %30 = vector.extract_strided_slice %1 {offsets = [0, 0], sizes = [64, 63], strides = [1, 1]} : vector<64x64xf32> to vector<64x63xf32>
    %31 = tpu.concatenate %27, %30 in 1 : vector<64x1xf32>, vector<64x63xf32> -> vector<64x64xf32>
    %cst_21 = arith.constant 0.000000e+00 : f32
    %32 = vector.shape_cast %29 : vector<1x64xi1> to vector<1x64xi1>
    %33 = vector.broadcast %32 : vector<1x64xi1> to vector<64x64xi1>
    %34 = vector.broadcast %cst_21 : f32 to vector<64x64xf32>
    %35 = arith.select %33, %34, %31 : vector<64x64xi1>, vector<64x64xf32>
    %c7_i32 = arith.constant 7 : i32
    %36 = vector.broadcast %c7_i32 : i32 to vector<1x64xi32>
    %37 = arith.cmpi eq, %26, %36 : vector<1x64xi32>
    %38 = vector.extract_strided_slice %1 {offsets = [0, 1], sizes = [64, 63], strides = [1, 1]} : vector<64x64xf32> to vector<64x63xf32>
    %39 = tpu.concatenate %38, %27 in 1 : vector<64x63xf32>, vector<64x1xf32> -> vector<64x64xf32>
    %cst_22 = arith.constant 0.000000e+00 : f32
    %40 = vector.shape_cast %37 : vector<1x64xi1> to vector<1x64xi1>
    %41 = vector.broadcast %40 : vector<1x64xi1> to vector<64x64xi1>
    %42 = vector.broadcast %cst_22 : f32 to vector<64x64xf32>
    %43 = arith.select %41, %42, %39 : vector<64x64xi1>, vector<64x64xf32>
    %44 = tpu.concatenate %35, %1, %43 in 0 : vector<64x64xf32>, vector<64x64xf32>, vector<64x64xf32> -> vector<192x64xf32>
    %cst_23 = arith.constant 0.000000e+00 : f32
    %45 = vector.broadcast %cst_23 : f32 to vector<192x8xf32>
    %46 = tpu.concatenate %45, %44, %45 in 1 : vector<192x8xf32>, vector<192x64xf32>, vector<192x8xf32> -> vector<192x80xf32>
    %47 = arith.truncf %46 : vector<192x80xf32> to vector<192x80xbf16>
    %48 = vector.extract_strided_slice %47 {offsets = [0, 0], sizes = [192, 64], strides = [1, 1]} : vector<192x80xbf16> to vector<192x64xbf16>
    %49 = vector.extract_strided_slice %6 {offsets = [0, 0, 0], sizes = [1, 32, 192], strides = [1, 1, 1]} : vector<3x32x192xbf16> to vector<1x32x192xbf16>
    %50 = vector.shape_cast %49 : vector<1x32x192xbf16> to vector<32x192xbf16>
    %cst_24 = arith.constant dense<0.000000e+00> : vector<32x64xf32>
    %51 = tpu.matmul %50, %48, %cst_24 {dimension_numbers = #tpu.dot_dimension_numbers<[1], [0], [0], [1], [0, 0, 1, 1], [], []>} : vector<32x192xbf16>, vector<192x64xbf16>, vector<32x64xf32> -> vector<32x64xf32>
    %52 = arith.addf %9, %51 : vector<32x64xf32>
    %53 = vector.extract_strided_slice %47 {offsets = [0, 8], sizes = [192, 64], strides = [1, 1]} : vector<192x80xbf16> to vector<192x64xbf16>
    %54 = vector.extract_strided_slice %6 {offsets = [1, 0, 0], sizes = [1, 32, 192], strides = [1, 1, 1]} : vector<3x32x192xbf16> to vector<1x32x192xbf16>
    %55 = vector.shape_cast %54 : vector<1x32x192xbf16> to vector<32x192xbf16>
    %cst_25 = arith.constant dense<0.000000e+00> : vector<32x64xf32>
    %56 = tpu.matmul %55, %53, %cst_25 {dimension_numbers = #tpu.dot_dimension_numbers<[1], [0], [0], [1], [0, 0, 1, 1], [], []>} : vector<32x192xbf16>, vector<192x64xbf16>, vector<32x64xf32> -> vector<32x64xf32>
    %57 = arith.addf %52, %56 : vector<32x64xf32>
    %58 = vector.extract_strided_slice %47 {offsets = [0, 16], sizes = [192, 64], strides = [1, 1]} : vector<192x80xbf16> to vector<192x64xbf16>
    %59 = vector.extract_strided_slice %6 {offsets = [2, 0, 0], sizes = [1, 32, 192], strides = [1, 1, 1]} : vector<3x32x192xbf16> to vector<1x32x192xbf16>
    %60 = vector.shape_cast %59 : vector<1x32x192xbf16> to vector<32x192xbf16>
    %cst_26 = arith.constant dense<0.000000e+00> : vector<32x64xf32>
    %61 = tpu.matmul %60, %58, %cst_26 {dimension_numbers = #tpu.dot_dimension_numbers<[1], [0], [0], [1], [0, 0, 1, 1], [], []>} : vector<32x192xbf16>, vector<192x64xbf16>, vector<32x64xf32> -> vector<32x64xf32>
    %62 = arith.addf %57, %61 : vector<32x64xf32>
    %63 = tpu.iota {dimensions = array<i32: 1>} : vector<1x64xi32>
    %c8_i32_27 = arith.constant 8 : i32
    %c0_i32_28 = arith.constant 0 : i32
    %64 = arith.cmpi eq, %c8_i32_27, %c0_i32_28 : i32
    %c1_i32_29 = arith.constant 1 : i32
    %65 = arith.select %64, %c1_i32_29, %c8_i32_27 : i32
    %66 = vector.broadcast %65 : i32 to vector<1x64xi32>
    %67 = arith.remsi %63, %66 : vector<1x64xi32>
    %c0_i32_30 = arith.constant 0 : i32
    %68 = vector.broadcast %c0_i32_30 : i32 to vector<1x64xi32>
    %69 = arith.cmpi ne, %67, %68 : vector<1x64xi32>
    %c0_i32_31 = arith.constant 0 : i32
    %70 = vector.broadcast %c0_i32_31 : i32 to vector<1x64xi32>
    %71 = arith.cmpi slt, %67, %70 : vector<1x64xi32>
    %c0_i32_32 = arith.constant 0 : i32
    %72 = arith.cmpi slt, %65, %c0_i32_32 : i32
    %73 = vector.broadcast %72 : i1 to vector<1x64xi1>
    %74 = vector.broadcast %73 : vector<1x64xi1> to vector<1x64xi1>
    %75 = arith.xori %71, %74 : vector<1x64xi1>
    %76 = arith.andi %75, %69 : vector<1x64xi1>
    %77 = vector.broadcast %65 : i32 to vector<1x64xi32>
    %78 = arith.addi %67, %77 : vector<1x64xi32>
    %79 = arith.select %76, %78, %67 : vector<1x64xi1>, vector<1x64xi32>
    %cst_33 = arith.constant 0.000000e+00 : f32
    %80 = vector.broadcast %cst_33 : f32 to vector<64x1xf32>
    %c0_i32_34 = arith.constant 0 : i32
    %81 = vector.broadcast %c0_i32_34 : i32 to vector<1x64xi32>
    %82 = arith.cmpi eq, %79, %81 : vector<1x64xi32>
    %83 = vector.extract_strided_slice %5 {offsets = [0, 0], sizes = [64, 63], strides = [1, 1]} : vector<64x64xf32> to vector<64x63xf32>
    %84 = tpu.concatenate %80, %83 in 1 : vector<64x1xf32>, vector<64x63xf32> -> vector<64x64xf32>
    %cst_35 = arith.constant 0.000000e+00 : f32
    %85 = vector.shape_cast %82 : vector<1x64xi1> to vector<1x64xi1>
    %86 = vector.broadcast %85 : vector<1x64xi1> to vector<64x64xi1>
    %87 = vector.broadcast %cst_35 : f32 to vector<64x64xf32>
    %88 = arith.select %86, %87, %84 : vector<64x64xi1>, vector<64x64xf32>
    %c7_i32_36 = arith.constant 7 : i32
    %89 = vector.broadcast %c7_i32_36 : i32 to vector<1x64xi32>
    %90 = arith.cmpi eq, %79, %89 : vector<1x64xi32>
    %91 = vector.extract_strided_slice %5 {offsets = [0, 1], sizes = [64, 63], strides = [1, 1]} : vector<64x64xf32> to vector<64x63xf32>
    %92 = tpu.concatenate %91, %80 in 1 : vector<64x63xf32>, vector<64x1xf32> -> vector<64x64xf32>
    %cst_37 = arith.constant 0.000000e+00 : f32
    %93 = vector.shape_cast %90 : vector<1x64xi1> to vector<1x64xi1>
    %94 = vector.broadcast %93 : vector<1x64xi1> to vector<64x64xi1>
    %95 = vector.broadcast %cst_37 : f32 to vector<64x64xf32>
    %96 = arith.select %94, %95, %92 : vector<64x64xi1>, vector<64x64xf32>
    %97 = tpu.concatenate %88, %5, %96 in 0 : vector<64x64xf32>, vector<64x64xf32>, vector<64x64xf32> -> vector<192x64xf32>
    %cst_38 = arith.constant 0.000000e+00 : f32
    %98 = vector.broadcast %cst_38 : f32 to vector<192x8xf32>
    %99 = tpu.concatenate %98, %97, %98 in 1 : vector<192x8xf32>, vector<192x64xf32>, vector<192x8xf32> -> vector<192x80xf32>
    %100 = arith.truncf %99 : vector<192x80xf32> to vector<192x80xbf16>
    %101 = vector.extract_strided_slice %100 {offsets = [0, 0], sizes = [192, 64], strides = [1, 1]} : vector<192x80xbf16> to vector<192x64xbf16>
    %102 = vector.extract_strided_slice %7 {offsets = [0, 0, 0], sizes = [1, 32, 192], strides = [1, 1, 1]} : vector<3x32x192xbf16> to vector<1x32x192xbf16>
    %103 = vector.shape_cast %102 : vector<1x32x192xbf16> to vector<32x192xbf16>
    %cst_39 = arith.constant dense<0.000000e+00> : vector<32x64xf32>
    %104 = tpu.matmul %103, %101, %cst_39 {dimension_numbers = #tpu.dot_dimension_numbers<[1], [0], [0], [1], [0, 0, 1, 1], [], []>} : vector<32x192xbf16>, vector<192x64xbf16>, vector<32x64xf32> -> vector<32x64xf32>
    %105 = arith.addf %62, %104 : vector<32x64xf32>
    %106 = vector.extract_strided_slice %100 {offsets = [0, 8], sizes = [192, 64], strides = [1, 1]} : vector<192x80xbf16> to vector<192x64xbf16>
    %107 = vector.extract_strided_slice %7 {offsets = [1, 0, 0], sizes = [1, 32, 192], strides = [1, 1, 1]} : vector<3x32x192xbf16> to vector<1x32x192xbf16>
    %108 = vector.shape_cast %107 : vector<1x32x192xbf16> to vector<32x192xbf16>
    %cst_40 = arith.constant dense<0.000000e+00> : vector<32x64xf32>
    %109 = tpu.matmul %108, %106, %cst_40 {dimension_numbers = #tpu.dot_dimension_numbers<[1], [0], [0], [1], [0, 0, 1, 1], [], []>} : vector<32x192xbf16>, vector<192x64xbf16>, vector<32x64xf32> -> vector<32x64xf32>
    %110 = arith.addf %105, %109 : vector<32x64xf32>
    %111 = vector.extract_strided_slice %100 {offsets = [0, 16], sizes = [192, 64], strides = [1, 1]} : vector<192x80xbf16> to vector<192x64xbf16>
    %112 = vector.extract_strided_slice %7 {offsets = [2, 0, 0], sizes = [1, 32, 192], strides = [1, 1, 1]} : vector<3x32x192xbf16> to vector<1x32x192xbf16>
    %113 = vector.shape_cast %112 : vector<1x32x192xbf16> to vector<32x192xbf16>
    %cst_41 = arith.constant dense<0.000000e+00> : vector<32x64xf32>
    %114 = tpu.matmul %113, %111, %cst_41 {dimension_numbers = #tpu.dot_dimension_numbers<[1], [0], [0], [1], [0, 0, 1, 1], [], []>} : vector<32x192xbf16>, vector<192x64xbf16>, vector<32x64xf32> -> vector<32x64xf32>
    %115 = arith.addf %110, %114 : vector<32x64xf32>
    %116 = vector.broadcast %8 : vector<32x1xf32> to vector<32x64xf32>
    %117 = arith.addf %115, %116 : vector<32x64xf32>
    %cst_42 = arith.constant 0.000000e+00 : f32
    %118 = vector.broadcast %cst_42 : f32 to vector<32x64xf32>
    %119 = arith.maximumf %117, %118 : vector<32x64xf32>
    %c0_43 = arith.constant 0 : index
    %c0_44 = arith.constant 0 : index
    %c0_45 = arith.constant 0 : index
    %120 = vector.load %arg6[%c0_43, %c0_44, %c0_45] : memref<3x32x96xbf16, #tpu.memory_space<vmem>>, vector<3x32x96xbf16>
    %c0_46 = arith.constant 0 : index
    %c0_47 = arith.constant 0 : index
    %121 = vector.load %arg7[%c0_46, %c0_47] : memref<32x1xf32, #tpu.memory_space<vmem>>, vector<32x1xf32>
    %cst_48 = arith.constant 0.000000e+00 : f32
    %122 = vector.broadcast %cst_48 : f32 to vector<32x64xf32>
    %123 = tpu.iota {dimensions = array<i32: 1>} : vector<1x64xi32>
    %c8_i32_49 = arith.constant 8 : i32
    %c0_i32_50 = arith.constant 0 : i32
    %124 = arith.cmpi eq, %c8_i32_49, %c0_i32_50 : i32
    %c1_i32_51 = arith.constant 1 : i32
    %125 = arith.select %124, %c1_i32_51, %c8_i32_49 : i32
    %126 = vector.broadcast %125 : i32 to vector<1x64xi32>
    %127 = arith.remsi %123, %126 : vector<1x64xi32>
    %c0_i32_52 = arith.constant 0 : i32
    %128 = vector.broadcast %c0_i32_52 : i32 to vector<1x64xi32>
    %129 = arith.cmpi ne, %127, %128 : vector<1x64xi32>
    %c0_i32_53 = arith.constant 0 : i32
    %130 = vector.broadcast %c0_i32_53 : i32 to vector<1x64xi32>
    %131 = arith.cmpi slt, %127, %130 : vector<1x64xi32>
    %c0_i32_54 = arith.constant 0 : i32
    %132 = arith.cmpi slt, %125, %c0_i32_54 : i32
    %133 = vector.broadcast %132 : i1 to vector<1x64xi1>
    %134 = vector.broadcast %133 : vector<1x64xi1> to vector<1x64xi1>
    %135 = arith.xori %131, %134 : vector<1x64xi1>
    %136 = arith.andi %135, %129 : vector<1x64xi1>
    %137 = vector.broadcast %125 : i32 to vector<1x64xi32>
    %138 = arith.addi %127, %137 : vector<1x64xi32>
    %139 = arith.select %136, %138, %127 : vector<1x64xi1>, vector<1x64xi32>
    %cst_55 = arith.constant 0.000000e+00 : f32
    %140 = vector.broadcast %cst_55 : f32 to vector<32x1xf32>
    %c0_i32_56 = arith.constant 0 : i32
    %141 = vector.broadcast %c0_i32_56 : i32 to vector<1x64xi32>
    %142 = arith.cmpi eq, %139, %141 : vector<1x64xi32>
    %143 = vector.extract_strided_slice %119 {offsets = [0, 0], sizes = [32, 63], strides = [1, 1]} : vector<32x64xf32> to vector<32x63xf32>
    %144 = tpu.concatenate %140, %143 in 1 : vector<32x1xf32>, vector<32x63xf32> -> vector<32x64xf32>
    %cst_57 = arith.constant 0.000000e+00 : f32
    %145 = vector.shape_cast %142 : vector<1x64xi1> to vector<1x64xi1>
    %146 = vector.broadcast %145 : vector<1x64xi1> to vector<32x64xi1>
    %147 = vector.broadcast %cst_57 : f32 to vector<32x64xf32>
    %148 = arith.select %146, %147, %144 : vector<32x64xi1>, vector<32x64xf32>
    %c7_i32_58 = arith.constant 7 : i32
    %149 = vector.broadcast %c7_i32_58 : i32 to vector<1x64xi32>
    %150 = arith.cmpi eq, %139, %149 : vector<1x64xi32>
    %151 = vector.extract_strided_slice %119 {offsets = [0, 1], sizes = [32, 63], strides = [1, 1]} : vector<32x64xf32> to vector<32x63xf32>
    %152 = tpu.concatenate %151, %140 in 1 : vector<32x63xf32>, vector<32x1xf32> -> vector<32x64xf32>
    %cst_59 = arith.constant 0.000000e+00 : f32
    %153 = vector.shape_cast %150 : vector<1x64xi1> to vector<1x64xi1>
    %154 = vector.broadcast %153 : vector<1x64xi1> to vector<32x64xi1>
    %155 = vector.broadcast %cst_59 : f32 to vector<32x64xf32>
    %156 = arith.select %154, %155, %152 : vector<32x64xi1>, vector<32x64xf32>
    %157 = tpu.concatenate %148, %119, %156 in 0 : vector<32x64xf32>, vector<32x64xf32>, vector<32x64xf32> -> vector<96x64xf32>
    %cst_60 = arith.constant 0.000000e+00 : f32
    %158 = vector.broadcast %cst_60 : f32 to vector<96x8xf32>
    %159 = tpu.concatenate %158, %157, %158 in 1 : vector<96x8xf32>, vector<96x64xf32>, vector<96x8xf32> -> vector<96x80xf32>
    %160 = arith.truncf %159 : vector<96x80xf32> to vector<96x80xbf16>
    %161 = vector.extract_strided_slice %160 {offsets = [0, 0], sizes = [96, 64], strides = [1, 1]} : vector<96x80xbf16> to vector<96x64xbf16>
    %162 = vector.extract_strided_slice %120 {offsets = [0, 0, 0], sizes = [1, 32, 96], strides = [1, 1, 1]} : vector<3x32x96xbf16> to vector<1x32x96xbf16>
    %163 = vector.shape_cast %162 : vector<1x32x96xbf16> to vector<32x96xbf16>
    %cst_61 = arith.constant dense<0.000000e+00> : vector<32x64xf32>
    %164 = tpu.matmul %163, %161, %cst_61 {dimension_numbers = #tpu.dot_dimension_numbers<[1], [0], [0], [1], [0, 0, 1, 1], [], []>} : vector<32x96xbf16>, vector<96x64xbf16>, vector<32x64xf32> -> vector<32x64xf32>
    %165 = arith.addf %122, %164 : vector<32x64xf32>
    %166 = vector.extract_strided_slice %160 {offsets = [0, 8], sizes = [96, 64], strides = [1, 1]} : vector<96x80xbf16> to vector<96x64xbf16>
    %167 = vector.extract_strided_slice %120 {offsets = [1, 0, 0], sizes = [1, 32, 96], strides = [1, 1, 1]} : vector<3x32x96xbf16> to vector<1x32x96xbf16>
    %168 = vector.shape_cast %167 : vector<1x32x96xbf16> to vector<32x96xbf16>
    %cst_62 = arith.constant dense<0.000000e+00> : vector<32x64xf32>
    %169 = tpu.matmul %168, %166, %cst_62 {dimension_numbers = #tpu.dot_dimension_numbers<[1], [0], [0], [1], [0, 0, 1, 1], [], []>} : vector<32x96xbf16>, vector<96x64xbf16>, vector<32x64xf32> -> vector<32x64xf32>
    %170 = arith.addf %165, %169 : vector<32x64xf32>
    %171 = vector.extract_strided_slice %160 {offsets = [0, 16], sizes = [96, 64], strides = [1, 1]} : vector<96x80xbf16> to vector<96x64xbf16>
    %172 = vector.extract_strided_slice %120 {offsets = [2, 0, 0], sizes = [1, 32, 96], strides = [1, 1, 1]} : vector<3x32x96xbf16> to vector<1x32x96xbf16>
    %173 = vector.shape_cast %172 : vector<1x32x96xbf16> to vector<32x96xbf16>
    %cst_63 = arith.constant dense<0.000000e+00> : vector<32x64xf32>
    %174 = tpu.matmul %173, %171, %cst_63 {dimension_numbers = #tpu.dot_dimension_numbers<[1], [0], [0], [1], [0, 0, 1, 1], [], []>} : vector<32x96xbf16>, vector<96x64xbf16>, vector<32x64xf32> -> vector<32x64xf32>
    %175 = arith.addf %170, %174 : vector<32x64xf32>
    %176 = vector.broadcast %121 : vector<32x1xf32> to vector<32x64xf32>
    %177 = arith.addf %175, %176 : vector<32x64xf32>
    %cst_64 = arith.constant 0.000000e+00 : f32
    %178 = vector.broadcast %cst_64 : f32 to vector<32x64xf32>
    %179 = arith.maximumf %177, %178 : vector<32x64xf32>
    %c0_65 = arith.constant 0 : index
    %c0_66 = arith.constant 0 : index
    %c0_67 = arith.constant 0 : index
    %180 = vector.load %arg9[%c0_65, %c0_66, %c0_67] : memref<1x32x64xf32, #tpu.memory_space<vmem>>, vector<1x32x64xf32>
    %181 = vector.shape_cast %180 : vector<1x32x64xf32> to vector<32x64xf32>
    %182 = vector.shape_cast %179 : vector<32x64xf32> to vector<1x32x64xf32>
    tpu.vector_store %arg9[%c0_65, %c0_66, %c0_67], %182 {strides = array<i32>} : memref<1x32x64xf32, #tpu.memory_space<vmem>>, vector<1x32x64xf32>,
    return
  }
  func.func @transform_0(%arg0: i32) -> (i32, i32, i32) {
    %c0_i32 = arith.constant 0 : i32
    %c0_i32_0 = arith.constant 0 : i32
    %c0_i32_1 = arith.constant 0 : i32
    return %arg0, %c0_i32, %c0_i32_0 : i32, i32, i32
  }
  func.func @transform_1(%arg0: i32) -> (i32, i32, i32) {
    %c0_i32 = arith.constant 0 : i32
    %c0_i32_0 = arith.constant 0 : i32
    %c0_i32_1 = arith.constant 0 : i32
    return %arg0, %c0_i32, %c0_i32_0 : i32, i32, i32
  }
  func.func @transform_2(%arg0: i32) -> (i32, i32, i32) {
    %c0_i32 = arith.constant 0 : i32
    %c0_i32_0 = arith.constant 0 : i32
    %c0_i32_1 = arith.constant 0 : i32
    %c0_i32_2 = arith.constant 0 : i32
    return %c0_i32, %c0_i32_0, %c0_i32_1 : i32, i32, i32
  }
  func.func @transform_3(%arg0: i32) -> (i32, i32, i32) {
    %c0_i32 = arith.constant 0 : i32
    %c0_i32_0 = arith.constant 0 : i32
    %c0_i32_1 = arith.constant 0 : i32
    %c0_i32_2 = arith.constant 0 : i32
    return %c0_i32, %c0_i32_0, %c0_i32_1 : i32, i32, i32
  }
  func.func @transform_4(%arg0: i32) -> (i32, i32) {
    %c0_i32 = arith.constant 0 : i32
    %c0_i32_0 = arith.constant 0 : i32
    %c0_i32_1 = arith.constant 0 : i32
    return %c0_i32, %c0_i32_0 : i32, i32
  }
  func.func @transform_5(%arg0: i32) -> (i32, i32, i32) {
    %c0_i32 = arith.constant 0 : i32
    %c0_i32_0 = arith.constant 0 : i32
    %c0_i32_1 = arith.constant 0 : i32
    %c0_i32_2 = arith.constant 0 : i32
    return %c0_i32, %c0_i32_0, %c0_i32_1 : i32, i32, i32
  }
  func.func @transform_6(%arg0: i32) -> (i32, i32) {
    %c0_i32 = arith.constant 0 : i32
    %c0_i32_0 = arith.constant 0 : i32
    %c0_i32_1 = arith.constant 0 : i32
    return %c0_i32, %c0_i32_0 : i32, i32
  }
  func.func @transform_7(%arg0: i32) -> (i32, i32) {
    %c0_i32 = arith.constant 0 : i32
    %c0_i32_0 = arith.constant 0 : i32
    %c0_i32_1 = arith.constant 0 : i32
    return %c0_i32, %c0_i32_0 : i32, i32
  }
  func.func @transform_8(%arg0: i32) -> (i32, i32, i32) {
    %c0_i32 = arith.constant 0 : i32
    %c0_i32_0 = arith.constant 0 : i32
    %c0_i32_1 = arith.constant 0 : i32
    return %arg0, %c0_i32, %c0_i32_0 : i32, i32, i32
  }
}

module attributes {stable_mosaic.version = 11 : i64} {
  func.func @_conv_block_kernel(%arg0: i32, %arg1: memref<1x32x256xf32, #tpu.memory_space<vmem>>, %arg2: memref<1x32x64xf32, #tpu.memory_space<vmem>>, %arg3: memref<3x32x96xbf16, #tpu.memory_space<vmem>>, %arg4: memref<3x32x96xbf16, #tpu.memory_space<vmem>>, %arg5: memref<32x1xf32, #tpu.memory_space<vmem>>, %arg6: memref<3x32x96xbf16, #tpu.memory_space<vmem>>, %arg7: memref<32x1xf32, #tpu.memory_space<vmem>>, %arg8: memref<64x256xf32, #tpu.memory_space<vmem>>, %arg9: memref<1x32xf32, #tpu.memory_space<vmem>>, %arg10: memref<1x1xf32, #tpu.memory_space<vmem>>, %arg11: memref<1x1x256xf32, #tpu.memory_space<vmem>>) attributes {dimension_semantics = [#tpu.dimension_semantics<parallel>], iteration_bounds = array<i64: 2>, scalar_prefetch = 0 : i64, scratch_operands = 0 : i64, tpu.core_type = #tpu.core_type<tc>, window_params = [{transform_indices = @transform_0, window_bounds = array<i64: 1, 32, 256>}, {transform_indices = @transform_1, window_bounds = array<i64: 1, 32, 64>}, {pipeline_mode = #tpu.pipeline_mode<synchronous>, transform_indices = @transform_2, window_bounds = array<i64: 3, 32, 96>}, {pipeline_mode = #tpu.pipeline_mode<synchronous>, transform_indices = @transform_3, window_bounds = array<i64: 3, 32, 96>}, {pipeline_mode = #tpu.pipeline_mode<synchronous>, transform_indices = @transform_4, window_bounds = array<i64: 32, 1>}, {pipeline_mode = #tpu.pipeline_mode<synchronous>, transform_indices = @transform_5, window_bounds = array<i64: 3, 32, 96>}, {pipeline_mode = #tpu.pipeline_mode<synchronous>, transform_indices = @transform_6, window_bounds = array<i64: 32, 1>}, {pipeline_mode = #tpu.pipeline_mode<synchronous>, transform_indices = @transform_7, window_bounds = array<i64: 64, 256>}, {pipeline_mode = #tpu.pipeline_mode<synchronous>, transform_indices = @transform_8, window_bounds = array<i64: 1, 32>}, {pipeline_mode = #tpu.pipeline_mode<synchronous>, transform_indices = @transform_9, window_bounds = array<i64: 1, 1>}, {transform_indices = @transform_10, window_bounds = array<i64: 1, 1, 256>}]} {
    %c0 = arith.constant 0 : index
    %c0_0 = arith.constant 0 : index
    %c0_1 = arith.constant 0 : index
    %0 = vector.load %arg1[%c0, %c0_0, %c0_1] : memref<1x32x256xf32, #tpu.memory_space<vmem>>, vector<1x32x256xf32>
    %1 = vector.shape_cast %0 : vector<1x32x256xf32> to vector<32x256xf32>
    %c0_2 = arith.constant 0 : index
    %c0_3 = arith.constant 0 : index
    %c0_4 = arith.constant 0 : index
    %2 = vector.load %arg2[%c0_2, %c0_3, %c0_4] : memref<1x32x64xf32, #tpu.memory_space<vmem>>, vector<1x32x64xf32>
    %3 = vector.shape_cast %2 : vector<1x32x64xf32> to vector<32x64xf32>
    %c0_5 = arith.constant 0 : index
    %c0_6 = arith.constant 0 : index
    %4 = vector.load %arg8[%c0_5, %c0_6] : memref<64x256xf32, #tpu.memory_space<vmem>>, vector<64x256xf32>
    %cst = arith.constant dense<0.000000e+00> : vector<32x256xf32>
    %5 = tpu.matmul %3, %4, %cst {dimension_numbers = #tpu.dot_dimension_numbers<[1], [0], [0], [1], [0, 0, 1, 1], [], []>} : vector<32x64xf32>, vector<64x256xf32>, vector<32x256xf32> -> vector<32x256xf32>
    %c0_7 = arith.constant 0 : index
    %c0_8 = arith.constant 0 : index
    %c0_9 = arith.constant 0 : index
    %6 = vector.load %arg3[%c0_7, %c0_8, %c0_9] : memref<3x32x96xbf16, #tpu.memory_space<vmem>>, vector<3x32x96xbf16>
    %c0_10 = arith.constant 0 : index
    %c0_11 = arith.constant 0 : index
    %c0_12 = arith.constant 0 : index
    %7 = vector.load %arg4[%c0_10, %c0_11, %c0_12] : memref<3x32x96xbf16, #tpu.memory_space<vmem>>, vector<3x32x96xbf16>
    %c0_13 = arith.constant 0 : index
    %c0_14 = arith.constant 0 : index
    %8 = vector.load %arg5[%c0_13, %c0_14] : memref<32x1xf32, #tpu.memory_space<vmem>>, vector<32x1xf32>
    %cst_15 = arith.constant 0.000000e+00 : f32
    %9 = vector.broadcast %cst_15 : f32 to vector<32x256xf32>
    %10 = tpu.iota {dimensions = array<i32: 1>} : vector<1x256xi32>
    %c16_i32 = arith.constant 16 : i32
    %c0_i32 = arith.constant 0 : i32
    %11 = arith.cmpi eq, %c16_i32, %c0_i32 : i32
    %c1_i32 = arith.constant 1 : i32
    %12 = arith.select %11, %c1_i32, %c16_i32 : i32
    %13 = vector.broadcast %12 : i32 to vector<1x256xi32>
    %14 = arith.remsi %10, %13 : vector<1x256xi32>
    %c0_i32_16 = arith.constant 0 : i32
    %15 = vector.broadcast %c0_i32_16 : i32 to vector<1x256xi32>
    %16 = arith.cmpi ne, %14, %15 : vector<1x256xi32>
    %c0_i32_17 = arith.constant 0 : i32
    %17 = vector.broadcast %c0_i32_17 : i32 to vector<1x256xi32>
    %18 = arith.cmpi slt, %14, %17 : vector<1x256xi32>
    %c0_i32_18 = arith.constant 0 : i32
    %19 = arith.cmpi slt, %12, %c0_i32_18 : i32
    %20 = vector.broadcast %19 : i1 to vector<1x256xi1>
    %21 = vector.broadcast %20 : vector<1x256xi1> to vector<1x256xi1>
    %22 = arith.xori %18, %21 : vector<1x256xi1>
    %23 = arith.andi %22, %16 : vector<1x256xi1>
    %24 = vector.broadcast %12 : i32 to vector<1x256xi32>
    %25 = arith.addi %14, %24 : vector<1x256xi32>
    %26 = arith.select %23, %25, %14 : vector<1x256xi1>, vector<1x256xi32>
    %cst_19 = arith.constant 0.000000e+00 : f32
    %27 = vector.broadcast %cst_19 : f32 to vector<32x1xf32>
    %c0_i32_20 = arith.constant 0 : i32
    %28 = vector.broadcast %c0_i32_20 : i32 to vector<1x256xi32>
    %29 = arith.cmpi eq, %26, %28 : vector<1x256xi32>
    %30 = vector.extract_strided_slice %1 {offsets = [0, 0], sizes = [32, 255], strides = [1, 1]} : vector<32x256xf32> to vector<32x255xf32>
    %31 = tpu.concatenate %27, %30 in 1 : vector<32x1xf32>, vector<32x255xf32> -> vector<32x256xf32>
    %cst_21 = arith.constant 0.000000e+00 : f32
    %32 = vector.shape_cast %29 : vector<1x256xi1> to vector<1x256xi1>
    %33 = vector.broadcast %32 : vector<1x256xi1> to vector<32x256xi1>
    %34 = vector.broadcast %cst_21 : f32 to vector<32x256xf32>
    %35 = arith.select %33, %34, %31 : vector<32x256xi1>, vector<32x256xf32>
    %c15_i32 = arith.constant 15 : i32
    %36 = vector.broadcast %c15_i32 : i32 to vector<1x256xi32>
    %37 = arith.cmpi eq, %26, %36 : vector<1x256xi32>
    %38 = vector.extract_strided_slice %1 {offsets = [0, 1], sizes = [32, 255], strides = [1, 1]} : vector<32x256xf32> to vector<32x255xf32>
    %39 = tpu.concatenate %38, %27 in 1 : vector<32x255xf32>, vector<32x1xf32> -> vector<32x256xf32>
    %cst_22 = arith.constant 0.000000e+00 : f32
    %40 = vector.shape_cast %37 : vector<1x256xi1> to vector<1x256xi1>
    %41 = vector.broadcast %40 : vector<1x256xi1> to vector<32x256xi1>
    %42 = vector.broadcast %cst_22 : f32 to vector<32x256xf32>
    %43 = arith.select %41, %42, %39 : vector<32x256xi1>, vector<32x256xf32>
    %44 = tpu.concatenate %35, %1, %43 in 0 : vector<32x256xf32>, vector<32x256xf32>, vector<32x256xf32> -> vector<96x256xf32>
    %cst_23 = arith.constant 0.000000e+00 : f32
    %45 = vector.broadcast %cst_23 : f32 to vector<96x16xf32>
    %46 = tpu.concatenate %45, %44, %45 in 1 : vector<96x16xf32>, vector<96x256xf32>, vector<96x16xf32> -> vector<96x288xf32>
    %47 = arith.truncf %46 : vector<96x288xf32> to vector<96x288xbf16>
    %48 = vector.extract_strided_slice %47 {offsets = [0, 0], sizes = [96, 256], strides = [1, 1]} : vector<96x288xbf16> to vector<96x256xbf16>
    %49 = vector.extract_strided_slice %6 {offsets = [0, 0, 0], sizes = [1, 32, 96], strides = [1, 1, 1]} : vector<3x32x96xbf16> to vector<1x32x96xbf16>
    %50 = vector.shape_cast %49 : vector<1x32x96xbf16> to vector<32x96xbf16>
    %cst_24 = arith.constant dense<0.000000e+00> : vector<32x256xf32>
    %51 = tpu.matmul %50, %48, %cst_24 {dimension_numbers = #tpu.dot_dimension_numbers<[1], [0], [0], [1], [0, 0, 1, 1], [], []>} : vector<32x96xbf16>, vector<96x256xbf16>, vector<32x256xf32> -> vector<32x256xf32>
    %52 = arith.addf %9, %51 : vector<32x256xf32>
    %53 = vector.extract_strided_slice %47 {offsets = [0, 16], sizes = [96, 256], strides = [1, 1]} : vector<96x288xbf16> to vector<96x256xbf16>
    %54 = vector.extract_strided_slice %6 {offsets = [1, 0, 0], sizes = [1, 32, 96], strides = [1, 1, 1]} : vector<3x32x96xbf16> to vector<1x32x96xbf16>
    %55 = vector.shape_cast %54 : vector<1x32x96xbf16> to vector<32x96xbf16>
    %cst_25 = arith.constant dense<0.000000e+00> : vector<32x256xf32>
    %56 = tpu.matmul %55, %53, %cst_25 {dimension_numbers = #tpu.dot_dimension_numbers<[1], [0], [0], [1], [0, 0, 1, 1], [], []>} : vector<32x96xbf16>, vector<96x256xbf16>, vector<32x256xf32> -> vector<32x256xf32>
    %57 = arith.addf %52, %56 : vector<32x256xf32>
    %58 = vector.extract_strided_slice %47 {offsets = [0, 32], sizes = [96, 256], strides = [1, 1]} : vector<96x288xbf16> to vector<96x256xbf16>
    %59 = vector.extract_strided_slice %6 {offsets = [2, 0, 0], sizes = [1, 32, 96], strides = [1, 1, 1]} : vector<3x32x96xbf16> to vector<1x32x96xbf16>
    %60 = vector.shape_cast %59 : vector<1x32x96xbf16> to vector<32x96xbf16>
    %cst_26 = arith.constant dense<0.000000e+00> : vector<32x256xf32>
    %61 = tpu.matmul %60, %58, %cst_26 {dimension_numbers = #tpu.dot_dimension_numbers<[1], [0], [0], [1], [0, 0, 1, 1], [], []>} : vector<32x96xbf16>, vector<96x256xbf16>, vector<32x256xf32> -> vector<32x256xf32>
    %62 = arith.addf %57, %61 : vector<32x256xf32>
    %63 = tpu.iota {dimensions = array<i32: 1>} : vector<1x256xi32>
    %c16_i32_27 = arith.constant 16 : i32
    %c0_i32_28 = arith.constant 0 : i32
    %64 = arith.cmpi eq, %c16_i32_27, %c0_i32_28 : i32
    %c1_i32_29 = arith.constant 1 : i32
    %65 = arith.select %64, %c1_i32_29, %c16_i32_27 : i32
    %66 = vector.broadcast %65 : i32 to vector<1x256xi32>
    %67 = arith.remsi %63, %66 : vector<1x256xi32>
    %c0_i32_30 = arith.constant 0 : i32
    %68 = vector.broadcast %c0_i32_30 : i32 to vector<1x256xi32>
    %69 = arith.cmpi ne, %67, %68 : vector<1x256xi32>
    %c0_i32_31 = arith.constant 0 : i32
    %70 = vector.broadcast %c0_i32_31 : i32 to vector<1x256xi32>
    %71 = arith.cmpi slt, %67, %70 : vector<1x256xi32>
    %c0_i32_32 = arith.constant 0 : i32
    %72 = arith.cmpi slt, %65, %c0_i32_32 : i32
    %73 = vector.broadcast %72 : i1 to vector<1x256xi1>
    %74 = vector.broadcast %73 : vector<1x256xi1> to vector<1x256xi1>
    %75 = arith.xori %71, %74 : vector<1x256xi1>
    %76 = arith.andi %75, %69 : vector<1x256xi1>
    %77 = vector.broadcast %65 : i32 to vector<1x256xi32>
    %78 = arith.addi %67, %77 : vector<1x256xi32>
    %79 = arith.select %76, %78, %67 : vector<1x256xi1>, vector<1x256xi32>
    %cst_33 = arith.constant 0.000000e+00 : f32
    %80 = vector.broadcast %cst_33 : f32 to vector<32x1xf32>
    %c0_i32_34 = arith.constant 0 : i32
    %81 = vector.broadcast %c0_i32_34 : i32 to vector<1x256xi32>
    %82 = arith.cmpi eq, %79, %81 : vector<1x256xi32>
    %83 = vector.extract_strided_slice %5 {offsets = [0, 0], sizes = [32, 255], strides = [1, 1]} : vector<32x256xf32> to vector<32x255xf32>
    %84 = tpu.concatenate %80, %83 in 1 : vector<32x1xf32>, vector<32x255xf32> -> vector<32x256xf32>
    %cst_35 = arith.constant 0.000000e+00 : f32
    %85 = vector.shape_cast %82 : vector<1x256xi1> to vector<1x256xi1>
    %86 = vector.broadcast %85 : vector<1x256xi1> to vector<32x256xi1>
    %87 = vector.broadcast %cst_35 : f32 to vector<32x256xf32>
    %88 = arith.select %86, %87, %84 : vector<32x256xi1>, vector<32x256xf32>
    %c15_i32_36 = arith.constant 15 : i32
    %89 = vector.broadcast %c15_i32_36 : i32 to vector<1x256xi32>
    %90 = arith.cmpi eq, %79, %89 : vector<1x256xi32>
    %91 = vector.extract_strided_slice %5 {offsets = [0, 1], sizes = [32, 255], strides = [1, 1]} : vector<32x256xf32> to vector<32x255xf32>
    %92 = tpu.concatenate %91, %80 in 1 : vector<32x255xf32>, vector<32x1xf32> -> vector<32x256xf32>
    %cst_37 = arith.constant 0.000000e+00 : f32
    %93 = vector.shape_cast %90 : vector<1x256xi1> to vector<1x256xi1>
    %94 = vector.broadcast %93 : vector<1x256xi1> to vector<32x256xi1>
    %95 = vector.broadcast %cst_37 : f32 to vector<32x256xf32>
    %96 = arith.select %94, %95, %92 : vector<32x256xi1>, vector<32x256xf32>
    %97 = tpu.concatenate %88, %5, %96 in 0 : vector<32x256xf32>, vector<32x256xf32>, vector<32x256xf32> -> vector<96x256xf32>
    %cst_38 = arith.constant 0.000000e+00 : f32
    %98 = vector.broadcast %cst_38 : f32 to vector<96x16xf32>
    %99 = tpu.concatenate %98, %97, %98 in 1 : vector<96x16xf32>, vector<96x256xf32>, vector<96x16xf32> -> vector<96x288xf32>
    %100 = arith.truncf %99 : vector<96x288xf32> to vector<96x288xbf16>
    %101 = vector.extract_strided_slice %100 {offsets = [0, 0], sizes = [96, 256], strides = [1, 1]} : vector<96x288xbf16> to vector<96x256xbf16>
    %102 = vector.extract_strided_slice %7 {offsets = [0, 0, 0], sizes = [1, 32, 96], strides = [1, 1, 1]} : vector<3x32x96xbf16> to vector<1x32x96xbf16>
    %103 = vector.shape_cast %102 : vector<1x32x96xbf16> to vector<32x96xbf16>
    %cst_39 = arith.constant dense<0.000000e+00> : vector<32x256xf32>
    %104 = tpu.matmul %103, %101, %cst_39 {dimension_numbers = #tpu.dot_dimension_numbers<[1], [0], [0], [1], [0, 0, 1, 1], [], []>} : vector<32x96xbf16>, vector<96x256xbf16>, vector<32x256xf32> -> vector<32x256xf32>
    %105 = arith.addf %62, %104 : vector<32x256xf32>
    %106 = vector.extract_strided_slice %100 {offsets = [0, 16], sizes = [96, 256], strides = [1, 1]} : vector<96x288xbf16> to vector<96x256xbf16>
    %107 = vector.extract_strided_slice %7 {offsets = [1, 0, 0], sizes = [1, 32, 96], strides = [1, 1, 1]} : vector<3x32x96xbf16> to vector<1x32x96xbf16>
    %108 = vector.shape_cast %107 : vector<1x32x96xbf16> to vector<32x96xbf16>
    %cst_40 = arith.constant dense<0.000000e+00> : vector<32x256xf32>
    %109 = tpu.matmul %108, %106, %cst_40 {dimension_numbers = #tpu.dot_dimension_numbers<[1], [0], [0], [1], [0, 0, 1, 1], [], []>} : vector<32x96xbf16>, vector<96x256xbf16>, vector<32x256xf32> -> vector<32x256xf32>
    %110 = arith.addf %105, %109 : vector<32x256xf32>
    %111 = vector.extract_strided_slice %100 {offsets = [0, 32], sizes = [96, 256], strides = [1, 1]} : vector<96x288xbf16> to vector<96x256xbf16>
    %112 = vector.extract_strided_slice %7 {offsets = [2, 0, 0], sizes = [1, 32, 96], strides = [1, 1, 1]} : vector<3x32x96xbf16> to vector<1x32x96xbf16>
    %113 = vector.shape_cast %112 : vector<1x32x96xbf16> to vector<32x96xbf16>
    %cst_41 = arith.constant dense<0.000000e+00> : vector<32x256xf32>
    %114 = tpu.matmul %113, %111, %cst_41 {dimension_numbers = #tpu.dot_dimension_numbers<[1], [0], [0], [1], [0, 0, 1, 1], [], []>} : vector<32x96xbf16>, vector<96x256xbf16>, vector<32x256xf32> -> vector<32x256xf32>
    %115 = arith.addf %110, %114 : vector<32x256xf32>
    %116 = vector.broadcast %8 : vector<32x1xf32> to vector<32x256xf32>
    %117 = arith.addf %115, %116 : vector<32x256xf32>
    %cst_42 = arith.constant 0.000000e+00 : f32
    %118 = vector.broadcast %cst_42 : f32 to vector<32x256xf32>
    %119 = arith.maximumf %117, %118 : vector<32x256xf32>
    %c0_43 = arith.constant 0 : index
    %c0_44 = arith.constant 0 : index
    %c0_45 = arith.constant 0 : index
    %120 = vector.load %arg6[%c0_43, %c0_44, %c0_45] : memref<3x32x96xbf16, #tpu.memory_space<vmem>>, vector<3x32x96xbf16>
    %c0_46 = arith.constant 0 : index
    %c0_47 = arith.constant 0 : index
    %121 = vector.load %arg7[%c0_46, %c0_47] : memref<32x1xf32, #tpu.memory_space<vmem>>, vector<32x1xf32>
    %cst_48 = arith.constant 0.000000e+00 : f32
    %122 = vector.broadcast %cst_48 : f32 to vector<32x256xf32>
    %123 = tpu.iota {dimensions = array<i32: 1>} : vector<1x256xi32>
    %c16_i32_49 = arith.constant 16 : i32
    %c0_i32_50 = arith.constant 0 : i32
    %124 = arith.cmpi eq, %c16_i32_49, %c0_i32_50 : i32
    %c1_i32_51 = arith.constant 1 : i32
    %125 = arith.select %124, %c1_i32_51, %c16_i32_49 : i32
    %126 = vector.broadcast %125 : i32 to vector<1x256xi32>
    %127 = arith.remsi %123, %126 : vector<1x256xi32>
    %c0_i32_52 = arith.constant 0 : i32
    %128 = vector.broadcast %c0_i32_52 : i32 to vector<1x256xi32>
    %129 = arith.cmpi ne, %127, %128 : vector<1x256xi32>
    %c0_i32_53 = arith.constant 0 : i32
    %130 = vector.broadcast %c0_i32_53 : i32 to vector<1x256xi32>
    %131 = arith.cmpi slt, %127, %130 : vector<1x256xi32>
    %c0_i32_54 = arith.constant 0 : i32
    %132 = arith.cmpi slt, %125, %c0_i32_54 : i32
    %133 = vector.broadcast %132 : i1 to vector<1x256xi1>
    %134 = vector.broadcast %133 : vector<1x256xi1> to vector<1x256xi1>
    %135 = arith.xori %131, %134 : vector<1x256xi1>
    %136 = arith.andi %135, %129 : vector<1x256xi1>
    %137 = vector.broadcast %125 : i32 to vector<1x256xi32>
    %138 = arith.addi %127, %137 : vector<1x256xi32>
    %139 = arith.select %136, %138, %127 : vector<1x256xi1>, vector<1x256xi32>
    %cst_55 = arith.constant 0.000000e+00 : f32
    %140 = vector.broadcast %cst_55 : f32 to vector<32x1xf32>
    %c0_i32_56 = arith.constant 0 : i32
    %141 = vector.broadcast %c0_i32_56 : i32 to vector<1x256xi32>
    %142 = arith.cmpi eq, %139, %141 : vector<1x256xi32>
    %143 = vector.extract_strided_slice %119 {offsets = [0, 0], sizes = [32, 255], strides = [1, 1]} : vector<32x256xf32> to vector<32x255xf32>
    %144 = tpu.concatenate %140, %143 in 1 : vector<32x1xf32>, vector<32x255xf32> -> vector<32x256xf32>
    %cst_57 = arith.constant 0.000000e+00 : f32
    %145 = vector.shape_cast %142 : vector<1x256xi1> to vector<1x256xi1>
    %146 = vector.broadcast %145 : vector<1x256xi1> to vector<32x256xi1>
    %147 = vector.broadcast %cst_57 : f32 to vector<32x256xf32>
    %148 = arith.select %146, %147, %144 : vector<32x256xi1>, vector<32x256xf32>
    %c15_i32_58 = arith.constant 15 : i32
    %149 = vector.broadcast %c15_i32_58 : i32 to vector<1x256xi32>
    %150 = arith.cmpi eq, %139, %149 : vector<1x256xi32>
    %151 = vector.extract_strided_slice %119 {offsets = [0, 1], sizes = [32, 255], strides = [1, 1]} : vector<32x256xf32> to vector<32x255xf32>
    %152 = tpu.concatenate %151, %140 in 1 : vector<32x255xf32>, vector<32x1xf32> -> vector<32x256xf32>
    %cst_59 = arith.constant 0.000000e+00 : f32
    %153 = vector.shape_cast %150 : vector<1x256xi1> to vector<1x256xi1>
    %154 = vector.broadcast %153 : vector<1x256xi1> to vector<32x256xi1>
    %155 = vector.broadcast %cst_59 : f32 to vector<32x256xf32>
    %156 = arith.select %154, %155, %152 : vector<32x256xi1>, vector<32x256xf32>
    %157 = tpu.concatenate %148, %119, %156 in 0 : vector<32x256xf32>, vector<32x256xf32>, vector<32x256xf32> -> vector<96x256xf32>
    %cst_60 = arith.constant 0.000000e+00 : f32
    %158 = vector.broadcast %cst_60 : f32 to vector<96x16xf32>
    %159 = tpu.concatenate %158, %157, %158 in 1 : vector<96x16xf32>, vector<96x256xf32>, vector<96x16xf32> -> vector<96x288xf32>
    %160 = arith.truncf %159 : vector<96x288xf32> to vector<96x288xbf16>
    %161 = vector.extract_strided_slice %160 {offsets = [0, 0], sizes = [96, 256], strides = [1, 1]} : vector<96x288xbf16> to vector<96x256xbf16>
    %162 = vector.extract_strided_slice %120 {offsets = [0, 0, 0], sizes = [1, 32, 96], strides = [1, 1, 1]} : vector<3x32x96xbf16> to vector<1x32x96xbf16>
    %163 = vector.shape_cast %162 : vector<1x32x96xbf16> to vector<32x96xbf16>
    %cst_61 = arith.constant dense<0.000000e+00> : vector<32x256xf32>
    %164 = tpu.matmul %163, %161, %cst_61 {dimension_numbers = #tpu.dot_dimension_numbers<[1], [0], [0], [1], [0, 0, 1, 1], [], []>} : vector<32x96xbf16>, vector<96x256xbf16>, vector<32x256xf32> -> vector<32x256xf32>
    %165 = arith.addf %122, %164 : vector<32x256xf32>
    %166 = vector.extract_strided_slice %160 {offsets = [0, 16], sizes = [96, 256], strides = [1, 1]} : vector<96x288xbf16> to vector<96x256xbf16>
    %167 = vector.extract_strided_slice %120 {offsets = [1, 0, 0], sizes = [1, 32, 96], strides = [1, 1, 1]} : vector<3x32x96xbf16> to vector<1x32x96xbf16>
    %168 = vector.shape_cast %167 : vector<1x32x96xbf16> to vector<32x96xbf16>
    %cst_62 = arith.constant dense<0.000000e+00> : vector<32x256xf32>
    %169 = tpu.matmul %168, %166, %cst_62 {dimension_numbers = #tpu.dot_dimension_numbers<[1], [0], [0], [1], [0, 0, 1, 1], [], []>} : vector<32x96xbf16>, vector<96x256xbf16>, vector<32x256xf32> -> vector<32x256xf32>
    %170 = arith.addf %165, %169 : vector<32x256xf32>
    %171 = vector.extract_strided_slice %160 {offsets = [0, 32], sizes = [96, 256], strides = [1, 1]} : vector<96x288xbf16> to vector<96x256xbf16>
    %172 = vector.extract_strided_slice %120 {offsets = [2, 0, 0], sizes = [1, 32, 96], strides = [1, 1, 1]} : vector<3x32x96xbf16> to vector<1x32x96xbf16>
    %173 = vector.shape_cast %172 : vector<1x32x96xbf16> to vector<32x96xbf16>
    %cst_63 = arith.constant dense<0.000000e+00> : vector<32x256xf32>
    %174 = tpu.matmul %173, %171, %cst_63 {dimension_numbers = #tpu.dot_dimension_numbers<[1], [0], [0], [1], [0, 0, 1, 1], [], []>} : vector<32x96xbf16>, vector<96x256xbf16>, vector<32x256xf32> -> vector<32x256xf32>
    %175 = arith.addf %170, %174 : vector<32x256xf32>
    %176 = vector.broadcast %121 : vector<32x1xf32> to vector<32x256xf32>
    %177 = arith.addf %175, %176 : vector<32x256xf32>
    %cst_64 = arith.constant 0.000000e+00 : f32
    %178 = vector.broadcast %cst_64 : f32 to vector<32x256xf32>
    %179 = arith.maximumf %177, %178 : vector<32x256xf32>
    %c0_65 = arith.constant 0 : index
    %c0_66 = arith.constant 0 : index
    %180 = vector.load %arg9[%c0_65, %c0_66] : memref<1x32xf32, #tpu.memory_space<vmem>>, vector<1x32xf32>
    %cst_67 = arith.constant dense<0.000000e+00> : vector<1x256xf32>
    %181 = tpu.matmul %180, %179, %cst_67 {dimension_numbers = #tpu.dot_dimension_numbers<[1], [0], [0], [1], [0, 0, 1, 1], [], []>} : vector<1x32xf32>, vector<32x256xf32>, vector<1x256xf32> -> vector<1x256xf32>
    %c0_68 = arith.constant 0 : index
    %c0_69 = arith.constant 0 : index
    %182 = vector.load %arg10[%c0_68, %c0_69] : memref<1x1xf32, #tpu.memory_space<vmem>>, vector<1x1xf32>
    %183 = vector.broadcast %182 : vector<1x1xf32> to vector<1x256xf32>
    %184 = arith.addf %181, %183 : vector<1x256xf32>
    %c0_70 = arith.constant 0 : index
    %c0_71 = arith.constant 0 : index
    %c0_72 = arith.constant 0 : index
    %185 = vector.load %arg11[%c0_70, %c0_71, %c0_72] : memref<1x1x256xf32, #tpu.memory_space<vmem>>, vector<1x1x256xf32>
    %186 = vector.shape_cast %185 : vector<1x1x256xf32> to vector<1x256xf32>
    %187 = vector.shape_cast %184 : vector<1x256xf32> to vector<1x1x256xf32>
    tpu.vector_store %arg11[%c0_70, %c0_71, %c0_72], %187 {strides = array<i32>} : memref<1x1x256xf32, #tpu.memory_space<vmem>>, vector<1x1x256xf32>,
    return
  }
  func.func @transform_0(%arg0: i32) -> (i32, i32, i32) {
    %c0_i32 = arith.constant 0 : i32
    %c0_i32_0 = arith.constant 0 : i32
    %c0_i32_1 = arith.constant 0 : i32
    return %arg0, %c0_i32, %c0_i32_0 : i32, i32, i32
  }
  func.func @transform_1(%arg0: i32) -> (i32, i32, i32) {
    %c0_i32 = arith.constant 0 : i32
    %c0_i32_0 = arith.constant 0 : i32
    %c0_i32_1 = arith.constant 0 : i32
    return %arg0, %c0_i32, %c0_i32_0 : i32, i32, i32
  }
  func.func @transform_2(%arg0: i32) -> (i32, i32, i32) {
    %c0_i32 = arith.constant 0 : i32
    %c0_i32_0 = arith.constant 0 : i32
    %c0_i32_1 = arith.constant 0 : i32
    %c0_i32_2 = arith.constant 0 : i32
    return %c0_i32, %c0_i32_0, %c0_i32_1 : i32, i32, i32
  }
  func.func @transform_3(%arg0: i32) -> (i32, i32, i32) {
    %c0_i32 = arith.constant 0 : i32
    %c0_i32_0 = arith.constant 0 : i32
    %c0_i32_1 = arith.constant 0 : i32
    %c0_i32_2 = arith.constant 0 : i32
    return %c0_i32, %c0_i32_0, %c0_i32_1 : i32, i32, i32
  }
  func.func @transform_4(%arg0: i32) -> (i32, i32) {
    %c0_i32 = arith.constant 0 : i32
    %c0_i32_0 = arith.constant 0 : i32
    %c0_i32_1 = arith.constant 0 : i32
    return %c0_i32, %c0_i32_0 : i32, i32
  }
  func.func @transform_5(%arg0: i32) -> (i32, i32, i32) {
    %c0_i32 = arith.constant 0 : i32
    %c0_i32_0 = arith.constant 0 : i32
    %c0_i32_1 = arith.constant 0 : i32
    %c0_i32_2 = arith.constant 0 : i32
    return %c0_i32, %c0_i32_0, %c0_i32_1 : i32, i32, i32
  }
  func.func @transform_6(%arg0: i32) -> (i32, i32) {
    %c0_i32 = arith.constant 0 : i32
    %c0_i32_0 = arith.constant 0 : i32
    %c0_i32_1 = arith.constant 0 : i32
    return %c0_i32, %c0_i32_0 : i32, i32
  }
  func.func @transform_7(%arg0: i32) -> (i32, i32) {
    %c0_i32 = arith.constant 0 : i32
    %c0_i32_0 = arith.constant 0 : i32
    %c0_i32_1 = arith.constant 0 : i32
    return %c0_i32, %c0_i32_0 : i32, i32
  }
  func.func @transform_8(%arg0: i32) -> (i32, i32) {
    %c0_i32 = arith.constant 0 : i32
    %c0_i32_0 = arith.constant 0 : i32
    %c0_i32_1 = arith.constant 0 : i32
    return %c0_i32, %c0_i32_0 : i32, i32
  }
  func.func @transform_9(%arg0: i32) -> (i32, i32) {
    %c0_i32 = arith.constant 0 : i32
    %c0_i32_0 = arith.constant 0 : i32
    %c0_i32_1 = arith.constant 0 : i32
    return %c0_i32, %c0_i32_0 : i32, i32
  }
  func.func @transform_10(%arg0: i32) -> (i32, i32, i32) {
    %c0_i32 = arith.constant 0 : i32
    %c0_i32_0 = arith.constant 0 : i32
    %c0_i32_1 = arith.constant 0 : i32
    return %arg0, %c0_i32, %c0_i32_0 : i32, i32, i32
  }
}

</mosaic_0001>

<llo_original>
// kernel: _lambda_.7
$region0: #{_lambda_.7}
  #allocation0 [shape = 'u32[]', space=smem, size = 0x4, offset = 0x4, fixed_abs, tag = 'smem constant byte address 0x4 - core index']
  #allocation1 [shape = 'u32[144,128]{1,0:T(1,128)}', space=vmem, size = 0x12000, scoped, tag = 'internal scratch']
  %s0 = inlined_call_operand.vmem [shape: f32[2,64,16], index: 0, kind: input, shape index: {}]
  %s1 = inlined_call_operand.vmem [shape: bf16[3,64,192], index: 1, kind: input, shape index: {}]
  %s2 = inlined_call_operand.vmem [shape: f32[64,1], index: 2, kind: input, shape index: {}]
  %s3 = inlined_call_operand.vmem [shape: bf16[3,64,192], index: 3, kind: input, shape index: {}]
  %s4 = inlined_call_operand.vmem [shape: f32[64,1], index: 4, kind: input, shape index: {}]
  %s5 = inlined_call_operand.vmem [shape: f32[2,64,16], index: 5, kind: output, shape index: {}]
  %s6 = sld [smem:[#allocation0]]
  $region53: #{_lambda_.7} parent=0
    _
  %s8 = ssub.s32 1, %s6
  %s9 = scalar_select 0, %s8, %s6
  loop: start=0, step=1, limit=4
  $region2: #{_lambda_.7} parent=0 // loop_pre_header
    _
  $region3: #{_lambda_.7} parent=0 // loop_header
    %s11 = sphi 0, %s15
    %p12 = scmp.ge.s32.totalorder %s11, 4
    %s21 = sphi 0, %s23
    %s24 = sphi 0, %s21
    %s25 = sphi 0, %s24
    %s41 = sphi 0, %s25
    %s45 = sphi 0, %s45
    %s47 = sphi 0, %s45
    %s48 = sphi 0, %s47
    %s62 = sphi 0, %s48
    %s66 = sphi 0, %s66
    %s68 = sphi 0, %s66
    %s69 = sphi 0, %s68
    %s83 = sphi 0, %s69
    %s87 = sphi 0, %s87
    %s89 = sphi 0, %s87
    %s90 = sphi 0, %s89
    %s104 = sphi 0, %s90
    %s108 = sphi 0, %s108
    %s110 = sphi 0, %s108
    %s111 = sphi 0, %s110
    %s125 = sphi 0, %s111
    %s131 = sphi 0, %s133
    %s134 = sphi 0, %s131
    %s135 = sphi 0, %s134
    %s151 = sphi 0, %s135
  $region4: #{_lambda_.7} parent=0 // loop_header_branch
    %14 = sbr.rel (%p12) target = $region8
  $region5: #{_lambda_.7} parent=0 // loop_body
    %s16 = ssub.s32 %s11, 1
    %s17 = ssub.s32 %s11, 2
    %s18 = sadd.s32 %s11, 1
    %s19 = ssub.s32 %s11, %s18
    %p20 = scmp.eq.s32.totalorder %s19, 0
    %s22 = sadd.s32 %s21, 1
    %s23 = scalar_select %p20, %s21, %s22
    %p26 = pneg %p20
    %p27 = scmp.eq.s32.totalorder %s11, 1
    %p28 = por %p26, %p27
    %p29 = scmp.ne.s32.totalorder %s21, %s24
    %p30 = scmp.eq.s32.totalorder %s11, 0
    %p31 = por %p29, %p30
    %p32 = scmp.ne.s32.totalorder %s21, %s24
    %p33 = scmp.eq.s32.totalorder %s16, 1
    %p34 = por %p32, %p33
    %p35 = scmp.ne.s32.totalorder %s24, %s25
    %p36 = scmp.eq.s32.totalorder %s16, 0
    %p37 = por %p35, %p36
    %p38 = scmp.ne.s32.totalorder %s24, %s25
    %p39 = scmp.eq.s32.totalorder %s17, 1
    %p40 = por %p38, %p39
    %p42 = scmp.ne.s32.totalorder %s25, %s41
    %p43 = scmp.eq.s32.totalorder %s17, 0
    %p44 = por %p42, %p43
    %s46 = sadd.s32 %s45, 1
    %p49 = scmp.eq.s32.totalorder %s11, 1
    %p50 = scmp.ne.s32.totalorder %s45, %s47
    %p51 = scmp.eq.s32.totalorder %s11, 0
    %p52 = por %p50, %p51
    %p53 = scmp.ne.s32.totalorder %s45, %s47
    %p54 = scmp.eq.s32.totalorder %s16, 1
    %p55 = por %p53, %p54
    %p56 = scmp.ne.s32.totalorder %s47, %s48
    %p57 = scmp.eq.s32.totalorder %s16, 0
    %p58 = por %p56, %p57
    %p59 = scmp.ne.s32.totalorder %s47, %s48
    %p60 = scmp.eq.s32.totalorder %s17, 1
    %p61 = por %p59, %p60
    %p63 = scmp.ne.s32.totalorder %s48, %s62
    %p64 = scmp.eq.s32.totalorder %s17, 0
    %p65 = por %p63, %p64
    %s67 = sadd.s32 %s66, 1
    %p70 = scmp.eq.s32.totalorder %s11, 1
    %p71 = scmp.ne.s32.totalorder %s66, %s68
    %p72 = scmp.eq.s32.totalorder %s11, 0
    %p73 = por %p71, %p72
    %p74 = scmp.ne.s32.totalorder %s66, %s68
    %p75 = scmp.eq.s32.totalorder %s16, 1
    %p76 = por %p74, %p75
    %p77 = scmp.ne.s32.totalorder %s68, %s69
    %p78 = scmp.eq.s32.totalorder %s16, 0
    %p79 = por %p77, %p78
    %p80 = scmp.ne.s32.totalorder %s68, %s69
    %p81 = scmp.eq.s32.totalorder %s17, 1
    %p82 = por %p80, %p81
    %p84 = scmp.ne.s32.totalorder %s69, %s83
    %p85 = scmp.eq.s32.totalorder %s17, 0
    %p86 = por %p84, %p85
    %s88 = sadd.s32 %s87, 1
    %p91 = scmp.eq.s32.totalorder %s11, 1
    %p92 = scmp.ne.s32.totalorder %s87, %s89
    %p93 = scmp.eq.s32.totalorder %s11, 0
    %p94 = por %p92, %p93
    %p95 = scmp.ne.s32.totalorder %s87, %s89
    %p96 = scmp.eq.s32.totalorder %s16, 1
    %p97 = por %p95, %p96
    %p98 = scmp.ne.s32.totalorder %s89, %s90
    %p99 = scmp.eq.s32.totalorder %s16, 0
    %p100 = por %p98, %p99
    %p101 = scmp.ne.s32.totalorder %s89, %s90
    %p102 = scmp.eq.s32.totalorder %s17, 1
    %p103 = por %p101, %p102
    %p105 = scmp.ne.s32.totalorder %s90, %s104
    %p106 = scmp.eq.s32.totalorder %s17, 0
    %p107 = por %p105, %p106
    %s109 = sadd.s32 %s108, 1
    %p112 = scmp.eq.s32.totalorder %s11, 1
    %p113 = scmp.ne.s32.totalorder %s108, %s110
    %p114 = scmp.eq.s32.totalorder %s11, 0
    %p115 = por %p113, %p114
    %p116 = scmp.ne.s32.totalorder %s108, %s110
    %p117 = scmp.eq.s32.totalorder %s16, 1
    %p118 = por %p116, %p117
    %p119 = scmp.ne.s32.totalorder %s110, %s111
    %p120 = scmp.eq.s32.totalorder %s16, 0
    %p121 = por %p119, %p120
    %p122 = scmp.ne.s32.totalorder %s110, %s111
    %p123 = scmp.eq.s32.totalorder %s17, 1
    %p124 = por %p122, %p123
    %p126 = scmp.ne.s32.totalorder %s111, %s125
    %p127 = scmp.eq.s32.totalorder %s17, 0
    %p128 = por %p126, %p127
    %s129 = ssub.s32 %s11, %s18
    %p130 = scmp.eq.s32.totalorder %s129, 0
    %s132 = sadd.s32 %s131, 1
    %s133 = scalar_select %p130, %s131, %s132
    %p136 = pneg %p130
    %p137 = scmp.eq.s32.totalorder %s11, 1
    %p138 = por %p136, %p137
    %p139 = scmp.ne.s32.totalorder %s131, %s134
    %p140 = scmp.eq.s32.totalorder %s11, 0
    %p141 = por %p139, %p140
    %p142 = scmp.ne.s32.totalorder %s131, %s134
    %p143 = scmp.eq.s32.totalorder %s16, 1
    %p144 = por %p142, %p143
    %p145 = scmp.ne.s32.totalorder %s134, %s135
    %p146 = scmp.eq.s32.totalorder %s16, 0
    %p147 = por %p145, %p146
    %p148 = scmp.ne.s32.totalorder %s134, %s135
    %p149 = scmp.eq.s32.totalorder %s17, 1
    %p150 = por %p148, %p149
    %p152 = scmp.ne.s32.totalorder %s135, %s151
    %p153 = scmp.eq.s32.totalorder %s17, 0
    %p154 = por %p152, %p153
    %p155 = scmp.le.s32.totalorder 1, %s11
    %p156 = scmp.lt.s32.totalorder %s11, 3
    %p157 = pnand %p155, %p156
    %p158 = pneg %p157
    // Predicated region
    $region9: #{_lambda_.7} parent=5 // pred_check
      _
    $region10: #{_lambda_.7} parent=5 // pred_check_branch
      %160 = sbr.rel (%p157) target = $region12
    $region11: #{_lambda_.7} parent=5 // pred_region
      %s161 = ssub.s32 %s11, 1
      // Predicated region
      $region13: #{_lambda_.7} parent=11 // pred_check
        %p162 = pneg %p58
      $region14: #{_lambda_.7} parent=11 // pred_check_branch
        %164 = sbr.rel (%p162) target = $region16
      $region15: #{_lambda_.7} parent=11 // pred_region
        _
      $region16: #{_lambda_.7} parent=11 // pred_fallthru
        _
      // Predicated region
      $region17: #{_lambda_.7} parent=11 // pred_check
        %p165 = pneg %p79
      $region18: #{_lambda_.7} parent=11 // pred_check_branch
        %167 = sbr.rel (%p165) target = $region20
      $region19: #{_lambda_.7} parent=11 // pred_region
        _
      $region20: #{_lambda_.7} parent=11 // pred_fallthru
        _
      // Predicated region
      $region21: #{_lambda_.7} parent=11 // pred_check
        %p168 = pneg %p100
      $region22: #{_lambda_.7} parent=11 // pred_check_branch
        %170 = sbr.rel (%p168) target = $region24
      $region23: #{_lambda_.7} parent=11 // pred_region
        _
      $region24: #{_lambda_.7} parent=11 // pred_fallthru
        _
      // Predicated region
      $region25: #{_lambda_.7} parent=11 // pred_check
        %p171 = pneg %p121
      $region26: #{_lambda_.7} parent=11 // pred_check_branch
        %173 = sbr.rel (%p171) target = $region28
      $region27: #{_lambda_.7} parent=11 // pred_region
        _
      $region28: #{_lambda_.7} parent=11 // pred_fallthru
        _
    $region12: #{_lambda_.7} parent=5 // pred_fallthru
      _
    %p174 = scmp.lt.s32.totalorder %s11, 2
    // Predicated region
    $region29: #{_lambda_.7} parent=5 // pred_check
      %p175 = pneg %p174
    $region30: #{_lambda_.7} parent=5 // pred_check_branch
      %177 = sbr.rel (%p175) target = $region32
    $region31: #{_lambda_.7} parent=5 // pred_region
      // Predicated region
      $region33: #{_lambda_.7} parent=31 // pred_check
        %p178 = pneg %p31
      $region34: #{_lambda_.7} parent=31 // pred_check_branch
        %180 = sbr.rel (%p178) target = $region36
      $region35: #{_lambda_.7} parent=31 // pred_region
        %p181 = scmp.lt.s32.totalorder %s11, 1
        %s182 = scalar_select %p181, %s11, 1
        %s183 = smul.addr %s182, 8
        %s184 = smul.addr %s183, 8
        %s185 = scalar_lea.vmem %s0, %s184
      $region36: #{_lambda_.7} parent=31 // pred_fallthru
        _
    $region32: #{_lambda_.7} parent=5 // pred_fallthru
      _
    %p186 = scmp.le.s32.totalorder 1, %s11
    %p187 = scmp.lt.s32.totalorder %s11, 3
    %p188 = pnand %p186, %p187
    %p189 = pneg %p188
    // Predicated region
    $region37: #{_lambda_.7} parent=5 // pred_check
      _
    $region38: #{_lambda_.7} parent=5 // pred_check_branch
      %191 = sbr.rel (%p188) target = $region40
    $region39: #{_lambda_.7} parent=5 // pred_region
      %s192 = ssub.s32 %s11, 1
      %p193 = scmp.lt.s32.totalorder %s16, 1
      %s194 = scalar_select %p193, %s16, 1
      %s195 = smul.addr %s194, 8
      %s196 = smul.addr %s195, 8
      %s197 = scalar_lea.vmem %s0, %s196
      %p198 = pneg %p37
      %p199 = pneg %p34
      %p200 = pneg %p58
      %p201 = pneg %p55
      %p202 = pneg %p79
      %p203 = pneg %p76
      %p204 = pneg %p100
      %p205 = pneg %p97
      %p206 = pneg %p121
      %p207 = pneg %p118
      %p208 = pneg %p147
      %p209 = pneg %p144
      %p210 = scmp.lt.s32.totalorder %s16, 1
      %s211 = scalar_select %p210, %s16, 1
      %s212 = smul.addr %s211, 8
      %s213 = smul.addr %s212, 8
      %s214 = scalar_lea.vmem %s5, %s213
      %p215 = scmp.lt.s32.totalorder %s16, 1
      %s216 = scalar_select %p215, %s16, 1
      %s217 = smul.addr %s216, 8
      %s218 = smul.addr %s217, 8
      %s219 = scalar_lea.vmem %s0, %s218
      %p220 = scmp.lt.s32.totalorder %s16, 1
      %s221 = scalar_select %p220, %s16, 1
      %s222 = smul.addr %s221, 8
      %s223 = smul.addr %s222, 8
      %s224 = scalar_lea.vmem %s5, %s223
      %v226 = vld [vmem:[%s219] sm:$0xff]
      %v227 = vld [vmem:[%s219 + $0x8] sm:$0xff]
      %v228 = vld [vmem:[%s219 + $0x10] sm:$0xff]
      %v229 = vld [vmem:[%s219 + $0x18] sm:$0xff]
      %v230 = vld [vmem:[%s219 + $0x20] sm:$0xff]
      %v231 = vld [vmem:[%s219 + $0x28] sm:$0xff]
      %v232 = vld [vmem:[%s219 + $0x30] sm:$0xff]
      %v233 = vld [vmem:[%s219 + $0x38] sm:$0xff]
      %v234 = vld [vmem:[%s1] sm:$0xff]
      %v235 = vld [vmem:[%s1 + $0x8] sm:$0xff]
      %v236 = vld [vmem:[%s1 + $0x10] sm:$0xff]
      %v237 = vld [vmem:[%s1 + $0x18] sm:$0xff]
      %v238 = vld [vmem:[%s1 + $0x20] sm:$0xff]
      %v239 = vld [vmem:[%s1 + $0x28] sm:$0xff]
      %v240 = vld [vmem:[%s1 + $0x30] sm:$0xff]
      %v241 = vld [vmem:[%s1 + $0x38] sm:$0xff]
      %v242 = vld [vmem:[%s1 + $0x40] sm:$0xff]
      %v243 = vld [vmem:[%s1 + $0x48] sm:$0xff]
      %v244 = vld [vmem:[%s1 + $0x50] sm:$0xff]
      %v245 = vld [vmem:[%s1 + $0x58] sm:$0xff]
      %v246 = vld [vmem:[%s1 + $0x60] sm:$0xff]
      %v247 = vld [vmem:[%s1 + $0x68] sm:$0xff]
      %v248 = vld [vmem:[%s1 + $0x70] sm:$0xff]
      %v249 = vld [vmem:[%s1 + $0x78] sm:$0xff]
      %v250 = vld [vmem:[%s1 + $0x80] sm:$0xff]
      %v251 = vld [vmem:[%s1 + $0x88] sm:$0xff]
      %v252 = vld [vmem:[%s1 + $0x90] sm:$0xff]
      %v253 = vld [vmem:[%s1 + $0x98] sm:$0xff]
      %v254 = vld [vmem:[%s1 + $0xa0] sm:$0xff]
      %v255 = vld [vmem:[%s1 + $0xa8] sm:$0xff]
      %v256 = vld [vmem:[%s1 + $0xb0] sm:$0xff]
      %v257 = vld [vmem:[%s1 + $0xb8] sm:$0xff]
      %v258 = vld [vmem:[%s2] sm:$0xff]
      %v259 = vld [vmem:[%s2 + $0x8] sm:$0xff]
      %v260 = vld [vmem:[%s2 + $0x10] sm:$0xff]
      %v261 = vld [vmem:[%s2 + $0x18] sm:$0xff]
      %v262 = vld [vmem:[%s2 + $0x20] sm:$0xff]
      %v263 = vld [vmem:[%s2 + $0x28] sm:$0xff]
      %v264 = vld [vmem:[%s2 + $0x30] sm:$0xff]
      %v265 = vld [vmem:[%s2 + $0x38] sm:$0xff]
      %v266 = vlaneseq
      %v267 = vand.u32 %v266, 127
      %vm268 = vcmp.lt.s32.totalorder %v267, 0
      %v269 = vsub.s32 0, %v267
      %v270 = vsel %vm268, %v269, %v267
      %v271 = vshrl.u32 %v270, 2
      %v272 = vand.u32 %v270, 3
      %v273 = vsub.s32 0, %v272
      %v274 = vsel %vm268, %v273, %v272
      %vm275 = vcmp.ne.s32.totalorder %v274, 0
      %vm276 = vcmp.lt.s32.totalorder %v274, 0
      %vm277 = vmand %vm276, %vm275
      %v278 = vadd.s32 %v274, 4
      %v279 = vsel %vm277, %v278, %v274
      %vm280 = vcmp.eq.s32.totalorder %v279, 0
      %289 = vrot.lane.b32.xlu0 %v226, 1
      %v290 = vpop.permute.xlu0 %289
      %291 = vrot.lane.b32.xlu0 %v227, 1
      %v292 = vpop.permute.xlu0 %291
      %293 = vrot.lane.b32.xlu0 %v228, 1
      %v294 = vpop.permute.xlu0 %293
      %295 = vrot.lane.b32.xlu0 %v229, 1
      %v296 = vpop.permute.xlu0 %295
      %297 = vrot.lane.b32.xlu0 %v230, 1
      %v298 = vpop.permute.xlu0 %297
      %299 = vrot.lane.b32.xlu0 %v231, 1
      %v300 = vpop.permute.xlu0 %299
      %301 = vrot.lane.b32.xlu0 %v232, 1
      %v302 = vpop.permute.xlu0 %301
      %303 = vrot.lane.b32.xlu0 %v233, 1
      %v304 = vpop.permute.xlu0 %303
      %vm313 = vcmask 7168
      %v314 = vsel %vm313, 0.0, %v290
      %v315 = vsel %vm313, 0.0, %v292
      %v316 = vsel %vm313, 0.0, %v294
      %v317 = vsel %vm313, 0.0, %v296
      %v318 = vsel %vm313, 0.0, %v298
      %v319 = vsel %vm313, 0.0, %v300
      %v320 = vsel %vm313, 0.0, %v302
      %v321 = vsel %vm313, 0.0, %v304
      %v322 = vsel %vm280, 1, 0
      %vm323 = vcmp.eq.s32.totalorder %v322, 1
      %v324 = vsel %vm323, 0.0, %v314
      %v325 = vsel %vm323, 0.0, %v315
      %v326 = vsel %vm323, 0.0, %v316
      %v327 = vsel %vm323, 0.0, %v317
      %v328 = vsel %vm323, 0.0, %v318
      %v329 = vsel %vm323, 0.0, %v319
      %v330 = vsel %vm323, 0.0, %v320
      %v331 = vsel %vm323, 0.0, %v321
      %vm332 = vcmp.eq.s32.totalorder %v279, 3
      %333 = vrot.lane.b32.xlu0 %v226, 127
      %v334 = vpop.permute.xlu0 %333
      %335 = vrot.lane.b32.xlu0 %v227, 127
      %v336 = vpop.permute.xlu0 %335
      %337 = vrot.lane.b32.xlu0 %v228, 127
      %v338 = vpop.permute.xlu0 %337
      %339 = vrot.lane.b32.xlu0 %v229, 127
      %v340 = vpop.permute.xlu0 %339
      %341 = vrot.lane.b32.xlu0 %v230, 127
      %v342 = vpop.permute.xlu0 %341
      %343 = vrot.lane.b32.xlu0 %v231, 127
      %v344 = vpop.permute.xlu0 %343
      %345 = vrot.lane.b32.xlu0 %v232, 127
      %v346 = vpop.permute.xlu0 %345
      %347 = vrot.lane.b32.xlu0 %v233, 127
      %v348 = vpop.permute.xlu0 %347
      %vm357 = vcmask 121856
      %v358 = vsel %vm357, %v334, 0.0
      %v359 = vsel %vm357, %v336, 0.0
      %v360 = vsel %vm357, %v338, 0.0
      %v361 = vsel %vm357, %v340, 0.0
      %v362 = vsel %vm357, %v342, 0.0
      %v363 = vsel %vm357, %v344, 0.0
      %v364 = vsel %vm357, %v346, 0.0
      %v365 = vsel %vm357, %v348, 0.0
      %v366 = vsel %vm332, 1, 0
      %vm367 = vcmp.eq.s32.totalorder %v366, 1
      %v368 = vsel %vm367, 0.0, %v358
      %v369 = vsel %vm367, 0.0, %v359
      %v370 = vsel %vm367, 0.0, %v360
      %v371 = vsel %vm367, 0.0, %v361
      %v372 = vsel %vm367, 0.0, %v362
      %v373 = vsel %vm367, 0.0, %v363
      %v374 = vsel %vm367, 0.0, %v364
      %v375 = vsel %vm367, 0.0, %v365
      %392 = vrot.lane.b32.xlu0 %v324, 4
      %v393 = vpop.permute.xlu0 %392
      %394 = vrot.lane.b32.xlu0 %v325, 4
      %v395 = vpop.permute.xlu0 %394
      %396 = vrot.lane.b32.xlu0 %v326, 4
      %v397 = vpop.permute.xlu0 %396
      %398 = vrot.lane.b32.xlu0 %v327, 4
      %v399 = vpop.permute.xlu0 %398
      %400 = vrot.lane.b32.xlu0 %v328, 4
      %v401 = vpop.permute.xlu0 %400
      %402 = vrot.lane.b32.xlu0 %v329, 4
      %v403 = vpop.permute.xlu0 %402
      %404 = vrot.lane.b32.xlu0 %v330, 4
      %v405 = vpop.permute.xlu0 %404
      %406 = vrot.lane.b32.xlu0 %v331, 4
      %v407 = vpop.permute.xlu0 %406
      %408 = vrot.lane.b32.xlu0 %v226, 4
      %v409 = vpop.permute.xlu0 %408
      %410 = vrot.lane.b32.xlu0 %v227, 4
      %v411 = vpop.permute.xlu0 %410
      %412 = vrot.lane.b32.xlu0 %v228, 4
      %v413 = vpop.permute.xlu0 %412
      %414 = vrot.lane.b32.xlu0 %v229, 4
      %v415 = vpop.permute.xlu0 %414
      %416 = vrot.lane.b32.xlu0 %v230, 4
      %v417 = vpop.permute.xlu0 %416
      %418 = vrot.lane.b32.xlu0 %v231, 4
      %v419 = vpop.permute.xlu0 %418
      %420 = vrot.lane.b32.xlu0 %v232, 4
      %v421 = vpop.permute.xlu0 %420
      %422 = vrot.lane.b32.xlu0 %v233, 4
      %v423 = vpop.permute.xlu0 %422
      %424 = vrot.lane.b32.xlu0 %v368, 4
      %v425 = vpop.permute.xlu0 %424
      %426 = vrot.lane.b32.xlu0 %v369, 4
      %v427 = vpop.permute.xlu0 %426
      %428 = vrot.lane.b32.xlu0 %v370, 4
      %v429 = vpop.permute.xlu0 %428
      %430 = vrot.lane.b32.xlu0 %v371, 4
      %v431 = vpop.permute.xlu0 %430
      %432 = vrot.lane.b32.xlu0 %v372, 4
      %v433 = vpop.permute.xlu0 %432
      %434 = vrot.lane.b32.xlu0 %v373, 4
      %v435 = vpop.permute.xlu0 %434
      %436 = vrot.lane.b32.xlu0 %v374, 4
      %v437 = vpop.permute.xlu0 %436
      %438 = vrot.lane.b32.xlu0 %v375, 4
      %v439 = vpop.permute.xlu0 %438
      %vm464 = vcmask 31744
      %v465 = vsel %vm464, 0.0, %v393
      %v466 = vsel %vm464, 0.0, %v395
      %v467 = vsel %vm464, 0.0, %v397
      %v468 = vsel %vm464, 0.0, %v399
      %v469 = vsel %vm464, 0.0, %v401
      %v470 = vsel %vm464, 0.0, %v403
      %v471 = vsel %vm464, 0.0, %v405
      %v472 = vsel %vm464, 0.0, %v407
      %v473 = vsel %vm464, 0.0, %v409
      %v474 = vsel %vm464, 0.0, %v411
      %v475 = vsel %vm464, 0.0, %v413
      %v476 = vsel %vm464, 0.0, %v415
      %v477 = vsel %vm464, 0.0, %v417
      %v478 = vsel %vm464, 0.0, %v419
      %v479 = vsel %vm464, 0.0, %v421
      %v480 = vsel %vm464, 0.0, %v423
      %v481 = vsel %vm464, 0.0, %v425
      %v482 = vsel %vm464, 0.0, %v427
      %v483 = vsel %vm464, 0.0, %v429
      %v484 = vsel %vm464, 0.0, %v431
      %v485 = vsel %vm464, 0.0, %v433
      %v486 = vsel %vm464, 0.0, %v435
      %v487 = vsel %vm464, 0.0, %v437
      %v488 = vsel %vm464, 0.0, %v439
      %vm489 = vcmask 162816
      %v490 = vsel %vm489, %v465, 0.0
      %v491 = vsel %vm489, %v466, 0.0
      %v492 = vsel %vm489, %v467, 0.0
      %v493 = vsel %vm489, %v468, 0.0
      %v494 = vsel %vm489, %v469, 0.0
      %v495 = vsel %vm489, %v470, 0.0
      %v496 = vsel %vm489, %v471, 0.0
      %v497 = vsel %vm489, %v472, 0.0
      %v498 = vsel %vm489, %v473, 0.0
      %v499 = vsel %vm489, %v474, 0.0
      %v500 = vsel %vm489, %v475, 0.0
      %v501 = vsel %vm489, %v476, 0.0
      %v502 = vsel %vm489, %v477, 0.0
      %v503 = vsel %vm489, %v478, 0.0
      %v504 = vsel %vm489, %v479, 0.0
      %v505 = vsel %vm489, %v480, 0.0
      %v506 = vsel %vm489, %v481, 0.0
      %v507 = vsel %vm489, %v482, 0.0
      %v508 = vsel %vm489, %v483, 0.0
      %v509 = vsel %vm489, %v484, 0.0
      %v510 = vsel %vm489, %v485, 0.0
      %v511 = vsel %vm489, %v486, 0.0
      %v512 = vsel %vm489, %v487, 0.0
      %v513 = vsel %vm489, %v488, 0.0
      %v514 = vpack.c.bf16 %v491, %v490
      %v515 = vpack.c.bf16 %v493, %v492
      %v516 = vpack.c.bf16 %v495, %v494
      %v517 = vpack.c.bf16 %v497, %v496
      %v518 = vpack.c.bf16 %v499, %v498
      %v519 = vpack.c.bf16 %v501, %v500
      %v520 = vpack.c.bf16 %v503, %v502
      %v521 = vpack.c.bf16 %v505, %v504
      %v522 = vpack.c.bf16 %v507, %v506
      %v523 = vpack.c.bf16 %v509, %v508
      %v524 = vpack.c.bf16 %v511, %v510
      %v525 = vpack.c.bf16 %v513, %v512
      %v534 = vunpack.c.l.b16 %v242
      %v535 = vunpack.c.h.b16 %v242
      %v536 = vunpack.c.l.b16 %v243
      %v537 = vunpack.c.h.b16 %v243
      %v538 = vunpack.c.l.b16 %v244
      %v539 = vunpack.c.h.b16 %v244
      %v540 = vunpack.c.l.b16 %v245
      %v541 = vunpack.c.h.b16 %v245
      %v542 = vunpack.c.l.b16 %v246
      %v543 = vunpack.c.h.b16 %v246
      %v544 = vunpack.c.l.b16 %v247
      %v545 = vunpack.c.h.b16 %v247
      %v546 = vunpack.c.l.b16 %v248
      %v547 = vunpack.c.h.b16 %v248
      %v548 = vunpack.c.l.b16 %v249
      %v549 = vunpack.c.h.b16 %v249
      %v550 = vpack.c.b16 %v536, %v534
      %v551 = vpack.c.b16 %v537, %v535
      %v552 = vpack.c.b16 %v540, %v538
      %v553 = vpack.c.b16 %v541, %v539
      %v554 = vpack.c.b16 %v544, %v542
      %v555 = vpack.c.b16 %v545, %v543
      %v556 = vpack.c.b16 %v548, %v546
      %v557 = vpack.c.b16 %v549, %v547
      %574 = vrot.lane.b32.xlu0 %v514, 124
      %v575 = vpop.permute.xlu0 %574
      %576 = vrot.lane.b32.xlu0 %v515, 124
      %v577 = vpop.permute.xlu0 %576
      %578 = vrot.lane.b32.xlu0 %v516, 124
      %v579 = vpop.permute.xlu0 %578
      %580 = vrot.lane.b32.xlu0 %v517, 124
      %v581 = vpop.permute.xlu0 %580
      %582 = vrot.lane.b32.xlu0 %v518, 124
      %v583 = vpop.permute.xlu0 %582
      %584 = vrot.lane.b32.xlu0 %v519, 124
      %v585 = vpop.permute.xlu0 %584
      %586 = vrot.lane.b32.xlu0 %v520, 124
      %v587 = vpop.permute.xlu0 %586
      %588 = vrot.lane.b32.xlu0 %v521, 124
      %v589 = vpop.permute.xlu0 %588
      %590 = vrot.lane.b32.xlu0 %v522, 124
      %v591 = vpop.permute.xlu0 %590
      %592 = vrot.lane.b32.xlu0 %v523, 124
      %v593 = vpop.permute.xlu0 %592
      %594 = vrot.lane.b32.xlu0 %v524, 124
      %v595 = vpop.permute.xlu0 %594
      %596 = vrot.lane.b32.xlu0 %v525, 124
      %v597 = vpop.permute.xlu0 %596
      %vm610 = vcmask 523264
      %v612 = vsel %vm610, %v551, 0
      %v615 = vsel %vm610, %v553, 0
      %v618 = vsel %vm610, %v555, 0
      %v621 = vsel %vm610, %v557, 0
      %623 = vmatprep.subr.bf16.mxu0 0
      %624 = vmatpush1.bf16.msra.mxu0 %v575
      %625 = vmatprep.subr.bf16.mxu0 0
      %626 = vmatpush1.bf16.msra.mxu0 %v577
      %627 = vmatprep.subr.bf16.mxu0 0
      %628 = vmatpush1.bf16.msra.mxu0 %v579
      %629 = vmatprep.subr.bf16.mxu0 0
      %630 = vmatpush1.bf16.msra.mxu0 %v581
      %631 = vmatprep.subr.bf16.mxu0 0
      %632 = vmatpush1.bf16.msra.mxu0 %v583
      %633 = vmatprep.subr.bf16.mxu0 0
      %634 = vmatpush1.bf16.msra.mxu0 %v585
      %635 = vmatprep.subr.bf16.mxu0 0
      %636 = vmatpush1.bf16.msra.mxu0 %v587
      %637 = vmatprep.subr.bf16.mxu0 0
      %638 = vmatpush1.bf16.msra.mxu0 %v589
      %639 = vmatprep.subr.bf16.mxu0 0
      %640 = vmatpush1.bf16.msra.mxu0 %v591
      %641 = vmatprep.subr.bf16.mxu0 0
      %642 = vmatpush1.bf16.msra.mxu0 %v593
      %643 = vmatprep.subr.bf16.mxu0 0
      %644 = vmatpush1.bf16.msra.mxu0 %v595
      %645 = vmatprep.subr.bf16.mxu0 0
      %646 = vmatpush1.bf16.msra.mxu0 %v597
      %647 = vmatprep.subr.bf16.mxu0 0
      %648 = vmatpush1.bf16.msra.mxu0 0
      %649 = vmatprep.subr.bf16.mxu0 0
      %650 = vmatpush1.bf16.msra.mxu0 0
      %651 = vmatprep.subr.bf16.mxu0 0
      %652 = vmatpush1.bf16.msra.mxu0 0
      %653 = vmatprep.subr.bf16.mxu0 0
      %654 = vmatpush1.bf16.msra.mxu0 0
      %655 = vmatprep.mubr.bf16.mxu0 %v612
      %656 = vmatmul.mubr.bf16.gmra.mrb[0].mxu0 %v550
      %v657 = vpop.f32.mrb[0].mxu0
      %v658 = vadd.f32 0.0, %v657
      %v659 = vpop.f32.mrb[0].mxu0
      %v660 = vpop.f32.mrb[0].mxu0
      %v661 = vadd.f32 0.0, %v660
      %v662 = vpop.f32.mrb[0].mxu0
      %663 = vmatprep.mubr.bf16.mxu0 %v615
      %664 = vmatmul.mubr.bf16.gmra.mrb[0].mxu0 %v552
      %v665 = vpop.f32.mrb[0].mxu0
      %v666 = vadd.f32 0.0, %v665
      %v667 = vpop.f32.mrb[0].mxu0
      %v668 = vpop.f32.mrb[0].mxu0
      %v669 = vadd.f32 0.0, %v668
      %v670 = vpop.f32.mrb[0].mxu0
      %671 = vmatprep.mubr.bf16.mxu0 %v618
      %672 = vmatmul.mubr.bf16.gmra.mrb[0].mxu0 %v554
      %v673 = vpop.f32.mrb[0].mxu0
      %v674 = vadd.f32 0.0, %v673
      %v675 = vpop.f32.mrb[0].mxu0
      %v676 = vpop.f32.mrb[0].mxu0
      %v677 = vadd.f32 0.0, %v676
      %v678 = vpop.f32.mrb[0].mxu0
      %679 = vmatprep.mubr.bf16.mxu0 %v621
      %680 = vmatmul.mubr.bf16.gmra.mrb[0].mxu0 %v556
      %v681 = vpop.f32.mrb[0].mxu0
      %v682 = vadd.f32 0.0, %v681
      %v683 = vpop.f32.mrb[0].mxu0
      %v684 = vpop.f32.mrb[0].mxu0
      %v685 = vadd.f32 0.0, %v684
      %v686 = vpop.f32.mrb[0].mxu0
      %687 = vdwg.mxu0
      %v696 = vunpack.c.l.b16 %v234
      %v697 = vunpack.c.h.b16 %v234
      %v698 = vunpack.c.l.b16 %v235
      %v699 = vunpack.c.h.b16 %v235
      %v700 = vunpack.c.l.b16 %v236
      %v701 = vunpack.c.h.b16 %v236
      %v702 = vunpack.c.l.b16 %v237
      %v703 = vunpack.c.h.b16 %v237
      %v704 = vunpack.c.l.b16 %v238
      %v705 = vunpack.c.h.b16 %v238
      %v706 = vunpack.c.l.b16 %v239
      %v707 = vunpack.c.h.b16 %v239
      %v708 = vunpack.c.l.b16 %v240
      %v709 = vunpack.c.h.b16 %v240
      %v710 = vunpack.c.l.b16 %v241
      %v711 = vunpack.c.h.b16 %v241
      %v712 = vpack.c.b16 %v698, %v696
      %v713 = vpack.c.b16 %v699, %v697
      %v714 = vpack.c.b16 %v702, %v700
      %v715 = vpack.c.b16 %v703, %v701
      %v716 = vpack.c.b16 %v706, %v704
      %v717 = vpack.c.b16 %v707, %v705
      %v718 = vpack.c.b16 %v710, %v708
      %v719 = vpack.c.b16 %v711, %v709
      %v725 = vsel %vm610, %v713, 0
      %v728 = vsel %vm610, %v715, 0
      %v731 = vsel %vm610, %v717, 0
      %v734 = vsel %vm610, %v719, 0
      %736 = vmatprep.subr.bf16.mxu0 0
      %737 = vmatpush1.bf16.msra.mxu0 %v514
      %738 = vmatprep.subr.bf16.mxu0 0
      %739 = vmatpush1.bf16.msra.mxu0 %v515
      %740 = vmatprep.subr.bf16.mxu0 0
      %741 = vmatpush1.bf16.msra.mxu0 %v516
      %742 = vmatprep.subr.bf16.mxu0 0
      %743 = vmatpush1.bf16.msra.mxu0 %v517
      %744 = vmatprep.subr.bf16.mxu0 0
      %745 = vmatpush1.bf16.msra.mxu0 %v518
      %746 = vmatprep.subr.bf16.mxu0 0
      %747 = vmatpush1.bf16.msra.mxu0 %v519
      %748 = vmatprep.subr.bf16.mxu0 0
      %749 = vmatpush1.bf16.msra.mxu0 %v520
      %750 = vmatprep.subr.bf16.mxu0 0
      %751 = vmatpush1.bf16.msra.mxu0 %v521
      %752 = vmatprep.subr.bf16.mxu0 0
      %753 = vmatpush1.bf16.msra.mxu0 %v522
      %754 = vmatprep.subr.bf16.mxu0 0
      %755 = vmatpush1.bf16.msra.mxu0 %v523
      %756 = vmatprep.subr.bf16.mxu0 0
      %757 = vmatpush1.bf16.msra.mxu0 %v524
      %758 = vmatprep.subr.bf16.mxu0 0
      %759 = vmatpush1.bf16.msra.mxu0 %v525
      %760 = vmatprep.subr.bf16.mxu0 0
      %761 = vmatpush1.bf16.msra.mxu0 0
      %762 = vmatprep.subr.bf16.mxu0 0
      %763 = vmatpush1.bf16.msra.mxu0 0
      %764 = vmatprep.subr.bf16.mxu0 0
      %765 = vmatpush1.bf16.msra.mxu0 0
      %766 = vmatprep.subr.bf16.mxu0 0
      %767 = vmatpush1.bf16.msra.mxu0 0
      %768 = vmatprep.mubr.bf16.mxu0 %v725
      %769 = vmatmul.mubr.bf16.gmra.mrb[0].mxu0 %v712
      %v770 = vpop.f32.mrb[0].mxu0
      %v771 = vadd.f32 %v658, %v770
      %v772 = vpop.f32.mrb[0].mxu0
      %v773 = vpop.f32.mrb[0].mxu0
      %v774 = vadd.f32 %v661, %v773
      %v775 = vpop.f32.mrb[0].mxu0
      %776 = vmatprep.mubr.bf16.mxu0 %v728
      %777 = vmatmul.mubr.bf16.gmra.mrb[0].mxu0 %v714
      %v778 = vpop.f32.mrb[0].mxu0
      %v779 = vadd.f32 %v666, %v778
      %v780 = vpop.f32.mrb[0].mxu0
      %v781 = vpop.f32.mrb[0].mxu0
      %v782 = vadd.f32 %v669, %v781
      %v783 = vpop.f32.mrb[0].mxu0
      %784 = vmatprep.mubr.bf16.mxu0 %v731
      %785 = vmatmul.mubr.bf16.gmra.mrb[0].mxu0 %v716
      %v786 = vpop.f32.mrb[0].mxu0
      %v787 = vadd.f32 %v674, %v786
      %v788 = vpop.f32.mrb[0].mxu0
      %v789 = vpop.f32.mrb[0].mxu0
      %v790 = vadd.f32 %v677, %v789
      %v791 = vpop.f32.mrb[0].mxu0
      %792 = vmatprep.mubr.bf16.mxu0 %v734
      %793 = vmatmul.mubr.bf16.gmra.mrb[0].mxu0 %v718
      %v794 = vpop.f32.mrb[0].mxu0
      %v795 = vadd.f32 %v682, %v794
      %v796 = vpop.f32.mrb[0].mxu0
      %v797 = vpop.f32.mrb[0].mxu0
      %v798 = vadd.f32 %v685, %v797
      %v799 = vpop.f32.mrb[0].mxu0
      %800 = vdwg.mxu0
      %v809 = vunpack.c.l.b16 %v250
      %v810 = vunpack.c.h.b16 %v250
      %v811 = vunpack.c.l.b16 %v251
      %v812 = vunpack.c.h.b16 %v251
      %v813 = vunpack.c.l.b16 %v252
      %v814 = vunpack.c.h.b16 %v252
      %v815 = vunpack.c.l.b16 %v253
      %v816 = vunpack.c.h.b16 %v253
      %v817 = vunpack.c.l.b16 %v254
      %v818 = vunpack.c.h.b16 %v254
      %v819 = vunpack.c.l.b16 %v255
      %v820 = vunpack.c.h.b16 %v255
      %v821 = vunpack.c.l.b16 %v256
      %v822 = vunpack.c.h.b16 %v256
      %v823 = vunpack.c.l.b16 %v257
      %v824 = vunpack.c.h.b16 %v257
      %v825 = vpack.c.b16 %v811, %v809
      %v826 = vpack.c.b16 %v812, %v810
      %v827 = vpack.c.b16 %v815, %v813
      %v828 = vpack.c.b16 %v816, %v814
      %v829 = vpack.c.b16 %v819, %v817
      %v830 = vpack.c.b16 %v820, %v818
      %v831 = vpack.c.b16 %v823, %v821
      %v832 = vpack.c.b16 %v824, %v822
      %837 = vrot.lane.b32.xlu0 %v514, 120
      %v838 = vpop.permute.xlu0 %837
      %839 = vrot.lane.b32.xlu0 %v515, 120
      %v840 = vpop.permute.xlu0 %839
      %841 = vrot.lane.b32.xlu0 %v516, 120
      %v842 = vpop.permute.xlu0 %841
      %843 = vrot.lane.b32.xlu0 %v517, 120
      %v844 = vpop.permute.xlu0 %843
      %845 = vrot.lane.b32.xlu0 %v518, 120
      %v846 = vpop.permute.xlu0 %845
      %847 = vrot.lane.b32.xlu0 %v519, 120
      %v848 = vpop.permute.xlu0 %847
      %849 = vrot.lane.b32.xlu0 %v520, 120
      %v850 = vpop.permute.xlu0 %849
      %851 = vrot.lane.b32.xlu0 %v521, 120
      %v852 = vpop.permute.xlu0 %851
      %853 = vrot.lane.b32.xlu0 %v522, 120
      %v854 = vpop.permute.xlu0 %853
      %855 = vrot.lane.b32.xlu0 %v523, 120
      %v856 = vpop.permute.xlu0 %855
      %857 = vrot.lane.b32.xlu0 %v524, 120
      %v858 = vpop.permute.xlu0 %857
      %859 = vrot.lane.b32.xlu0 %v525, 120
      %v860 = vpop.permute.xlu0 %859
      %v874 = vsel %vm610, %v826, 0
      %v877 = vsel %vm610, %v828, 0
      %v880 = vsel %vm610, %v830, 0
      %v883 = vsel %vm610, %v832, 0
      %885 = vmatprep.subr.bf16.mxu0 0
      %886 = vmatpush1.bf16.msra.mxu0 %v838
      %887 = vmatprep.subr.bf16.mxu0 0
      %888 = vmatpush1.bf16.msra.mxu0 %v840
      %889 = vmatprep.subr.bf16.mxu0 0
      %890 = vmatpush1.bf16.msra.mxu0 %v842
      %891 = vmatprep.subr.bf16.mxu0 0
      %892 = vmatpush1.bf16.msra.mxu0 %v844
      %893 = vmatprep.subr.bf16.mxu0 0
      %894 = vmatpush1.bf16.msra.mxu0 %v846
      %895 = vmatprep.subr.bf16.mxu0 0
      %896 = vmatpush1.bf16.msra.mxu0 %v848
      %897 = vmatprep.subr.bf16.mxu0 0
      %898 = vmatpush1.bf16.msra.mxu0 %v850
      %899 = vmatprep.subr.bf16.mxu0 0
      %900 = vmatpush1.bf16.msra.mxu0 %v852
      %901 = vmatprep.subr.bf16.mxu0 0
      %902 = vmatpush1.bf16.msra.mxu0 %v854
      %903 = vmatprep.subr.bf16.mxu0 0
      %904 = vmatpush1.bf16.msra.mxu0 %v856
      %905 = vmatprep.subr.bf16.mxu0 0
      %906 = vmatpush1.bf16.msra.mxu0 %v858
      %907 = vmatprep.subr.bf16.mxu0 0
      %908 = vmatpush1.bf16.msra.mxu0 %v860
      %909 = vmatprep.subr.bf16.mxu0 0
      %910 = vmatpush1.bf16.msra.mxu0 0
      %911 = vmatprep.subr.bf16.mxu0 0
      %912 = vmatpush1.bf16.msra.mxu0 0
      %913 = vmatprep.subr.bf16.mxu0 0
      %914 = vmatpush1.bf16.msra.mxu0 0
      %915 = vmatprep.subr.bf16.mxu0 0
      %916 = vmatpush1.bf16.msra.mxu0 0
      %917 = vmatprep.mubr.bf16.mxu0 %v874
      %918 = vmatmul.mubr.bf16.gmra.mrb[0].mxu0 %v825
      %v919 = vpop.f32.mrb[0].mxu0
      %v920 = vadd.f32 0.0, %v919
      %v921 = vpop.f32.mrb[0].mxu0
      %v922 = vpop.f32.mrb[0].mxu0
      %v923 = vadd.f32 0.0, %v922
      %v924 = vpop.f32.mrb[0].mxu0
      %925 = vmatprep.mubr.bf16.mxu0 %v877
      %926 = vmatmul.mubr.bf16.gmra.mrb[0].mxu0 %v827
      %v927 = vpop.f32.mrb[0].mxu0
      %v928 = vadd.f32 0.0, %v927
      %v929 = vpop.f32.mrb[0].mxu0
      %v930 = vpop.f32.mrb[0].mxu0
      %v931 = vadd.f32 0.0, %v930
      %v932 = vpop.f32.mrb[0].mxu0
      %933 = vmatprep.mubr.bf16.mxu0 %v880
      %934 = vmatmul.mubr.bf16.gmra.mrb[0].mxu0 %v829
      %v935 = vpop.f32.mrb[0].mxu0
      %v936 = vadd.f32 0.0, %v935
      %v937 = vpop.f32.mrb[0].mxu0
      %v938 = vpop.f32.mrb[0].mxu0
      %v939 = vadd.f32 0.0, %v938
      %v940 = vpop.f32.mrb[0].mxu0
      %941 = vmatprep.mubr.bf16.mxu0 %v883
      %942 = vmatmul.mubr.bf16.gmra.mrb[0].mxu0 %v831
      %v943 = vpop.f32.mrb[0].mxu0
      %v944 = vadd.f32 0.0, %v943
      %v945 = vpop.f32.mrb[0].mxu0
      %v946 = vpop.f32.mrb[0].mxu0
      %v947 = vadd.f32 0.0, %v946
      %v948 = vpop.f32.mrb[0].mxu0
      %949 = vdwg.mxu0
      %v950 = vadd.f32 %v771, %v920
      %v951 = vadd.f32 %v774, %v923
      %v952 = vadd.f32 %v779, %v928
      %v953 = vadd.f32 %v782, %v931
      %v954 = vadd.f32 %v787, %v936
      %v955 = vadd.f32 %v790, %v939
      %v956 = vadd.f32 %v795, %v944
      %v957 = vadd.f32 %v798, %v947
      %959 = vset.pattern.permute.xlu0 0
      %960 = vperm.xlu0 %959, %v258
      %v961 = vpop.permute.xlu0 %960
      %964 = vset.pattern.permute.xlu0 0
      %965 = vperm.xlu0 %964, %v259
      %v966 = vpop.permute.xlu0 %965
      %969 = vset.pattern.permute.xlu0 0
      %970 = vperm.xlu0 %969, %v260
      %v971 = vpop.permute.xlu0 %970
      %974 = vset.pattern.permute.xlu0 0
      %975 = vperm.xlu0 %974, %v261
      %v976 = vpop.permute.xlu0 %975
      %979 = vset.pattern.permute.xlu0 0
      %980 = vperm.xlu0 %979, %v262
      %v981 = vpop.permute.xlu0 %980
      %984 = vset.pattern.permute.xlu0 0
      %985 = vperm.xlu0 %984, %v263
      %v986 = vpop.permute.xlu0 %985
      %989 = vset.pattern.permute.xlu0 0
      %990 = vperm.xlu0 %989, %v264
      %v991 = vpop.permute.xlu0 %990
      %994 = vset.pattern.permute.xlu0 0
      %995 = vperm.xlu0 %994, %v265
      %v996 = vpop.permute.xlu0 %995
      %v998 = vadd.f32 %v950, %v961
      %v999 = vadd.f32 %v951, %v966
      %v1000 = vadd.f32 %v952, %v971
      %v1001 = vadd.f32 %v953, %v976
      %v1002 = vadd.f32 %v954, %v981
      %v1003 = vadd.f32 %v955, %v986
      %v1004 = vadd.f32 %v956, %v991
      %v1005 = vadd.f32 %v957, %v996
      %v1006 = vmax.f32 %v998, 0.0
      %v1007 = vmax.f32 %v999, 0.0
      %v1008 = vmax.f32 %v1000, 0.0
      %v1009 = vmax.f32 %v1001, 0.0
      %v1010 = vmax.f32 %v1002, 0.0
      %v1011 = vmax.f32 %v1003, 0.0
      %v1012 = vmax.f32 %v1004, 0.0
      %v1013 = vmax.f32 %v1005, 0.0
      %v1014 = vld [vmem:[%s3] sm:$0xff]
      %v1015 = vld [vmem:[%s3 + $0x8] sm:$0xff]
      %v1016 = vld [vmem:[%s3 + $0x10] sm:$0xff]
      %v1017 = vld [vmem:[%s3 + $0x18] sm:$0xff]
      %v1018 = vld [vmem:[%s3 + $0x20] sm:$0xff]
      %v1019 = vld [vmem:[%s3 + $0x28] sm:$0xff]
      %v1020 = vld [vmem:[%s3 + $0x30] sm:$0xff]
      %v1021 = vld [vmem:[%s3 + $0x38] sm:$0xff]
      %v1022 = vld [vmem:[%s3 + $0x40] sm:$0xff]
      %v1023 = vld [vmem:[%s3 + $0x48] sm:$0xff]
      %v1024 = vld [vmem:[%s3 + $0x50] sm:$0xff]
      %v1025 = vld [vmem:[%s3 + $0x58] sm:$0xff]
      %v1026 = vld [vmem:[%s3 + $0x60] sm:$0xff]
      %v1027 = vld [vmem:[%s3 + $0x68] sm:$0xff]
      %v1028 = vld [vmem:[%s3 + $0x70] sm:$0xff]
      %v1029 = vld [vmem:[%s3 + $0x78] sm:$0xff]
      %v1030 = vld [vmem:[%s3 + $0x80] sm:$0xff]
      %v1031 = vld [vmem:[%s3 + $0x88] sm:$0xff]
      %v1032 = vld [vmem:[%s3 + $0x90] sm:$0xff]
      %v1033 = vld [vmem:[%s3 + $0x98] sm:$0xff]
      %v1034 = vld [vmem:[%s3 + $0xa0] sm:$0xff]
      %v1035 = vld [vmem:[%s3 + $0xa8] sm:$0xff]
      %v1036 = vld [vmem:[%s3 + $0xb0] sm:$0xff]
      %v1037 = vld [vmem:[%s3 + $0xb8] sm:$0xff]
      %v1038 = vld [vmem:[%s4] sm:$0xff]
      %v1039 = vld [vmem:[%s4 + $0x8] sm:$0xff]
      %v1040 = vld [vmem:[%s4 + $0x10] sm:$0xff]
      %v1041 = vld [vmem:[%s4 + $0x18] sm:$0xff]
      %v1042 = vld [vmem:[%s4 + $0x20] sm:$0xff]
      %v1043 = vld [vmem:[%s4 + $0x28] sm:$0xff]
      %v1044 = vld [vmem:[%s4 + $0x30] sm:$0xff]
      %v1045 = vld [vmem:[%s4 + $0x38] sm:$0xff]
      %1054 = vrot.lane.b32.xlu0 %v1006, 1
      %v1055 = vpop.permute.xlu0 %1054
      %1056 = vrot.lane.b32.xlu0 %v1007, 1
      %v1057 = vpop.permute.xlu0 %1056
      %1058 = vrot.lane.b32.xlu0 %v1008, 1
      %v1059 = vpop.permute.xlu0 %1058
      %1060 = vrot.lane.b32.xlu0 %v1009, 1
      %v1061 = vpop.permute.xlu0 %1060
      %1062 = vrot.lane.b32.xlu0 %v1010, 1
      %v1063 = vpop.permute.xlu0 %1062
      %1064 = vrot.lane.b32.xlu0 %v1011, 1
      %v1065 = vpop.permute.xlu0 %1064
      %1066 = vrot.lane.b32.xlu0 %v1012, 1
      %v1067 = vpop.permute.xlu0 %1066
      %1068 = vrot.lane.b32.xlu0 %v1013, 1
      %v1069 = vpop.permute.xlu0 %1068
      %v1078 = vsel %vm313, 0.0, %v1055
      %v1079 = vsel %vm313, 0.0, %v1057
      %v1080 = vsel %vm313, 0.0, %v1059
      %v1081 = vsel %vm313, 0.0, %v1061
      %v1082 = vsel %vm313, 0.0, %v1063
      %v1083 = vsel %vm313, 0.0, %v1065
      %v1084 = vsel %vm313, 0.0, %v1067
      %v1085 = vsel %vm313, 0.0, %v1069
      %v1086 = vsel %vm323, 0.0, %v1078
      %v1087 = vsel %vm323, 0.0, %v1079
      %v1088 = vsel %vm323, 0.0, %v1080
      %v1089 = vsel %vm323, 0.0, %v1081
      %v1090 = vsel %vm323, 0.0, %v1082
      %v1091 = vsel %vm323, 0.0, %v1083
      %v1092 = vsel %vm323, 0.0, %v1084
      %v1093 = vsel %vm323, 0.0, %v1085
      %1094 = vrot.lane.b32.xlu0 %v1006, 127
      %v1095 = vpop.permute.xlu0 %1094
      %1096 = vrot.lane.b32.xlu0 %v1007, 127
      %v1097 = vpop.permute.xlu0 %1096
      %1098 = vrot.lane.b32.xlu0 %v1008, 127
      %v1099 = vpop.permute.xlu0 %1098
      %1100 = vrot.lane.b32.xlu0 %v1009, 127
      %v1101 = vpop.permute.xlu0 %1100
      %1102 = vrot.lane.b32.xlu0 %v1010, 127
      %v1103 = vpop.permute.xlu0 %1102
      %1104 = vrot.lane.b32.xlu0 %v1011, 127
      %v1105 = vpop.permute.xlu0 %1104
      %1106 = vrot.lane.b32.xlu0 %v1012, 127
      %v1107 = vpop.permute.xlu0 %1106
      %1108 = vrot.lane.b32.xlu0 %v1013, 127
      %v1109 = vpop.permute.xlu0 %1108
      %v1118 = vsel %vm357, %v1095, 0.0
      %v1119 = vsel %vm357, %v1097, 0.0
      %v1120 = vsel %vm357, %v1099, 0.0
      %v1121 = vsel %vm357, %v1101, 0.0
      %v1122 = vsel %vm357, %v1103, 0.0
      %v1123 = vsel %vm357, %v1105, 0.0
      %v1124 = vsel %vm357, %v1107, 0.0
      %v1125 = vsel %vm357, %v1109, 0.0
      %v1126 = vsel %vm367, 0.0, %v1118
      %v1127 = vsel %vm367, 0.0, %v1119
      %v1128 = vsel %vm367, 0.0, %v1120
      %v1129 = vsel %vm367, 0.0, %v1121
      %v1130 = vsel %vm367, 0.0, %v1122
      %v1131 = vsel %vm367, 0.0, %v1123
      %v1132 = vsel %vm367, 0.0, %v1124
      %v1133 = vsel %vm367, 0.0, %v1125
      %1150 = vrot.lane.b32.xlu0 %v1086, 4
      %v1151 = vpop.permute.xlu0 %1150
      %1152 = vrot.lane.b32.xlu0 %v1087, 4
      %v1153 = vpop.permute.xlu0 %1152
      %1154 = vrot.lane.b32.xlu0 %v1088, 4
      %v1155 = vpop.permute.xlu0 %1154
      %1156 = vrot.lane.b32.xlu0 %v1089, 4
      %v1157 = vpop.permute.xlu0 %1156
      %1158 = vrot.lane.b32.xlu0 %v1090, 4
      %v1159 = vpop.permute.xlu0 %1158
      %1160 = vrot.lane.b32.xlu0 %v1091, 4
      %v1161 = vpop.permute.xlu0 %1160
      %1162 = vrot.lane.b32.xlu0 %v1092, 4
      %v1163 = vpop.permute.xlu0 %1162
      %1164 = vrot.lane.b32.xlu0 %v1093, 4
      %v1165 = vpop.permute.xlu0 %1164
      %1166 = vrot.lane.b32.xlu0 %v1006, 4
      %v1167 = vpop.permute.xlu0 %1166
      %1168 = vrot.lane.b32.xlu0 %v1007, 4
      %v1169 = vpop.permute.xlu0 %1168
      %1170 = vrot.lane.b32.xlu0 %v1008, 4
      %v1171 = vpop.permute.xlu0 %1170
      %1172 = vrot.lane.b32.xlu0 %v1009, 4
      %v1173 = vpop.permute.xlu0 %1172
      %1174 = vrot.lane.b32.xlu0 %v1010, 4
      %v1175 = vpop.permute.xlu0 %1174
      %1176 = vrot.lane.b32.xlu0 %v1011, 4
      %v1177 = vpop.permute.xlu0 %1176
      %1178 = vrot.lane.b32.xlu0 %v1012, 4
      %v1179 = vpop.permute.xlu0 %1178
      %1180 = vrot.lane.b32.xlu0 %v1013, 4
      %v1181 = vpop.permute.xlu0 %1180
      %1182 = vrot.lane.b32.xlu0 %v1126, 4
      %v1183 = vpop.permute.xlu0 %1182
      %1184 = vrot.lane.b32.xlu0 %v1127, 4
      %v1185 = vpop.permute.xlu0 %1184
      %1186 = vrot.lane.b32.xlu0 %v1128, 4
      %v1187 = vpop.permute.xlu0 %1186
      %1188 = vrot.lane.b32.xlu0 %v1129, 4
      %v1189 = vpop.permute.xlu0 %1188
      %1190 = vrot.lane.b32.xlu0 %v1130, 4
      %v1191 = vpop.permute.xlu0 %1190
      %1192 = vrot.lane.b32.xlu0 %v1131, 4
      %v1193 = vpop.permute.xlu0 %1192
      %1194 = vrot.lane.b32.xlu0 %v1132, 4
      %v1195 = vpop.permute.xlu0 %1194
      %1196 = vrot.lane.b32.xlu0 %v1133, 4
      %v1197 = vpop.permute.xlu0 %1196
      %v1222 = vsel %vm464, 0.0, %v1151
      %v1223 = vsel %vm464, 0.0, %v1153
      %v1224 = vsel %vm464, 0.0, %v1155
      %v1225 = vsel %vm464, 0.0, %v1157
      %v1226 = vsel %vm464, 0.0, %v1159
      %v1227 = vsel %vm464, 0.0, %v1161
      %v1228 = vsel %vm464, 0.0, %v1163
      %v1229 = vsel %vm464, 0.0, %v1165
      %v1230 = vsel %vm464, 0.0, %v1167
      %v1231 = vsel %vm464, 0.0, %v1169
      %v1232 = vsel %vm464, 0.0, %v1171
      %v1233 = vsel %vm464, 0.0, %v1173
      %v1234 = vsel %vm464, 0.0, %v1175
      %v1235 = vsel %vm464, 0.0, %v1177
      %v1236 = vsel %vm464, 0.0, %v1179
      %v1237 = vsel %vm464, 0.0, %v1181
      %v1238 = vsel %vm464, 0.0, %v1183
      %v1239 = vsel %vm464, 0.0, %v1185
      %v1240 = vsel %vm464, 0.0, %v1187
      %v1241 = vsel %vm464, 0.0, %v1189
      %v1242 = vsel %vm464, 0.0, %v1191
      %v1243 = vsel %vm464, 0.0, %v1193
      %v1244 = vsel %vm464, 0.0, %v1195
      %v1245 = vsel %vm464, 0.0, %v1197
      %v1246 = vsel %vm489, %v1222, 0.0
      %v1247 = vsel %vm489, %v1223, 0.0
      %v1248 = vsel %vm489, %v1224, 0.0
      %v1249 = vsel %vm489, %v1225, 0.0
      %v1250 = vsel %vm489, %v1226, 0.0
      %v1251 = vsel %vm489, %v1227, 0.0
      %v1252 = vsel %vm489, %v1228, 0.0
      %v1253 = vsel %vm489, %v1229, 0.0
      %v1254 = vsel %vm489, %v1230, 0.0
      %v1255 = vsel %vm489, %v1231, 0.0
      %v1256 = vsel %vm489, %v1232, 0.0
      %v1257 = vsel %vm489, %v1233, 0.0
      %v1258 = vsel %vm489, %v1234, 0.0
      %v1259 = vsel %vm489, %v1235, 0.0
      %v1260 = vsel %vm489, %v1236, 0.0
      %v1261 = vsel %vm489, %v1237, 0.0
      %v1262 = vsel %vm489, %v1238, 0.0
      %v1263 = vsel %vm489, %v1239, 0.0
      %v1264 = vsel %vm489, %v1240, 0.0
      %v1265 = vsel %vm489, %v1241, 0.0
      %v1266 = vsel %vm489, %v1242, 0.0
      %v1267 = vsel %vm489, %v1243, 0.0
      %v1268 = vsel %vm489, %v1244, 0.0
      %v1269 = vsel %vm489, %v1245, 0.0
      %v1270 = vpack.c.bf16 %v1247, %v1246
      %v1271 = vpack.c.bf16 %v1249, %v1248
      %v1272 = vpack.c.bf16 %v1251, %v1250
      %v1273 = vpack.c.bf16 %v1253, %v1252
      %v1274 = vpack.c.bf16 %v1255, %v1254
      %v1275 = vpack.c.bf16 %v1257, %v1256
      %v1276 = vpack.c.bf16 %v1259, %v1258
      %v1277 = vpack.c.bf16 %v1261, %v1260
      %v1278 = vpack.c.bf16 %v1263, %v1262
      %v1279 = vpack.c.bf16 %v1265, %v1264
      %v1280 = vpack.c.bf16 %v1267, %v1266
      %v1281 = vpack.c.bf16 %v1269, %v1268
      %v1290 = vunpack.c.l.b16 %v1022
      %v1291 = vunpack.c.h.b16 %v1022
      %v1292 = vunpack.c.l.b16 %v1023
      %v1293 = vunpack.c.h.b16 %v1023
      %v1294 = vunpack.c.l.b16 %v1024
      %v1295 = vunpack.c.h.b16 %v1024
      %v1296 = vunpack.c.l.b16 %v1025
      %v1297 = vunpack.c.h.b16 %v1025
      %v1298 = vunpack.c.l.b16 %v1026
      %v1299 = vunpack.c.h.b16 %v1026
      %v1300 = vunpack.c.l.b16 %v1027
      %v1301 = vunpack.c.h.b16 %v1027
      %v1302 = vunpack.c.l.b16 %v1028
      %v1303 = vunpack.c.h.b16 %v1028
      %v1304 = vunpack.c.l.b16 %v1029
      %v1305 = vunpack.c.h.b16 %v1029
      %v1306 = vpack.c.b16 %v1292, %v1290
      %v1307 = vpack.c.b16 %v1293, %v1291
      %v1308 = vpack.c.b16 %v1296, %v1294
      %v1309 = vpack.c.b16 %v1297, %v1295
      %v1310 = vpack.c.b16 %v1300, %v1298
      %v1311 = vpack.c.b16 %v1301, %v1299
      %v1312 = vpack.c.b16 %v1304, %v1302
      %v1313 = vpack.c.b16 %v1305, %v1303
      %1330 = vrot.lane.b32.xlu0 %v1270, 124
      %v1331 = vpop.permute.xlu0 %1330
      %1332 = vrot.lane.b32.xlu0 %v1271, 124
      %v1333 = vpop.permute.xlu0 %1332
      %1334 = vrot.lane.b32.xlu0 %v1272, 124
      %v1335 = vpop.permute.xlu0 %1334
      %1336 = vrot.lane.b32.xlu0 %v1273, 124
      %v1337 = vpop.permute.xlu0 %1336
      %1338 = vrot.lane.b32.xlu0 %v1274, 124
      %v1339 = vpop.permute.xlu0 %1338
      %1340 = vrot.lane.b32.xlu0 %v1275, 124
      %v1341 = vpop.permute.xlu0 %1340
      %1342 = vrot.lane.b32.xlu0 %v1276, 124
      %v1343 = vpop.permute.xlu0 %1342
      %1344 = vrot.lane.b32.xlu0 %v1277, 124
      %v1345 = vpop.permute.xlu0 %1344
      %1346 = vrot.lane.b32.xlu0 %v1278, 124
      %v1347 = vpop.permute.xlu0 %1346
      %1348 = vrot.lane.b32.xlu0 %v1279, 124
      %v1349 = vpop.permute.xlu0 %1348
      %1350 = vrot.lane.b32.xlu0 %v1280, 124
      %v1351 = vpop.permute.xlu0 %1350
      %1352 = vrot.lane.b32.xlu0 %v1281, 124
      %v1353 = vpop.permute.xlu0 %1352
      %v1367 = vsel %vm610, %v1307, 0
      %v1370 = vsel %vm610, %v1309, 0
      %v1373 = vsel %vm610, %v1311, 0
      %v1376 = vsel %vm610, %v1313, 0
      %1378 = vmatprep.subr.bf16.mxu0 0
      %1379 = vmatpush1.bf16.msra.mxu0 %v1331
      %1380 = vmatprep.subr.bf16.mxu0 0
      %1381 = vmatpush1.bf16.msra.mxu0 %v1333
      %1382 = vmatprep.subr.bf16.mxu0 0
      %1383 = vmatpush1.bf16.msra.mxu0 %v1335
      %1384 = vmatprep.subr.bf16.mxu0 0
      %1385 = vmatpush1.bf16.msra.mxu0 %v1337
      %1386 = vmatprep.subr.bf16.mxu0 0
      %1387 = vmatpush1.bf16.msra.mxu0 %v1339
      %1388 = vmatprep.subr.bf16.mxu0 0
      %1389 = vmatpush1.bf16.msra.mxu0 %v1341
      %1390 = vmatprep.subr.bf16.mxu0 0
      %1391 = vmatpush1.bf16.msra.mxu0 %v1343
      %1392 = vmatprep.subr.bf16.mxu0 0
      %1393 = vmatpush1.bf16.msra.mxu0 %v1345
      %1394 = vmatprep.subr.bf16.mxu0 0
      %1395 = vmatpush1.bf16.msra.mxu0 %v1347
      %1396 = vmatprep.subr.bf16.mxu0 0
      %1397 = vmatpush1.bf16.msra.mxu0 %v1349
      %1398 = vmatprep.subr.bf16.mxu0 0
      %1399 = vmatpush1.bf16.msra.mxu0 %v1351
      %1400 = vmatprep.subr.bf16.mxu0 0
      %1401 = vmatpush1.bf16.msra.mxu0 %v1353
      %1402 = vmatprep.subr.bf16.mxu0 0
      %1403 = vmatpush1.bf16.msra.mxu0 0
      %1404 = vmatprep.subr.bf16.mxu0 0
      %1405 = vmatpush1.bf16.msra.mxu0 0
      %1406 = vmatprep.subr.bf16.mxu0 0
      %1407 = vmatpush1.bf16.msra.mxu0 0
      %1408 = vmatprep.subr.bf16.mxu0 0
      %1409 = vmatpush1.bf16.msra.mxu0 0
      %1410 = vmatprep.mubr.bf16.mxu0 %v1367
      %1411 = vmatmul.mubr.bf16.gmra.mrb[0].mxu0 %v1306
      %v1412 = vpop.f32.mrb[0].mxu0
      %v1413 = vadd.f32 0.0, %v1412
      %v1414 = vpop.f32.mrb[0].mxu0
      %v1415 = vpop.f32.mrb[0].mxu0
      %v1416 = vadd.f32 0.0, %v1415
      %v1417 = vpop.f32.mrb[0].mxu0
      %1418 = vmatprep.mubr.bf16.mxu0 %v1370
      %1419 = vmatmul.mubr.bf16.gmra.mrb[0].mxu0 %v1308
      %v1420 = vpop.f32.mrb[0].mxu0
      %v1421 = vadd.f32 0.0, %v1420
      %v1422 = vpop.f32.mrb[0].mxu0
      %v1423 = vpop.f32.mrb[0].mxu0
      %v1424 = vadd.f32 0.0, %v1423
      %v1425 = vpop.f32.mrb[0].mxu0
      %1426 = vmatprep.mubr.bf16.mxu0 %v1373
      %1427 = vmatmul.mubr.bf16.gmra.mrb[0].mxu0 %v1310
      %v1428 = vpop.f32.mrb[0].mxu0
      %v1429 = vadd.f32 0.0, %v1428
      %v1430 = vpop.f32.mrb[0].mxu0
      %v1431 = vpop.f32.mrb[0].mxu0
      %v1432 = vadd.f32 0.0, %v1431
      %v1433 = vpop.f32.mrb[0].mxu0
      %1434 = vmatprep.mubr.bf16.mxu0 %v1376
      %1435 = vmatmul.mubr.bf16.gmra.mrb[0].mxu0 %v1312
      %v1436 = vpop.f32.mrb[0].mxu0
      %v1437 = vadd.f32 0.0, %v1436
      %v1438 = vpop.f32.mrb[0].mxu0
      %v1439 = vpop.f32.mrb[0].mxu0
      %v1440 = vadd.f32 0.0, %v1439
      %v1441 = vpop.f32.mrb[0].mxu0
      %1442 = vdwg.mxu0
      %v1451 = vunpack.c.l.b16 %v1014
      %v1452 = vunpack.c.h.b16 %v1014
      %v1453 = vunpack.c.l.b16 %v1015
      %v1454 = vunpack.c.h.b16 %v1015
      %v1455 = vunpack.c.l.b16 %v1016
      %v1456 = vunpack.c.h.b16 %v1016
      %v1457 = vunpack.c.l.b16 %v1017
      %v1458 = vunpack.c.h.b16 %v1017
      %v1459 = vunpack.c.l.b16 %v1018
      %v1460 = vunpack.c.h.b16 %v1018
      %v1461 = vunpack.c.l.b16 %v1019
      %v1462 = vunpack.c.h.b16 %v1019
      %v1463 = vunpack.c.l.b16 %v1020
      %v1464 = vunpack.c.h.b16 %v1020
      %v1465 = vunpack.c.l.b16 %v1021
      %v1466 = vunpack.c.h.b16 %v1021
      %v1467 = vpack.c.b16 %v1453, %v1451
      %v1468 = vpack.c.b16 %v1454, %v1452
      %v1469 = vpack.c.b16 %v1457, %v1455
      %v1470 = vpack.c.b16 %v1458, %v1456
      %v1471 = vpack.c.b16 %v1461, %v1459
      %v1472 = vpack.c.b16 %v1462, %v1460
      %v1473 = vpack.c.b16 %v1465, %v1463
      %v1474 = vpack.c.b16 %v1466, %v1464
      %v1480 = vsel %vm610, %v1468, 0
      %v1483 = vsel %vm610, %v1470, 0
      %v1486 = vsel %vm610, %v1472, 0
      %v1489 = vsel %vm610, %v1474, 0
      %1491 = vmatprep.subr.bf16.mxu0 0
      %1492 = vmatpush1.bf16.msra.mxu0 %v1270
      %1493 = vmatprep.subr.bf16.mxu0 0
      %1494 = vmatpush1.bf16.msra.mxu0 %v1271
      %1495 = vmatprep.subr.bf16.mxu0 0
      %1496 = vmatpush1.bf16.msra.mxu0 %v1272
      %1497 = vmatprep.subr.bf16.mxu0 0
      %1498 = vmatpush1.bf16.msra.mxu0 %v1273
      %1499 = vmatprep.subr.bf16.mxu0 0
      %1500 = vmatpush1.bf16.msra.mxu0 %v1274
      %1501 = vmatprep.subr.bf16.mxu0 0
      %1502 = vmatpush1.bf16.msra.mxu0 %v1275
      %1503 = vmatprep.subr.bf16.mxu0 0
      %1504 = vmatpush1.bf16.msra.mxu0 %v1276
      %1505 = vmatprep.subr.bf16.mxu0 0
      %1506 = vmatpush1.bf16.msra.mxu0 %v1277
      %1507 = vmatprep.subr.bf16.mxu0 0
      %1508 = vmatpush1.bf16.msra.mxu0 %v1278
      %1509 = vmatprep.subr.bf16.mxu0 0
      %1510 = vmatpush1.bf16.msra.mxu0 %v1279
      %1511 = vmatprep.subr.bf16.mxu0 0
      %1512 = vmatpush1.bf16.msra.mxu0 %v1280
      %1513 = vmatprep.subr.bf16.mxu0 0
      %1514 = vmatpush1.bf16.msra.mxu0 %v1281
      %1515 = vmatprep.subr.bf16.mxu0 0
      %1516 = vmatpush1.bf16.msra.mxu0 0
      %1517 = vmatprep.subr.bf16.mxu0 0
      %1518 = vmatpush1.bf16.msra.mxu0 0
      %1519 = vmatprep.subr.bf16.mxu0 0
      %1520 = vmatpush1.bf16.msra.mxu0 0
      %1521 = vmatprep.subr.bf16.mxu0 0
      %1522 = vmatpush1.bf16.msra.mxu0 0
      %1523 = vmatprep.mubr.bf16.mxu0 %v1480
      %1524 = vmatmul.mubr.bf16.gmra.mrb[0].mxu0 %v1467
      %v1525 = vpop.f32.mrb[0].mxu0
      %v1526 = vadd.f32 %v1413, %v1525
      %v1527 = vpop.f32.mrb[0].mxu0
      %v1528 = vpop.f32.mrb[0].mxu0
      %v1529 = vadd.f32 %v1416, %v1528
      %v1530 = vpop.f32.mrb[0].mxu0
      %1531 = vmatprep.mubr.bf16.mxu0 %v1483
      %1532 = vmatmul.mubr.bf16.gmra.mrb[0].mxu0 %v1469
      %v1533 = vpop.f32.mrb[0].mxu0
      %v1534 = vadd.f32 %v1421, %v1533
      %v1535 = vpop.f32.mrb[0].mxu0
      %v1536 = vpop.f32.mrb[0].mxu0
      %v1537 = vadd.f32 %v1424, %v1536
      %v1538 = vpop.f32.mrb[0].mxu0
      %1539 = vmatprep.mubr.bf16.mxu0 %v1486
      %1540 = vmatmul.mubr.bf16.gmra.mrb[0].mxu0 %v1471
      %v1541 = vpop.f32.mrb[0].mxu0
      %v1542 = vadd.f32 %v1429, %v1541
      %v1543 = vpop.f32.mrb[0].mxu0
      %v1544 = vpop.f32.mrb[0].mxu0
      %v1545 = vadd.f32 %v1432, %v1544
      %v1546 = vpop.f32.mrb[0].mxu0
      %1547 = vmatprep.mubr.bf16.mxu0 %v1489
      %1548 = vmatmul.mubr.bf16.gmra.mrb[0].mxu0 %v1473
      %v1549 = vpop.f32.mrb[0].mxu0
      %v1550 = vadd.f32 %v1437, %v1549
      %v1551 = vpop.f32.mrb[0].mxu0
      %v1552 = vpop.f32.mrb[0].mxu0
      %v1553 = vadd.f32 %v1440, %v1552
      %v1554 = vpop.f32.mrb[0].mxu0
      %1555 = vdwg.mxu0
      %v1564 = vunpack.c.l.b16 %v1030
      %v1565 = vunpack.c.h.b16 %v1030
      %v1566 = vunpack.c.l.b16 %v1031
      %v1567 = vunpack.c.h.b16 %v1031
      %v1568 = vunpack.c.l.b16 %v1032
      %v1569 = vunpack.c.h.b16 %v1032
      %v1570 = vunpack.c.l.b16 %v1033
      %v1571 = vunpack.c.h.b16 %v1033
      %v1572 = vunpack.c.l.b16 %v1034
      %v1573 = vunpack.c.h.b16 %v1034
      %v1574 = vunpack.c.l.b16 %v1035
      %v1575 = vunpack.c.h.b16 %v1035
      %v1576 = vunpack.c.l.b16 %v1036
      %v1577 = vunpack.c.h.b16 %v1036
      %v1578 = vunpack.c.l.b16 %v1037
      %v1579 = vunpack.c.h.b16 %v1037
      %v1580 = vpack.c.b16 %v1566, %v1564
      %v1581 = vpack.c.b16 %v1567, %v1565
      %v1582 = vpack.c.b16 %v1570, %v1568
      %v1583 = vpack.c.b16 %v1571, %v1569
      %v1584 = vpack.c.b16 %v1574, %v1572
      %v1585 = vpack.c.b16 %v1575, %v1573
      %v1586 = vpack.c.b16 %v1578, %v1576
      %v1587 = vpack.c.b16 %v1579, %v1577
      %1592 = vrot.lane.b32.xlu0 %v1270, 120
      %v1593 = vpop.permute.xlu0 %1592
      %1594 = vrot.lane.b32.xlu0 %v1271, 120
      %v1595 = vpop.permute.xlu0 %1594
      %1596 = vrot.lane.b32.xlu0 %v1272, 120
      %v1597 = vpop.permute.xlu0 %1596
      %1598 = vrot.lane.b32.xlu0 %v1273, 120
      %v1599 = vpop.permute.xlu0 %1598
      %1600 = vrot.lane.b32.xlu0 %v1274, 120
      %v1601 = vpop.permute.xlu0 %1600
      %1602 = vrot.lane.b32.xlu0 %v1275, 120
      %v1603 = vpop.permute.xlu0 %1602
      %1604 = vrot.lane.b32.xlu0 %v1276, 120
      %v1605 = vpop.permute.xlu0 %1604
      %1606 = vrot.lane.b32.xlu0 %v1277, 120
      %v1607 = vpop.permute.xlu0 %1606
      %1608 = vrot.lane.b32.xlu0 %v1278, 120
      %v1609 = vpop.permute.xlu0 %1608
      %1610 = vrot.lane.b32.xlu0 %v1279, 120
      %v1611 = vpop.permute.xlu0 %1610
      %1612 = vrot.lane.b32.xlu0 %v1280, 120
      %v1613 = vpop.permute.xlu0 %1612
      %1614 = vrot.lane.b32.xlu0 %v1281, 120
      %v1615 = vpop.permute.xlu0 %1614
      %v1629 = vsel %vm610, %v1581, 0
      %v1632 = vsel %vm610, %v1583, 0
      %v1635 = vsel %vm610, %v1585, 0
      %v1638 = vsel %vm610, %v1587, 0
      %1640 = vmatprep.subr.bf16.mxu0 0
      %1641 = vmatpush1.bf16.msra.mxu0 %v1593
      %1642 = vmatprep.subr.bf16.mxu0 0
      %1643 = vmatpush1.bf16.msra.mxu0 %v1595
      %1644 = vmatprep.subr.bf16.mxu0 0
      %1645 = vmatpush1.bf16.msra.mxu0 %v1597
      %1646 = vmatprep.subr.bf16.mxu0 0
      %1647 = vmatpush1.bf16.msra.mxu0 %v1599
      %1648 = vmatprep.subr.bf16.mxu0 0
      %1649 = vmatpush1.bf16.msra.mxu0 %v1601
      %1650 = vmatprep.subr.bf16.mxu0 0
      %1651 = vmatpush1.bf16.msra.mxu0 %v1603
      %1652 = vmatprep.subr.bf16.mxu0 0
      %1653 = vmatpush1.bf16.msra.mxu0 %v1605
      %1654 = vmatprep.subr.bf16.mxu0 0
      %1655 = vmatpush1.bf16.msra.mxu0 %v1607
      %1656 = vmatprep.subr.bf16.mxu0 0
      %1657 = vmatpush1.bf16.msra.mxu0 %v1609
      %1658 = vmatprep.subr.bf16.mxu0 0
      %1659 = vmatpush1.bf16.msra.mxu0 %v1611
      %1660 = vmatprep.subr.bf16.mxu0 0
      %1661 = vmatpush1.bf16.msra.mxu0 %v1613
      %1662 = vmatprep.subr.bf16.mxu0 0
      %1663 = vmatpush1.bf16.msra.mxu0 %v1615
      %1664 = vmatprep.subr.bf16.mxu0 0
      %1665 = vmatpush1.bf16.msra.mxu0 0
      %1666 = vmatprep.subr.bf16.mxu0 0
      %1667 = vmatpush1.bf16.msra.mxu0 0
      %1668 = vmatprep.subr.bf16.mxu0 0
      %1669 = vmatpush1.bf16.msra.mxu0 0
      %1670 = vmatprep.subr.bf16.mxu0 0
      %1671 = vmatpush1.bf16.msra.mxu0 0
      %1672 = vmatprep.mubr.bf16.mxu0 %v1629
      %1673 = vmatmul.mubr.bf16.gmra.mrb[0].mxu0 %v1580
      %v1674 = vpop.f32.mrb[0].mxu0
      %v1675 = vadd.f32 0.0, %v1674
      %v1676 = vpop.f32.mrb[0].mxu0
      %v1677 = vpop.f32.mrb[0].mxu0
      %v1678 = vadd.f32 0.0, %v1677
      %v1679 = vpop.f32.mrb[0].mxu0
      %1680 = vmatprep.mubr.bf16.mxu0 %v1632
      %1681 = vmatmul.mubr.bf16.gmra.mrb[0].mxu0 %v1582
      %v1682 = vpop.f32.mrb[0].mxu0
      %v1683 = vadd.f32 0.0, %v1682
      %v1684 = vpop.f32.mrb[0].mxu0
      %v1685 = vpop.f32.mrb[0].mxu0
      %v1686 = vadd.f32 0.0, %v1685
      %v1687 = vpop.f32.mrb[0].mxu0
      %1688 = vmatprep.mubr.bf16.mxu0 %v1635
      %1689 = vmatmul.mubr.bf16.gmra.mrb[0].mxu0 %v1584
      %v1690 = vpop.f32.mrb[0].mxu0
      %v1691 = vadd.f32 0.0, %v1690
      %v1692 = vpop.f32.mrb[0].mxu0
      %v1693 = vpop.f32.mrb[0].mxu0
      %v1694 = vadd.f32 0.0, %v1693
      %v1695 = vpop.f32.mrb[0].mxu0
      %1696 = vmatprep.mubr.bf16.mxu0 %v1638
      %1697 = vmatmul.mubr.bf16.gmra.mrb[0].mxu0 %v1586
      %v1698 = vpop.f32.mrb[0].mxu0
      %v1699 = vadd.f32 0.0, %v1698
      %v1700 = vpop.f32.mrb[0].mxu0
      %v1701 = vpop.f32.mrb[0].mxu0
      %v1702 = vadd.f32 0.0, %v1701
      %v1703 = vpop.f32.mrb[0].mxu0
      %1704 = vdwg.mxu0
      %v1705 = vadd.f32 %v1526, %v1675
      %v1706 = vadd.f32 %v1529, %v1678
      %v1707 = vadd.f32 %v1534, %v1683
      %v1708 = vadd.f32 %v1537, %v1686
      %v1709 = vadd.f32 %v1542, %v1691
      %v1710 = vadd.f32 %v1545, %v1694
      %v1711 = vadd.f32 %v1550, %v1699
      %v1712 = vadd.f32 %v1553, %v1702
      %1714 = vset.pattern.permute.xlu0 0
      %1715 = vperm.xlu0 %1714, %v1038
      %v1716 = vpop.permute.xlu0 %1715
      %1719 = vset.pattern.permute.xlu0 0
      %1720 = vperm.xlu0 %1719, %v1039
      %v1721 = vpop.permute.xlu0 %1720
      %1724 = vset.pattern.permute.xlu0 0
      %1725 = vperm.xlu0 %1724, %v1040
      %v1726 = vpop.permute.xlu0 %1725
      %1729 = vset.pattern.permute.xlu0 0
      %1730 = vperm.xlu0 %1729, %v1041
      %v1731 = vpop.permute.xlu0 %1730
      %1734 = vset.pattern.permute.xlu0 0
      %1735 = vperm.xlu0 %1734, %v1042
      %v1736 = vpop.permute.xlu0 %1735
      %1739 = vset.pattern.permute.xlu0 0
      %1740 = vperm.xlu0 %1739, %v1043
      %v1741 = vpop.permute.xlu0 %1740
      %1744 = vset.pattern.permute.xlu0 0
      %1745 = vperm.xlu0 %1744, %v1044
      %v1746 = vpop.permute.xlu0 %1745
      %1749 = vset.pattern.permute.xlu0 0
      %1750 = vperm.xlu0 %1749, %v1045
      %v1751 = vpop.permute.xlu0 %1750
      %v1753 = vadd.f32 %v1705, %v1716
      %v1754 = vadd.f32 %v1706, %v1721
      %v1755 = vadd.f32 %v1707, %v1726
      %v1756 = vadd.f32 %v1708, %v1731
      %v1757 = vadd.f32 %v1709, %v1736
      %v1758 = vadd.f32 %v1710, %v1741
      %v1759 = vadd.f32 %v1711, %v1746
      %v1760 = vadd.f32 %v1712, %v1751
      %v1761 = vmax.f32 %v1753, 0.0
      %v1762 = vmax.f32 %v1754, 0.0
      %v1763 = vmax.f32 %v1755, 0.0
      %v1764 = vmax.f32 %v1756, 0.0
      %v1765 = vmax.f32 %v1757, 0.0
      %v1766 = vmax.f32 %v1758, 0.0
      %v1767 = vmax.f32 %v1759, 0.0
      %v1768 = vmax.f32 %v1760, 0.0
      %vm1769 = vcmask 130048
      %1770 = vst.msk [vmem:[%s224] sm:$0xff] %vm1769, %v1761
      %1771 = vst.msk [vmem:[%s224 + $0x8] sm:$0xff] %vm1769, %v1762
      %1772 = vst.msk [vmem:[%s224 + $0x10] sm:$0xff] %vm1769, %v1763
      %1773 = vst.msk [vmem:[%s224 + $0x18] sm:$0xff] %vm1769, %v1764
      %1774 = vst.msk [vmem:[%s224 + $0x20] sm:$0xff] %vm1769, %v1765
      %1775 = vst.msk [vmem:[%s224 + $0x28] sm:$0xff] %vm1769, %v1766
      %1776 = vst.msk [vmem:[%s224 + $0x30] sm:$0xff] %vm1769, %v1767
      %1777 = vst.msk [vmem:[%s224 + $0x38] sm:$0xff] %vm1769, %v1768
      %p1778 = scmp.lt.s32.totalorder %s16, 1
      %s1779 = scalar_select %p1778, %s16, 1
      %s1780 = smul.addr %s1779, 8
      %s1781 = smul.addr %s1780, 8
      %s1782 = scalar_lea.vmem %s5, %s1781
      // Predicated region
      $region41: #{_lambda_.7} parent=39 // pred_check
        %p1783 = pneg %p144
      $region42: #{_lambda_.7} parent=39 // pred_check_branch
        %1785 = sbr.rel (%p1783) target = $region44
      $region43: #{_lambda_.7} parent=39 // pred_region
        _
      $region44: #{_lambda_.7} parent=39 // pred_fallthru
        _
    $region40: #{_lambda_.7} parent=5 // pred_fallthru
      _
    %p1786 = scmp.le.s32.totalorder 2, %s11
    // Predicated region
    $region45: #{_lambda_.7} parent=5 // pred_check
      %p1787 = pneg %p1786
    $region46: #{_lambda_.7} parent=5 // pred_check_branch
      %1789 = sbr.rel (%p1787) target = $region48
    $region47: #{_lambda_.7} parent=5 // pred_region
      %s1790 = ssub.s32 %s11, 2
      // Predicated region
      $region49: #{_lambda_.7} parent=47 // pred_check
        %p1791 = pneg %p150
      $region50: #{_lambda_.7} parent=47 // pred_check_branch
        %1793 = sbr.rel (%p1791) target = $region52
      $region51: #{_lambda_.7} parent=47 // pred_region
        %p1794 = scmp.lt.s32.totalorder %s17, 1
        %s1795 = scalar_select %p1794, %s17, 1
        %s1796 = smul.addr %s1795, 8
        %s1797 = smul.addr %s1796, 8
        %s1798 = scalar_lea.vmem %s5, %s1797
      $region52: #{_lambda_.7} parent=47 // pred_fallthru
        _
    $region48: #{_lambda_.7} parent=5 // pred_fallthru
      _
  $region6: #{_lambda_.7} parent=0 // loop_footer
    %s15 = sadd.s32 1, %s11
  $region7: #{_lambda_.7} parent=0 // loop_footer_branch
    %10 = sbr.rel target = $region3
  $region8: #{_lambda_.7} parent=0 // loop_exit
    _

// kernel: _lambda_.6
$region0: #{_lambda_.6}
  #allocation0 [shape = 'u32[]', space=smem, size = 0x4, offset = 0x4, fixed_abs, tag = 'smem constant byte address 0x4 - core index']
  #allocation1 [shape = 'u32[144,128]{1,0:T(1,128)}', space=vmem, size = 0x12000, scoped, tag = 'internal scratch']
  %s0 = inlined_call_operand.vmem [shape: f32[2,32,64], index: 0, kind: input, shape index: {}]
  %s1 = inlined_call_operand.vmem [shape: bf16[3,64,96], index: 1, kind: input, shape index: {}]
  %s2 = inlined_call_operand.vmem [shape: f32[64,1], index: 2, kind: input, shape index: {}]
  %s3 = inlined_call_operand.vmem [shape: bf16[3,64,192], index: 3, kind: input, shape index: {}]
  %s4 = inlined_call_operand.vmem [shape: f32[64,1], index: 4, kind: input, shape index: {}]
  %s5 = inlined_call_operand.vmem [shape: f32[4,64,16], index: 5, kind: input, shape index: {}]
  %s6 = inlined_call_operand.vmem [shape: f32[2,64,64], index: 6, kind: output, shape index: {0}]
  %s7 = inlined_call_operand.vmem [shape: f32[2,64,16], index: 7, kind: output, shape index: {1}]
  %8 = xla_tuple %s6, %s7
  %s9 = sld [smem:[#allocation0]]
  $region65: #{_lambda_.6} parent=0
    _
  %s11 = ssub.s32 1, %s9
  %s12 = scalar_select 0, %s11, %s9
  loop: start=0, step=1, limit=4
  $region2: #{_lambda_.6} parent=0 // loop_pre_header
    _
  $region3: #{_lambda_.6} parent=0 // loop_header
    %s14 = sphi 0, %s18
    %p15 = scmp.ge.s32.totalorder %s14, 4
    %s24 = sphi 0, %s26
    %s27 = sphi 0, %s24
    %s28 = sphi 0, %s27
    %s44 = sphi 0, %s28
    %s48 = sphi 0, %s48
    %s50 = sphi 0, %s48
    %s51 = sphi 0, %s50
    %s65 = sphi 0, %s51
    %s69 = sphi 0, %s69
    %s71 = sphi 0, %s69
    %s72 = sphi 0, %s71
    %s86 = sphi 0, %s72
    %s90 = sphi 0, %s90
    %s92 = sphi 0, %s90
    %s93 = sphi 0, %s92
    %s107 = sphi 0, %s93
    %s111 = sphi 0, %s111
    %s113 = sphi 0, %s111
    %s114 = sphi 0, %s113
    %s128 = sphi 0, %s114
    %s132 = sphi 0, %s132
    %s134 = sphi 0, %s132
    %s135 = sphi 0, %s134
    %s149 = sphi 0, %s135
    %s155 = sphi 0, %s157
    %s158 = sphi 0, %s155
    %s159 = sphi 0, %s158
    %s175 = sphi 0, %s159
    %s181 = sphi 0, %s183
    %s184 = sphi 0, %s181
    %s185 = sphi 0, %s184
    %s201 = sphi 0, %s185
  $region4: #{_lambda_.6} parent=0 // loop_header_branch
    %17 = sbr.rel (%p15) target = $region8
  $region5: #{_lambda_.6} parent=0 // loop_body
    %s19 = ssub.s32 %s14, 1
    %s20 = ssub.s32 %s14, 2
    %s21 = sadd.s32 %s14, 1
    %s22 = ssub.s32 %s14, %s21
    %p23 = scmp.eq.s32.totalorder %s22, 0
    %s25 = sadd.s32 %s24, 1
    %s26 = scalar_select %p23, %s24, %s25
    %p29 = pneg %p23
    %p30 = scmp.eq.s32.totalorder %s14, 1
    %p31 = por %p29, %p30
    %p32 = scmp.ne.s32.totalorder %s24, %s27
    %p33 = scmp.eq.s32.totalorder %s14, 0
    %p34 = por %p32, %p33
    %p35 = scmp.ne.s32.totalorder %s24, %s27
    %p36 = scmp.eq.s32.totalorder %s19, 1
    %p37 = por %p35, %p36
    %p38 = scmp.ne.s32.totalorder %s27, %s28
    %p39 = scmp.eq.s32.totalorder %s19, 0
    %p40 = por %p38, %p39
    %p41 = scmp.ne.s32.totalorder %s27, %s28
    %p42 = scmp.eq.s32.totalorder %s20, 1
    %p43 = por %p41, %p42
    %p45 = scmp.ne.s32.totalorder %s28, %s44
    %p46 = scmp.eq.s32.totalorder %s20, 0
    %p47 = por %p45, %p46
    %s49 = sadd.s32 %s48, 1
    %p52 = scmp.eq.s32.totalorder %s14, 1
    %p53 = scmp.ne.s32.totalorder %s48, %s50
    %p54 = scmp.eq.s32.totalorder %s14, 0
    %p55 = por %p53, %p54
    %p56 = scmp.ne.s32.totalorder %s48, %s50
    %p57 = scmp.eq.s32.totalorder %s19, 1
    %p58 = por %p56, %p57
    %p59 = scmp.ne.s32.totalorder %s50, %s51
    %p60 = scmp.eq.s32.totalorder %s19, 0
    %p61 = por %p59, %p60
    %p62 = scmp.ne.s32.totalorder %s50, %s51
    %p63 = scmp.eq.s32.totalorder %s20, 1
    %p64 = por %p62, %p63
    %p66 = scmp.ne.s32.totalorder %s51, %s65
    %p67 = scmp.eq.s32.totalorder %s20, 0
    %p68 = por %p66, %p67
    %s70 = sadd.s32 %s69, 1
    %p73 = scmp.eq.s32.totalorder %s14, 1
    %p74 = scmp.ne.s32.totalorder %s69, %s71
    %p75 = scmp.eq.s32.totalorder %s14, 0
    %p76 = por %p74, %p75
    %p77 = scmp.ne.s32.totalorder %s69, %s71
    %p78 = scmp.eq.s32.totalorder %s19, 1
    %p79 = por %p77, %p78
    %p80 = scmp.ne.s32.totalorder %s71, %s72
    %p81 = scmp.eq.s32.totalorder %s19, 0
    %p82 = por %p80, %p81
    %p83 = scmp.ne.s32.totalorder %s71, %s72
    %p84 = scmp.eq.s32.totalorder %s20, 1
    %p85 = por %p83, %p84
    %p87 = scmp.ne.s32.totalorder %s72, %s86
    %p88 = scmp.eq.s32.totalorder %s20, 0
    %p89 = por %p87, %p88
    %s91 = sadd.s32 %s90, 1
    %p94 = scmp.eq.s32.totalorder %s14, 1
    %p95 = scmp.ne.s32.totalorder %s90, %s92
    %p96 = scmp.eq.s32.totalorder %s14, 0
    %p97 = por %p95, %p96
    %p98 = scmp.ne.s32.totalorder %s90, %s92
    %p99 = scmp.eq.s32.totalorder %s19, 1
    %p100 = por %p98, %p99
    %p101 = scmp.ne.s32.totalorder %s92, %s93
    %p102 = scmp.eq.s32.totalorder %s19, 0
    %p103 = por %p101, %p102
    %p104 = scmp.ne.s32.totalorder %s92, %s93
    %p105 = scmp.eq.s32.totalorder %s20, 1
    %p106 = por %p104, %p105
    %p108 = scmp.ne.s32.totalorder %s93, %s107
    %p109 = scmp.eq.s32.totalorder %s20, 0
    %p110 = por %p108, %p109
    %s112 = sadd.s32 %s111, 1
    %p115 = scmp.eq.s32.totalorder %s14, 1
    %p116 = scmp.ne.s32.totalorder %s111, %s113
    %p117 = scmp.eq.s32.totalorder %s14, 0
    %p118 = por %p116, %p117
    %p119 = scmp.ne.s32.totalorder %s111, %s113
    %p120 = scmp.eq.s32.totalorder %s19, 1
    %p121 = por %p119, %p120
    %p122 = scmp.ne.s32.totalorder %s113, %s114
    %p123 = scmp.eq.s32.totalorder %s19, 0
    %p124 = por %p122, %p123
    %p125 = scmp.ne.s32.totalorder %s113, %s114
    %p126 = scmp.eq.s32.totalorder %s20, 1
    %p127 = por %p125, %p126
    %p129 = scmp.ne.s32.totalorder %s114, %s128
    %p130 = scmp.eq.s32.totalorder %s20, 0
    %p131 = por %p129, %p130
    %s133 = sadd.s32 %s132, 1
    %p136 = scmp.eq.s32.totalorder %s14, 1
    %p137 = scmp.ne.s32.totalorder %s132, %s134
    %p138 = scmp.eq.s32.totalorder %s14, 0
    %p139 = por %p137, %p138
    %p140 = scmp.ne.s32.totalorder %s132, %s134
    %p141 = scmp.eq.s32.totalorder %s19, 1
    %p142 = por %p140, %p141
    %p143 = scmp.ne.s32.totalorder %s134, %s135
    %p144 = scmp.eq.s32.totalorder %s19, 0
    %p145 = por %p143, %p144
    %p146 = scmp.ne.s32.totalorder %s134, %s135
    %p147 = scmp.eq.s32.totalorder %s20, 1
    %p148 = por %p146, %p147
    %p150 = scmp.ne.s32.totalorder %s135, %s149
    %p151 = scmp.eq.s32.totalorder %s20, 0
    %p152 = por %p150, %p151
    %s153 = ssub.s32 %s14, %s21
    %p154 = scmp.eq.s32.totalorder %s153, 0
    %s156 = sadd.s32 %s155, 1
    %s157 = scalar_select %p154, %s155, %s156
    %p160 = pneg %p154
    %p161 = scmp.eq.s32.totalorder %s14, 1
    %p162 = por %p160, %p161
    %p163 = scmp.ne.s32.totalorder %s155, %s158
    %p164 = scmp.eq.s32.totalorder %s14, 0
    %p165 = por %p163, %p164
    %p166 = scmp.ne.s32.totalorder %s155, %s158
    %p167 = scmp.eq.s32.totalorder %s19, 1
    %p168 = por %p166, %p167
    %p169 = scmp.ne.s32.totalorder %s158, %s159
    %p170 = scmp.eq.s32.totalorder %s19, 0
    %p171 = por %p169, %p170
    %p172 = scmp.ne.s32.totalorder %s158, %s159
    %p173 = scmp.eq.s32.totalorder %s20, 1
    %p174 = por %p172, %p173
    %p176 = scmp.ne.s32.totalorder %s159, %s175
    %p177 = scmp.eq.s32.totalorder %s20, 0
    %p178 = por %p176, %p177
    %s179 = ssub.s32 %s14, %s21
    %p180 = scmp.eq.s32.totalorder %s179, 0
    %s182 = sadd.s32 %s181, 1
    %s183 = scalar_select %p180, %s181, %s182
    %p186 = pneg %p180
    %p187 = scmp.eq.s32.totalorder %s14, 1
    %p188 = por %p186, %p187
    %p189 = scmp.ne.s32.totalorder %s181, %s184
    %p190 = scmp.eq.s32.totalorder %s14, 0
    %p191 = por %p189, %p190
    %p192 = scmp.ne.s32.totalorder %s181, %s184
    %p193 = scmp.eq.s32.totalorder %s19, 1
    %p194 = por %p192, %p193
    %p195 = scmp.ne.s32.totalorder %s184, %s185
    %p196 = scmp.eq.s32.totalorder %s19, 0
    %p197 = por %p195, %p196
    %p198 = scmp.ne.s32.totalorder %s184, %s185
    %p199 = scmp.eq.s32.totalorder %s20, 1
    %p200 = por %p198, %p199
    %p202 = scmp.ne.s32.totalorder %s185, %s201
    %p203 = scmp.eq.s32.totalorder %s20, 0
    %p204 = por %p202, %p203
    %p205 = scmp.le.s32.totalorder 1, %s14
    %p206 = scmp.lt.s32.totalorder %s14, 3
    %p207 = pnand %p205, %p206
    %p208 = pneg %p207
    // Predicated region
    $region9: #{_lambda_.6} parent=5 // pred_check
      _
    $region10: #{_lambda_.6} parent=5 // pred_check_branch
      %210 = sbr.rel (%p207) target = $region12
    $region11: #{_lambda_.6} parent=5 // pred_region
      %s211 = ssub.s32 %s14, 1
      // Predicated region
      $region13: #{_lambda_.6} parent=11 // pred_check
        %p212 = pneg %p61
      $region14: #{_lambda_.6} parent=11 // pred_check_branch
        %214 = sbr.rel (%p212) target = $region16
      $region15: #{_lambda_.6} parent=11 // pred_region
        _
      $region16: #{_lambda_.6} parent=11 // pred_fallthru
        _
      // Predicated region
      $region17: #{_lambda_.6} parent=11 // pred_check
        %p215 = pneg %p82
      $region18: #{_lambda_.6} parent=11 // pred_check_branch
        %217 = sbr.rel (%p215) target = $region20
      $region19: #{_lambda_.6} parent=11 // pred_region
        _
      $region20: #{_lambda_.6} parent=11 // pred_fallthru
        _
      // Predicated region
      $region21: #{_lambda_.6} parent=11 // pred_check
        %p218 = pneg %p103
      $region22: #{_lambda_.6} parent=11 // pred_check_branch
        %220 = sbr.rel (%p218) target = $region24
      $region23: #{_lambda_.6} parent=11 // pred_region
        _
      $region24: #{_lambda_.6} parent=11 // pred_fallthru
        _
      // Predicated region
      $region25: #{_lambda_.6} parent=11 // pred_check
        %p221 = pneg %p124
      $region26: #{_lambda_.6} parent=11 // pred_check_branch
        %223 = sbr.rel (%p221) target = $region28
      $region27: #{_lambda_.6} parent=11 // pred_region
        _
      $region28: #{_lambda_.6} parent=11 // pred_fallthru
        _
      // Predicated region
      $region29: #{_lambda_.6} parent=11 // pred_check
        %p224 = pneg %p145
      $region30: #{_lambda_.6} parent=11 // pred_check_branch
        %226 = sbr.rel (%p224) target = $region32
      $region31: #{_lambda_.6} parent=11 // pred_region
        _
      $region32: #{_lambda_.6} parent=11 // pred_fallthru
        _
    $region12: #{_lambda_.6} parent=5 // pred_fallthru
      _
    %p227 = scmp.lt.s32.totalorder %s14, 2
    // Predicated region
    $region33: #{_lambda_.6} parent=5 // pred_check
      %p228 = pneg %p227
    $region34: #{_lambda_.6} parent=5 // pred_check_branch
      %230 = sbr.rel (%p228) target = $region36
    $region35: #{_lambda_.6} parent=5 // pred_region
      // Predicated region
      $region37: #{_lambda_.6} parent=35 // pred_check
        %p231 = pneg %p34
      $region38: #{_lambda_.6} parent=35 // pred_check_branch
        %233 = sbr.rel (%p231) target = $region40
      $region39: #{_lambda_.6} parent=35 // pred_region
        %p234 = scmp.lt.s32.totalorder %s14, 1
        %s235 = scalar_select %p234, %s14, 1
        %s236 = smul.addr %s235, 4
        %s237 = smul.addr %s236, 8
        %s238 = scalar_lea.vmem %s0, %s237
      $region40: #{_lambda_.6} parent=35 // pred_fallthru
        _
    $region36: #{_lambda_.6} parent=5 // pred_fallthru
      _
    %p239 = scmp.le.s32.totalorder 1, %s14
    %p240 = scmp.lt.s32.totalorder %s14, 3
    %p241 = pnand %p239, %p240
    %p242 = pneg %p241
    // Predicated region
    $region41: #{_lambda_.6} parent=5 // pred_check
      _
    $region42: #{_lambda_.6} parent=5 // pred_check_branch
      %244 = sbr.rel (%p241) target = $region44
    $region43: #{_lambda_.6} parent=5 // pred_region
      %s245 = ssub.s32 %s14, 1
      %p246 = scmp.lt.s32.totalorder %s19, 1
      %s247 = scalar_select %p246, %s19, 1
      %s248 = smul.addr %s247, 4
      %s249 = smul.addr %s248, 8
      %s250 = scalar_lea.vmem %s0, %s249
      %p251 = pneg %p40
      %p252 = pneg %p37
      %p253 = pneg %p61
      %p254 = pneg %p58
      %p255 = pneg %p82
      %p256 = pneg %p79
      %p257 = pneg %p103
      %p258 = pneg %p100
      %p259 = pneg %p124
      %p260 = pneg %p121
      %p261 = pneg %p145
      %p262 = pneg %p142
      %p263 = pneg %p171
      %p264 = pneg %p168
      %p265 = scmp.lt.s32.totalorder %s19, 1
      %s266 = scalar_select %p265, %s19, 1
      %s267 = smul.addr %s266, 8
      %s268 = smul.addr %s267, 8
      %s269 = scalar_lea.vmem %s6, %s268
      %p270 = pneg %p197
      %p271 = pneg %p194
      %p272 = scmp.lt.s32.totalorder %s19, 1
      %s273 = scalar_select %p272, %s19, 1
      %s274 = smul.addr %s273, 8
      %s275 = smul.addr %s274, 8
      %s276 = scalar_lea.vmem %s7, %s275
      %p277 = scmp.lt.s32.totalorder %s19, 1
      %s278 = scalar_select %p277, %s19, 1
      %s279 = smul.addr %s278, 4
      %s280 = smul.addr %s279, 8
      %s281 = scalar_lea.vmem %s0, %s280
      %p282 = scmp.lt.s32.totalorder %s19, 1
      %s283 = scalar_select %p282, %s19, 1
      %s284 = smul.addr %s283, 8
      %s285 = smul.addr %s284, 8
      %s286 = scalar_lea.vmem %s6, %s285
      %p287 = scmp.lt.s32.totalorder %s19, 1
      %s288 = scalar_select %p287, %s19, 1
      %s289 = smul.addr %s288, 8
      %s290 = smul.addr %s289, 8
      %s291 = scalar_lea.vmem %s7, %s290
      %v293 = vld [vmem:[%s281] sm:$0xff]
      %v294 = vld [vmem:[%s281 + $0x8] sm:$0xff]
      %v295 = vld [vmem:[%s281 + $0x10] sm:$0xff]
      %v296 = vld [vmem:[%s281 + $0x18] sm:$0xff]
      %v297 = vld [vmem:[%s1] sm:$0xf]
      %v298 = vld [vmem:[%s1 + $0x4] sm:$0xf]
      %v299 = vld [vmem:[%s1 + $0x8] sm:$0xf]
      %v300 = vld [vmem:[%s1 + $0xc] sm:$0xf]
      %v301 = vld [vmem:[%s1 + $0x10] sm:$0xf]
      %v302 = vld [vmem:[%s1 + $0x14] sm:$0xf]
      %v303 = vld [vmem:[%s1 + $0x18] sm:$0xf]
      %v304 = vld [vmem:[%s1 + $0x1c] sm:$0xf]
      %v305 = vld [vmem:[%s1 + $0x20] sm:$0xf]
      %v306 = vld [vmem:[%s1 + $0x24] sm:$0xf]
      %v307 = vld [vmem:[%s1 + $0x28] sm:$0xf]
      %v308 = vld [vmem:[%s1 + $0x2c] sm:$0xf]
      %v309 = vld [vmem:[%s1 + $0x30] sm:$0xf]
      %v310 = vld [vmem:[%s1 + $0x34] sm:$0xf]
      %v311 = vld [vmem:[%s1 + $0x38] sm:$0xf]
      %v312 = vld [vmem:[%s1 + $0x3c] sm:$0xf]
      %v313 = vld [vmem:[%s1 + $0x40] sm:$0xf]
      %v314 = vld [vmem:[%s1 + $0x44] sm:$0xf]
      %v315 = vld [vmem:[%s1 + $0x48] sm:$0xf]
      %v316 = vld [vmem:[%s1 + $0x4c] sm:$0xf]
      %v317 = vld [vmem:[%s1 + $0x50] sm:$0xf]
      %v318 = vld [vmem:[%s1 + $0x54] sm:$0xf]
      %v319 = vld [vmem:[%s1 + $0x58] sm:$0xf]
      %v320 = vld [vmem:[%s1 + $0x5c] sm:$0xf]
      %v321 = vld [vmem:[%s2] sm:$0xff]
      %v322 = vld [vmem:[%s2 + $0x8] sm:$0xff]
      %v323 = vld [vmem:[%s2 + $0x10] sm:$0xff]
      %v324 = vld [vmem:[%s2 + $0x18] sm:$0xff]
      %v325 = vld [vmem:[%s2 + $0x20] sm:$0xff]
      %v326 = vld [vmem:[%s2 + $0x28] sm:$0xff]
      %v327 = vld [vmem:[%s2 + $0x30] sm:$0xff]
      %v328 = vld [vmem:[%s2 + $0x38] sm:$0xff]
      %v329 = vlaneseq
      %v330 = vand.u32 %v329, 127
      %vm331 = vcmp.lt.s32.totalorder %v330, 0
      %v332 = vsub.s32 0, %v330
      %v333 = vsel %vm331, %v332, %v330
      %v334 = vshrl.u32 %v333, 3
      %v335 = vand.u32 %v333, 7
      %v336 = vsub.s32 0, %v335
      %v337 = vsel %vm331, %v336, %v335
      %vm338 = vcmp.ne.s32.totalorder %v337, 0
      %vm339 = vcmp.lt.s32.totalorder %v337, 0
      %vm340 = vmand %vm339, %vm338
      %v341 = vadd.s32 %v337, 8
      %v342 = vsel %vm340, %v341, %v337
      %vm343 = vcmp.eq.s32.totalorder %v342, 0
      %348 = vrot.lane.b32.xlu0 %v293, 1
      %v349 = vpop.permute.xlu0 %348
      %350 = vrot.lane.b32.xlu0 %v294, 1
      %v351 = vpop.permute.xlu0 %350
      %352 = vrot.lane.b32.xlu0 %v295, 1
      %v353 = vpop.permute.xlu0 %352
      %354 = vrot.lane.b32.xlu0 %v296, 1
      %v355 = vpop.permute.xlu0 %354
      %vm360 = vcmask 7168
      %v361 = vsel %vm360, 0.0, %v349
      %v362 = vsel %vm360, 0.0, %v351
      %v363 = vsel %vm360, 0.0, %v353
      %v364 = vsel %vm360, 0.0, %v355
      %v365 = vsel %vm343, 1, 0
      %vm366 = vcmp.eq.s32.totalorder %v365, 1
      %v367 = vsel %vm366, 0.0, %v361
      %v368 = vsel %vm366, 0.0, %v362
      %v369 = vsel %vm366, 0.0, %v363
      %v370 = vsel %vm366, 0.0, %v364
      %vm371 = vcmp.eq.s32.totalorder %v342, 7
      %372 = vrot.lane.b32.xlu0 %v293, 127
      %v373 = vpop.permute.xlu0 %372
      %374 = vrot.lane.b32.xlu0 %v294, 127
      %v375 = vpop.permute.xlu0 %374
      %376 = vrot.lane.b32.xlu0 %v295, 127
      %v377 = vpop.permute.xlu0 %376
      %378 = vrot.lane.b32.xlu0 %v296, 127
      %v379 = vpop.permute.xlu0 %378
      %vm384 = vcmask 515072
      %v385 = vsel %vm384, %v373, 0.0
      %v386 = vsel %vm384, %v375, 0.0
      %v387 = vsel %vm384, %v377, 0.0
      %v388 = vsel %vm384, %v379, 0.0
      %v389 = vsel %vm371, 1, 0
      %vm390 = vcmp.eq.s32.totalorder %v389, 1
      %v391 = vsel %vm390, 0.0, %v385
      %v392 = vsel %vm390, 0.0, %v386
      %v393 = vsel %vm390, 0.0, %v387
      %v394 = vsel %vm390, 0.0, %v388
      %403 = vrot.lane.b32.xlu0 %v367, 8
      %v404 = vpop.permute.xlu0 %403
      %405 = vrot.lane.b32.xlu0 %v368, 8
      %v406 = vpop.permute.xlu0 %405
      %407 = vrot.lane.b32.xlu0 %v369, 8
      %v408 = vpop.permute.xlu0 %407
      %409 = vrot.lane.b32.xlu0 %v370, 8
      %v410 = vpop.permute.xlu0 %409
      %411 = vrot.lane.b32.xlu0 %v293, 8
      %v412 = vpop.permute.xlu0 %411
      %413 = vrot.lane.b32.xlu0 %v294, 8
      %v414 = vpop.permute.xlu0 %413
      %415 = vrot.lane.b32.xlu0 %v295, 8
      %v416 = vpop.permute.xlu0 %415
      %417 = vrot.lane.b32.xlu0 %v296, 8
      %v418 = vpop.permute.xlu0 %417
      %419 = vrot.lane.b32.xlu0 %v391, 8
      %v420 = vpop.permute.xlu0 %419
      %421 = vrot.lane.b32.xlu0 %v392, 8
      %v422 = vpop.permute.xlu0 %421
      %423 = vrot.lane.b32.xlu0 %v393, 8
      %v424 = vpop.permute.xlu0 %423
      %425 = vrot.lane.b32.xlu0 %v394, 8
      %v426 = vpop.permute.xlu0 %425
      %vm439 = vcmask 64512
      %v440 = vsel %vm439, 0.0, %v404
      %v441 = vsel %vm439, 0.0, %v406
      %v442 = vsel %vm439, 0.0, %v408
      %v443 = vsel %vm439, 0.0, %v410
      %v444 = vsel %vm439, 0.0, %v412
      %v445 = vsel %vm439, 0.0, %v414
      %v446 = vsel %vm439, 0.0, %v416
      %v447 = vsel %vm439, 0.0, %v418
      %v448 = vsel %vm439, 0.0, %v420
      %v449 = vsel %vm439, 0.0, %v422
      %v450 = vsel %vm439, 0.0, %v424
      %v451 = vsel %vm439, 0.0, %v426
      %vm452 = vcmask 588800
      %v453 = vsel %vm452, %v440, 0.0
      %v454 = vsel %vm452, %v441, 0.0
      %v455 = vsel %vm452, %v442, 0.0
      %v456 = vsel %vm452, %v443, 0.0
      %v457 = vsel %vm452, %v444, 0.0
      %v458 = vsel %vm452, %v445, 0.0
      %v459 = vsel %vm452, %v446, 0.0
      %v460 = vsel %vm452, %v447, 0.0
      %v461 = vsel %vm452, %v448, 0.0
      %v462 = vsel %vm452, %v449, 0.0
      %v463 = vsel %vm452, %v450, 0.0
      %v464 = vsel %vm452, %v451, 0.0
      %v465 = vpack.c.bf16 %v454, %v453
      %v466 = vpack.c.bf16 %v456, %v455
      %v467 = vpack.c.bf16 %v458, %v457
      %v468 = vpack.c.bf16 %v460, %v459
      %v469 = vpack.c.bf16 %v462, %v461
      %v470 = vpack.c.bf16 %v464, %v463
      %v479 = vunpack.c.l.b16 %v305
      %v480 = vunpack.c.l.b16 %v306
      %v481 = vunpack.c.l.b16 %v307
      %v482 = vunpack.c.l.b16 %v308
      %v483 = vunpack.c.l.b16 %v309
      %v484 = vunpack.c.l.b16 %v310
      %v485 = vunpack.c.l.b16 %v311
      %v486 = vunpack.c.l.b16 %v312
      %v487 = vpack.c.b16 %v480, %v479
      %v488 = vpack.c.b16 %v482, %v481
      %v489 = vpack.c.b16 %v484, %v483
      %v490 = vpack.c.b16 %v486, %v485
      %497 = vrot.lane.b32.xlu0 %v465, 120
      %v498 = vpop.permute.xlu0 %497
      %499 = vrot.lane.b32.xlu0 %v466, 120
      %v500 = vpop.permute.xlu0 %499
      %501 = vrot.lane.b32.xlu0 %v467, 120
      %v502 = vpop.permute.xlu0 %501
      %503 = vrot.lane.b32.xlu0 %v468, 120
      %v504 = vpop.permute.xlu0 %503
      %505 = vrot.lane.b32.xlu0 %v469, 120
      %v506 = vpop.permute.xlu0 %505
      %507 = vrot.lane.b32.xlu0 %v470, 120
      %v508 = vpop.permute.xlu0 %507
      %vm515 = vcmask 785408
      %v517 = vsel %vm515, %v487, 0
      %v520 = vsel %vm515, %v488, 0
      %v523 = vsel %vm515, %v489, 0
      %v526 = vsel %vm515, %v490, 0
      %528 = vmatprep.subr.bf16.mxu0 0
      %529 = vmatpush1.bf16.msra.mxu0 %v498
      %530 = vmatprep.subr.bf16.mxu0 0
      %531 = vmatpush1.bf16.msra.mxu0 %v500
      %532 = vmatprep.subr.bf16.mxu0 0
      %533 = vmatpush1.bf16.msra.mxu0 %v502
      %534 = vmatprep.subr.bf16.mxu0 0
      %535 = vmatpush1.bf16.msra.mxu0 %v504
      %536 = vmatprep.subr.bf16.mxu0 0
      %537 = vmatpush1.bf16.msra.mxu0 %v506
      %538 = vmatprep.subr.bf16.mxu0 0
      %539 = vmatpush1.bf16.msra.mxu0 %v508
      %540 = vmatprep.subr.bf16.mxu0 0
      %541 = vmatpush1.bf16.msra.mxu0 0
      %542 = vmatprep.subr.bf16.mxu0 0
      %543 = vmatpush1.bf16.msra.mxu0 0
      %544 = vmatprep.subr.bf16.mxu0 0
      %545 = vmatpush1.bf16.msra.mxu0 0
      %546 = vmatprep.subr.bf16.mxu0 0
      %547 = vmatpush1.bf16.msra.mxu0 0
      %548 = vmatprep.subr.bf16.mxu0 0
      %549 = vmatpush1.bf16.msra.mxu0 0
      %550 = vmatprep.subr.bf16.mxu0 0
      %551 = vmatpush1.bf16.msra.mxu0 0
      %552 = vmatprep.subr.bf16.mxu0 0
      %553 = vmatpush1.bf16.msra.mxu0 0
      %554 = vmatprep.subr.bf16.mxu0 0
      %555 = vmatpush1.bf16.msra.mxu0 0
      %556 = vmatprep.subr.bf16.mxu0 0
      %557 = vmatpush1.bf16.msra.mxu0 0
      %558 = vmatprep.subr.bf16.mxu0 0
      %559 = vmatpush1.bf16.msra.mxu0 0
      %560 = vmatprep.mubr.bf16.mxu0 0
      %561 = vmatmul.mubr.bf16.gmra.mrb[0].mxu0 %v517
      %v562 = vpop.f32.mrb[0].mxu0
      %v563 = vadd.f32 0.0, %v562
      %v564 = vpop.f32.mrb[0].mxu0
      %v565 = vpop.f32.mrb[0].mxu0
      %v566 = vadd.f32 0.0, %v565
      %v567 = vpop.f32.mrb[0].mxu0
      %568 = vmatprep.mubr.bf16.mxu0 0
      %569 = vmatmul.mubr.bf16.gmra.mrb[0].mxu0 %v520
      %v570 = vpop.f32.mrb[0].mxu0
      %v571 = vadd.f32 0.0, %v570
      %v572 = vpop.f32.mrb[0].mxu0
      %v573 = vpop.f32.mrb[0].mxu0
      %v574 = vadd.f32 0.0, %v573
      %v575 = vpop.f32.mrb[0].mxu0
      %576 = vmatprep.mubr.bf16.mxu0 0
      %577 = vmatmul.mubr.bf16.gmra.mrb[0].mxu0 %v523
      %v578 = vpop.f32.mrb[0].mxu0
      %v579 = vadd.f32 0.0, %v578
      %v580 = vpop.f32.mrb[0].mxu0
      %v581 = vpop.f32.mrb[0].mxu0
      %v582 = vadd.f32 0.0, %v581
      %v583 = vpop.f32.mrb[0].mxu0
      %584 = vmatprep.mubr.bf16.mxu0 0
      %585 = vmatmul.mubr.bf16.gmra.mrb[0].mxu0 %v526
      %v586 = vpop.f32.mrb[0].mxu0
      %v587 = vadd.f32 0.0, %v586
      %v588 = vpop.f32.mrb[0].mxu0
      %v589 = vpop.f32.mrb[0].mxu0
      %v590 = vadd.f32 0.0, %v589
      %v591 = vpop.f32.mrb[0].mxu0
      %592 = vdwg.mxu0
      %v601 = vunpack.c.l.b16 %v297
      %v602 = vunpack.c.l.b16 %v298
      %v603 = vunpack.c.l.b16 %v299
      %v604 = vunpack.c.l.b16 %v300
      %v605 = vunpack.c.l.b16 %v301
      %v606 = vunpack.c.l.b16 %v302
      %v607 = vunpack.c.l.b16 %v303
      %v608 = vunpack.c.l.b16 %v304
      %v609 = vpack.c.b16 %v602, %v601
      %v610 = vpack.c.b16 %v604, %v603
      %v611 = vpack.c.b16 %v606, %v605
      %v612 = vpack.c.b16 %v608, %v607
      %v614 = vsel %vm515, %v609, 0
      %v617 = vsel %vm515, %v610, 0
      %v620 = vsel %vm515, %v611, 0
      %v623 = vsel %vm515, %v612, 0
      %625 = vmatprep.subr.bf16.mxu0 0
      %626 = vmatpush1.bf16.msra.mxu0 %v465
      %627 = vmatprep.subr.bf16.mxu0 0
      %628 = vmatpush1.bf16.msra.mxu0 %v466
      %629 = vmatprep.subr.bf16.mxu0 0
      %630 = vmatpush1.bf16.msra.mxu0 %v467
      %631 = vmatprep.subr.bf16.mxu0 0
      %632 = vmatpush1.bf16.msra.mxu0 %v468
      %633 = vmatprep.subr.bf16.mxu0 0
      %634 = vmatpush1.bf16.msra.mxu0 %v469
      %635 = vmatprep.subr.bf16.mxu0 0
      %636 = vmatpush1.bf16.msra.mxu0 %v470
      %637 = vmatprep.subr.bf16.mxu0 0
      %638 = vmatpush1.bf16.msra.mxu0 0
      %639 = vmatprep.subr.bf16.mxu0 0
      %640 = vmatpush1.bf16.msra.mxu0 0
      %641 = vmatprep.subr.bf16.mxu0 0
      %642 = vmatpush1.bf16.msra.mxu0 0
      %643 = vmatprep.subr.bf16.mxu0 0
      %644 = vmatpush1.bf16.msra.mxu0 0
      %645 = vmatprep.subr.bf16.mxu0 0
      %646 = vmatpush1.bf16.msra.mxu0 0
      %647 = vmatprep.subr.bf16.mxu0 0
      %648 = vmatpush1.bf16.msra.mxu0 0
      %649 = vmatprep.subr.bf16.mxu0 0
      %650 = vmatpush1.bf16.msra.mxu0 0
      %651 = vmatprep.subr.bf16.mxu0 0
      %652 = vmatpush1.bf16.msra.mxu0 0
      %653 = vmatprep.subr.bf16.mxu0 0
      %654 = vmatpush1.bf16.msra.mxu0 0
      %655 = vmatprep.subr.bf16.mxu0 0
      %656 = vmatpush1.bf16.msra.mxu0 0
      %657 = vmatprep.mubr.bf16.mxu0 0
      %658 = vmatmul.mubr.bf16.gmra.mrb[0].mxu0 %v614
      %v659 = vpop.f32.mrb[0].mxu0
      %v660 = vadd.f32 %v563, %v659
      %v661 = vpop.f32.mrb[0].mxu0
      %v662 = vpop.f32.mrb[0].mxu0
      %v663 = vadd.f32 %v566, %v662
      %v664 = vpop.f32.mrb[0].mxu0
      %665 = vmatprep.mubr.bf16.mxu0 0
      %666 = vmatmul.mubr.bf16.gmra.mrb[0].mxu0 %v617
      %v667 = vpop.f32.mrb[0].mxu0
      %v668 = vadd.f32 %v571, %v667
      %v669 = vpop.f32.mrb[0].mxu0
      %v670 = vpop.f32.mrb[0].mxu0
      %v671 = vadd.f32 %v574, %v670
      %v672 = vpop.f32.mrb[0].mxu0
      %673 = vmatprep.mubr.bf16.mxu0 0
      %674 = vmatmul.mubr.bf16.gmra.mrb[0].mxu0 %v620
      %v675 = vpop.f32.mrb[0].mxu0
      %v676 = vadd.f32 %v579, %v675
      %v677 = vpop.f32.mrb[0].mxu0
      %v678 = vpop.f32.mrb[0].mxu0
      %v679 = vadd.f32 %v582, %v678
      %v680 = vpop.f32.mrb[0].mxu0
      %681 = vmatprep.mubr.bf16.mxu0 0
      %682 = vmatmul.mubr.bf16.gmra.mrb[0].mxu0 %v623
      %v683 = vpop.f32.mrb[0].mxu0
      %v684 = vadd.f32 %v587, %v683
      %v685 = vpop.f32.mrb[0].mxu0
      %v686 = vpop.f32.mrb[0].mxu0
      %v687 = vadd.f32 %v590, %v686
      %v688 = vpop.f32.mrb[0].mxu0
      %689 = vdwg.mxu0
      %v698 = vunpack.c.l.b16 %v313
      %v699 = vunpack.c.l.b16 %v314
      %v700 = vunpack.c.l.b16 %v315
      %v701 = vunpack.c.l.b16 %v316
      %v702 = vunpack.c.l.b16 %v317
      %v703 = vunpack.c.l.b16 %v318
      %v704 = vunpack.c.l.b16 %v319
      %v705 = vunpack.c.l.b16 %v320
      %v706 = vpack.c.b16 %v699, %v698
      %v707 = vpack.c.b16 %v701, %v700
      %v708 = vpack.c.b16 %v703, %v702
      %v709 = vpack.c.b16 %v705, %v704
      %710 = vrot.lane.b32.xlu0 %v465, 112
      %v711 = vpop.permute.xlu0 %710
      %712 = vrot.lane.b32.xlu0 %v466, 112
      %v713 = vpop.permute.xlu0 %712
      %714 = vrot.lane.b32.xlu0 %v467, 112
      %v715 = vpop.permute.xlu0 %714
      %716 = vrot.lane.b32.xlu0 %v468, 112
      %v717 = vpop.permute.xlu0 %716
      %718 = vrot.lane.b32.xlu0 %v469, 112
      %v719 = vpop.permute.xlu0 %718
      %720 = vrot.lane.b32.xlu0 %v470, 112
      %v721 = vpop.permute.xlu0 %720
      %v729 = vsel %vm515, %v706, 0
      %v732 = vsel %vm515, %v707, 0
      %v735 = vsel %vm515, %v708, 0
      %v738 = vsel %vm515, %v709, 0
      %740 = vmatprep.subr.bf16.mxu0 0
      %741 = vmatpush1.bf16.msra.mxu0 %v711
      %742 = vmatprep.subr.bf16.mxu0 0
      %743 = vmatpush1.bf16.msra.mxu0 %v713
      %744 = vmatprep.subr.bf16.mxu0 0
      %745 = vmatpush1.bf16.msra.mxu0 %v715
      %746 = vmatprep.subr.bf16.mxu0 0
      %747 = vmatpush1.bf16.msra.mxu0 %v717
      %748 = vmatprep.subr.bf16.mxu0 0
      %749 = vmatpush1.bf16.msra.mxu0 %v719
      %750 = vmatprep.subr.bf16.mxu0 0
      %751 = vmatpush1.bf16.msra.mxu0 %v721
      %752 = vmatprep.subr.bf16.mxu0 0
      %753 = vmatpush1.bf16.msra.mxu0 0
      %754 = vmatprep.subr.bf16.mxu0 0
      %755 = vmatpush1.bf16.msra.mxu0 0
      %756 = vmatprep.subr.bf16.mxu0 0
      %757 = vmatpush1.bf16.msra.mxu0 0
      %758 = vmatprep.subr.bf16.mxu0 0
      %759 = vmatpush1.bf16.msra.mxu0 0
      %760 = vmatprep.subr.bf16.mxu0 0
      %761 = vmatpush1.bf16.msra.mxu0 0
      %762 = vmatprep.subr.bf16.mxu0 0
      %763 = vmatpush1.bf16.msra.mxu0 0
      %764 = vmatprep.subr.bf16.mxu0 0
      %765 = vmatpush1.bf16.msra.mxu0 0
      %766 = vmatprep.subr.bf16.mxu0 0
      %767 = vmatpush1.bf16.msra.mxu0 0
      %768 = vmatprep.subr.bf16.mxu0 0
      %769 = vmatpush1.bf16.msra.mxu0 0
      %770 = vmatprep.subr.bf16.mxu0 0
      %771 = vmatpush1.bf16.msra.mxu0 0
      %772 = vmatprep.mubr.bf16.mxu0 0
      %773 = vmatmul.mubr.bf16.gmra.mrb[0].mxu0 %v729
      %v774 = vpop.f32.mrb[0].mxu0
      %v775 = vadd.f32 0.0, %v774
      %v776 = vpop.f32.mrb[0].mxu0
      %v777 = vpop.f32.mrb[0].mxu0
      %v778 = vadd.f32 0.0, %v777
      %v779 = vpop.f32.mrb[0].mxu0
      %780 = vmatprep.mubr.bf16.mxu0 0
      %781 = vmatmul.mubr.bf16.gmra.mrb[0].mxu0 %v732
      %v782 = vpop.f32.mrb[0].mxu0
      %v783 = vadd.f32 0.0, %v782
      %v784 = vpop.f32.mrb[0].mxu0
      %v785 = vpop.f32.mrb[0].mxu0
      %v786 = vadd.f32 0.0, %v785
      %v787 = vpop.f32.mrb[0].mxu0
      %788 = vmatprep.mubr.bf16.mxu0 0
      %789 = vmatmul.mubr.bf16.gmra.mrb[0].mxu0 %v735
      %v790 = vpop.f32.mrb[0].mxu0
      %v791 = vadd.f32 0.0, %v790
      %v792 = vpop.f32.mrb[0].mxu0
      %v793 = vpop.f32.mrb[0].mxu0
      %v794 = vadd.f32 0.0, %v793
      %v795 = vpop.f32.mrb[0].mxu0
      %796 = vmatprep.mubr.bf16.mxu0 0
      %797 = vmatmul.mubr.bf16.gmra.mrb[0].mxu0 %v738
      %v798 = vpop.f32.mrb[0].mxu0
      %v799 = vadd.f32 0.0, %v798
      %v800 = vpop.f32.mrb[0].mxu0
      %v801 = vpop.f32.mrb[0].mxu0
      %v802 = vadd.f32 0.0, %v801
      %v803 = vpop.f32.mrb[0].mxu0
      %804 = vdwg.mxu0
      %v805 = vadd.f32 %v660, %v775
      %v806 = vadd.f32 %v663, %v778
      %v807 = vadd.f32 %v668, %v783
      %v808 = vadd.f32 %v671, %v786
      %v809 = vadd.f32 %v676, %v791
      %v810 = vadd.f32 %v679, %v794
      %v811 = vadd.f32 %v684, %v799
      %v812 = vadd.f32 %v687, %v802
      %814 = vset.pattern.permute.xlu0 0
      %815 = vperm.xlu0 %814, %v321
      %v816 = vpop.permute.xlu0 %815
      %819 = vset.pattern.permute.xlu0 0
      %820 = vperm.xlu0 %819, %v322
      %v821 = vpop.permute.xlu0 %820
      %824 = vset.pattern.permute.xlu0 0
      %825 = vperm.xlu0 %824, %v323
      %v826 = vpop.permute.xlu0 %825
      %829 = vset.pattern.permute.xlu0 0
      %830 = vperm.xlu0 %829, %v324
      %v831 = vpop.permute.xlu0 %830
      %834 = vset.pattern.permute.xlu0 0
      %835 = vperm.xlu0 %834, %v325
      %v836 = vpop.permute.xlu0 %835
      %839 = vset.pattern.permute.xlu0 0
      %840 = vperm.xlu0 %839, %v326
      %v841 = vpop.permute.xlu0 %840
      %844 = vset.pattern.permute.xlu0 0
      %845 = vperm.xlu0 %844, %v327
      %v846 = vpop.permute.xlu0 %845
      %849 = vset.pattern.permute.xlu0 0
      %850 = vperm.xlu0 %849, %v328
      %v851 = vpop.permute.xlu0 %850
      %v853 = vadd.f32 %v805, %v816
      %v854 = vadd.f32 %v806, %v821
      %v855 = vadd.f32 %v807, %v826
      %v856 = vadd.f32 %v808, %v831
      %v857 = vadd.f32 %v809, %v836
      %v858 = vadd.f32 %v810, %v841
      %v859 = vadd.f32 %v811, %v846
      %v860 = vadd.f32 %v812, %v851
      %v861 = vmax.f32 %v853, 0.0
      %v862 = vmax.f32 %v854, 0.0
      %v863 = vmax.f32 %v855, 0.0
      %v864 = vmax.f32 %v856, 0.0
      %v865 = vmax.f32 %v857, 0.0
      %v866 = vmax.f32 %v858, 0.0
      %v867 = vmax.f32 %v859, 0.0
      %v868 = vmax.f32 %v860, 0.0
      %v869 = vld [vmem:[%s3] sm:$0xff]
      %v870 = vld [vmem:[%s3 + $0x8] sm:$0xff]
      %v871 = vld [vmem:[%s3 + $0x10] sm:$0xff]
      %v872 = vld [vmem:[%s3 + $0x18] sm:$0xff]
      %v873 = vld [vmem:[%s3 + $0x20] sm:$0xff]
      %v874 = vld [vmem:[%s3 + $0x28] sm:$0xff]
      %v875 = vld [vmem:[%s3 + $0x30] sm:$0xff]
      %v876 = vld [vmem:[%s3 + $0x38] sm:$0xff]
      %v877 = vld [vmem:[%s3 + $0x40] sm:$0xff]
      %v878 = vld [vmem:[%s3 + $0x48] sm:$0xff]
      %v879 = vld [vmem:[%s3 + $0x50] sm:$0xff]
      %v880 = vld [vmem:[%s3 + $0x58] sm:$0xff]
      %v881 = vld [vmem:[%s3 + $0x60] sm:$0xff]
      %v882 = vld [vmem:[%s3 + $0x68] sm:$0xff]
      %v883 = vld [vmem:[%s3 + $0x70] sm:$0xff]
      %v884 = vld [vmem:[%s3 + $0x78] sm:$0xff]
      %v885 = vld [vmem:[%s3 + $0x80] sm:$0xff]
      %v886 = vld [vmem:[%s3 + $0x88] sm:$0xff]
      %v887 = vld [vmem:[%s3 + $0x90] sm:$0xff]
      %v888 = vld [vmem:[%s3 + $0x98] sm:$0xff]
      %v889 = vld [vmem:[%s3 + $0xa0] sm:$0xff]
      %v890 = vld [vmem:[%s3 + $0xa8] sm:$0xff]
      %v891 = vld [vmem:[%s3 + $0xb0] sm:$0xff]
      %v892 = vld [vmem:[%s3 + $0xb8] sm:$0xff]
      %v893 = vld [vmem:[%s4] sm:$0xff]
      %v894 = vld [vmem:[%s4 + $0x8] sm:$0xff]
      %v895 = vld [vmem:[%s4 + $0x10] sm:$0xff]
      %v896 = vld [vmem:[%s4 + $0x18] sm:$0xff]
      %v897 = vld [vmem:[%s4 + $0x20] sm:$0xff]
      %v898 = vld [vmem:[%s4 + $0x28] sm:$0xff]
      %v899 = vld [vmem:[%s4 + $0x30] sm:$0xff]
      %v900 = vld [vmem:[%s4 + $0x38] sm:$0xff]
      %909 = vrot.lane.b32.xlu0 %v861, 1
      %v910 = vpop.permute.xlu0 %909
      %911 = vrot.lane.b32.xlu0 %v862, 1
      %v912 = vpop.permute.xlu0 %911
      %913 = vrot.lane.b32.xlu0 %v863, 1
      %v914 = vpop.permute.xlu0 %913
      %915 = vrot.lane.b32.xlu0 %v864, 1
      %v916 = vpop.permute.xlu0 %915
      %917 = vrot.lane.b32.xlu0 %v865, 1
      %v918 = vpop.permute.xlu0 %917
      %919 = vrot.lane.b32.xlu0 %v866, 1
      %v920 = vpop.permute.xlu0 %919
      %921 = vrot.lane.b32.xlu0 %v867, 1
      %v922 = vpop.permute.xlu0 %921
      %923 = vrot.lane.b32.xlu0 %v868, 1
      %v924 = vpop.permute.xlu0 %923
      %v933 = vsel %vm360, 0.0, %v910
      %v934 = vsel %vm360, 0.0, %v912
      %v935 = vsel %vm360, 0.0, %v914
      %v936 = vsel %vm360, 0.0, %v916
      %v937 = vsel %vm360, 0.0, %v918
      %v938 = vsel %vm360, 0.0, %v920
      %v939 = vsel %vm360, 0.0, %v922
      %v940 = vsel %vm360, 0.0, %v924
      %v941 = vsel %vm366, 0.0, %v933
      %v942 = vsel %vm366, 0.0, %v934
      %v943 = vsel %vm366, 0.0, %v935
      %v944 = vsel %vm366, 0.0, %v936
      %v945 = vsel %vm366, 0.0, %v937
      %v946 = vsel %vm366, 0.0, %v938
      %v947 = vsel %vm366, 0.0, %v939
      %v948 = vsel %vm366, 0.0, %v940
      %949 = vrot.lane.b32.xlu0 %v861, 127
      %v950 = vpop.permute.xlu0 %949
      %951 = vrot.lane.b32.xlu0 %v862, 127
      %v952 = vpop.permute.xlu0 %951
      %953 = vrot.lane.b32.xlu0 %v863, 127
      %v954 = vpop.permute.xlu0 %953
      %955 = vrot.lane.b32.xlu0 %v864, 127
      %v956 = vpop.permute.xlu0 %955
      %957 = vrot.lane.b32.xlu0 %v865, 127
      %v958 = vpop.permute.xlu0 %957
      %959 = vrot.lane.b32.xlu0 %v866, 127
      %v960 = vpop.permute.xlu0 %959
      %961 = vrot.lane.b32.xlu0 %v867, 127
      %v962 = vpop.permute.xlu0 %961
      %963 = vrot.lane.b32.xlu0 %v868, 127
      %v964 = vpop.permute.xlu0 %963
      %v973 = vsel %vm384, %v950, 0.0
      %v974 = vsel %vm384, %v952, 0.0
      %v975 = vsel %vm384, %v954, 0.0
      %v976 = vsel %vm384, %v956, 0.0
      %v977 = vsel %vm384, %v958, 0.0
      %v978 = vsel %vm384, %v960, 0.0
      %v979 = vsel %vm384, %v962, 0.0
      %v980 = vsel %vm384, %v964, 0.0
      %v981 = vsel %vm390, 0.0, %v973
      %v982 = vsel %vm390, 0.0, %v974
      %v983 = vsel %vm390, 0.0, %v975
      %v984 = vsel %vm390, 0.0, %v976
      %v985 = vsel %vm390, 0.0, %v977
      %v986 = vsel %vm390, 0.0, %v978
      %v987 = vsel %vm390, 0.0, %v979
      %v988 = vsel %vm390, 0.0, %v980
      %1005 = vrot.lane.b32.xlu0 %v941, 8
      %v1006 = vpop.permute.xlu0 %1005
      %1007 = vrot.lane.b32.xlu0 %v942, 8
      %v1008 = vpop.permute.xlu0 %1007
      %1009 = vrot.lane.b32.xlu0 %v943, 8
      %v1010 = vpop.permute.xlu0 %1009
      %1011 = vrot.lane.b32.xlu0 %v944, 8
      %v1012 = vpop.permute.xlu0 %1011
      %1013 = vrot.lane.b32.xlu0 %v945, 8
      %v1014 = vpop.permute.xlu0 %1013
      %1015 = vrot.lane.b32.xlu0 %v946, 8
      %v1016 = vpop.permute.xlu0 %1015
      %1017 = vrot.lane.b32.xlu0 %v947, 8
      %v1018 = vpop.permute.xlu0 %1017
      %1019 = vrot.lane.b32.xlu0 %v948, 8
      %v1020 = vpop.permute.xlu0 %1019
      %1021 = vrot.lane.b32.xlu0 %v861, 8
      %v1022 = vpop.permute.xlu0 %1021
      %1023 = vrot.lane.b32.xlu0 %v862, 8
      %v1024 = vpop.permute.xlu0 %1023
      %1025 = vrot.lane.b32.xlu0 %v863, 8
      %v1026 = vpop.permute.xlu0 %1025
      %1027 = vrot.lane.b32.xlu0 %v864, 8
      %v1028 = vpop.permute.xlu0 %1027
      %1029 = vrot.lane.b32.xlu0 %v865, 8
      %v1030 = vpop.permute.xlu0 %1029
      %1031 = vrot.lane.b32.xlu0 %v866, 8
      %v1032 = vpop.permute.xlu0 %1031
      %1033 = vrot.lane.b32.xlu0 %v867, 8
      %v1034 = vpop.permute.xlu0 %1033
      %1035 = vrot.lane.b32.xlu0 %v868, 8
      %v1036 = vpop.permute.xlu0 %1035
      %1037 = vrot.lane.b32.xlu0 %v981, 8
      %v1038 = vpop.permute.xlu0 %1037
      %1039 = vrot.lane.b32.xlu0 %v982, 8
      %v1040 = vpop.permute.xlu0 %1039
      %1041 = vrot.lane.b32.xlu0 %v983, 8
      %v1042 = vpop.permute.xlu0 %1041
      %1043 = vrot.lane.b32.xlu0 %v984, 8
      %v1044 = vpop.permute.xlu0 %1043
      %1045 = vrot.lane.b32.xlu0 %v985, 8
      %v1046 = vpop.permute.xlu0 %1045
      %1047 = vrot.lane.b32.xlu0 %v986, 8
      %v1048 = vpop.permute.xlu0 %1047
      %1049 = vrot.lane.b32.xlu0 %v987, 8
      %v1050 = vpop.permute.xlu0 %1049
      %1051 = vrot.lane.b32.xlu0 %v988, 8
      %v1052 = vpop.permute.xlu0 %1051
      %v1077 = vsel %vm439, 0.0, %v1006
      %v1078 = vsel %vm439, 0.0, %v1008
      %v1079 = vsel %vm439, 0.0, %v1010
      %v1080 = vsel %vm439, 0.0, %v1012
      %v1081 = vsel %vm439, 0.0, %v1014
      %v1082 = vsel %vm439, 0.0, %v1016
      %v1083 = vsel %vm439, 0.0, %v1018
      %v1084 = vsel %vm439, 0.0, %v1020
      %v1085 = vsel %vm439, 0.0, %v1022
      %v1086 = vsel %vm439, 0.0, %v1024
      %v1087 = vsel %vm439, 0.0, %v1026
      %v1088 = vsel %vm439, 0.0, %v1028
      %v1089 = vsel %vm439, 0.0, %v1030
      %v1090 = vsel %vm439, 0.0, %v1032
      %v1091 = vsel %vm439, 0.0, %v1034
      %v1092 = vsel %vm439, 0.0, %v1036
      %v1093 = vsel %vm439, 0.0, %v1038
      %v1094 = vsel %vm439, 0.0, %v1040
      %v1095 = vsel %vm439, 0.0, %v1042
      %v1096 = vsel %vm439, 0.0, %v1044
      %v1097 = vsel %vm439, 0.0, %v1046
      %v1098 = vsel %vm439, 0.0, %v1048
      %v1099 = vsel %vm439, 0.0, %v1050
      %v1100 = vsel %vm439, 0.0, %v1052
      %v1101 = vsel %vm452, %v1077, 0.0
      %v1102 = vsel %vm452, %v1078, 0.0
      %v1103 = vsel %vm452, %v1079, 0.0
      %v1104 = vsel %vm452, %v1080, 0.0
      %v1105 = vsel %vm452, %v1081, 0.0
      %v1106 = vsel %vm452, %v1082, 0.0
      %v1107 = vsel %vm452, %v1083, 0.0
      %v1108 = vsel %vm452, %v1084, 0.0
      %v1109 = vsel %vm452, %v1085, 0.0
      %v1110 = vsel %vm452, %v1086, 0.0
      %v1111 = vsel %vm452, %v1087, 0.0
      %v1112 = vsel %vm452, %v1088, 0.0
      %v1113 = vsel %vm452, %v1089, 0.0
      %v1114 = vsel %vm452, %v1090, 0.0
      %v1115 = vsel %vm452, %v1091, 0.0
      %v1116 = vsel %vm452, %v1092, 0.0
      %v1117 = vsel %vm452, %v1093, 0.0
      %v1118 = vsel %vm452, %v1094, 0.0
      %v1119 = vsel %vm452, %v1095, 0.0
      %v1120 = vsel %vm452, %v1096, 0.0
      %v1121 = vsel %vm452, %v1097, 0.0
      %v1122 = vsel %vm452, %v1098, 0.0
      %v1123 = vsel %vm452, %v1099, 0.0
      %v1124 = vsel %vm452, %v1100, 0.0
      %v1125 = vpack.c.bf16 %v1102, %v1101
      %v1126 = vpack.c.bf16 %v1104, %v1103
      %v1127 = vpack.c.bf16 %v1106, %v1105
      %v1128 = vpack.c.bf16 %v1108, %v1107
      %v1129 = vpack.c.bf16 %v1110, %v1109
      %v1130 = vpack.c.bf16 %v1112, %v1111
      %v1131 = vpack.c.bf16 %v1114, %v1113
      %v1132 = vpack.c.bf16 %v1116, %v1115
      %v1133 = vpack.c.bf16 %v1118, %v1117
      %v1134 = vpack.c.bf16 %v1120, %v1119
      %v1135 = vpack.c.bf16 %v1122, %v1121
      %v1136 = vpack.c.bf16 %v1124, %v1123
      %v1145 = vunpack.c.l.b16 %v877
      %v1146 = vunpack.c.h.b16 %v877
      %v1147 = vunpack.c.l.b16 %v878
      %v1148 = vunpack.c.h.b16 %v878
      %v1149 = vunpack.c.l.b16 %v879
      %v1150 = vunpack.c.h.b16 %v879
      %v1151 = vunpack.c.l.b16 %v880
      %v1152 = vunpack.c.h.b16 %v880
      %v1153 = vunpack.c.l.b16 %v881
      %v1154 = vunpack.c.h.b16 %v881
      %v1155 = vunpack.c.l.b16 %v882
      %v1156 = vunpack.c.h.b16 %v882
      %v1157 = vunpack.c.l.b16 %v883
      %v1158 = vunpack.c.h.b16 %v883
      %v1159 = vunpack.c.l.b16 %v884
      %v1160 = vunpack.c.h.b16 %v884
      %v1161 = vpack.c.b16 %v1147, %v1145
      %v1162 = vpack.c.b16 %v1148, %v1146
      %v1163 = vpack.c.b16 %v1151, %v1149
      %v1164 = vpack.c.b16 %v1152, %v1150
      %v1165 = vpack.c.b16 %v1155, %v1153
      %v1166 = vpack.c.b16 %v1156, %v1154
      %v1167 = vpack.c.b16 %v1159, %v1157
      %v1168 = vpack.c.b16 %v1160, %v1158
      %1185 = vrot.lane.b32.xlu0 %v1125, 120
      %v1186 = vpop.permute.xlu0 %1185
      %1187 = vrot.lane.b32.xlu0 %v1126, 120
      %v1188 = vpop.permute.xlu0 %1187
      %1189 = vrot.lane.b32.xlu0 %v1127, 120
      %v1190 = vpop.permute.xlu0 %1189
      %1191 = vrot.lane.b32.xlu0 %v1128, 120
      %v1192 = vpop.permute.xlu0 %1191
      %1193 = vrot.lane.b32.xlu0 %v1129, 120
      %v1194 = vpop.permute.xlu0 %1193
      %1195 = vrot.lane.b32.xlu0 %v1130, 120
      %v1196 = vpop.permute.xlu0 %1195
      %1197 = vrot.lane.b32.xlu0 %v1131, 120
      %v1198 = vpop.permute.xlu0 %1197
      %1199 = vrot.lane.b32.xlu0 %v1132, 120
      %v1200 = vpop.permute.xlu0 %1199
      %1201 = vrot.lane.b32.xlu0 %v1133, 120
      %v1202 = vpop.permute.xlu0 %1201
      %1203 = vrot.lane.b32.xlu0 %v1134, 120
      %v1204 = vpop.permute.xlu0 %1203
      %1205 = vrot.lane.b32.xlu0 %v1135, 120
      %v1206 = vpop.permute.xlu0 %1205
      %1207 = vrot.lane.b32.xlu0 %v1136, 120
      %v1208 = vpop.permute.xlu0 %1207
      %vm1221 = vcmask 523264
      %v1223 = vsel %vm1221, %v1162, 0
      %v1226 = vsel %vm1221, %v1164, 0
      %v1229 = vsel %vm1221, %v1166, 0
      %v1232 = vsel %vm1221, %v1168, 0
      %1234 = vmatprep.subr.bf16.mxu0 0
      %1235 = vmatpush1.bf16.msra.mxu0 %v1186
      %1236 = vmatprep.subr.bf16.mxu0 0
      %1237 = vmatpush1.bf16.msra.mxu0 %v1188
      %1238 = vmatprep.subr.bf16.mxu0 0
      %1239 = vmatpush1.bf16.msra.mxu0 %v1190
      %1240 = vmatprep.subr.bf16.mxu0 0
      %1241 = vmatpush1.bf16.msra.mxu0 %v1192
      %1242 = vmatprep.subr.bf16.mxu0 0
      %1243 = vmatpush1.bf16.msra.mxu0 %v1194
      %1244 = vmatprep.subr.bf16.mxu0 0
      %1245 = vmatpush1.bf16.msra.mxu0 %v1196
      %1246 = vmatprep.subr.bf16.mxu0 0
      %1247 = vmatpush1.bf16.msra.mxu0 %v1198
      %1248 = vmatprep.subr.bf16.mxu0 0
      %1249 = vmatpush1.bf16.msra.mxu0 %v1200
      %1250 = vmatprep.subr.bf16.mxu0 0
      %1251 = vmatpush1.bf16.msra.mxu0 %v1202
      %1252 = vmatprep.subr.bf16.mxu0 0
      %1253 = vmatpush1.bf16.msra.mxu0 %v1204
      %1254 = vmatprep.subr.bf16.mxu0 0
      %1255 = vmatpush1.bf16.msra.mxu0 %v1206
      %1256 = vmatprep.subr.bf16.mxu0 0
      %1257 = vmatpush1.bf16.msra.mxu0 %v1208
      %1258 = vmatprep.subr.bf16.mxu0 0
      %1259 = vmatpush1.bf16.msra.mxu0 0
      %1260 = vmatprep.subr.bf16.mxu0 0
      %1261 = vmatpush1.bf16.msra.mxu0 0
      %1262 = vmatprep.subr.bf16.mxu0 0
      %1263 = vmatpush1.bf16.msra.mxu0 0
      %1264 = vmatprep.subr.bf16.mxu0 0
      %1265 = vmatpush1.bf16.msra.mxu0 0
      %1266 = vmatprep.mubr.bf16.mxu0 %v1223
      %1267 = vmatmul.mubr.bf16.gmra.mrb[0].mxu0 %v1161
      %v1268 = vpop.f32.mrb[0].mxu0
      %v1269 = vadd.f32 0.0, %v1268
      %v1270 = vpop.f32.mrb[0].mxu0
      %v1271 = vpop.f32.mrb[0].mxu0
      %v1272 = vadd.f32 0.0, %v1271
      %v1273 = vpop.f32.mrb[0].mxu0
      %1274 = vmatprep.mubr.bf16.mxu0 %v1226
      %1275 = vmatmul.mubr.bf16.gmra.mrb[0].mxu0 %v1163
      %v1276 = vpop.f32.mrb[0].mxu0
      %v1277 = vadd.f32 0.0, %v1276
      %v1278 = vpop.f32.mrb[0].mxu0
      %v1279 = vpop.f32.mrb[0].mxu0
      %v1280 = vadd.f32 0.0, %v1279
      %v1281 = vpop.f32.mrb[0].mxu0
      %1282 = vmatprep.mubr.bf16.mxu0 %v1229
      %1283 = vmatmul.mubr.bf16.gmra.mrb[0].mxu0 %v1165
      %v1284 = vpop.f32.mrb[0].mxu0
      %v1285 = vadd.f32 0.0, %v1284
      %v1286 = vpop.f32.mrb[0].mxu0
      %v1287 = vpop.f32.mrb[0].mxu0
      %v1288 = vadd.f32 0.0, %v1287
      %v1289 = vpop.f32.mrb[0].mxu0
      %1290 = vmatprep.mubr.bf16.mxu0 %v1232
      %1291 = vmatmul.mubr.bf16.gmra.mrb[0].mxu0 %v1167
      %v1292 = vpop.f32.mrb[0].mxu0
      %v1293 = vadd.f32 0.0, %v1292
      %v1294 = vpop.f32.mrb[0].mxu0
      %v1295 = vpop.f32.mrb[0].mxu0
      %v1296 = vadd.f32 0.0, %v1295
      %v1297 = vpop.f32.mrb[0].mxu0
      %1298 = vdwg.mxu0
      %v1307 = vunpack.c.l.b16 %v869
      %v1308 = vunpack.c.h.b16 %v869
      %v1309 = vunpack.c.l.b16 %v870
      %v1310 = vunpack.c.h.b16 %v870
      %v1311 = vunpack.c.l.b16 %v871
      %v1312 = vunpack.c.h.b16 %v871
      %v1313 = vunpack.c.l.b16 %v872
      %v1314 = vunpack.c.h.b16 %v872
      %v1315 = vunpack.c.l.b16 %v873
      %v1316 = vunpack.c.h.b16 %v873
      %v1317 = vunpack.c.l.b16 %v874
      %v1318 = vunpack.c.h.b16 %v874
      %v1319 = vunpack.c.l.b16 %v875
      %v1320 = vunpack.c.h.b16 %v875
      %v1321 = vunpack.c.l.b16 %v876
      %v1322 = vunpack.c.h.b16 %v876
      %v1323 = vpack.c.b16 %v1309, %v1307
      %v1324 = vpack.c.b16 %v1310, %v1308
      %v1325 = vpack.c.b16 %v1313, %v1311
      %v1326 = vpack.c.b16 %v1314, %v1312
      %v1327 = vpack.c.b16 %v1317, %v1315
      %v1328 = vpack.c.b16 %v1318, %v1316
      %v1329 = vpack.c.b16 %v1321, %v1319
      %v1330 = vpack.c.b16 %v1322, %v1320
      %v1336 = vsel %vm1221, %v1324, 0
      %v1339 = vsel %vm1221, %v1326, 0
      %v1342 = vsel %vm1221, %v1328, 0
      %v1345 = vsel %vm1221, %v1330, 0
      %1347 = vmatprep.subr.bf16.mxu0 0
      %1348 = vmatpush1.bf16.msra.mxu0 %v1125
      %1349 = vmatprep.subr.bf16.mxu0 0
      %1350 = vmatpush1.bf16.msra.mxu0 %v1126
      %1351 = vmatprep.subr.bf16.mxu0 0
      %1352 = vmatpush1.bf16.msra.mxu0 %v1127
      %1353 = vmatprep.subr.bf16.mxu0 0
      %1354 = vmatpush1.bf16.msra.mxu0 %v1128
      %1355 = vmatprep.subr.bf16.mxu0 0
      %1356 = vmatpush1.bf16.msra.mxu0 %v1129
      %1357 = vmatprep.subr.bf16.mxu0 0
      %1358 = vmatpush1.bf16.msra.mxu0 %v1130
      %1359 = vmatprep.subr.bf16.mxu0 0
      %1360 = vmatpush1.bf16.msra.mxu0 %v1131
      %1361 = vmatprep.subr.bf16.mxu0 0
      %1362 = vmatpush1.bf16.msra.mxu0 %v1132
      %1363 = vmatprep.subr.bf16.mxu0 0
      %1364 = vmatpush1.bf16.msra.mxu0 %v1133
      %1365 = vmatprep.subr.bf16.mxu0 0
      %1366 = vmatpush1.bf16.msra.mxu0 %v1134
      %1367 = vmatprep.subr.bf16.mxu0 0
      %1368 = vmatpush1.bf16.msra.mxu0 %v1135
      %1369 = vmatprep.subr.bf16.mxu0 0
      %1370 = vmatpush1.bf16.msra.mxu0 %v1136
      %1371 = vmatprep.subr.bf16.mxu0 0
      %1372 = vmatpush1.bf16.msra.mxu0 0
      %1373 = vmatprep.subr.bf16.mxu0 0
      %1374 = vmatpush1.bf16.msra.mxu0 0
      %1375 = vmatprep.subr.bf16.mxu0 0
      %1376 = vmatpush1.bf16.msra.mxu0 0
      %1377 = vmatprep.subr.bf16.mxu0 0
      %1378 = vmatpush1.bf16.msra.mxu0 0
      %1379 = vmatprep.mubr.bf16.mxu0 %v1336
      %1380 = vmatmul.mubr.bf16.gmra.mrb[0].mxu0 %v1323
      %v1381 = vpop.f32.mrb[0].mxu0
      %v1382 = vadd.f32 %v1269, %v1381
      %v1383 = vpop.f32.mrb[0].mxu0
      %v1384 = vpop.f32.mrb[0].mxu0
      %v1385 = vadd.f32 %v1272, %v1384
      %v1386 = vpop.f32.mrb[0].mxu0
      %1387 = vmatprep.mubr.bf16.mxu0 %v1339
      %1388 = vmatmul.mubr.bf16.gmra.mrb[0].mxu0 %v1325
      %v1389 = vpop.f32.mrb[0].mxu0
      %v1390 = vadd.f32 %v1277, %v1389
      %v1391 = vpop.f32.mrb[0].mxu0
      %v1392 = vpop.f32.mrb[0].mxu0
      %v1393 = vadd.f32 %v1280, %v1392
      %v1394 = vpop.f32.mrb[0].mxu0
      %1395 = vmatprep.mubr.bf16.mxu0 %v1342
      %1396 = vmatmul.mubr.bf16.gmra.mrb[0].mxu0 %v1327
      %v1397 = vpop.f32.mrb[0].mxu0
      %v1398 = vadd.f32 %v1285, %v1397
      %v1399 = vpop.f32.mrb[0].mxu0
      %v1400 = vpop.f32.mrb[0].mxu0
      %v1401 = vadd.f32 %v1288, %v1400
      %v1402 = vpop.f32.mrb[0].mxu0
      %1403 = vmatprep.mubr.bf16.mxu0 %v1345
      %1404 = vmatmul.mubr.bf16.gmra.mrb[0].mxu0 %v1329
      %v1405 = vpop.f32.mrb[0].mxu0
      %v1406 = vadd.f32 %v1293, %v1405
      %v1407 = vpop.f32.mrb[0].mxu0
      %v1408 = vpop.f32.mrb[0].mxu0
      %v1409 = vadd.f32 %v1296, %v1408
      %v1410 = vpop.f32.mrb[0].mxu0
      %1411 = vdwg.mxu0
      %v1420 = vunpack.c.l.b16 %v885
      %v1421 = vunpack.c.h.b16 %v885
      %v1422 = vunpack.c.l.b16 %v886
      %v1423 = vunpack.c.h.b16 %v886
      %v1424 = vunpack.c.l.b16 %v887
      %v1425 = vunpack.c.h.b16 %v887
      %v1426 = vunpack.c.l.b16 %v888
      %v1427 = vunpack.c.h.b16 %v888
      %v1428 = vunpack.c.l.b16 %v889
      %v1429 = vunpack.c.h.b16 %v889
      %v1430 = vunpack.c.l.b16 %v890
      %v1431 = vunpack.c.h.b16 %v890
      %v1432 = vunpack.c.l.b16 %v891
      %v1433 = vunpack.c.h.b16 %v891
      %v1434 = vunpack.c.l.b16 %v892
      %v1435 = vunpack.c.h.b16 %v892
      %v1436 = vpack.c.b16 %v1422, %v1420
      %v1437 = vpack.c.b16 %v1423, %v1421
      %v1438 = vpack.c.b16 %v1426, %v1424
      %v1439 = vpack.c.b16 %v1427, %v1425
      %v1440 = vpack.c.b16 %v1430, %v1428
      %v1441 = vpack.c.b16 %v1431, %v1429
      %v1442 = vpack.c.b16 %v1434, %v1432
      %v1443 = vpack.c.b16 %v1435, %v1433
      %1448 = vrot.lane.b32.xlu0 %v1125, 112
      %v1449 = vpop.permute.xlu0 %1448
      %1450 = vrot.lane.b32.xlu0 %v1126, 112
      %v1451 = vpop.permute.xlu0 %1450
      %1452 = vrot.lane.b32.xlu0 %v1127, 112
      %v1453 = vpop.permute.xlu0 %1452
      %1454 = vrot.lane.b32.xlu0 %v1128, 112
      %v1455 = vpop.permute.xlu0 %1454
      %1456 = vrot.lane.b32.xlu0 %v1129, 112
      %v1457 = vpop.permute.xlu0 %1456
      %1458 = vrot.lane.b32.xlu0 %v1130, 112
      %v1459 = vpop.permute.xlu0 %1458
      %1460 = vrot.lane.b32.xlu0 %v1131, 112
      %v1461 = vpop.permute.xlu0 %1460
      %1462 = vrot.lane.b32.xlu0 %v1132, 112
      %v1463 = vpop.permute.xlu0 %1462
      %1464 = vrot.lane.b32.xlu0 %v1133, 112
      %v1465 = vpop.permute.xlu0 %1464
      %1466 = vrot.lane.b32.xlu0 %v1134, 112
      %v1467 = vpop.permute.xlu0 %1466
      %1468 = vrot.lane.b32.xlu0 %v1135, 112
      %v1469 = vpop.permute.xlu0 %1468
      %1470 = vrot.lane.b32.xlu0 %v1136, 112
      %v1471 = vpop.permute.xlu0 %1470
      %v1485 = vsel %vm1221, %v1437, 0
      %v1488 = vsel %vm1221, %v1439, 0
      %v1491 = vsel %vm1221, %v1441, 0
      %v1494 = vsel %vm1221, %v1443, 0
      %1496 = vmatprep.subr.bf16.mxu0 0
      %1497 = vmatpush1.bf16.msra.mxu0 %v1449
      %1498 = vmatprep.subr.bf16.mxu0 0
      %1499 = vmatpush1.bf16.msra.mxu0 %v1451
      %1500 = vmatprep.subr.bf16.mxu0 0
      %1501 = vmatpush1.bf16.msra.mxu0 %v1453
      %1502 = vmatprep.subr.bf16.mxu0 0
      %1503 = vmatpush1.bf16.msra.mxu0 %v1455
      %1504 = vmatprep.subr.bf16.mxu0 0
      %1505 = vmatpush1.bf16.msra.mxu0 %v1457
      %1506 = vmatprep.subr.bf16.mxu0 0
      %1507 = vmatpush1.bf16.msra.mxu0 %v1459
      %1508 = vmatprep.subr.bf16.mxu0 0
      %1509 = vmatpush1.bf16.msra.mxu0 %v1461
      %1510 = vmatprep.subr.bf16.mxu0 0
      %1511 = vmatpush1.bf16.msra.mxu0 %v1463
      %1512 = vmatprep.subr.bf16.mxu0 0
      %1513 = vmatpush1.bf16.msra.mxu0 %v1465
      %1514 = vmatprep.subr.bf16.mxu0 0
      %1515 = vmatpush1.bf16.msra.mxu0 %v1467
      %1516 = vmatprep.subr.bf16.mxu0 0
      %1517 = vmatpush1.bf16.msra.mxu0 %v1469
      %1518 = vmatprep.subr.bf16.mxu0 0
      %1519 = vmatpush1.bf16.msra.mxu0 %v1471
      %1520 = vmatprep.subr.bf16.mxu0 0
      %1521 = vmatpush1.bf16.msra.mxu0 0
      %1522 = vmatprep.subr.bf16.mxu0 0
      %1523 = vmatpush1.bf16.msra.mxu0 0
      %1524 = vmatprep.subr.bf16.mxu0 0
      %1525 = vmatpush1.bf16.msra.mxu0 0
      %1526 = vmatprep.subr.bf16.mxu0 0
      %1527 = vmatpush1.bf16.msra.mxu0 0
      %1528 = vmatprep.mubr.bf16.mxu0 %v1485
      %1529 = vmatmul.mubr.bf16.gmra.mrb[0].mxu0 %v1436
      %v1530 = vpop.f32.mrb[0].mxu0
      %v1531 = vadd.f32 0.0, %v1530
      %v1532 = vpop.f32.mrb[0].mxu0
      %v1533 = vpop.f32.mrb[0].mxu0
      %v1534 = vadd.f32 0.0, %v1533
      %v1535 = vpop.f32.mrb[0].mxu0
      %1536 = vmatprep.mubr.bf16.mxu0 %v1488
      %1537 = vmatmul.mubr.bf16.gmra.mrb[0].mxu0 %v1438
      %v1538 = vpop.f32.mrb[0].mxu0
      %v1539 = vadd.f32 0.0, %v1538
      %v1540 = vpop.f32.mrb[0].mxu0
      %v1541 = vpop.f32.mrb[0].mxu0
      %v1542 = vadd.f32 0.0, %v1541
      %v1543 = vpop.f32.mrb[0].mxu0
      %1544 = vmatprep.mubr.bf16.mxu0 %v1491
      %1545 = vmatmul.mubr.bf16.gmra.mrb[0].mxu0 %v1440
      %v1546 = vpop.f32.mrb[0].mxu0
      %v1547 = vadd.f32 0.0, %v1546
      %v1548 = vpop.f32.mrb[0].mxu0
      %v1549 = vpop.f32.mrb[0].mxu0
      %v1550 = vadd.f32 0.0, %v1549
      %v1551 = vpop.f32.mrb[0].mxu0
      %1552 = vmatprep.mubr.bf16.mxu0 %v1494
      %1553 = vmatmul.mubr.bf16.gmra.mrb[0].mxu0 %v1442
      %v1554 = vpop.f32.mrb[0].mxu0
      %v1555 = vadd.f32 0.0, %v1554
      %v1556 = vpop.f32.mrb[0].mxu0
      %v1557 = vpop.f32.mrb[0].mxu0
      %v1558 = vadd.f32 0.0, %v1557
      %v1559 = vpop.f32.mrb[0].mxu0
      %1560 = vdwg.mxu0
      %v1561 = vadd.f32 %v1382, %v1531
      %v1562 = vadd.f32 %v1385, %v1534
      %v1563 = vadd.f32 %v1390, %v1539
      %v1564 = vadd.f32 %v1393, %v1542
      %v1565 = vadd.f32 %v1398, %v1547
      %v1566 = vadd.f32 %v1401, %v1550
      %v1567 = vadd.f32 %v1406, %v1555
      %v1568 = vadd.f32 %v1409, %v1558
      %1570 = vset.pattern.permute.xlu0 0
      %1571 = vperm.xlu0 %1570, %v893
      %v1572 = vpop.permute.xlu0 %1571
      %1575 = vset.pattern.permute.xlu0 0
      %1576 = vperm.xlu0 %1575, %v894
      %v1577 = vpop.permute.xlu0 %1576
      %1580 = vset.pattern.permute.xlu0 0
      %1581 = vperm.xlu0 %1580, %v895
      %v1582 = vpop.permute.xlu0 %1581
      %1585 = vset.pattern.permute.xlu0 0
      %1586 = vperm.xlu0 %1585, %v896
      %v1587 = vpop.permute.xlu0 %1586
      %1590 = vset.pattern.permute.xlu0 0
      %1591 = vperm.xlu0 %1590, %v897
      %v1592 = vpop.permute.xlu0 %1591
      %1595 = vset.pattern.permute.xlu0 0
      %1596 = vperm.xlu0 %1595, %v898
      %v1597 = vpop.permute.xlu0 %1596
      %1600 = vset.pattern.permute.xlu0 0
      %1601 = vperm.xlu0 %1600, %v899
      %v1602 = vpop.permute.xlu0 %1601
      %1605 = vset.pattern.permute.xlu0 0
      %1606 = vperm.xlu0 %1605, %v900
      %v1607 = vpop.permute.xlu0 %1606
      %v1609 = vadd.f32 %v1561, %v1572
      %v1610 = vadd.f32 %v1562, %v1577
      %v1611 = vadd.f32 %v1563, %v1582
      %v1612 = vadd.f32 %v1564, %v1587
      %v1613 = vadd.f32 %v1565, %v1592
      %v1614 = vadd.f32 %v1566, %v1597
      %v1615 = vadd.f32 %v1567, %v1602
      %v1616 = vadd.f32 %v1568, %v1607
      %v1617 = vmax.f32 %v1609, 0.0
      %v1618 = vmax.f32 %v1610, 0.0
      %v1619 = vmax.f32 %v1611, 0.0
      %v1620 = vmax.f32 %v1612, 0.0
      %v1621 = vmax.f32 %v1613, 0.0
      %v1622 = vmax.f32 %v1614, 0.0
      %v1623 = vmax.f32 %v1615, 0.0
      %v1624 = vmax.f32 %v1616, 0.0
      %1625 = vst.msk [vmem:[%s286] sm:$0xff] %vm1221, %v1617
      %1626 = vst.msk [vmem:[%s286 + $0x8] sm:$0xff] %vm1221, %v1618
      %1627 = vst.msk [vmem:[%s286 + $0x10] sm:$0xff] %vm1221, %v1619
      %1628 = vst.msk [vmem:[%s286 + $0x18] sm:$0xff] %vm1221, %v1620
      %1629 = vst.msk [vmem:[%s286 + $0x20] sm:$0xff] %vm1221, %v1621
      %1630 = vst.msk [vmem:[%s286 + $0x28] sm:$0xff] %vm1221, %v1622
      %1631 = vst.msk [vmem:[%s286 + $0x30] sm:$0xff] %vm1221, %v1623
      %1632 = vst.msk [vmem:[%s286 + $0x38] sm:$0xff] %vm1221, %v1624
      %v1633 = vld [vmem:[%s5] sm:$0xff]
      %v1634 = vld [vmem:[%s5 + $0x8] sm:$0xff]
      %v1635 = vld [vmem:[%s5 + $0x10] sm:$0xff]
      %v1636 = vld [vmem:[%s5 + $0x18] sm:$0xff]
      %v1637 = vld [vmem:[%s5 + $0x20] sm:$0xff]
      %v1638 = vld [vmem:[%s5 + $0x28] sm:$0xff]
      %v1639 = vld [vmem:[%s5 + $0x30] sm:$0xff]
      %v1640 = vld [vmem:[%s5 + $0x38] sm:$0xff]
      %v1641 = vld [vmem:[%s5 + $0x40] sm:$0xff]
      %v1642 = vld [vmem:[%s5 + $0x48] sm:$0xff]
      %v1643 = vld [vmem:[%s5 + $0x50] sm:$0xff]
      %v1644 = vld [vmem:[%s5 + $0x58] sm:$0xff]
      %v1645 = vld [vmem:[%s5 + $0x60] sm:$0xff]
      %v1646 = vld [vmem:[%s5 + $0x68] sm:$0xff]
      %v1647 = vld [vmem:[%s5 + $0x70] sm:$0xff]
      %v1648 = vld [vmem:[%s5 + $0x78] sm:$0xff]
      %v1649 = vld [vmem:[%s5 + $0x80] sm:$0xff]
      %v1650 = vld [vmem:[%s5 + $0x88] sm:$0xff]
      %v1651 = vld [vmem:[%s5 + $0x90] sm:$0xff]
      %v1652 = vld [vmem:[%s5 + $0x98] sm:$0xff]
      %v1653 = vld [vmem:[%s5 + $0xa0] sm:$0xff]
      %v1654 = vld [vmem:[%s5 + $0xa8] sm:$0xff]
      %v1655 = vld [vmem:[%s5 + $0xb0] sm:$0xff]
      %v1656 = vld [vmem:[%s5 + $0xb8] sm:$0xff]
      %v1657 = vld [vmem:[%s5 + $0xc0] sm:$0xff]
      %v1658 = vld [vmem:[%s5 + $0xc8] sm:$0xff]
      %v1659 = vld [vmem:[%s5 + $0xd0] sm:$0xff]
      %v1660 = vld [vmem:[%s5 + $0xd8] sm:$0xff]
      %v1661 = vld [vmem:[%s5 + $0xe0] sm:$0xff]
      %v1662 = vld [vmem:[%s5 + $0xe8] sm:$0xff]
      %v1663 = vld [vmem:[%s5 + $0xf0] sm:$0xff]
      %v1664 = vld [vmem:[%s5 + $0xf8] sm:$0xff]
      %v1666 = vsel %vm1221, %v1617, 0
      %v1669 = vsel %vm1221, %v1618, 0
      %v1672 = vsel %vm1221, %v1619, 0
      %v1675 = vsel %vm1221, %v1620, 0
      %v1678 = vsel %vm1221, %v1621, 0
      %v1681 = vsel %vm1221, %v1622, 0
      %v1684 = vsel %vm1221, %v1623, 0
      %v1687 = vsel %vm1221, %v1624, 0
      %1689 = vmatprep.subr.mxu0 0.0
      %1690 = vmatpush1.msra.mxu0 %v1633
      %1691 = vmatprep.subr.mxu0 0.0
      %1692 = vmatpush1.msra.mxu0 %v1634
      %1693 = vmatprep.subr.mxu0 0.0
      %1694 = vmatpush1.msra.mxu0 %v1635
      %1695 = vmatprep.subr.mxu0 0.0
      %1696 = vmatpush1.msra.mxu0 %v1636
      %1697 = vmatprep.subr.mxu0 0.0
      %1698 = vmatpush1.msra.mxu0 %v1637
      %1699 = vmatprep.subr.mxu0 0.0
      %1700 = vmatpush1.msra.mxu0 %v1638
      %1701 = vmatprep.subr.mxu0 0.0
      %1702 = vmatpush1.msra.mxu0 %v1639
      %1703 = vmatprep.subr.mxu0 0.0
      %1704 = vmatpush1.msra.mxu0 %v1640
      %1705 = vmatprep.subr.mxu0 0.0
      %1706 = vmatpush1.msra.mxu0 0.0
      %1707 = vmatprep.subr.mxu0 0.0
      %1708 = vmatpush1.msra.mxu0 0.0
      %1709 = vmatprep.subr.mxu0 0.0
      %1710 = vmatpush1.msra.mxu0 0.0
      %1711 = vmatprep.subr.mxu0 0.0
      %1712 = vmatpush1.msra.mxu0 0.0
      %1713 = vmatprep.subr.mxu0 0.0
      %1714 = vmatpush1.msra.mxu0 0.0
      %1715 = vmatprep.subr.mxu0 0.0
      %1716 = vmatpush1.msra.mxu0 0.0
      %1717 = vmatprep.subr.mxu0 0.0
      %1718 = vmatpush1.msra.mxu0 0.0
      %1719 = vmatprep.subr.mxu0 0.0
      %1720 = vmatpush1.msra.mxu0 0.0
      %1721 = vmatprep.subr.mxu0 0.0
      %1722 = vmatpush1.msra.mxu0 0.0
      %1723 = vmatprep.subr.mxu0 0.0
      %1724 = vmatpush1.msra.mxu0 0.0
      %1725 = vmatprep.subr.mxu0 0.0
      %1726 = vmatpush1.msra.mxu0 0.0
      %1727 = vmatprep.subr.mxu0 0.0
      %1728 = vmatpush1.msra.mxu0 0.0
      %1729 = vmatprep.subr.mxu0 0.0
      %1730 = vmatpush1.msra.mxu0 0.0
      %1731 = vmatprep.subr.mxu0 0.0
      %1732 = vmatpush1.msra.mxu0 0.0
      %1733 = vmatprep.subr.mxu0 0.0
      %1734 = vmatpush1.msra.mxu0 0.0
      %1735 = vmatprep.subr.mxu0 0.0
      %1736 = vmatpush1.msra.mxu0 0.0
      %1737 = vmatprep.subr.mxu0 0.0
      %1738 = vmatpush1.msra.mxu0 0.0
      %1739 = vmatprep.subr.mxu0 0.0
      %1740 = vmatpush1.msra.mxu0 0.0
      %1741 = vmatprep.subr.mxu0 0.0
      %1742 = vmatpush1.msra.mxu0 0.0
      %1743 = vmatprep.subr.mxu0 0.0
      %1744 = vmatpush1.msra.mxu0 0.0
      %1745 = vmatprep.subr.mxu0 0.0
      %1746 = vmatpush1.msra.mxu0 0.0
      %1747 = vmatprep.subr.mxu0 0.0
      %1748 = vmatpush1.msra.mxu0 0.0
      %1749 = vmatprep.subr.mxu0 0.0
      %1750 = vmatpush1.msra.mxu0 0.0
      %1751 = vmatprep.subr.mxu0 0.0
      %1752 = vmatpush1.msra.mxu0 0.0
      %1753 = vmatprep.mubr.f32.mxu0 0.0
      %1754 = vmatmul.mubr.f32.gmra.mrb[0].mxu0 %v1666
      %v1755 = vpop.f32.mrb[0].mxu0
      %v1756 = vadd.f32 0.0, %v1755
      %v1757 = vpop.f32.mrb[0].mxu0
      %1758 = vmatprep.mubr.f32.mxu0 0.0
      %1759 = vmatmul.mubr.f32.gmra.mrb[0].mxu0 %v1669
      %v1760 = vpop.f32.mrb[0].mxu0
      %v1761 = vadd.f32 0.0, %v1760
      %v1762 = vpop.f32.mrb[0].mxu0
      %1763 = vmatprep.mubr.f32.mxu0 0.0
      %1764 = vmatmul.mubr.f32.gmra.mrb[0].mxu0 %v1672
      %v1765 = vpop.f32.mrb[0].mxu0
      %v1766 = vadd.f32 0.0, %v1765
      %v1767 = vpop.f32.mrb[0].mxu0
      %1768 = vmatprep.mubr.f32.mxu0 0.0
      %1769 = vmatmul.mubr.f32.gmra.mrb[0].mxu0 %v1675
      %v1770 = vpop.f32.mrb[0].mxu0
      %v1771 = vadd.f32 0.0, %v1770
      %v1772 = vpop.f32.mrb[0].mxu0
      %1773 = vmatprep.mubr.f32.mxu0 0.0
      %1774 = vmatmul.mubr.f32.gmra.mrb[0].mxu0 %v1678
      %v1775 = vpop.f32.mrb[0].mxu0
      %v1776 = vadd.f32 0.0, %v1775
      %v1777 = vpop.f32.mrb[0].mxu0
      %1778 = vmatprep.mubr.f32.mxu0 0.0
      %1779 = vmatmul.mubr.f32.gmra.mrb[0].mxu0 %v1681
      %v1780 = vpop.f32.mrb[0].mxu0
      %v1781 = vadd.f32 0.0, %v1780
      %v1782 = vpop.f32.mrb[0].mxu0
      %1783 = vmatprep.mubr.f32.mxu0 0.0
      %1784 = vmatmul.mubr.f32.gmra.mrb[0].mxu0 %v1684
      %v1785 = vpop.f32.mrb[0].mxu0
      %v1786 = vadd.f32 0.0, %v1785
      %v1787 = vpop.f32.mrb[0].mxu0
      %1788 = vmatprep.mubr.f32.mxu0 0.0
      %1789 = vmatmul.mubr.f32.gmra.mrb[0].mxu0 %v1687
      %v1790 = vpop.f32.mrb[0].mxu0
      %v1791 = vadd.f32 0.0, %v1790
      %v1792 = vpop.f32.mrb[0].mxu0
      %1793 = vdwg.mxu0
      %1794 = vmatprep.subr.mxu0 0.0
      %1795 = vmatpush1.msra.mxu0 %v1641
      %1796 = vmatprep.subr.mxu0 0.0
      %1797 = vmatpush1.msra.mxu0 %v1642
      %1798 = vmatprep.subr.mxu0 0.0
      %1799 = vmatpush1.msra.mxu0 %v1643
      %1800 = vmatprep.subr.mxu0 0.0
      %1801 = vmatpush1.msra.mxu0 %v1644
      %1802 = vmatprep.subr.mxu0 0.0
      %1803 = vmatpush1.msra.mxu0 %v1645
      %1804 = vmatprep.subr.mxu0 0.0
      %1805 = vmatpush1.msra.mxu0 %v1646
      %1806 = vmatprep.subr.mxu0 0.0
      %1807 = vmatpush1.msra.mxu0 %v1647
      %1808 = vmatprep.subr.mxu0 0.0
      %1809 = vmatpush1.msra.mxu0 %v1648
      %1810 = vmatprep.subr.mxu0 0.0
      %1811 = vmatpush1.msra.mxu0 0.0
      %1812 = vmatprep.subr.mxu0 0.0
      %1813 = vmatpush1.msra.mxu0 0.0
      %1814 = vmatprep.subr.mxu0 0.0
      %1815 = vmatpush1.msra.mxu0 0.0
      %1816 = vmatprep.subr.mxu0 0.0
      %1817 = vmatpush1.msra.mxu0 0.0
      %1818 = vmatprep.subr.mxu0 0.0
      %1819 = vmatpush1.msra.mxu0 0.0
      %1820 = vmatprep.subr.mxu0 0.0
      %1821 = vmatpush1.msra.mxu0 0.0
      %1822 = vmatprep.subr.mxu0 0.0
      %1823 = vmatpush1.msra.mxu0 0.0
      %1824 = vmatprep.subr.mxu0 0.0
      %1825 = vmatpush1.msra.mxu0 0.0
      %1826 = vmatprep.subr.mxu0 0.0
      %1827 = vmatpush1.msra.mxu0 0.0
      %1828 = vmatprep.subr.mxu0 0.0
      %1829 = vmatpush1.msra.mxu0 0.0
      %1830 = vmatprep.subr.mxu0 0.0
      %1831 = vmatpush1.msra.mxu0 0.0
      %1832 = vmatprep.subr.mxu0 0.0
      %1833 = vmatpush1.msra.mxu0 0.0
      %1834 = vmatprep.subr.mxu0 0.0
      %1835 = vmatpush1.msra.mxu0 0.0
      %1836 = vmatprep.subr.mxu0 0.0
      %1837 = vmatpush1.msra.mxu0 0.0
      %1838 = vmatprep.subr.mxu0 0.0
      %1839 = vmatpush1.msra.mxu0 0.0
      %1840 = vmatprep.subr.mxu0 0.0
      %1841 = vmatpush1.msra.mxu0 0.0
      %1842 = vmatprep.subr.mxu0 0.0
      %1843 = vmatpush1.msra.mxu0 0.0
      %1844 = vmatprep.subr.mxu0 0.0
      %1845 = vmatpush1.msra.mxu0 0.0
      %1846 = vmatprep.subr.mxu0 0.0
      %1847 = vmatpush1.msra.mxu0 0.0
      %1848 = vmatprep.subr.mxu0 0.0
      %1849 = vmatpush1.msra.mxu0 0.0
      %1850 = vmatprep.subr.mxu0 0.0
      %1851 = vmatpush1.msra.mxu0 0.0
      %1852 = vmatprep.subr.mxu0 0.0
      %1853 = vmatpush1.msra.mxu0 0.0
      %1854 = vmatprep.subr.mxu0 0.0
      %1855 = vmatpush1.msra.mxu0 0.0
      %1856 = vmatprep.subr.mxu0 0.0
      %1857 = vmatpush1.msra.mxu0 0.0
      %1858 = vmatprep.mubr.f32.mxu0 0.0
      %1859 = vmatmul.mubr.f32.gmra.mrb[0].mxu0 %v1666
      %v1860 = vpop.f32.mrb[0].mxu0
      %v1861 = vadd.f32 0.0, %v1860
      %v1862 = vpop.f32.mrb[0].mxu0
      %1863 = vmatprep.mubr.f32.mxu0 0.0
      %1864 = vmatmul.mubr.f32.gmra.mrb[0].mxu0 %v1669
      %v1865 = vpop.f32.mrb[0].mxu0
      %v1866 = vadd.f32 0.0, %v1865
      %v1867 = vpop.f32.mrb[0].mxu0
      %1868 = vmatprep.mubr.f32.mxu0 0.0
      %1869 = vmatmul.mubr.f32.gmra.mrb[0].mxu0 %v1672
      %v1870 = vpop.f32.mrb[0].mxu0
      %v1871 = vadd.f32 0.0, %v1870
      %v1872 = vpop.f32.mrb[0].mxu0
      %1873 = vmatprep.mubr.f32.mxu0 0.0
      %1874 = vmatmul.mubr.f32.gmra.mrb[0].mxu0 %v1675
      %v1875 = vpop.f32.mrb[0].mxu0
      %v1876 = vadd.f32 0.0, %v1875
      %v1877 = vpop.f32.mrb[0].mxu0
      %1878 = vmatprep.mubr.f32.mxu0 0.0
      %1879 = vmatmul.mubr.f32.gmra.mrb[0].mxu0 %v1678
      %v1880 = vpop.f32.mrb[0].mxu0
      %v1881 = vadd.f32 0.0, %v1880
      %v1882 = vpop.f32.mrb[0].mxu0
      %1883 = vmatprep.mubr.f32.mxu0 0.0
      %1884 = vmatmul.mubr.f32.gmra.mrb[0].mxu0 %v1681
      %v1885 = vpop.f32.mrb[0].mxu0
      %v1886 = vadd.f32 0.0, %v1885
      %v1887 = vpop.f32.mrb[0].mxu0
      %1888 = vmatprep.mubr.f32.mxu0 0.0
      %1889 = vmatmul.mubr.f32.gmra.mrb[0].mxu0 %v1684
      %v1890 = vpop.f32.mrb[0].mxu0
      %v1891 = vadd.f32 0.0, %v1890
      %v1892 = vpop.f32.mrb[0].mxu0
      %1893 = vmatprep.mubr.f32.mxu0 0.0
      %1894 = vmatmul.mubr.f32.gmra.mrb[0].mxu0 %v1687
      %v1895 = vpop.f32.mrb[0].mxu0
      %v1896 = vadd.f32 0.0, %v1895
      %v1897 = vpop.f32.mrb[0].mxu0
      %1898 = vdwg.mxu0
      %1899 = vmatprep.subr.mxu0 0.0
      %1900 = vmatpush1.msra.mxu0 %v1649
      %1901 = vmatprep.subr.mxu0 0.0
      %1902 = vmatpush1.msra.mxu0 %v1650
      %1903 = vmatprep.subr.mxu0 0.0
      %1904 = vmatpush1.msra.mxu0 %v1651
      %1905 = vmatprep.subr.mxu0 0.0
      %1906 = vmatpush1.msra.mxu0 %v1652
      %1907 = vmatprep.subr.mxu0 0.0
      %1908 = vmatpush1.msra.mxu0 %v1653
      %1909 = vmatprep.subr.mxu0 0.0
      %1910 = vmatpush1.msra.mxu0 %v1654
      %1911 = vmatprep.subr.mxu0 0.0
      %1912 = vmatpush1.msra.mxu0 %v1655
      %1913 = vmatprep.subr.mxu0 0.0
      %1914 = vmatpush1.msra.mxu0 %v1656
      %1915 = vmatprep.subr.mxu0 0.0
      %1916 = vmatpush1.msra.mxu0 0.0
      %1917 = vmatprep.subr.mxu0 0.0
      %1918 = vmatpush1.msra.mxu0 0.0
      %1919 = vmatprep.subr.mxu0 0.0
      %1920 = vmatpush1.msra.mxu0 0.0
      %1921 = vmatprep.subr.mxu0 0.0
      %1922 = vmatpush1.msra.mxu0 0.0
      %1923 = vmatprep.subr.mxu0 0.0
      %1924 = vmatpush1.msra.mxu0 0.0
      %1925 = vmatprep.subr.mxu0 0.0
      %1926 = vmatpush1.msra.mxu0 0.0
      %1927 = vmatprep.subr.mxu0 0.0
      %1928 = vmatpush1.msra.mxu0 0.0
      %1929 = vmatprep.subr.mxu0 0.0
      %1930 = vmatpush1.msra.mxu0 0.0
      %1931 = vmatprep.subr.mxu0 0.0
      %1932 = vmatpush1.msra.mxu0 0.0
      %1933 = vmatprep.subr.mxu0 0.0
      %1934 = vmatpush1.msra.mxu0 0.0
      %1935 = vmatprep.subr.mxu0 0.0
      %1936 = vmatpush1.msra.mxu0 0.0
      %1937 = vmatprep.subr.mxu0 0.0
      %1938 = vmatpush1.msra.mxu0 0.0
      %1939 = vmatprep.subr.mxu0 0.0
      %1940 = vmatpush1.msra.mxu0 0.0
      %1941 = vmatprep.subr.mxu0 0.0
      %1942 = vmatpush1.msra.mxu0 0.0
      %1943 = vmatprep.subr.mxu0 0.0
      %1944 = vmatpush1.msra.mxu0 0.0
      %1945 = vmatprep.subr.mxu0 0.0
      %1946 = vmatpush1.msra.mxu0 0.0
      %1947 = vmatprep.subr.mxu0 0.0
      %1948 = vmatpush1.msra.mxu0 0.0
      %1949 = vmatprep.subr.mxu0 0.0
      %1950 = vmatpush1.msra.mxu0 0.0
      %1951 = vmatprep.subr.mxu0 0.0
      %1952 = vmatpush1.msra.mxu0 0.0
      %1953 = vmatprep.subr.mxu0 0.0
      %1954 = vmatpush1.msra.mxu0 0.0
      %1955 = vmatprep.subr.mxu0 0.0
      %1956 = vmatpush1.msra.mxu0 0.0
      %1957 = vmatprep.subr.mxu0 0.0
      %1958 = vmatpush1.msra.mxu0 0.0
      %1959 = vmatprep.subr.mxu0 0.0
      %1960 = vmatpush1.msra.mxu0 0.0
      %1961 = vmatprep.subr.mxu0 0.0
      %1962 = vmatpush1.msra.mxu0 0.0
      %1963 = vmatprep.mubr.f32.mxu0 0.0
      %1964 = vmatmul.mubr.f32.gmra.mrb[0].mxu0 %v1666
      %v1965 = vpop.f32.mrb[0].mxu0
      %v1966 = vadd.f32 0.0, %v1965
      %v1967 = vpop.f32.mrb[0].mxu0
      %1968 = vmatprep.mubr.f32.mxu0 0.0
      %1969 = vmatmul.mubr.f32.gmra.mrb[0].mxu0 %v1669
      %v1970 = vpop.f32.mrb[0].mxu0
      %v1971 = vadd.f32 0.0, %v1970
      %v1972 = vpop.f32.mrb[0].mxu0
      %1973 = vmatprep.mubr.f32.mxu0 0.0
      %1974 = vmatmul.mubr.f32.gmra.mrb[0].mxu0 %v1672
      %v1975 = vpop.f32.mrb[0].mxu0
      %v1976 = vadd.f32 0.0, %v1975
      %v1977 = vpop.f32.mrb[0].mxu0
      %1978 = vmatprep.mubr.f32.mxu0 0.0
      %1979 = vmatmul.mubr.f32.gmra.mrb[0].mxu0 %v1675
      %v1980 = vpop.f32.mrb[0].mxu0
      %v1981 = vadd.f32 0.0, %v1980
      %v1982 = vpop.f32.mrb[0].mxu0
      %1983 = vmatprep.mubr.f32.mxu0 0.0
      %1984 = vmatmul.mubr.f32.gmra.mrb[0].mxu0 %v1678
      %v1985 = vpop.f32.mrb[0].mxu0
      %v1986 = vadd.f32 0.0, %v1985
      %v1987 = vpop.f32.mrb[0].mxu0
      %1988 = vmatprep.mubr.f32.mxu0 0.0
      %1989 = vmatmul.mubr.f32.gmra.mrb[0].mxu0 %v1681
      %v1990 = vpop.f32.mrb[0].mxu0
      %v1991 = vadd.f32 0.0, %v1990
      %v1992 = vpop.f32.mrb[0].mxu0
      %1993 = vmatprep.mubr.f32.mxu0 0.0
      %1994 = vmatmul.mubr.f32.gmra.mrb[0].mxu0 %v1684
      %v1995 = vpop.f32.mrb[0].mxu0
      %v1996 = vadd.f32 0.0, %v1995
      %v1997 = vpop.f32.mrb[0].mxu0
      %1998 = vmatprep.mubr.f32.mxu0 0.0
      %1999 = vmatmul.mubr.f32.gmra.mrb[0].mxu0 %v1687
      %v2000 = vpop.f32.mrb[0].mxu0
      %v2001 = vadd.f32 0.0, %v2000
      %v2002 = vpop.f32.mrb[0].mxu0
      %2003 = vdwg.mxu0
      %2004 = vmatprep.subr.mxu0 0.0
      %2005 = vmatpush1.msra.mxu0 %v1657
      %2006 = vmatprep.subr.mxu0 0.0
      %2007 = vmatpush1.msra.mxu0 %v1658
      %2008 = vmatprep.subr.mxu0 0.0
      %2009 = vmatpush1.msra.mxu0 %v1659
      %2010 = vmatprep.subr.mxu0 0.0
      %2011 = vmatpush1.msra.mxu0 %v1660
      %2012 = vmatprep.subr.mxu0 0.0
      %2013 = vmatpush1.msra.mxu0 %v1661
      %2014 = vmatprep.subr.mxu0 0.0
      %2015 = vmatpush1.msra.mxu0 %v1662
      %2016 = vmatprep.subr.mxu0 0.0
      %2017 = vmatpush1.msra.mxu0 %v1663
      %2018 = vmatprep.subr.mxu0 0.0
      %2019 = vmatpush1.msra.mxu0 %v1664
      %2020 = vmatprep.subr.mxu0 0.0
      %2021 = vmatpush1.msra.mxu0 0.0
      %2022 = vmatprep.subr.mxu0 0.0
      %2023 = vmatpush1.msra.mxu0 0.0
      %2024 = vmatprep.subr.mxu0 0.0
      %2025 = vmatpush1.msra.mxu0 0.0
      %2026 = vmatprep.subr.mxu0 0.0
      %2027 = vmatpush1.msra.mxu0 0.0
      %2028 = vmatprep.subr.mxu0 0.0
      %2029 = vmatpush1.msra.mxu0 0.0
      %2030 = vmatprep.subr.mxu0 0.0
      %2031 = vmatpush1.msra.mxu0 0.0
      %2032 = vmatprep.subr.mxu0 0.0
      %2033 = vmatpush1.msra.mxu0 0.0
      %2034 = vmatprep.subr.mxu0 0.0
      %2035 = vmatpush1.msra.mxu0 0.0
      %2036 = vmatprep.subr.mxu0 0.0
      %2037 = vmatpush1.msra.mxu0 0.0
      %2038 = vmatprep.subr.mxu0 0.0
      %2039 = vmatpush1.msra.mxu0 0.0
      %2040 = vmatprep.subr.mxu0 0.0
      %2041 = vmatpush1.msra.mxu0 0.0
      %2042 = vmatprep.subr.mxu0 0.0
      %2043 = vmatpush1.msra.mxu0 0.0
      %2044 = vmatprep.subr.mxu0 0.0
      %2045 = vmatpush1.msra.mxu0 0.0
      %2046 = vmatprep.subr.mxu0 0.0
      %2047 = vmatpush1.msra.mxu0 0.0
      %2048 = vmatprep.subr.mxu0 0.0
      %2049 = vmatpush1.msra.mxu0 0.0
      %2050 = vmatprep.subr.mxu0 0.0
      %2051 = vmatpush1.msra.mxu0 0.0
      %2052 = vmatprep.subr.mxu0 0.0
      %2053 = vmatpush1.msra.mxu0 0.0
      %2054 = vmatprep.subr.mxu0 0.0
      %2055 = vmatpush1.msra.mxu0 0.0
      %2056 = vmatprep.subr.mxu0 0.0
      %2057 = vmatpush1.msra.mxu0 0.0
      %2058 = vmatprep.subr.mxu0 0.0
      %2059 = vmatpush1.msra.mxu0 0.0
      %2060 = vmatprep.subr.mxu0 0.0
      %2061 = vmatpush1.msra.mxu0 0.0
      %2062 = vmatprep.subr.mxu0 0.0
      %2063 = vmatpush1.msra.mxu0 0.0
      %2064 = vmatprep.subr.mxu0 0.0
      %2065 = vmatpush1.msra.mxu0 0.0
      %2066 = vmatprep.subr.mxu0 0.0
      %2067 = vmatpush1.msra.mxu0 0.0
      %2068 = vmatprep.mubr.f32.mxu0 0.0
      %2069 = vmatmul.mubr.f32.gmra.mrb[0].mxu0 %v1666
      %v2070 = vpop.f32.mrb[0].mxu0
      %v2071 = vadd.f32 0.0, %v2070
      %v2072 = vpop.f32.mrb[0].mxu0
      %2073 = vmatprep.mubr.f32.mxu0 0.0
      %2074 = vmatmul.mubr.f32.gmra.mrb[0].mxu0 %v1669
      %v2075 = vpop.f32.mrb[0].mxu0
      %v2076 = vadd.f32 0.0, %v2075
      %v2077 = vpop.f32.mrb[0].mxu0
      %2078 = vmatprep.mubr.f32.mxu0 0.0
      %2079 = vmatmul.mubr.f32.gmra.mrb[0].mxu0 %v1672
      %v2080 = vpop.f32.mrb[0].mxu0
      %v2081 = vadd.f32 0.0, %v2080
      %v2082 = vpop.f32.mrb[0].mxu0
      %2083 = vmatprep.mubr.f32.mxu0 0.0
      %2084 = vmatmul.mubr.f32.gmra.mrb[0].mxu0 %v1675
      %v2085 = vpop.f32.mrb[0].mxu0
      %v2086 = vadd.f32 0.0, %v2085
      %v2087 = vpop.f32.mrb[0].mxu0
      %2088 = vmatprep.mubr.f32.mxu0 0.0
      %2089 = vmatmul.mubr.f32.gmra.mrb[0].mxu0 %v1678
      %v2090 = vpop.f32.mrb[0].mxu0
      %v2091 = vadd.f32 0.0, %v2090
      %v2092 = vpop.f32.mrb[0].mxu0
      %2093 = vmatprep.mubr.f32.mxu0 0.0
      %2094 = vmatmul.mubr.f32.gmra.mrb[0].mxu0 %v1681
      %v2095 = vpop.f32.mrb[0].mxu0
      %v2096 = vadd.f32 0.0, %v2095
      %v2097 = vpop.f32.mrb[0].mxu0
      %2098 = vmatprep.mubr.f32.mxu0 0.0
      %2099 = vmatmul.mubr.f32.gmra.mrb[0].mxu0 %v1684
      %v2100 = vpop.f32.mrb[0].mxu0
      %v2101 = vadd.f32 0.0, %v2100
      %v2102 = vpop.f32.mrb[0].mxu0
      %2103 = vmatprep.mubr.f32.mxu0 0.0
      %2104 = vmatmul.mubr.f32.gmra.mrb[0].mxu0 %v1687
      %v2105 = vpop.f32.mrb[0].mxu0
      %v2106 = vadd.f32 0.0, %v2105
      %v2107 = vpop.f32.mrb[0].mxu0
      %2108 = vdwg.mxu0
      %v2109 = vmax.f32 %v1756, %v1861
      %v2110 = vmax.f32 %v1761, %v1866
      %v2111 = vmax.f32 %v1766, %v1871
      %v2112 = vmax.f32 %v1771, %v1876
      %v2113 = vmax.f32 %v1776, %v1881
      %v2114 = vmax.f32 %v1781, %v1886
      %v2115 = vmax.f32 %v1786, %v1891
      %v2116 = vmax.f32 %v1791, %v1896
      %v2117 = vmax.f32 %v1966, %v2071
      %v2118 = vmax.f32 %v1971, %v2076
      %v2119 = vmax.f32 %v1976, %v2081
      %v2120 = vmax.f32 %v1981, %v2086
      %v2121 = vmax.f32 %v1986, %v2091
      %v2122 = vmax.f32 %v1991, %v2096
      %v2123 = vmax.f32 %v1996, %v2101
      %v2124 = vmax.f32 %v2001, %v2106
      %v2125 = vmax.f32 %v2109, %v2117
      %v2126 = vmax.f32 %v2110, %v2118
      %v2127 = vmax.f32 %v2111, %v2119
      %v2128 = vmax.f32 %v2112, %v2120
      %v2129 = vmax.f32 %v2113, %v2121
      %v2130 = vmax.f32 %v2114, %v2122
      %v2131 = vmax.f32 %v2115, %v2123
      %v2132 = vmax.f32 %v2116, %v2124
      %vm2133 = vcmask 130048
      %2134 = vst.msk [vmem:[%s291] sm:$0xff] %vm2133, %v2125
      %2135 = vst.msk [vmem:[%s291 + $0x8] sm:$0xff] %vm2133, %v2126
      %2136 = vst.msk [vmem:[%s291 + $0x10] sm:$0xff] %vm2133, %v2127
      %2137 = vst.msk [vmem:[%s291 + $0x18] sm:$0xff] %vm2133, %v2128
      %2138 = vst.msk [vmem:[%s291 + $0x20] sm:$0xff] %vm2133, %v2129
      %2139 = vst.msk [vmem:[%s291 + $0x28] sm:$0xff] %vm2133, %v2130
      %2140 = vst.msk [vmem:[%s291 + $0x30] sm:$0xff] %vm2133, %v2131
      %2141 = vst.msk [vmem:[%s291 + $0x38] sm:$0xff] %vm2133, %v2132
      %p2142 = scmp.lt.s32.totalorder %s19, 1
      %s2143 = scalar_select %p2142, %s19, 1
      %s2144 = smul.addr %s2143, 8
      %s2145 = smul.addr %s2144, 8
      %s2146 = scalar_lea.vmem %s6, %s2145
      %p2147 = scmp.lt.s32.totalorder %s19, 1
      %s2148 = scalar_select %p2147, %s19, 1
      %s2149 = smul.addr %s2148, 8
      %s2150 = smul.addr %s2149, 8
      %s2151 = scalar_lea.vmem %s7, %s2150
      // Predicated region
      $region45: #{_lambda_.6} parent=43 // pred_check
        %p2152 = pneg %p168
      $region46: #{_lambda_.6} parent=43 // pred_check_branch
        %2154 = sbr.rel (%p2152) target = $region48
      $region47: #{_lambda_.6} parent=43 // pred_region
        _
      $region48: #{_lambda_.6} parent=43 // pred_fallthru
        _
      // Predicated region
      $region49: #{_lambda_.6} parent=43 // pred_check
        %p2155 = pneg %p194
      $region50: #{_lambda_.6} parent=43 // pred_check_branch
        %2157 = sbr.rel (%p2155) target = $region52
      $region51: #{_lambda_.6} parent=43 // pred_region
        _
      $region52: #{_lambda_.6} parent=43 // pred_fallthru
        _
    $region44: #{_lambda_.6} parent=5 // pred_fallthru
      _
    %p2158 = scmp.le.s32.totalorder 2, %s14
    // Predicated region
    $region53: #{_lambda_.6} parent=5 // pred_check
      %p2159 = pneg %p2158
    $region54: #{_lambda_.6} parent=5 // pred_check_branch
      %2161 = sbr.rel (%p2159) target = $region56
    $region55: #{_lambda_.6} parent=5 // pred_region
      %s2162 = ssub.s32 %s14, 2
      // Predicated region
      $region57: #{_lambda_.6} parent=55 // pred_check
        %p2163 = pneg %p174
      $region58: #{_lambda_.6} parent=55 // pred_check_branch
        %2165 = sbr.rel (%p2163) target = $region60
      $region59: #{_lambda_.6} parent=55 // pred_region
        %p2166 = scmp.lt.s32.totalorder %s20, 1
        %s2167 = scalar_select %p2166, %s20, 1
        %s2168 = smul.addr %s2167, 8
        %s2169 = smul.addr %s2168, 8
        %s2170 = scalar_lea.vmem %s6, %s2169
      $region60: #{_lambda_.6} parent=55 // pred_fallthru
        _
      // Predicated region
      $region61: #{_lambda_.6} parent=55 // pred_check
        %p2171 = pneg %p200
      $region62: #{_lambda_.6} parent=55 // pred_check_branch
        %2173 = sbr.rel (%p2171) target = $region64
      $region63: #{_lambda_.6} parent=55 // pred_region
        %p2174 = scmp.lt.s32.totalorder %s20, 1
        %s2175 = scalar_select %p2174, %s20, 1
        %s2176 = smul.addr %s2175, 8
        %s2177 = smul.addr %s2176, 8
        %s2178 = scalar_lea.vmem %s7, %s2177
      $region64: #{_lambda_.6} parent=55 // pred_fallthru
        _
    $region56: #{_lambda_.6} parent=5 // pred_fallthru
      _
  $region6: #{_lambda_.6} parent=0 // loop_footer
    %s18 = sadd.s32 1, %s14
  $region7: #{_lambda_.6} parent=0 // loop_footer_branch
    %13 = sbr.rel target = $region3
  $region8: #{_lambda_.6} parent=0 // loop_exit
    _

// kernel: _lambda_.5
$region0: #{_lambda_.5}
  #allocation0 [shape = 'u32[]', space=smem, size = 0x4, offset = 0x4, fixed_abs, tag = 'smem constant byte address 0x4 - core index']
  #allocation1 [shape = 'u32[144,128]{1,0:T(1,128)}', space=vmem, size = 0x12000, scoped, tag = 'internal scratch']
  %s0 = inlined_call_operand.vmem [shape: f32[2,1,256], index: 0, kind: input, shape index: {}]
  %s1 = inlined_call_operand.vmem [shape: bf16[3,32,3], index: 1, kind: input, shape index: {}]
  %s2 = inlined_call_operand.vmem [shape: f32[32,1], index: 2, kind: input, shape index: {}]
  %s3 = inlined_call_operand.vmem [shape: bf16[3,32,96], index: 3, kind: input, shape index: {}]
  %s4 = inlined_call_operand.vmem [shape: f32[32,1], index: 4, kind: input, shape index: {}]
  %s5 = inlined_call_operand.vmem [shape: f32[4,256,64], index: 5, kind: input, shape index: {}]
  %s6 = inlined_call_operand.vmem [shape: f32[2,32,256], index: 6, kind: output, shape index: {0}]
  %s7 = inlined_call_operand.vmem [shape: f32[2,32,64], index: 7, kind: output, shape index: {1}]
  %8 = xla_tuple %s6, %s7
  %s9 = sld [smem:[#allocation0]]
  $region65: #{_lambda_.5} parent=0
    _
  %s11 = ssub.s32 1, %s9
  %s12 = scalar_select 0, %s11, %s9
  loop: start=0, step=1, limit=4
  $region2: #{_lambda_.5} parent=0 // loop_pre_header
    _
  $region3: #{_lambda_.5} parent=0 // loop_header
    %s14 = sphi 0, %s18
    %p15 = scmp.ge.s32.totalorder %s14, 4
    %s24 = sphi 0, %s26
    %s27 = sphi 0, %s24
    %s28 = sphi 0, %s27
    %s44 = sphi 0, %s28
    %s48 = sphi 0, %s48
    %s50 = sphi 0, %s48
    %s51 = sphi 0, %s50
    %s65 = sphi 0, %s51
    %s69 = sphi 0, %s69
    %s71 = sphi 0, %s69
    %s72 = sphi 0, %s71
    %s86 = sphi 0, %s72
    %s90 = sphi 0, %s90
    %s92 = sphi 0, %s90
    %s93 = sphi 0, %s92
    %s107 = sphi 0, %s93
    %s111 = sphi 0, %s111
    %s113 = sphi 0, %s111
    %s114 = sphi 0, %s113
    %s128 = sphi 0, %s114
    %s132 = sphi 0, %s132
    %s134 = sphi 0, %s132
    %s135 = sphi 0, %s134
    %s149 = sphi 0, %s135
    %s155 = sphi 0, %s157
    %s158 = sphi 0, %s155
    %s159 = sphi 0, %s158
    %s175 = sphi 0, %s159
    %s181 = sphi 0, %s183
    %s184 = sphi 0, %s181
    %s185 = sphi 0, %s184
    %s201 = sphi 0, %s185
  $region4: #{_lambda_.5} parent=0 // loop_header_branch
    %17 = sbr.rel (%p15) target = $region8
  $region5: #{_lambda_.5} parent=0 // loop_body
    %s19 = ssub.s32 %s14, 1
    %s20 = ssub.s32 %s14, 2
    %s21 = sadd.s32 %s14, 1
    %s22 = ssub.s32 %s14, %s21
    %p23 = scmp.eq.s32.totalorder %s22, 0
    %s25 = sadd.s32 %s24, 1
    %s26 = scalar_select %p23, %s24, %s25
    %p29 = pneg %p23
    %p30 = scmp.eq.s32.totalorder %s14, 1
    %p31 = por %p29, %p30
    %p32 = scmp.ne.s32.totalorder %s24, %s27
    %p33 = scmp.eq.s32.totalorder %s14, 0
    %p34 = por %p32, %p33
    %p35 = scmp.ne.s32.totalorder %s24, %s27
    %p36 = scmp.eq.s32.totalorder %s19, 1
    %p37 = por %p35, %p36
    %p38 = scmp.ne.s32.totalorder %s27, %s28
    %p39 = scmp.eq.s32.totalorder %s19, 0
    %p40 = por %p38, %p39
    %p41 = scmp.ne.s32.totalorder %s27, %s28
    %p42 = scmp.eq.s32.totalorder %s20, 1
    %p43 = por %p41, %p42
    %p45 = scmp.ne.s32.totalorder %s28, %s44
    %p46 = scmp.eq.s32.totalorder %s20, 0
    %p47 = por %p45, %p46
    %s49 = sadd.s32 %s48, 1
    %p52 = scmp.eq.s32.totalorder %s14, 1
    %p53 = scmp.ne.s32.totalorder %s48, %s50
    %p54 = scmp.eq.s32.totalorder %s14, 0
    %p55 = por %p53, %p54
    %p56 = scmp.ne.s32.totalorder %s48, %s50
    %p57 = scmp.eq.s32.totalorder %s19, 1
    %p58 = por %p56, %p57
    %p59 = scmp.ne.s32.totalorder %s50, %s51
    %p60 = scmp.eq.s32.totalorder %s19, 0
    %p61 = por %p59, %p60
    %p62 = scmp.ne.s32.totalorder %s50, %s51
    %p63 = scmp.eq.s32.totalorder %s20, 1
    %p64 = por %p62, %p63
    %p66 = scmp.ne.s32.totalorder %s51, %s65
    %p67 = scmp.eq.s32.totalorder %s20, 0
    %p68 = por %p66, %p67
    %s70 = sadd.s32 %s69, 1
    %p73 = scmp.eq.s32.totalorder %s14, 1
    %p74 = scmp.ne.s32.totalorder %s69, %s71
    %p75 = scmp.eq.s32.totalorder %s14, 0
    %p76 = por %p74, %p75
    %p77 = scmp.ne.s32.totalorder %s69, %s71
    %p78 = scmp.eq.s32.totalorder %s19, 1
    %p79 = por %p77, %p78
    %p80 = scmp.ne.s32.totalorder %s71, %s72
    %p81 = scmp.eq.s32.totalorder %s19, 0
    %p82 = por %p80, %p81
    %p83 = scmp.ne.s32.totalorder %s71, %s72
    %p84 = scmp.eq.s32.totalorder %s20, 1
    %p85 = por %p83, %p84
    %p87 = scmp.ne.s32.totalorder %s72, %s86
    %p88 = scmp.eq.s32.totalorder %s20, 0
    %p89 = por %p87, %p88
    %s91 = sadd.s32 %s90, 1
    %p94 = scmp.eq.s32.totalorder %s14, 1
    %p95 = scmp.ne.s32.totalorder %s90, %s92
    %p96 = scmp.eq.s32.totalorder %s14, 0
    %p97 = por %p95, %p96
    %p98 = scmp.ne.s32.totalorder %s90, %s92
    %p99 = scmp.eq.s32.totalorder %s19, 1
    %p100 = por %p98, %p99
    %p101 = scmp.ne.s32.totalorder %s92, %s93
    %p102 = scmp.eq.s32.totalorder %s19, 0
    %p103 = por %p101, %p102
    %p104 = scmp.ne.s32.totalorder %s92, %s93
    %p105 = scmp.eq.s32.totalorder %s20, 1
    %p106 = por %p104, %p105
    %p108 = scmp.ne.s32.totalorder %s93, %s107
    %p109 = scmp.eq.s32.totalorder %s20, 0
    %p110 = por %p108, %p109
    %s112 = sadd.s32 %s111, 1
    %p115 = scmp.eq.s32.totalorder %s14, 1
    %p116 = scmp.ne.s32.totalorder %s111, %s113
    %p117 = scmp.eq.s32.totalorder %s14, 0
    %p118 = por %p116, %p117
    %p119 = scmp.ne.s32.totalorder %s111, %s113
    %p120 = scmp.eq.s32.totalorder %s19, 1
    %p121 = por %p119, %p120
    %p122 = scmp.ne.s32.totalorder %s113, %s114
    %p123 = scmp.eq.s32.totalorder %s19, 0
    %p124 = por %p122, %p123
    %p125 = scmp.ne.s32.totalorder %s113, %s114
    %p126 = scmp.eq.s32.totalorder %s20, 1
    %p127 = por %p125, %p126
    %p129 = scmp.ne.s32.totalorder %s114, %s128
    %p130 = scmp.eq.s32.totalorder %s20, 0
    %p131 = por %p129, %p130
    %s133 = sadd.s32 %s132, 1
    %p136 = scmp.eq.s32.totalorder %s14, 1
    %p137 = scmp.ne.s32.totalorder %s132, %s134
    %p138 = scmp.eq.s32.totalorder %s14, 0
    %p139 = por %p137, %p138
    %p140 = scmp.ne.s32.totalorder %s132, %s134
    %p141 = scmp.eq.s32.totalorder %s19, 1
    %p142 = por %p140, %p141
    %p143 = scmp.ne.s32.totalorder %s134, %s135
    %p144 = scmp.eq.s32.totalorder %s19, 0
    %p145 = por %p143, %p144
    %p146 = scmp.ne.s32.totalorder %s134, %s135
    %p147 = scmp.eq.s32.totalorder %s20, 1
    %p148 = por %p146, %p147
    %p150 = scmp.ne.s32.totalorder %s135, %s149
    %p151 = scmp.eq.s32.totalorder %s20, 0
    %p152 = por %p150, %p151
    %s153 = ssub.s32 %s14, %s21
    %p154 = scmp.eq.s32.totalorder %s153, 0
    %s156 = sadd.s32 %s155, 1
    %s157 = scalar_select %p154, %s155, %s156
    %p160 = pneg %p154
    %p161 = scmp.eq.s32.totalorder %s14, 1
    %p162 = por %p160, %p161
    %p163 = scmp.ne.s32.totalorder %s155, %s158
    %p164 = scmp.eq.s32.totalorder %s14, 0
    %p165 = por %p163, %p164
    %p166 = scmp.ne.s32.totalorder %s155, %s158
    %p167 = scmp.eq.s32.totalorder %s19, 1
    %p168 = por %p166, %p167
    %p169 = scmp.ne.s32.totalorder %s158, %s159
    %p170 = scmp.eq.s32.totalorder %s19, 0
    %p171 = por %p169, %p170
    %p172 = scmp.ne.s32.totalorder %s158, %s159
    %p173 = scmp.eq.s32.totalorder %s20, 1
    %p174 = por %p172, %p173
    %p176 = scmp.ne.s32.totalorder %s159, %s175
    %p177 = scmp.eq.s32.totalorder %s20, 0
    %p178 = por %p176, %p177
    %s179 = ssub.s32 %s14, %s21
    %p180 = scmp.eq.s32.totalorder %s179, 0
    %s182 = sadd.s32 %s181, 1
    %s183 = scalar_select %p180, %s181, %s182
    %p186 = pneg %p180
    %p187 = scmp.eq.s32.totalorder %s14, 1
    %p188 = por %p186, %p187
    %p189 = scmp.ne.s32.totalorder %s181, %s184
    %p190 = scmp.eq.s32.totalorder %s14, 0
    %p191 = por %p189, %p190
    %p192 = scmp.ne.s32.totalorder %s181, %s184
    %p193 = scmp.eq.s32.totalorder %s19, 1
    %p194 = por %p192, %p193
    %p195 = scmp.ne.s32.totalorder %s184, %s185
    %p196 = scmp.eq.s32.totalorder %s19, 0
    %p197 = por %p195, %p196
    %p198 = scmp.ne.s32.totalorder %s184, %s185
    %p199 = scmp.eq.s32.totalorder %s20, 1
    %p200 = por %p198, %p199
    %p202 = scmp.ne.s32.totalorder %s185, %s201
    %p203 = scmp.eq.s32.totalorder %s20, 0
    %p204 = por %p202, %p203
    %p205 = scmp.le.s32.totalorder 1, %s14
    %p206 = scmp.lt.s32.totalorder %s14, 3
    %p207 = pnand %p205, %p206
    %p208 = pneg %p207
    // Predicated region
    $region9: #{_lambda_.5} parent=5 // pred_check
      _
    $region10: #{_lambda_.5} parent=5 // pred_check_branch
      %210 = sbr.rel (%p207) target = $region12
    $region11: #{_lambda_.5} parent=5 // pred_region
      %s211 = ssub.s32 %s14, 1
      // Predicated region
      $region13: #{_lambda_.5} parent=11 // pred_check
        %p212 = pneg %p61
      $region14: #{_lambda_.5} parent=11 // pred_check_branch
        %214 = sbr.rel (%p212) target = $region16
      $region15: #{_lambda_.5} parent=11 // pred_region
        _
      $region16: #{_lambda_.5} parent=11 // pred_fallthru
        _
      // Predicated region
      $region17: #{_lambda_.5} parent=11 // pred_check
        %p215 = pneg %p82
      $region18: #{_lambda_.5} parent=11 // pred_check_branch
        %217 = sbr.rel (%p215) target = $region20
      $region19: #{_lambda_.5} parent=11 // pred_region
        _
      $region20: #{_lambda_.5} parent=11 // pred_fallthru
        _
      // Predicated region
      $region21: #{_lambda_.5} parent=11 // pred_check
        %p218 = pneg %p103
      $region22: #{_lambda_.5} parent=11 // pred_check_branch
        %220 = sbr.rel (%p218) target = $region24
      $region23: #{_lambda_.5} parent=11 // pred_region
        _
      $region24: #{_lambda_.5} parent=11 // pred_fallthru
        _
      // Predicated region
      $region25: #{_lambda_.5} parent=11 // pred_check
        %p221 = pneg %p124
      $region26: #{_lambda_.5} parent=11 // pred_check_branch
        %223 = sbr.rel (%p221) target = $region28
      $region27: #{_lambda_.5} parent=11 // pred_region
        _
      $region28: #{_lambda_.5} parent=11 // pred_fallthru
        _
      // Predicated region
      $region29: #{_lambda_.5} parent=11 // pred_check
        %p224 = pneg %p145
      $region30: #{_lambda_.5} parent=11 // pred_check_branch
        %226 = sbr.rel (%p224) target = $region32
      $region31: #{_lambda_.5} parent=11 // pred_region
        _
      $region32: #{_lambda_.5} parent=11 // pred_fallthru
        _
    $region12: #{_lambda_.5} parent=5 // pred_fallthru
      _
    %p227 = scmp.lt.s32.totalorder %s14, 2
    // Predicated region
    $region33: #{_lambda_.5} parent=5 // pred_check
      %p228 = pneg %p227
    $region34: #{_lambda_.5} parent=5 // pred_check_branch
      %230 = sbr.rel (%p228) target = $region36
    $region35: #{_lambda_.5} parent=5 // pred_region
      // Predicated region
      $region37: #{_lambda_.5} parent=35 // pred_check
        %p231 = pneg %p34
      $region38: #{_lambda_.5} parent=35 // pred_check_branch
        %233 = sbr.rel (%p231) target = $region40
      $region39: #{_lambda_.5} parent=35 // pred_region
        %p234 = scmp.lt.s32.totalorder %s14, 1
        %s235 = scalar_select %p234, %s14, 1
        %s236 = smul.addr %s235, 2
        %s237 = scalar_lea.vmem %s0, %s236
      $region40: #{_lambda_.5} parent=35 // pred_fallthru
        _
    $region36: #{_lambda_.5} parent=5 // pred_fallthru
      _
    %p238 = scmp.le.s32.totalorder 1, %s14
    %p239 = scmp.lt.s32.totalorder %s14, 3
    %p240 = pnand %p238, %p239
    %p241 = pneg %p240
    // Predicated region
    $region41: #{_lambda_.5} parent=5 // pred_check
      _
    $region42: #{_lambda_.5} parent=5 // pred_check_branch
      %243 = sbr.rel (%p240) target = $region44
    $region43: #{_lambda_.5} parent=5 // pred_region
      %s244 = ssub.s32 %s14, 1
      %p245 = scmp.lt.s32.totalorder %s19, 1
      %s246 = scalar_select %p245, %s19, 1
      %s247 = smul.addr %s246, 2
      %s248 = scalar_lea.vmem %s0, %s247
      %p249 = pneg %p40
      %p250 = pneg %p37
      %p251 = pneg %p61
      %p252 = pneg %p58
      %p253 = pneg %p82
      %p254 = pneg %p79
      %p255 = pneg %p103
      %p256 = pneg %p100
      %p257 = pneg %p124
      %p258 = pneg %p121
      %p259 = pneg %p145
      %p260 = pneg %p142
      %p261 = pneg %p171
      %p262 = pneg %p168
      %p263 = scmp.lt.s32.totalorder %s19, 1
      %s264 = scalar_select %p263, %s19, 1
      %s265 = smul.addr %s264, 8
      %s266 = smul.addr %s265, 8
      %s267 = scalar_lea.vmem %s6, %s266
      %p268 = pneg %p197
      %p269 = pneg %p194
      %p270 = scmp.lt.s32.totalorder %s19, 1
      %s271 = scalar_select %p270, %s19, 1
      %s272 = smul.addr %s271, 4
      %s273 = smul.addr %s272, 8
      %s274 = scalar_lea.vmem %s7, %s273
      %p275 = scmp.lt.s32.totalorder %s19, 1
      %s276 = scalar_select %p275, %s19, 1
      %s277 = smul.addr %s276, 2
      %s278 = scalar_lea.vmem %s0, %s277
      %p279 = scmp.lt.s32.totalorder %s19, 1
      %s280 = scalar_select %p279, %s19, 1
      %s281 = smul.addr %s280, 8
      %s282 = smul.addr %s281, 8
      %s283 = scalar_lea.vmem %s6, %s282
      %p284 = scmp.lt.s32.totalorder %s19, 1
      %s285 = scalar_select %p284, %s19, 1
      %s286 = smul.addr %s285, 4
      %s287 = smul.addr %s286, 8
      %s288 = scalar_lea.vmem %s7, %s287
      %v290 = vld [vmem:[%s278] sm:$0x3]
      %v291 = vld [vmem:[%s1] sm:$0xf]
      %v292 = vld [vmem:[%s1 + $0x4] sm:$0xf]
      %v293 = vld [vmem:[%s1 + $0x8] sm:$0xf]
      %v294 = vld [vmem:[%s1 + $0xc] sm:$0xf]
      %v295 = vld [vmem:[%s1 + $0x10] sm:$0xf]
      %v296 = vld [vmem:[%s1 + $0x14] sm:$0xf]
      %v297 = vld [vmem:[%s1 + $0x18] sm:$0xf]
      %v298 = vld [vmem:[%s1 + $0x1c] sm:$0xf]
      %v299 = vld [vmem:[%s1 + $0x20] sm:$0xf]
      %v300 = vld [vmem:[%s1 + $0x24] sm:$0xf]
      %v301 = vld [vmem:[%s1 + $0x28] sm:$0xf]
      %v302 = vld [vmem:[%s1 + $0x2c] sm:$0xf]
      %v303 = vld [vmem:[%s2] sm:$0xff]
      %v304 = vld [vmem:[%s2 + $0x8] sm:$0xff]
      %v305 = vld [vmem:[%s2 + $0x10] sm:$0xff]
      %v306 = vld [vmem:[%s2 + $0x18] sm:$0xff]
      %v307 = vlaneseq
      %v308 = vand.u32 %v307, 127
      %v309 = vadd.s32 %v308, 128
      %vm310 = vcmp.lt.s32.totalorder %v308, 0
      %v311 = vsub.s32 0, %v308
      %v312 = vsel %vm310, %v311, %v308
      %v313 = vshrl.u32 %v312, 4
      %v314 = vand.u32 %v312, 15
      %v315 = vsub.s32 0, %v314
      %v316 = vsel %vm310, %v315, %v314
      %vm317 = vcmp.lt.s32.totalorder %v309, 0
      %v318 = vsub.s32 0, %v309
      %v319 = vsel %vm317, %v318, %v309
      %v320 = vshrl.u32 %v319, 4
      %v321 = vand.u32 %v319, 15
      %v322 = vsub.s32 0, %v321
      %v323 = vsel %vm317, %v322, %v321
      %vm324 = vcmp.ne.s32.totalorder %v316, 0
      %vm325 = vcmp.ne.s32.totalorder %v323, 0
      %vm326 = vcmp.lt.s32.totalorder %v316, 0
      %vm327 = vcmp.lt.s32.totalorder %v323, 0
      %vm328 = vmand %vm326, %vm324
      %vm329 = vmand %vm327, %vm325
      %v330 = vadd.s32 %v316, 16
      %v331 = vadd.s32 %v323, 16
      %v332 = vsel %vm328, %v330, %v316
      %v333 = vsel %vm329, %v331, %v323
      %vm334 = vcmp.eq.s32.totalorder %v332, 0
      %vm335 = vcmp.eq.s32.totalorder %v333, 0
      %v337 = vlaneseq
      %v338 = vshrl.u32 %v337, 7
      %v339 = vsub.s32 0, %v338
      %v340 = vrot.slane %v290, %v339
      %v341 = vlaneseq
      %v342 = vshrl.u32 %v341, 7
      %v343 = vsub.s32 1, %v342
      %v344 = vrot.slane %v290, %v343
      %345 = vrot.lane.b32.xlu0 %v340, 1
      %v346 = vpop.permute.xlu0 %345
      %347 = vrot.lane.b32.xlu0 %v344, 1
      %v348 = vpop.permute.xlu0 %347
      %vm349 = vcmask 7168
      %v350 = vsel %vm349, %v346, %v348
      %v353 = vsel %vm349, 0.0, %v346
      %v354 = vsel %vm334, 0.0, %v353
      %v355 = vsel %vm335, 0.0, %v350
      %vm356 = vcmp.eq.s32.totalorder %v332, 15
      %vm357 = vcmp.eq.s32.totalorder %v333, 15
      %358 = vrot.lane.b32.xlu0 %v340, 127
      %v359 = vpop.permute.xlu0 %358
      %360 = vrot.lane.b32.xlu0 %v344, 127
      %v361 = vpop.permute.xlu0 %360
      %vm362 = vcmask 1039360
      %v363 = vsel %vm362, %v359, %v361
      %v366 = vsel %vm362, %v361, 0.0
      %v367 = vsel %vm356, 0.0, %v363
      %v368 = vsel %vm357, 0.0, %v366
      %v373 = vrot.slane %v367, 6
      %v374 = vrot.slane %v368, 6
      %vm377 = vcmask 1040384
      %v378 = vsel %vm377, %v354, %v340
      %v379 = vsel %vm377, %v355, %v344
      %vm380 = vcmask 1041408
      %v381 = vsel %vm380, %v378, %v373
      %v382 = vsel %vm380, %v379, %v374
      %385 = vrot.lane.b32.xlu0 %v381, 16
      %v386 = vpop.permute.xlu0 %385
      %387 = vrot.lane.b32.xlu0 %v382, 16
      %v388 = vpop.permute.xlu0 %387
      %vm389 = vcmask 130048
      %v390 = vsel %vm389, %v386, %v388
      %v394 = vsel %vm389, 0.0, %v386
      %v395 = vsel %vm389, %v388, 0.0
      %v396 = vpack.c.bf16 %v394, %v394
      %v397 = vpack.c.bf16 %v390, %v390
      %v398 = vpack.c.bf16 %v395, %v395
      %v403 = vunpack.c.l.b16 %v295
      %v404 = vunpack.c.l.b16 %v296
      %v405 = vunpack.c.l.b16 %v297
      %v406 = vunpack.c.l.b16 %v298
      %v407 = vpack.c.b16 %v404, %v403
      %v408 = vpack.c.b16 %v406, %v405
      %412 = vrot.lane.b32.xlu0 %v396, 112
      %v413 = vpop.permute.xlu0 %412
      %414 = vrot.lane.b32.xlu0 %v397, 112
      %v415 = vpop.permute.xlu0 %414
      %416 = vrot.lane.b32.xlu0 %v398, 112
      %v417 = vpop.permute.xlu0 %416
      %vm418 = vcmask 916480
      %v419 = vsel %vm418, %v413, %v415
      %v420 = vsel %vm418, %v415, %v417
      %vm421 = vcmask 23552
      %v423 = vsel %vm421, %v407, 0
      %v426 = vsel %vm421, %v408, 0
      %v428 = vsel %vm377, 4294967295, 65535
      %v429 = vsel %vm380, %v428, 0
      %v431 = vand.u32 %v419, %v429
      %v434 = vand.u32 %v420, %v429
      %436 = vmatprep.subr.bf16.mxu0 %v434
      %437 = vmatpush1.bf16.msra.mxu0 %v431
      %438 = vmatprep.subr.bf16.mxu0 0
      %439 = vmatpush1.bf16.msra.mxu0 0
      %440 = vmatprep.subr.bf16.mxu0 0
      %441 = vmatpush1.bf16.msra.mxu0 0
      %442 = vmatprep.subr.bf16.mxu0 0
      %443 = vmatpush1.bf16.msra.mxu0 0
      %444 = vmatprep.subr.bf16.mxu0 0
      %445 = vmatpush1.bf16.msra.mxu0 0
      %446 = vmatprep.subr.bf16.mxu0 0
      %447 = vmatpush1.bf16.msra.mxu0 0
      %448 = vmatprep.subr.bf16.mxu0 0
      %449 = vmatpush1.bf16.msra.mxu0 0
      %450 = vmatprep.subr.bf16.mxu0 0
      %451 = vmatpush1.bf16.msra.mxu0 0
      %452 = vmatprep.subr.bf16.mxu0 0
      %453 = vmatpush1.bf16.msra.mxu0 0
      %454 = vmatprep.subr.bf16.mxu0 0
      %455 = vmatpush1.bf16.msra.mxu0 0
      %456 = vmatprep.subr.bf16.mxu0 0
      %457 = vmatpush1.bf16.msra.mxu0 0
      %458 = vmatprep.subr.bf16.mxu0 0
      %459 = vmatpush1.bf16.msra.mxu0 0
      %460 = vmatprep.subr.bf16.mxu0 0
      %461 = vmatpush1.bf16.msra.mxu0 0
      %462 = vmatprep.subr.bf16.mxu0 0
      %463 = vmatpush1.bf16.msra.mxu0 0
      %464 = vmatprep.subr.bf16.mxu0 0
      %465 = vmatpush1.bf16.msra.mxu0 0
      %466 = vmatprep.subr.bf16.mxu0 0
      %467 = vmatpush1.bf16.msra.mxu0 0
      %468 = vmatprep.mubr.bf16.mxu0 0
      %469 = vmatmul.mubr.bf16.gmra.mrb[0].mxu0 %v423
      %v470 = vpop.f32.mrb[0].mxu0
      %v471 = vadd.f32 0.0, %v470
      %v472 = vpop.f32.mrb[0].mxu0
      %v473 = vadd.f32 0.0, %v472
      %v474 = vpop.f32.mrb[0].mxu0
      %v475 = vadd.f32 0.0, %v474
      %v476 = vpop.f32.mrb[0].mxu0
      %v477 = vadd.f32 0.0, %v476
      %478 = vmatprep.mubr.bf16.mxu0 0
      %479 = vmatmul.mubr.bf16.gmra.mrb[0].mxu0 %v426
      %v480 = vpop.f32.mrb[0].mxu0
      %v481 = vadd.f32 0.0, %v480
      %v482 = vpop.f32.mrb[0].mxu0
      %v483 = vadd.f32 0.0, %v482
      %v484 = vpop.f32.mrb[0].mxu0
      %v485 = vadd.f32 0.0, %v484
      %v486 = vpop.f32.mrb[0].mxu0
      %v487 = vadd.f32 0.0, %v486
      %488 = vdwg.mxu0
      %v493 = vunpack.c.l.b16 %v291
      %v494 = vunpack.c.l.b16 %v292
      %v495 = vunpack.c.l.b16 %v293
      %v496 = vunpack.c.l.b16 %v294
      %v497 = vpack.c.b16 %v494, %v493
      %v498 = vpack.c.b16 %v496, %v495
      %v500 = vsel %vm421, %v497, 0
      %v503 = vsel %vm421, %v498, 0
      %v506 = vand.u32 %v396, %v429
      %v509 = vand.u32 %v397, %v429
      %511 = vmatprep.subr.bf16.mxu0 %v509
      %512 = vmatpush1.bf16.msra.mxu0 %v506
      %513 = vmatprep.subr.bf16.mxu0 0
      %514 = vmatpush1.bf16.msra.mxu0 0
      %515 = vmatprep.subr.bf16.mxu0 0
      %516 = vmatpush1.bf16.msra.mxu0 0
      %517 = vmatprep.subr.bf16.mxu0 0
      %518 = vmatpush1.bf16.msra.mxu0 0
      %519 = vmatprep.subr.bf16.mxu0 0
      %520 = vmatpush1.bf16.msra.mxu0 0
      %521 = vmatprep.subr.bf16.mxu0 0
      %522 = vmatpush1.bf16.msra.mxu0 0
      %523 = vmatprep.subr.bf16.mxu0 0
      %524 = vmatpush1.bf16.msra.mxu0 0
      %525 = vmatprep.subr.bf16.mxu0 0
      %526 = vmatpush1.bf16.msra.mxu0 0
      %527 = vmatprep.subr.bf16.mxu0 0
      %528 = vmatpush1.bf16.msra.mxu0 0
      %529 = vmatprep.subr.bf16.mxu0 0
      %530 = vmatpush1.bf16.msra.mxu0 0
      %531 = vmatprep.subr.bf16.mxu0 0
      %532 = vmatpush1.bf16.msra.mxu0 0
      %533 = vmatprep.subr.bf16.mxu0 0
      %534 = vmatpush1.bf16.msra.mxu0 0
      %535 = vmatprep.subr.bf16.mxu0 0
      %536 = vmatpush1.bf16.msra.mxu0 0
      %537 = vmatprep.subr.bf16.mxu0 0
      %538 = vmatpush1.bf16.msra.mxu0 0
      %539 = vmatprep.subr.bf16.mxu0 0
      %540 = vmatpush1.bf16.msra.mxu0 0
      %541 = vmatprep.subr.bf16.mxu0 0
      %542 = vmatpush1.bf16.msra.mxu0 0
      %543 = vmatprep.mubr.bf16.mxu0 0
      %544 = vmatmul.mubr.bf16.gmra.mrb[0].mxu0 %v500
      %v545 = vpop.f32.mrb[0].mxu0
      %v546 = vadd.f32 %v471, %v545
      %v547 = vpop.f32.mrb[0].mxu0
      %v548 = vadd.f32 %v473, %v547
      %v549 = vpop.f32.mrb[0].mxu0
      %v550 = vadd.f32 %v475, %v549
      %v551 = vpop.f32.mrb[0].mxu0
      %v552 = vadd.f32 %v477, %v551
      %553 = vmatprep.mubr.bf16.mxu0 0
      %554 = vmatmul.mubr.bf16.gmra.mrb[0].mxu0 %v503
      %v555 = vpop.f32.mrb[0].mxu0
      %v556 = vadd.f32 %v481, %v555
      %v557 = vpop.f32.mrb[0].mxu0
      %v558 = vadd.f32 %v483, %v557
      %v559 = vpop.f32.mrb[0].mxu0
      %v560 = vadd.f32 %v485, %v559
      %v561 = vpop.f32.mrb[0].mxu0
      %v562 = vadd.f32 %v487, %v561
      %563 = vdwg.mxu0
      %v568 = vunpack.c.l.b16 %v299
      %v569 = vunpack.c.l.b16 %v300
      %v570 = vunpack.c.l.b16 %v301
      %v571 = vunpack.c.l.b16 %v302
      %v572 = vpack.c.b16 %v569, %v568
      %v573 = vpack.c.b16 %v571, %v570
      %574 = vrot.lane.b32.xlu0 %v396, 96
      %v575 = vpop.permute.xlu0 %574
      %576 = vrot.lane.b32.xlu0 %v397, 96
      %v577 = vpop.permute.xlu0 %576
      %578 = vrot.lane.b32.xlu0 %v398, 96
      %v579 = vpop.permute.xlu0 %578
      %vm580 = vcmask 785408
      %v581 = vsel %vm580, %v575, %v577
      %v582 = vsel %vm580, %v577, %v579
      %v584 = vsel %vm421, %v572, 0
      %v587 = vsel %vm421, %v573, 0
      %v590 = vand.u32 %v581, %v429
      %v593 = vand.u32 %v582, %v429
      %595 = vmatprep.subr.bf16.mxu0 %v593
      %596 = vmatpush1.bf16.msra.mxu0 %v590
      %597 = vmatprep.subr.bf16.mxu0 0
      %598 = vmatpush1.bf16.msra.mxu0 0
      %599 = vmatprep.subr.bf16.mxu0 0
      %600 = vmatpush1.bf16.msra.mxu0 0
      %601 = vmatprep.subr.bf16.mxu0 0
      %602 = vmatpush1.bf16.msra.mxu0 0
      %603 = vmatprep.subr.bf16.mxu0 0
      %604 = vmatpush1.bf16.msra.mxu0 0
      %605 = vmatprep.subr.bf16.mxu0 0
      %606 = vmatpush1.bf16.msra.mxu0 0
      %607 = vmatprep.subr.bf16.mxu0 0
      %608 = vmatpush1.bf16.msra.mxu0 0
      %609 = vmatprep.subr.bf16.mxu0 0
      %610 = vmatpush1.bf16.msra.mxu0 0
      %611 = vmatprep.subr.bf16.mxu0 0
      %612 = vmatpush1.bf16.msra.mxu0 0
      %613 = vmatprep.subr.bf16.mxu0 0
      %614 = vmatpush1.bf16.msra.mxu0 0
      %615 = vmatprep.subr.bf16.mxu0 0
      %616 = vmatpush1.bf16.msra.mxu0 0
      %617 = vmatprep.subr.bf16.mxu0 0
      %618 = vmatpush1.bf16.msra.mxu0 0
      %619 = vmatprep.subr.bf16.mxu0 0
      %620 = vmatpush1.bf16.msra.mxu0 0
      %621 = vmatprep.subr.bf16.mxu0 0
      %622 = vmatpush1.bf16.msra.mxu0 0
      %623 = vmatprep.subr.bf16.mxu0 0
      %624 = vmatpush1.bf16.msra.mxu0 0
      %625 = vmatprep.subr.bf16.mxu0 0
      %626 = vmatpush1.bf16.msra.mxu0 0
      %627 = vmatprep.mubr.bf16.mxu0 0
      %628 = vmatmul.mubr.bf16.gmra.mrb[0].mxu0 %v584
      %v629 = vpop.f32.mrb[0].mxu0
      %v630 = vadd.f32 0.0, %v629
      %v631 = vpop.f32.mrb[0].mxu0
      %v632 = vadd.f32 0.0, %v631
      %v633 = vpop.f32.mrb[0].mxu0
      %v634 = vadd.f32 0.0, %v633
      %v635 = vpop.f32.mrb[0].mxu0
      %v636 = vadd.f32 0.0, %v635
      %637 = vmatprep.mubr.bf16.mxu0 0
      %638 = vmatmul.mubr.bf16.gmra.mrb[0].mxu0 %v587
      %v639 = vpop.f32.mrb[0].mxu0
      %v640 = vadd.f32 0.0, %v639
      %v641 = vpop.f32.mrb[0].mxu0
      %v642 = vadd.f32 0.0, %v641
      %v643 = vpop.f32.mrb[0].mxu0
      %v644 = vadd.f32 0.0, %v643
      %v645 = vpop.f32.mrb[0].mxu0
      %v646 = vadd.f32 0.0, %v645
      %647 = vdwg.mxu0
      %v648 = vadd.f32 %v546, %v630
      %v649 = vadd.f32 %v548, %v632
      %v650 = vadd.f32 %v550, %v634
      %v651 = vadd.f32 %v552, %v636
      %v652 = vadd.f32 %v556, %v640
      %v653 = vadd.f32 %v558, %v642
      %v654 = vadd.f32 %v560, %v644
      %v655 = vadd.f32 %v562, %v646
      %657 = vset.pattern.permute.xlu0 0
      %658 = vperm.xlu0 %657, %v303
      %v659 = vpop.permute.xlu0 %658
      %662 = vset.pattern.permute.xlu0 0
      %663 = vperm.xlu0 %662, %v304
      %v664 = vpop.permute.xlu0 %663
      %667 = vset.pattern.permute.xlu0 0
      %668 = vperm.xlu0 %667, %v305
      %v669 = vpop.permute.xlu0 %668
      %672 = vset.pattern.permute.xlu0 0
      %673 = vperm.xlu0 %672, %v306
      %v674 = vpop.permute.xlu0 %673
      %v676 = vadd.f32 %v648, %v659
      %v677 = vadd.f32 %v649, %v659
      %v678 = vadd.f32 %v650, %v664
      %v679 = vadd.f32 %v651, %v664
      %v680 = vadd.f32 %v652, %v669
      %v681 = vadd.f32 %v653, %v669
      %v682 = vadd.f32 %v654, %v674
      %v683 = vadd.f32 %v655, %v674
      %v684 = vmax.f32 %v676, 0.0
      %v685 = vmax.f32 %v677, 0.0
      %v686 = vmax.f32 %v678, 0.0
      %v687 = vmax.f32 %v679, 0.0
      %v688 = vmax.f32 %v680, 0.0
      %v689 = vmax.f32 %v681, 0.0
      %v690 = vmax.f32 %v682, 0.0
      %v691 = vmax.f32 %v683, 0.0
      %v692 = vld [vmem:[%s3] sm:$0xf]
      %v693 = vld [vmem:[%s3 + $0x4] sm:$0xf]
      %v694 = vld [vmem:[%s3 + $0x8] sm:$0xf]
      %v695 = vld [vmem:[%s3 + $0xc] sm:$0xf]
      %v696 = vld [vmem:[%s3 + $0x10] sm:$0xf]
      %v697 = vld [vmem:[%s3 + $0x14] sm:$0xf]
      %v698 = vld [vmem:[%s3 + $0x18] sm:$0xf]
      %v699 = vld [vmem:[%s3 + $0x1c] sm:$0xf]
      %v700 = vld [vmem:[%s3 + $0x20] sm:$0xf]
      %v701 = vld [vmem:[%s3 + $0x24] sm:$0xf]
      %v702 = vld [vmem:[%s3 + $0x28] sm:$0xf]
      %v703 = vld [vmem:[%s3 + $0x2c] sm:$0xf]
      %v704 = vld [vmem:[%s4] sm:$0xff]
      %v705 = vld [vmem:[%s4 + $0x8] sm:$0xff]
      %v706 = vld [vmem:[%s4 + $0x10] sm:$0xff]
      %v707 = vld [vmem:[%s4 + $0x18] sm:$0xff]
      %716 = vrot.lane.b32.xlu0 %v684, 1
      %v717 = vpop.permute.xlu0 %716
      %718 = vrot.lane.b32.xlu0 %v685, 1
      %v719 = vpop.permute.xlu0 %718
      %720 = vrot.lane.b32.xlu0 %v686, 1
      %v721 = vpop.permute.xlu0 %720
      %722 = vrot.lane.b32.xlu0 %v687, 1
      %v723 = vpop.permute.xlu0 %722
      %724 = vrot.lane.b32.xlu0 %v688, 1
      %v725 = vpop.permute.xlu0 %724
      %726 = vrot.lane.b32.xlu0 %v689, 1
      %v727 = vpop.permute.xlu0 %726
      %728 = vrot.lane.b32.xlu0 %v690, 1
      %v729 = vpop.permute.xlu0 %728
      %730 = vrot.lane.b32.xlu0 %v691, 1
      %v731 = vpop.permute.xlu0 %730
      %v732 = vsel %vm349, %v717, %v719
      %v733 = vsel %vm349, %v721, %v723
      %v734 = vsel %vm349, %v725, %v727
      %v735 = vsel %vm349, %v729, %v731
      %v744 = vsel %vm349, 0.0, %v717
      %v745 = vsel %vm349, 0.0, %v721
      %v746 = vsel %vm349, 0.0, %v725
      %v747 = vsel %vm349, 0.0, %v729
      %v748 = vsel %vm334, 1, 0
      %v749 = vsel %vm335, 1, 0
      %vm750 = vcmp.eq.s32.totalorder %v748, 1
      %vm751 = vcmp.eq.s32.totalorder %v749, 1
      %v752 = vsel %vm750, 0.0, %v744
      %v753 = vsel %vm751, 0.0, %v732
      %v754 = vsel %vm750, 0.0, %v745
      %v755 = vsel %vm751, 0.0, %v733
      %v756 = vsel %vm750, 0.0, %v746
      %v757 = vsel %vm751, 0.0, %v734
      %v758 = vsel %vm750, 0.0, %v747
      %v759 = vsel %vm751, 0.0, %v735
      %760 = vrot.lane.b32.xlu0 %v684, 127
      %v761 = vpop.permute.xlu0 %760
      %762 = vrot.lane.b32.xlu0 %v685, 127
      %v763 = vpop.permute.xlu0 %762
      %764 = vrot.lane.b32.xlu0 %v686, 127
      %v765 = vpop.permute.xlu0 %764
      %766 = vrot.lane.b32.xlu0 %v687, 127
      %v767 = vpop.permute.xlu0 %766
      %768 = vrot.lane.b32.xlu0 %v688, 127
      %v769 = vpop.permute.xlu0 %768
      %770 = vrot.lane.b32.xlu0 %v689, 127
      %v771 = vpop.permute.xlu0 %770
      %772 = vrot.lane.b32.xlu0 %v690, 127
      %v773 = vpop.permute.xlu0 %772
      %774 = vrot.lane.b32.xlu0 %v691, 127
      %v775 = vpop.permute.xlu0 %774
      %v776 = vsel %vm362, %v761, %v763
      %v777 = vsel %vm362, %v765, %v767
      %v778 = vsel %vm362, %v769, %v771
      %v779 = vsel %vm362, %v773, %v775
      %v788 = vsel %vm362, %v763, 0.0
      %v789 = vsel %vm362, %v767, 0.0
      %v790 = vsel %vm362, %v771, 0.0
      %v791 = vsel %vm362, %v775, 0.0
      %v792 = vsel %vm356, 1, 0
      %v793 = vsel %vm357, 1, 0
      %vm794 = vcmp.eq.s32.totalorder %v792, 1
      %vm795 = vcmp.eq.s32.totalorder %v793, 1
      %v796 = vsel %vm794, 0.0, %v776
      %v797 = vsel %vm795, 0.0, %v788
      %v798 = vsel %vm794, 0.0, %v777
      %v799 = vsel %vm795, 0.0, %v789
      %v800 = vsel %vm794, 0.0, %v778
      %v801 = vsel %vm795, 0.0, %v790
      %v802 = vsel %vm794, 0.0, %v779
      %v803 = vsel %vm795, 0.0, %v791
      %820 = vrot.lane.b32.xlu0 %v752, 16
      %v821 = vpop.permute.xlu0 %820
      %822 = vrot.lane.b32.xlu0 %v753, 16
      %v823 = vpop.permute.xlu0 %822
      %824 = vrot.lane.b32.xlu0 %v754, 16
      %v825 = vpop.permute.xlu0 %824
      %826 = vrot.lane.b32.xlu0 %v755, 16
      %v827 = vpop.permute.xlu0 %826
      %828 = vrot.lane.b32.xlu0 %v756, 16
      %v829 = vpop.permute.xlu0 %828
      %830 = vrot.lane.b32.xlu0 %v757, 16
      %v831 = vpop.permute.xlu0 %830
      %832 = vrot.lane.b32.xlu0 %v758, 16
      %v833 = vpop.permute.xlu0 %832
      %834 = vrot.lane.b32.xlu0 %v759, 16
      %v835 = vpop.permute.xlu0 %834
      %836 = vrot.lane.b32.xlu0 %v684, 16
      %v837 = vpop.permute.xlu0 %836
      %838 = vrot.lane.b32.xlu0 %v685, 16
      %v839 = vpop.permute.xlu0 %838
      %840 = vrot.lane.b32.xlu0 %v686, 16
      %v841 = vpop.permute.xlu0 %840
      %842 = vrot.lane.b32.xlu0 %v687, 16
      %v843 = vpop.permute.xlu0 %842
      %844 = vrot.lane.b32.xlu0 %v688, 16
      %v845 = vpop.permute.xlu0 %844
      %846 = vrot.lane.b32.xlu0 %v689, 16
      %v847 = vpop.permute.xlu0 %846
      %848 = vrot.lane.b32.xlu0 %v690, 16
      %v849 = vpop.permute.xlu0 %848
      %850 = vrot.lane.b32.xlu0 %v691, 16
      %v851 = vpop.permute.xlu0 %850
      %852 = vrot.lane.b32.xlu0 %v796, 16
      %v853 = vpop.permute.xlu0 %852
      %854 = vrot.lane.b32.xlu0 %v797, 16
      %v855 = vpop.permute.xlu0 %854
      %856 = vrot.lane.b32.xlu0 %v798, 16
      %v857 = vpop.permute.xlu0 %856
      %858 = vrot.lane.b32.xlu0 %v799, 16
      %v859 = vpop.permute.xlu0 %858
      %860 = vrot.lane.b32.xlu0 %v800, 16
      %v861 = vpop.permute.xlu0 %860
      %862 = vrot.lane.b32.xlu0 %v801, 16
      %v863 = vpop.permute.xlu0 %862
      %864 = vrot.lane.b32.xlu0 %v802, 16
      %v865 = vpop.permute.xlu0 %864
      %866 = vrot.lane.b32.xlu0 %v803, 16
      %v867 = vpop.permute.xlu0 %866
      %v868 = vsel %vm389, %v821, %v823
      %v869 = vsel %vm389, %v825, %v827
      %v870 = vsel %vm389, %v829, %v831
      %v871 = vsel %vm389, %v833, %v835
      %v872 = vsel %vm389, %v837, %v839
      %v873 = vsel %vm389, %v841, %v843
      %v874 = vsel %vm389, %v845, %v847
      %v875 = vsel %vm389, %v849, %v851
      %v876 = vsel %vm389, %v853, %v855
      %v877 = vsel %vm389, %v857, %v859
      %v878 = vsel %vm389, %v861, %v863
      %v879 = vsel %vm389, %v865, %v867
      %v916 = vsel %vm389, 0.0, %v821
      %v917 = vsel %vm389, 0.0, %v825
      %v918 = vsel %vm389, 0.0, %v829
      %v919 = vsel %vm389, 0.0, %v833
      %v920 = vsel %vm389, 0.0, %v837
      %v921 = vsel %vm389, 0.0, %v841
      %v922 = vsel %vm389, 0.0, %v845
      %v923 = vsel %vm389, 0.0, %v849
      %v924 = vsel %vm389, 0.0, %v853
      %v925 = vsel %vm389, 0.0, %v857
      %v926 = vsel %vm389, 0.0, %v861
      %v927 = vsel %vm389, 0.0, %v865
      %v928 = vsel %vm389, %v823, 0.0
      %v929 = vsel %vm389, %v827, 0.0
      %v930 = vsel %vm389, %v831, 0.0
      %v931 = vsel %vm389, %v835, 0.0
      %v932 = vsel %vm389, %v839, 0.0
      %v933 = vsel %vm389, %v843, 0.0
      %v934 = vsel %vm389, %v847, 0.0
      %v935 = vsel %vm389, %v851, 0.0
      %v936 = vsel %vm389, %v855, 0.0
      %v937 = vsel %vm389, %v859, 0.0
      %v938 = vsel %vm389, %v863, 0.0
      %v939 = vsel %vm389, %v867, 0.0
      %v940 = vpack.c.bf16 %v917, %v916
      %v941 = vpack.c.bf16 %v869, %v868
      %v942 = vpack.c.bf16 %v929, %v928
      %v943 = vpack.c.bf16 %v919, %v918
      %v944 = vpack.c.bf16 %v871, %v870
      %v945 = vpack.c.bf16 %v931, %v930
      %v946 = vpack.c.bf16 %v921, %v920
      %v947 = vpack.c.bf16 %v873, %v872
      %v948 = vpack.c.bf16 %v933, %v932
      %v949 = vpack.c.bf16 %v923, %v922
      %v950 = vpack.c.bf16 %v875, %v874
      %v951 = vpack.c.bf16 %v935, %v934
      %v952 = vpack.c.bf16 %v925, %v924
      %v953 = vpack.c.bf16 %v877, %v876
      %v954 = vpack.c.bf16 %v937, %v936
      %v955 = vpack.c.bf16 %v927, %v926
      %v956 = vpack.c.bf16 %v879, %v878
      %v957 = vpack.c.bf16 %v939, %v938
      %v962 = vunpack.c.l.b16 %v696
      %v963 = vunpack.c.l.b16 %v697
      %v964 = vunpack.c.l.b16 %v698
      %v965 = vunpack.c.l.b16 %v699
      %v966 = vpack.c.b16 %v963, %v962
      %v967 = vpack.c.b16 %v965, %v964
      %986 = vrot.lane.b32.xlu0 %v940, 112
      %v987 = vpop.permute.xlu0 %986
      %988 = vrot.lane.b32.xlu0 %v941, 112
      %v989 = vpop.permute.xlu0 %988
      %990 = vrot.lane.b32.xlu0 %v942, 112
      %v991 = vpop.permute.xlu0 %990
      %992 = vrot.lane.b32.xlu0 %v943, 112
      %v993 = vpop.permute.xlu0 %992
      %994 = vrot.lane.b32.xlu0 %v944, 112
      %v995 = vpop.permute.xlu0 %994
      %996 = vrot.lane.b32.xlu0 %v945, 112
      %v997 = vpop.permute.xlu0 %996
      %998 = vrot.lane.b32.xlu0 %v946, 112
      %v999 = vpop.permute.xlu0 %998
      %1000 = vrot.lane.b32.xlu0 %v947, 112
      %v1001 = vpop.permute.xlu0 %1000
      %1002 = vrot.lane.b32.xlu0 %v948, 112
      %v1003 = vpop.permute.xlu0 %1002
      %1004 = vrot.lane.b32.xlu0 %v949, 112
      %v1005 = vpop.permute.xlu0 %1004
      %1006 = vrot.lane.b32.xlu0 %v950, 112
      %v1007 = vpop.permute.xlu0 %1006
      %1008 = vrot.lane.b32.xlu0 %v951, 112
      %v1009 = vpop.permute.xlu0 %1008
      %1010 = vrot.lane.b32.xlu0 %v952, 112
      %v1011 = vpop.permute.xlu0 %1010
      %1012 = vrot.lane.b32.xlu0 %v953, 112
      %v1013 = vpop.permute.xlu0 %1012
      %1014 = vrot.lane.b32.xlu0 %v954, 112
      %v1015 = vpop.permute.xlu0 %1014
      %1016 = vrot.lane.b32.xlu0 %v955, 112
      %v1017 = vpop.permute.xlu0 %1016
      %1018 = vrot.lane.b32.xlu0 %v956, 112
      %v1019 = vpop.permute.xlu0 %1018
      %1020 = vrot.lane.b32.xlu0 %v957, 112
      %v1021 = vpop.permute.xlu0 %1020
      %v1022 = vsel %vm418, %v987, %v989
      %v1023 = vsel %vm418, %v989, %v991
      %v1024 = vsel %vm418, %v993, %v995
      %v1025 = vsel %vm418, %v995, %v997
      %v1026 = vsel %vm418, %v999, %v1001
      %v1027 = vsel %vm418, %v1001, %v1003
      %v1028 = vsel %vm418, %v1005, %v1007
      %v1029 = vsel %vm418, %v1007, %v1009
      %v1030 = vsel %vm418, %v1011, %v1013
      %v1031 = vsel %vm418, %v1013, %v1015
      %v1032 = vsel %vm418, %v1017, %v1019
      %v1033 = vsel %vm418, %v1019, %v1021
      %vm1046 = vcmask 785408
      %v1048 = vsel %vm1046, %v966, 0
      %v1051 = vsel %vm1046, %v967, 0
      %1053 = vmatprep.subr.bf16.mxu0 %v1023
      %1054 = vmatpush1.bf16.msra.mxu0 %v1022
      %1055 = vmatprep.subr.bf16.mxu0 %v1025
      %1056 = vmatpush1.bf16.msra.mxu0 %v1024
      %1057 = vmatprep.subr.bf16.mxu0 %v1027
      %1058 = vmatpush1.bf16.msra.mxu0 %v1026
      %1059 = vmatprep.subr.bf16.mxu0 %v1029
      %1060 = vmatpush1.bf16.msra.mxu0 %v1028
      %1061 = vmatprep.subr.bf16.mxu0 %v1031
      %1062 = vmatpush1.bf16.msra.mxu0 %v1030
      %1063 = vmatprep.subr.bf16.mxu0 %v1033
      %1064 = vmatpush1.bf16.msra.mxu0 %v1032
      %1065 = vmatprep.subr.bf16.mxu0 0
      %1066 = vmatpush1.bf16.msra.mxu0 0
      %1067 = vmatprep.subr.bf16.mxu0 0
      %1068 = vmatpush1.bf16.msra.mxu0 0
      %1069 = vmatprep.subr.bf16.mxu0 0
      %1070 = vmatpush1.bf16.msra.mxu0 0
      %1071 = vmatprep.subr.bf16.mxu0 0
      %1072 = vmatpush1.bf16.msra.mxu0 0
      %1073 = vmatprep.subr.bf16.mxu0 0
      %1074 = vmatpush1.bf16.msra.mxu0 0
      %1075 = vmatprep.subr.bf16.mxu0 0
      %1076 = vmatpush1.bf16.msra.mxu0 0
      %1077 = vmatprep.subr.bf16.mxu0 0
      %1078 = vmatpush1.bf16.msra.mxu0 0
      %1079 = vmatprep.subr.bf16.mxu0 0
      %1080 = vmatpush1.bf16.msra.mxu0 0
      %1081 = vmatprep.subr.bf16.mxu0 0
      %1082 = vmatpush1.bf16.msra.mxu0 0
      %1083 = vmatprep.subr.bf16.mxu0 0
      %1084 = vmatpush1.bf16.msra.mxu0 0
      %1085 = vmatprep.mubr.bf16.mxu0 0
      %1086 = vmatmul.mubr.bf16.gmra.mrb[0].mxu0 %v1048
      %v1087 = vpop.f32.mrb[0].mxu0
      %v1088 = vadd.f32 0.0, %v1087
      %v1089 = vpop.f32.mrb[0].mxu0
      %v1090 = vadd.f32 0.0, %v1089
      %v1091 = vpop.f32.mrb[0].mxu0
      %v1092 = vadd.f32 0.0, %v1091
      %v1093 = vpop.f32.mrb[0].mxu0
      %v1094 = vadd.f32 0.0, %v1093
      %1095 = vmatprep.mubr.bf16.mxu0 0
      %1096 = vmatmul.mubr.bf16.gmra.mrb[0].mxu0 %v1051
      %v1097 = vpop.f32.mrb[0].mxu0
      %v1098 = vadd.f32 0.0, %v1097
      %v1099 = vpop.f32.mrb[0].mxu0
      %v1100 = vadd.f32 0.0, %v1099
      %v1101 = vpop.f32.mrb[0].mxu0
      %v1102 = vadd.f32 0.0, %v1101
      %v1103 = vpop.f32.mrb[0].mxu0
      %v1104 = vadd.f32 0.0, %v1103
      %1105 = vdwg.mxu0
      %v1110 = vunpack.c.l.b16 %v692
      %v1111 = vunpack.c.l.b16 %v693
      %v1112 = vunpack.c.l.b16 %v694
      %v1113 = vunpack.c.l.b16 %v695
      %v1114 = vpack.c.b16 %v1111, %v1110
      %v1115 = vpack.c.b16 %v1113, %v1112
      %v1117 = vsel %vm1046, %v1114, 0
      %v1120 = vsel %vm1046, %v1115, 0
      %1122 = vmatprep.subr.bf16.mxu0 %v941
      %1123 = vmatpush1.bf16.msra.mxu0 %v940
      %1124 = vmatprep.subr.bf16.mxu0 %v944
      %1125 = vmatpush1.bf16.msra.mxu0 %v943
      %1126 = vmatprep.subr.bf16.mxu0 %v947
      %1127 = vmatpush1.bf16.msra.mxu0 %v946
      %1128 = vmatprep.subr.bf16.mxu0 %v950
      %1129 = vmatpush1.bf16.msra.mxu0 %v949
      %1130 = vmatprep.subr.bf16.mxu0 %v953
      %1131 = vmatpush1.bf16.msra.mxu0 %v952
      %1132 = vmatprep.subr.bf16.mxu0 %v956
      %1133 = vmatpush1.bf16.msra.mxu0 %v955
      %1134 = vmatprep.subr.bf16.mxu0 0
      %1135 = vmatpush1.bf16.msra.mxu0 0
      %1136 = vmatprep.subr.bf16.mxu0 0
      %1137 = vmatpush1.bf16.msra.mxu0 0
      %1138 = vmatprep.subr.bf16.mxu0 0
      %1139 = vmatpush1.bf16.msra.mxu0 0
      %1140 = vmatprep.subr.bf16.mxu0 0
      %1141 = vmatpush1.bf16.msra.mxu0 0
      %1142 = vmatprep.subr.bf16.mxu0 0
      %1143 = vmatpush1.bf16.msra.mxu0 0
      %1144 = vmatprep.subr.bf16.mxu0 0
      %1145 = vmatpush1.bf16.msra.mxu0 0
      %1146 = vmatprep.subr.bf16.mxu0 0
      %1147 = vmatpush1.bf16.msra.mxu0 0
      %1148 = vmatprep.subr.bf16.mxu0 0
      %1149 = vmatpush1.bf16.msra.mxu0 0
      %1150 = vmatprep.subr.bf16.mxu0 0
      %1151 = vmatpush1.bf16.msra.mxu0 0
      %1152 = vmatprep.subr.bf16.mxu0 0
      %1153 = vmatpush1.bf16.msra.mxu0 0
      %1154 = vmatprep.mubr.bf16.mxu0 0
      %1155 = vmatmul.mubr.bf16.gmra.mrb[0].mxu0 %v1117
      %v1156 = vpop.f32.mrb[0].mxu0
      %v1157 = vadd.f32 %v1088, %v1156
      %v1158 = vpop.f32.mrb[0].mxu0
      %v1159 = vadd.f32 %v1090, %v1158
      %v1160 = vpop.f32.mrb[0].mxu0
      %v1161 = vadd.f32 %v1092, %v1160
      %v1162 = vpop.f32.mrb[0].mxu0
      %v1163 = vadd.f32 %v1094, %v1162
      %1164 = vmatprep.mubr.bf16.mxu0 0
      %1165 = vmatmul.mubr.bf16.gmra.mrb[0].mxu0 %v1120
      %v1166 = vpop.f32.mrb[0].mxu0
      %v1167 = vadd.f32 %v1098, %v1166
      %v1168 = vpop.f32.mrb[0].mxu0
      %v1169 = vadd.f32 %v1100, %v1168
      %v1170 = vpop.f32.mrb[0].mxu0
      %v1171 = vadd.f32 %v1102, %v1170
      %v1172 = vpop.f32.mrb[0].mxu0
      %v1173 = vadd.f32 %v1104, %v1172
      %1174 = vdwg.mxu0
      %v1179 = vunpack.c.l.b16 %v700
      %v1180 = vunpack.c.l.b16 %v701
      %v1181 = vunpack.c.l.b16 %v702
      %v1182 = vunpack.c.l.b16 %v703
      %v1183 = vpack.c.b16 %v1180, %v1179
      %v1184 = vpack.c.b16 %v1182, %v1181
      %1185 = vrot.lane.b32.xlu0 %v940, 96
      %v1186 = vpop.permute.xlu0 %1185
      %1187 = vrot.lane.b32.xlu0 %v941, 96
      %v1188 = vpop.permute.xlu0 %1187
      %1189 = vrot.lane.b32.xlu0 %v942, 96
      %v1190 = vpop.permute.xlu0 %1189
      %1191 = vrot.lane.b32.xlu0 %v943, 96
      %v1192 = vpop.permute.xlu0 %1191
      %1193 = vrot.lane.b32.xlu0 %v944, 96
      %v1194 = vpop.permute.xlu0 %1193
      %1195 = vrot.lane.b32.xlu0 %v945, 96
      %v1196 = vpop.permute.xlu0 %1195
      %1197 = vrot.lane.b32.xlu0 %v946, 96
      %v1198 = vpop.permute.xlu0 %1197
      %1199 = vrot.lane.b32.xlu0 %v947, 96
      %v1200 = vpop.permute.xlu0 %1199
      %1201 = vrot.lane.b32.xlu0 %v948, 96
      %v1202 = vpop.permute.xlu0 %1201
      %1203 = vrot.lane.b32.xlu0 %v949, 96
      %v1204 = vpop.permute.xlu0 %1203
      %1205 = vrot.lane.b32.xlu0 %v950, 96
      %v1206 = vpop.permute.xlu0 %1205
      %1207 = vrot.lane.b32.xlu0 %v951, 96
      %v1208 = vpop.permute.xlu0 %1207
      %1209 = vrot.lane.b32.xlu0 %v952, 96
      %v1210 = vpop.permute.xlu0 %1209
      %1211 = vrot.lane.b32.xlu0 %v953, 96
      %v1212 = vpop.permute.xlu0 %1211
      %1213 = vrot.lane.b32.xlu0 %v954, 96
      %v1214 = vpop.permute.xlu0 %1213
      %1215 = vrot.lane.b32.xlu0 %v955, 96
      %v1216 = vpop.permute.xlu0 %1215
      %1217 = vrot.lane.b32.xlu0 %v956, 96
      %v1218 = vpop.permute.xlu0 %1217
      %1219 = vrot.lane.b32.xlu0 %v957, 96
      %v1220 = vpop.permute.xlu0 %1219
      %v1221 = vsel %vm580, %v1186, %v1188
      %v1222 = vsel %vm580, %v1188, %v1190
      %v1223 = vsel %vm580, %v1192, %v1194
      %v1224 = vsel %vm580, %v1194, %v1196
      %v1225 = vsel %vm580, %v1198, %v1200
      %v1226 = vsel %vm580, %v1200, %v1202
      %v1227 = vsel %vm580, %v1204, %v1206
      %v1228 = vsel %vm580, %v1206, %v1208
      %v1229 = vsel %vm580, %v1210, %v1212
      %v1230 = vsel %vm580, %v1212, %v1214
      %v1231 = vsel %vm580, %v1216, %v1218
      %v1232 = vsel %vm580, %v1218, %v1220
      %v1246 = vsel %vm1046, %v1183, 0
      %v1249 = vsel %vm1046, %v1184, 0
      %1251 = vmatprep.subr.bf16.mxu0 %v1222
      %1252 = vmatpush1.bf16.msra.mxu0 %v1221
      %1253 = vmatprep.subr.bf16.mxu0 %v1224
      %1254 = vmatpush1.bf16.msra.mxu0 %v1223
      %1255 = vmatprep.subr.bf16.mxu0 %v1226
      %1256 = vmatpush1.bf16.msra.mxu0 %v1225
      %1257 = vmatprep.subr.bf16.mxu0 %v1228
      %1258 = vmatpush1.bf16.msra.mxu0 %v1227
      %1259 = vmatprep.subr.bf16.mxu0 %v1230
      %1260 = vmatpush1.bf16.msra.mxu0 %v1229
      %1261 = vmatprep.subr.bf16.mxu0 %v1232
      %1262 = vmatpush1.bf16.msra.mxu0 %v1231
      %1263 = vmatprep.subr.bf16.mxu0 0
      %1264 = vmatpush1.bf16.msra.mxu0 0
      %1265 = vmatprep.subr.bf16.mxu0 0
      %1266 = vmatpush1.bf16.msra.mxu0 0
      %1267 = vmatprep.subr.bf16.mxu0 0
      %1268 = vmatpush1.bf16.msra.mxu0 0
      %1269 = vmatprep.subr.bf16.mxu0 0
      %1270 = vmatpush1.bf16.msra.mxu0 0
      %1271 = vmatprep.subr.bf16.mxu0 0
      %1272 = vmatpush1.bf16.msra.mxu0 0
      %1273 = vmatprep.subr.bf16.mxu0 0
      %1274 = vmatpush1.bf16.msra.mxu0 0
      %1275 = vmatprep.subr.bf16.mxu0 0
      %1276 = vmatpush1.bf16.msra.mxu0 0
      %1277 = vmatprep.subr.bf16.mxu0 0
      %1278 = vmatpush1.bf16.msra.mxu0 0
      %1279 = vmatprep.subr.bf16.mxu0 0
      %1280 = vmatpush1.bf16.msra.mxu0 0
      %1281 = vmatprep.subr.bf16.mxu0 0
      %1282 = vmatpush1.bf16.msra.mxu0 0
      %1283 = vmatprep.mubr.bf16.mxu0 0
      %1284 = vmatmul.mubr.bf16.gmra.mrb[0].mxu0 %v1246
      %v1285 = vpop.f32.mrb[0].mxu0
      %v1286 = vadd.f32 0.0, %v1285
      %v1287 = vpop.f32.mrb[0].mxu0
      %v1288 = vadd.f32 0.0, %v1287
      %v1289 = vpop.f32.mrb[0].mxu0
      %v1290 = vadd.f32 0.0, %v1289
      %v1291 = vpop.f32.mrb[0].mxu0
      %v1292 = vadd.f32 0.0, %v1291
      %1293 = vmatprep.mubr.bf16.mxu0 0
      %1294 = vmatmul.mubr.bf16.gmra.mrb[0].mxu0 %v1249
      %v1295 = vpop.f32.mrb[0].mxu0
      %v1296 = vadd.f32 0.0, %v1295
      %v1297 = vpop.f32.mrb[0].mxu0
      %v1298 = vadd.f32 0.0, %v1297
      %v1299 = vpop.f32.mrb[0].mxu0
      %v1300 = vadd.f32 0.0, %v1299
      %v1301 = vpop.f32.mrb[0].mxu0
      %v1302 = vadd.f32 0.0, %v1301
      %1303 = vdwg.mxu0
      %v1304 = vadd.f32 %v1157, %v1286
      %v1305 = vadd.f32 %v1159, %v1288
      %v1306 = vadd.f32 %v1161, %v1290
      %v1307 = vadd.f32 %v1163, %v1292
      %v1308 = vadd.f32 %v1167, %v1296
      %v1309 = vadd.f32 %v1169, %v1298
      %v1310 = vadd.f32 %v1171, %v1300
      %v1311 = vadd.f32 %v1173, %v1302
      %1313 = vset.pattern.permute.xlu0 0
      %1314 = vperm.xlu0 %1313, %v704
      %v1315 = vpop.permute.xlu0 %1314
      %1318 = vset.pattern.permute.xlu0 0
      %1319 = vperm.xlu0 %1318, %v705
      %v1320 = vpop.permute.xlu0 %1319
      %1323 = vset.pattern.permute.xlu0 0
      %1324 = vperm.xlu0 %1323, %v706
      %v1325 = vpop.permute.xlu0 %1324
      %1328 = vset.pattern.permute.xlu0 0
      %1329 = vperm.xlu0 %1328, %v707
      %v1330 = vpop.permute.xlu0 %1329
      %v1332 = vadd.f32 %v1304, %v1315
      %v1333 = vadd.f32 %v1305, %v1315
      %v1334 = vadd.f32 %v1306, %v1320
      %v1335 = vadd.f32 %v1307, %v1320
      %v1336 = vadd.f32 %v1308, %v1325
      %v1337 = vadd.f32 %v1309, %v1325
      %v1338 = vadd.f32 %v1310, %v1330
      %v1339 = vadd.f32 %v1311, %v1330
      %v1340 = vmax.f32 %v1332, 0.0
      %v1341 = vmax.f32 %v1333, 0.0
      %v1342 = vmax.f32 %v1334, 0.0
      %v1343 = vmax.f32 %v1335, 0.0
      %v1344 = vmax.f32 %v1336, 0.0
      %v1345 = vmax.f32 %v1337, 0.0
      %v1346 = vmax.f32 %v1338, 0.0
      %v1347 = vmax.f32 %v1339, 0.0
      %1348 = vst [vmem:[%s283] sm:$0xff] %v1340
      %1349 = vst [vmem:[%s283 + $0x8] sm:$0xff] %v1341
      %1350 = vst [vmem:[%s283 + $0x10] sm:$0xff] %v1342
      %1351 = vst [vmem:[%s283 + $0x18] sm:$0xff] %v1343
      %1352 = vst [vmem:[%s283 + $0x20] sm:$0xff] %v1344
      %1353 = vst [vmem:[%s283 + $0x28] sm:$0xff] %v1345
      %1354 = vst [vmem:[%s283 + $0x30] sm:$0xff] %v1346
      %1355 = vst [vmem:[%s283 + $0x38] sm:$0xff] %v1347
      %v1356 = vld [vmem:[%s5] sm:$0xff]
      %v1357 = vld [vmem:[%s5 + $0x8] sm:$0xff]
      %v1358 = vld [vmem:[%s5 + $0x10] sm:$0xff]
      %v1359 = vld [vmem:[%s5 + $0x18] sm:$0xff]
      %v1360 = vld [vmem:[%s5 + $0x20] sm:$0xff]
      %v1361 = vld [vmem:[%s5 + $0x28] sm:$0xff]
      %v1362 = vld [vmem:[%s5 + $0x30] sm:$0xff]
      %v1363 = vld [vmem:[%s5 + $0x38] sm:$0xff]
      %v1364 = vld [vmem:[%s5 + $0x40] sm:$0xff]
      %v1365 = vld [vmem:[%s5 + $0x48] sm:$0xff]
      %v1366 = vld [vmem:[%s5 + $0x50] sm:$0xff]
      %v1367 = vld [vmem:[%s5 + $0x58] sm:$0xff]
      %v1368 = vld [vmem:[%s5 + $0x60] sm:$0xff]
      %v1369 = vld [vmem:[%s5 + $0x68] sm:$0xff]
      %v1370 = vld [vmem:[%s5 + $0x70] sm:$0xff]
      %v1371 = vld [vmem:[%s5 + $0x78] sm:$0xff]
      %v1372 = vld [vmem:[%s5 + $0x80] sm:$0xff]
      %v1373 = vld [vmem:[%s5 + $0x88] sm:$0xff]
      %v1374 = vld [vmem:[%s5 + $0x90] sm:$0xff]
      %v1375 = vld [vmem:[%s5 + $0x98] sm:$0xff]
      %v1376 = vld [vmem:[%s5 + $0xa0] sm:$0xff]
      %v1377 = vld [vmem:[%s5 + $0xa8] sm:$0xff]
      %v1378 = vld [vmem:[%s5 + $0xb0] sm:$0xff]
      %v1379 = vld [vmem:[%s5 + $0xb8] sm:$0xff]
      %v1380 = vld [vmem:[%s5 + $0xc0] sm:$0xff]
      %v1381 = vld [vmem:[%s5 + $0xc8] sm:$0xff]
      %v1382 = vld [vmem:[%s5 + $0xd0] sm:$0xff]
      %v1383 = vld [vmem:[%s5 + $0xd8] sm:$0xff]
      %v1384 = vld [vmem:[%s5 + $0xe0] sm:$0xff]
      %v1385 = vld [vmem:[%s5 + $0xe8] sm:$0xff]
      %v1386 = vld [vmem:[%s5 + $0xf0] sm:$0xff]
      %v1387 = vld [vmem:[%s5 + $0xf8] sm:$0xff]
      %v1388 = vld [vmem:[%s5 + $0x100] sm:$0xff]
      %v1389 = vld [vmem:[%s5 + $0x108] sm:$0xff]
      %v1390 = vld [vmem:[%s5 + $0x110] sm:$0xff]
      %v1391 = vld [vmem:[%s5 + $0x118] sm:$0xff]
      %v1392 = vld [vmem:[%s5 + $0x120] sm:$0xff]
      %v1393 = vld [vmem:[%s5 + $0x128] sm:$0xff]
      %v1394 = vld [vmem:[%s5 + $0x130] sm:$0xff]
      %v1395 = vld [vmem:[%s5 + $0x138] sm:$0xff]
      %v1396 = vld [vmem:[%s5 + $0x140] sm:$0xff]
      %v1397 = vld [vmem:[%s5 + $0x148] sm:$0xff]
      %v1398 = vld [vmem:[%s5 + $0x150] sm:$0xff]
      %v1399 = vld [vmem:[%s5 + $0x158] sm:$0xff]
      %v1400 = vld [vmem:[%s5 + $0x160] sm:$0xff]
      %v1401 = vld [vmem:[%s5 + $0x168] sm:$0xff]
      %v1402 = vld [vmem:[%s5 + $0x170] sm:$0xff]
      %v1403 = vld [vmem:[%s5 + $0x178] sm:$0xff]
      %v1404 = vld [vmem:[%s5 + $0x180] sm:$0xff]
      %v1405 = vld [vmem:[%s5 + $0x188] sm:$0xff]
      %v1406 = vld [vmem:[%s5 + $0x190] sm:$0xff]
      %v1407 = vld [vmem:[%s5 + $0x198] sm:$0xff]
      %v1408 = vld [vmem:[%s5 + $0x1a0] sm:$0xff]
      %v1409 = vld [vmem:[%s5 + $0x1a8] sm:$0xff]
      %v1410 = vld [vmem:[%s5 + $0x1b0] sm:$0xff]
      %v1411 = vld [vmem:[%s5 + $0x1b8] sm:$0xff]
      %v1412 = vld [vmem:[%s5 + $0x1c0] sm:$0xff]
      %v1413 = vld [vmem:[%s5 + $0x1c8] sm:$0xff]
      %v1414 = vld [vmem:[%s5 + $0x1d0] sm:$0xff]
      %v1415 = vld [vmem:[%s5 + $0x1d8] sm:$0xff]
      %v1416 = vld [vmem:[%s5 + $0x1e0] sm:$0xff]
      %v1417 = vld [vmem:[%s5 + $0x1e8] sm:$0xff]
      %v1418 = vld [vmem:[%s5 + $0x1f0] sm:$0xff]
      %v1419 = vld [vmem:[%s5 + $0x1f8] sm:$0xff]
      %v1420 = vld [vmem:[%s5 + $0x200] sm:$0xff]
      %v1421 = vld [vmem:[%s5 + $0x208] sm:$0xff]
      %v1422 = vld [vmem:[%s5 + $0x210] sm:$0xff]
      %v1423 = vld [vmem:[%s5 + $0x218] sm:$0xff]
      %v1424 = vld [vmem:[%s5 + $0x220] sm:$0xff]
      %v1425 = vld [vmem:[%s5 + $0x228] sm:$0xff]
      %v1426 = vld [vmem:[%s5 + $0x230] sm:$0xff]
      %v1427 = vld [vmem:[%s5 + $0x238] sm:$0xff]
      %v1428 = vld [vmem:[%s5 + $0x240] sm:$0xff]
      %v1429 = vld [vmem:[%s5 + $0x248] sm:$0xff]
      %v1430 = vld [vmem:[%s5 + $0x250] sm:$0xff]
      %v1431 = vld [vmem:[%s5 + $0x258] sm:$0xff]
      %v1432 = vld [vmem:[%s5 + $0x260] sm:$0xff]
      %v1433 = vld [vmem:[%s5 + $0x268] sm:$0xff]
      %v1434 = vld [vmem:[%s5 + $0x270] sm:$0xff]
      %v1435 = vld [vmem:[%s5 + $0x278] sm:$0xff]
      %v1436 = vld [vmem:[%s5 + $0x280] sm:$0xff]
      %v1437 = vld [vmem:[%s5 + $0x288] sm:$0xff]
      %v1438 = vld [vmem:[%s5 + $0x290] sm:$0xff]
      %v1439 = vld [vmem:[%s5 + $0x298] sm:$0xff]
      %v1440 = vld [vmem:[%s5 + $0x2a0] sm:$0xff]
      %v1441 = vld [vmem:[%s5 + $0x2a8] sm:$0xff]
      %v1442 = vld [vmem:[%s5 + $0x2b0] sm:$0xff]
      %v1443 = vld [vmem:[%s5 + $0x2b8] sm:$0xff]
      %v1444 = vld [vmem:[%s5 + $0x2c0] sm:$0xff]
      %v1445 = vld [vmem:[%s5 + $0x2c8] sm:$0xff]
      %v1446 = vld [vmem:[%s5 + $0x2d0] sm:$0xff]
      %v1447 = vld [vmem:[%s5 + $0x2d8] sm:$0xff]
      %v1448 = vld [vmem:[%s5 + $0x2e0] sm:$0xff]
      %v1449 = vld [vmem:[%s5 + $0x2e8] sm:$0xff]
      %v1450 = vld [vmem:[%s5 + $0x2f0] sm:$0xff]
      %v1451 = vld [vmem:[%s5 + $0x2f8] sm:$0xff]
      %v1452 = vld [vmem:[%s5 + $0x300] sm:$0xff]
      %v1453 = vld [vmem:[%s5 + $0x308] sm:$0xff]
      %v1454 = vld [vmem:[%s5 + $0x310] sm:$0xff]
      %v1455 = vld [vmem:[%s5 + $0x318] sm:$0xff]
      %v1456 = vld [vmem:[%s5 + $0x320] sm:$0xff]
      %v1457 = vld [vmem:[%s5 + $0x328] sm:$0xff]
      %v1458 = vld [vmem:[%s5 + $0x330] sm:$0xff]
      %v1459 = vld [vmem:[%s5 + $0x338] sm:$0xff]
      %v1460 = vld [vmem:[%s5 + $0x340] sm:$0xff]
      %v1461 = vld [vmem:[%s5 + $0x348] sm:$0xff]
      %v1462 = vld [vmem:[%s5 + $0x350] sm:$0xff]
      %v1463 = vld [vmem:[%s5 + $0x358] sm:$0xff]
      %v1464 = vld [vmem:[%s5 + $0x360] sm:$0xff]
      %v1465 = vld [vmem:[%s5 + $0x368] sm:$0xff]
      %v1466 = vld [vmem:[%s5 + $0x370] sm:$0xff]
      %v1467 = vld [vmem:[%s5 + $0x378] sm:$0xff]
      %v1468 = vld [vmem:[%s5 + $0x380] sm:$0xff]
      %v1469 = vld [vmem:[%s5 + $0x388] sm:$0xff]
      %v1470 = vld [vmem:[%s5 + $0x390] sm:$0xff]
      %v1471 = vld [vmem:[%s5 + $0x398] sm:$0xff]
      %v1472 = vld [vmem:[%s5 + $0x3a0] sm:$0xff]
      %v1473 = vld [vmem:[%s5 + $0x3a8] sm:$0xff]
      %v1474 = vld [vmem:[%s5 + $0x3b0] sm:$0xff]
      %v1475 = vld [vmem:[%s5 + $0x3b8] sm:$0xff]
      %v1476 = vld [vmem:[%s5 + $0x3c0] sm:$0xff]
      %v1477 = vld [vmem:[%s5 + $0x3c8] sm:$0xff]
      %v1478 = vld [vmem:[%s5 + $0x3d0] sm:$0xff]
      %v1479 = vld [vmem:[%s5 + $0x3d8] sm:$0xff]
      %v1480 = vld [vmem:[%s5 + $0x3e0] sm:$0xff]
      %v1481 = vld [vmem:[%s5 + $0x3e8] sm:$0xff]
      %v1482 = vld [vmem:[%s5 + $0x3f0] sm:$0xff]
      %v1483 = vld [vmem:[%s5 + $0x3f8] sm:$0xff]
      %1484 = vmatprep.subr.mxu0 0.0
      %1485 = vmatpush1.msra.mxu0 %v1356
      %1486 = vmatprep.subr.mxu0 0.0
      %1487 = vmatpush1.msra.mxu0 %v1357
      %1488 = vmatprep.subr.mxu0 0.0
      %1489 = vmatpush1.msra.mxu0 %v1358
      %1490 = vmatprep.subr.mxu0 0.0
      %1491 = vmatpush1.msra.mxu0 %v1359
      %1492 = vmatprep.subr.mxu0 0.0
      %1493 = vmatpush1.msra.mxu0 %v1360
      %1494 = vmatprep.subr.mxu0 0.0
      %1495 = vmatpush1.msra.mxu0 %v1361
      %1496 = vmatprep.subr.mxu0 0.0
      %1497 = vmatpush1.msra.mxu0 %v1362
      %1498 = vmatprep.subr.mxu0 0.0
      %1499 = vmatpush1.msra.mxu0 %v1363
      %1500 = vmatprep.subr.mxu0 0.0
      %1501 = vmatpush1.msra.mxu0 %v1364
      %1502 = vmatprep.subr.mxu0 0.0
      %1503 = vmatpush1.msra.mxu0 %v1365
      %1504 = vmatprep.subr.mxu0 0.0
      %1505 = vmatpush1.msra.mxu0 %v1366
      %1506 = vmatprep.subr.mxu0 0.0
      %1507 = vmatpush1.msra.mxu0 %v1367
      %1508 = vmatprep.subr.mxu0 0.0
      %1509 = vmatpush1.msra.mxu0 %v1368
      %1510 = vmatprep.subr.mxu0 0.0
      %1511 = vmatpush1.msra.mxu0 %v1369
      %1512 = vmatprep.subr.mxu0 0.0
      %1513 = vmatpush1.msra.mxu0 %v1370
      %1514 = vmatprep.subr.mxu0 0.0
      %1515 = vmatpush1.msra.mxu0 %v1371
      %1516 = vmatprep.subr.mxu0 0.0
      %1517 = vmatpush1.msra.mxu0 %v1372
      %1518 = vmatprep.subr.mxu0 0.0
      %1519 = vmatpush1.msra.mxu0 %v1373
      %1520 = vmatprep.subr.mxu0 0.0
      %1521 = vmatpush1.msra.mxu0 %v1374
      %1522 = vmatprep.subr.mxu0 0.0
      %1523 = vmatpush1.msra.mxu0 %v1375
      %1524 = vmatprep.subr.mxu0 0.0
      %1525 = vmatpush1.msra.mxu0 %v1376
      %1526 = vmatprep.subr.mxu0 0.0
      %1527 = vmatpush1.msra.mxu0 %v1377
      %1528 = vmatprep.subr.mxu0 0.0
      %1529 = vmatpush1.msra.mxu0 %v1378
      %1530 = vmatprep.subr.mxu0 0.0
      %1531 = vmatpush1.msra.mxu0 %v1379
      %1532 = vmatprep.subr.mxu0 0.0
      %1533 = vmatpush1.msra.mxu0 %v1380
      %1534 = vmatprep.subr.mxu0 0.0
      %1535 = vmatpush1.msra.mxu0 %v1381
      %1536 = vmatprep.subr.mxu0 0.0
      %1537 = vmatpush1.msra.mxu0 %v1382
      %1538 = vmatprep.subr.mxu0 0.0
      %1539 = vmatpush1.msra.mxu0 %v1383
      %1540 = vmatprep.subr.mxu0 0.0
      %1541 = vmatpush1.msra.mxu0 %v1384
      %1542 = vmatprep.subr.mxu0 0.0
      %1543 = vmatpush1.msra.mxu0 %v1385
      %1544 = vmatprep.subr.mxu0 0.0
      %1545 = vmatpush1.msra.mxu0 %v1386
      %1546 = vmatprep.subr.mxu0 0.0
      %1547 = vmatpush1.msra.mxu0 %v1387
      %1548 = vmatprep.mubr.f32.mxu0 %v1341
      %1549 = vmatmul.mubr.f32.gmra.mrb[0].mxu0 %v1340
      %v1550 = vpop.f32.mrb[0].mxu0
      %v1551 = vadd.f32 0.0, %v1550
      %v1552 = vpop.f32.mrb[0].mxu0
      %1553 = vmatprep.mubr.f32.mxu0 %v1343
      %1554 = vmatmul.mubr.f32.gmra.mrb[0].mxu0 %v1342
      %v1555 = vpop.f32.mrb[0].mxu0
      %v1556 = vadd.f32 0.0, %v1555
      %v1557 = vpop.f32.mrb[0].mxu0
      %1558 = vmatprep.mubr.f32.mxu0 %v1345
      %1559 = vmatmul.mubr.f32.gmra.mrb[0].mxu0 %v1344
      %v1560 = vpop.f32.mrb[0].mxu0
      %v1561 = vadd.f32 0.0, %v1560
      %v1562 = vpop.f32.mrb[0].mxu0
      %1563 = vmatprep.mubr.f32.mxu0 %v1347
      %1564 = vmatmul.mubr.f32.gmra.mrb[0].mxu0 %v1346
      %v1565 = vpop.f32.mrb[0].mxu0
      %v1566 = vadd.f32 0.0, %v1565
      %v1567 = vpop.f32.mrb[0].mxu0
      %1568 = vdwg.mxu0
      %1569 = vmatprep.subr.mxu0 0.0
      %1570 = vmatpush1.msra.mxu0 %v1388
      %1571 = vmatprep.subr.mxu0 0.0
      %1572 = vmatpush1.msra.mxu0 %v1389
      %1573 = vmatprep.subr.mxu0 0.0
      %1574 = vmatpush1.msra.mxu0 %v1390
      %1575 = vmatprep.subr.mxu0 0.0
      %1576 = vmatpush1.msra.mxu0 %v1391
      %1577 = vmatprep.subr.mxu0 0.0
      %1578 = vmatpush1.msra.mxu0 %v1392
      %1579 = vmatprep.subr.mxu0 0.0
      %1580 = vmatpush1.msra.mxu0 %v1393
      %1581 = vmatprep.subr.mxu0 0.0
      %1582 = vmatpush1.msra.mxu0 %v1394
      %1583 = vmatprep.subr.mxu0 0.0
      %1584 = vmatpush1.msra.mxu0 %v1395
      %1585 = vmatprep.subr.mxu0 0.0
      %1586 = vmatpush1.msra.mxu0 %v1396
      %1587 = vmatprep.subr.mxu0 0.0
      %1588 = vmatpush1.msra.mxu0 %v1397
      %1589 = vmatprep.subr.mxu0 0.0
      %1590 = vmatpush1.msra.mxu0 %v1398
      %1591 = vmatprep.subr.mxu0 0.0
      %1592 = vmatpush1.msra.mxu0 %v1399
      %1593 = vmatprep.subr.mxu0 0.0
      %1594 = vmatpush1.msra.mxu0 %v1400
      %1595 = vmatprep.subr.mxu0 0.0
      %1596 = vmatpush1.msra.mxu0 %v1401
      %1597 = vmatprep.subr.mxu0 0.0
      %1598 = vmatpush1.msra.mxu0 %v1402
      %1599 = vmatprep.subr.mxu0 0.0
      %1600 = vmatpush1.msra.mxu0 %v1403
      %1601 = vmatprep.subr.mxu0 0.0
      %1602 = vmatpush1.msra.mxu0 %v1404
      %1603 = vmatprep.subr.mxu0 0.0
      %1604 = vmatpush1.msra.mxu0 %v1405
      %1605 = vmatprep.subr.mxu0 0.0
      %1606 = vmatpush1.msra.mxu0 %v1406
      %1607 = vmatprep.subr.mxu0 0.0
      %1608 = vmatpush1.msra.mxu0 %v1407
      %1609 = vmatprep.subr.mxu0 0.0
      %1610 = vmatpush1.msra.mxu0 %v1408
      %1611 = vmatprep.subr.mxu0 0.0
      %1612 = vmatpush1.msra.mxu0 %v1409
      %1613 = vmatprep.subr.mxu0 0.0
      %1614 = vmatpush1.msra.mxu0 %v1410
      %1615 = vmatprep.subr.mxu0 0.0
      %1616 = vmatpush1.msra.mxu0 %v1411
      %1617 = vmatprep.subr.mxu0 0.0
      %1618 = vmatpush1.msra.mxu0 %v1412
      %1619 = vmatprep.subr.mxu0 0.0
      %1620 = vmatpush1.msra.mxu0 %v1413
      %1621 = vmatprep.subr.mxu0 0.0
      %1622 = vmatpush1.msra.mxu0 %v1414
      %1623 = vmatprep.subr.mxu0 0.0
      %1624 = vmatpush1.msra.mxu0 %v1415
      %1625 = vmatprep.subr.mxu0 0.0
      %1626 = vmatpush1.msra.mxu0 %v1416
      %1627 = vmatprep.subr.mxu0 0.0
      %1628 = vmatpush1.msra.mxu0 %v1417
      %1629 = vmatprep.subr.mxu0 0.0
      %1630 = vmatpush1.msra.mxu0 %v1418
      %1631 = vmatprep.subr.mxu0 0.0
      %1632 = vmatpush1.msra.mxu0 %v1419
      %1633 = vmatprep.mubr.f32.mxu0 %v1341
      %1634 = vmatmul.mubr.f32.gmra.mrb[0].mxu0 %v1340
      %v1635 = vpop.f32.mrb[0].mxu0
      %v1636 = vadd.f32 0.0, %v1635
      %v1637 = vpop.f32.mrb[0].mxu0
      %1638 = vmatprep.mubr.f32.mxu0 %v1343
      %1639 = vmatmul.mubr.f32.gmra.mrb[0].mxu0 %v1342
      %v1640 = vpop.f32.mrb[0].mxu0
      %v1641 = vadd.f32 0.0, %v1640
      %v1642 = vpop.f32.mrb[0].mxu0
      %1643 = vmatprep.mubr.f32.mxu0 %v1345
      %1644 = vmatmul.mubr.f32.gmra.mrb[0].mxu0 %v1344
      %v1645 = vpop.f32.mrb[0].mxu0
      %v1646 = vadd.f32 0.0, %v1645
      %v1647 = vpop.f32.mrb[0].mxu0
      %1648 = vmatprep.mubr.f32.mxu0 %v1347
      %1649 = vmatmul.mubr.f32.gmra.mrb[0].mxu0 %v1346
      %v1650 = vpop.f32.mrb[0].mxu0
      %v1651 = vadd.f32 0.0, %v1650
      %v1652 = vpop.f32.mrb[0].mxu0
      %1653 = vdwg.mxu0
      %1654 = vmatprep.subr.mxu0 0.0
      %1655 = vmatpush1.msra.mxu0 %v1420
      %1656 = vmatprep.subr.mxu0 0.0
      %1657 = vmatpush1.msra.mxu0 %v1421
      %1658 = vmatprep.subr.mxu0 0.0
      %1659 = vmatpush1.msra.mxu0 %v1422
      %1660 = vmatprep.subr.mxu0 0.0
      %1661 = vmatpush1.msra.mxu0 %v1423
      %1662 = vmatprep.subr.mxu0 0.0
      %1663 = vmatpush1.msra.mxu0 %v1424
      %1664 = vmatprep.subr.mxu0 0.0
      %1665 = vmatpush1.msra.mxu0 %v1425
      %1666 = vmatprep.subr.mxu0 0.0
      %1667 = vmatpush1.msra.mxu0 %v1426
      %1668 = vmatprep.subr.mxu0 0.0
      %1669 = vmatpush1.msra.mxu0 %v1427
      %1670 = vmatprep.subr.mxu0 0.0
      %1671 = vmatpush1.msra.mxu0 %v1428
      %1672 = vmatprep.subr.mxu0 0.0
      %1673 = vmatpush1.msra.mxu0 %v1429
      %1674 = vmatprep.subr.mxu0 0.0
      %1675 = vmatpush1.msra.mxu0 %v1430
      %1676 = vmatprep.subr.mxu0 0.0
      %1677 = vmatpush1.msra.mxu0 %v1431
      %1678 = vmatprep.subr.mxu0 0.0
      %1679 = vmatpush1.msra.mxu0 %v1432
      %1680 = vmatprep.subr.mxu0 0.0
      %1681 = vmatpush1.msra.mxu0 %v1433
      %1682 = vmatprep.subr.mxu0 0.0
      %1683 = vmatpush1.msra.mxu0 %v1434
      %1684 = vmatprep.subr.mxu0 0.0
      %1685 = vmatpush1.msra.mxu0 %v1435
      %1686 = vmatprep.subr.mxu0 0.0
      %1687 = vmatpush1.msra.mxu0 %v1436
      %1688 = vmatprep.subr.mxu0 0.0
      %1689 = vmatpush1.msra.mxu0 %v1437
      %1690 = vmatprep.subr.mxu0 0.0
      %1691 = vmatpush1.msra.mxu0 %v1438
      %1692 = vmatprep.subr.mxu0 0.0
      %1693 = vmatpush1.msra.mxu0 %v1439
      %1694 = vmatprep.subr.mxu0 0.0
      %1695 = vmatpush1.msra.mxu0 %v1440
      %1696 = vmatprep.subr.mxu0 0.0
      %1697 = vmatpush1.msra.mxu0 %v1441
      %1698 = vmatprep.subr.mxu0 0.0
      %1699 = vmatpush1.msra.mxu0 %v1442
      %1700 = vmatprep.subr.mxu0 0.0
      %1701 = vmatpush1.msra.mxu0 %v1443
      %1702 = vmatprep.subr.mxu0 0.0
      %1703 = vmatpush1.msra.mxu0 %v1444
      %1704 = vmatprep.subr.mxu0 0.0
      %1705 = vmatpush1.msra.mxu0 %v1445
      %1706 = vmatprep.subr.mxu0 0.0
      %1707 = vmatpush1.msra.mxu0 %v1446
      %1708 = vmatprep.subr.mxu0 0.0
      %1709 = vmatpush1.msra.mxu0 %v1447
      %1710 = vmatprep.subr.mxu0 0.0
      %1711 = vmatpush1.msra.mxu0 %v1448
      %1712 = vmatprep.subr.mxu0 0.0
      %1713 = vmatpush1.msra.mxu0 %v1449
      %1714 = vmatprep.subr.mxu0 0.0
      %1715 = vmatpush1.msra.mxu0 %v1450
      %1716 = vmatprep.subr.mxu0 0.0
      %1717 = vmatpush1.msra.mxu0 %v1451
      %1718 = vmatprep.mubr.f32.mxu0 %v1341
      %1719 = vmatmul.mubr.f32.gmra.mrb[0].mxu0 %v1340
      %v1720 = vpop.f32.mrb[0].mxu0
      %v1721 = vadd.f32 0.0, %v1720
      %v1722 = vpop.f32.mrb[0].mxu0
      %1723 = vmatprep.mubr.f32.mxu0 %v1343
      %1724 = vmatmul.mubr.f32.gmra.mrb[0].mxu0 %v1342
      %v1725 = vpop.f32.mrb[0].mxu0
      %v1726 = vadd.f32 0.0, %v1725
      %v1727 = vpop.f32.mrb[0].mxu0
      %1728 = vmatprep.mubr.f32.mxu0 %v1345
      %1729 = vmatmul.mubr.f32.gmra.mrb[0].mxu0 %v1344
      %v1730 = vpop.f32.mrb[0].mxu0
      %v1731 = vadd.f32 0.0, %v1730
      %v1732 = vpop.f32.mrb[0].mxu0
      %1733 = vmatprep.mubr.f32.mxu0 %v1347
      %1734 = vmatmul.mubr.f32.gmra.mrb[0].mxu0 %v1346
      %v1735 = vpop.f32.mrb[0].mxu0
      %v1736 = vadd.f32 0.0, %v1735
      %v1737 = vpop.f32.mrb[0].mxu0
      %1738 = vdwg.mxu0
      %1739 = vmatprep.subr.mxu0 0.0
      %1740 = vmatpush1.msra.mxu0 %v1452
      %1741 = vmatprep.subr.mxu0 0.0
      %1742 = vmatpush1.msra.mxu0 %v1453
      %1743 = vmatprep.subr.mxu0 0.0
      %1744 = vmatpush1.msra.mxu0 %v1454
      %1745 = vmatprep.subr.mxu0 0.0
      %1746 = vmatpush1.msra.mxu0 %v1455
      %1747 = vmatprep.subr.mxu0 0.0
      %1748 = vmatpush1.msra.mxu0 %v1456
      %1749 = vmatprep.subr.mxu0 0.0
      %1750 = vmatpush1.msra.mxu0 %v1457
      %1751 = vmatprep.subr.mxu0 0.0
      %1752 = vmatpush1.msra.mxu0 %v1458
      %1753 = vmatprep.subr.mxu0 0.0
      %1754 = vmatpush1.msra.mxu0 %v1459
      %1755 = vmatprep.subr.mxu0 0.0
      %1756 = vmatpush1.msra.mxu0 %v1460
      %1757 = vmatprep.subr.mxu0 0.0
      %1758 = vmatpush1.msra.mxu0 %v1461
      %1759 = vmatprep.subr.mxu0 0.0
      %1760 = vmatpush1.msra.mxu0 %v1462
      %1761 = vmatprep.subr.mxu0 0.0
      %1762 = vmatpush1.msra.mxu0 %v1463
      %1763 = vmatprep.subr.mxu0 0.0
      %1764 = vmatpush1.msra.mxu0 %v1464
      %1765 = vmatprep.subr.mxu0 0.0
      %1766 = vmatpush1.msra.mxu0 %v1465
      %1767 = vmatprep.subr.mxu0 0.0
      %1768 = vmatpush1.msra.mxu0 %v1466
      %1769 = vmatprep.subr.mxu0 0.0
      %1770 = vmatpush1.msra.mxu0 %v1467
      %1771 = vmatprep.subr.mxu0 0.0
      %1772 = vmatpush1.msra.mxu0 %v1468
      %1773 = vmatprep.subr.mxu0 0.0
      %1774 = vmatpush1.msra.mxu0 %v1469
      %1775 = vmatprep.subr.mxu0 0.0
      %1776 = vmatpush1.msra.mxu0 %v1470
      %1777 = vmatprep.subr.mxu0 0.0
      %1778 = vmatpush1.msra.mxu0 %v1471
      %1779 = vmatprep.subr.mxu0 0.0
      %1780 = vmatpush1.msra.mxu0 %v1472
      %1781 = vmatprep.subr.mxu0 0.0
      %1782 = vmatpush1.msra.mxu0 %v1473
      %1783 = vmatprep.subr.mxu0 0.0
      %1784 = vmatpush1.msra.mxu0 %v1474
      %1785 = vmatprep.subr.mxu0 0.0
      %1786 = vmatpush1.msra.mxu0 %v1475
      %1787 = vmatprep.subr.mxu0 0.0
      %1788 = vmatpush1.msra.mxu0 %v1476
      %1789 = vmatprep.subr.mxu0 0.0
      %1790 = vmatpush1.msra.mxu0 %v1477
      %1791 = vmatprep.subr.mxu0 0.0
      %1792 = vmatpush1.msra.mxu0 %v1478
      %1793 = vmatprep.subr.mxu0 0.0
      %1794 = vmatpush1.msra.mxu0 %v1479
      %1795 = vmatprep.subr.mxu0 0.0
      %1796 = vmatpush1.msra.mxu0 %v1480
      %1797 = vmatprep.subr.mxu0 0.0
      %1798 = vmatpush1.msra.mxu0 %v1481
      %1799 = vmatprep.subr.mxu0 0.0
      %1800 = vmatpush1.msra.mxu0 %v1482
      %1801 = vmatprep.subr.mxu0 0.0
      %1802 = vmatpush1.msra.mxu0 %v1483
      %1803 = vmatprep.mubr.f32.mxu0 %v1341
      %1804 = vmatmul.mubr.f32.gmra.mrb[0].mxu0 %v1340
      %v1805 = vpop.f32.mrb[0].mxu0
      %v1806 = vadd.f32 0.0, %v1805
      %v1807 = vpop.f32.mrb[0].mxu0
      %1808 = vmatprep.mubr.f32.mxu0 %v1343
      %1809 = vmatmul.mubr.f32.gmra.mrb[0].mxu0 %v1342
      %v1810 = vpop.f32.mrb[0].mxu0
      %v1811 = vadd.f32 0.0, %v1810
      %v1812 = vpop.f32.mrb[0].mxu0
      %1813 = vmatprep.mubr.f32.mxu0 %v1345
      %1814 = vmatmul.mubr.f32.gmra.mrb[0].mxu0 %v1344
      %v1815 = vpop.f32.mrb[0].mxu0
      %v1816 = vadd.f32 0.0, %v1815
      %v1817 = vpop.f32.mrb[0].mxu0
      %1818 = vmatprep.mubr.f32.mxu0 %v1347
      %1819 = vmatmul.mubr.f32.gmra.mrb[0].mxu0 %v1346
      %v1820 = vpop.f32.mrb[0].mxu0
      %v1821 = vadd.f32 0.0, %v1820
      %v1822 = vpop.f32.mrb[0].mxu0
      %1823 = vdwg.mxu0
      %v1824 = vmax.f32 %v1551, %v1636
      %v1825 = vmax.f32 %v1556, %v1641
      %v1826 = vmax.f32 %v1561, %v1646
      %v1827 = vmax.f32 %v1566, %v1651
      %v1828 = vmax.f32 %v1721, %v1806
      %v1829 = vmax.f32 %v1726, %v1811
      %v1830 = vmax.f32 %v1731, %v1816
      %v1831 = vmax.f32 %v1736, %v1821
      %v1832 = vmax.f32 %v1824, %v1828
      %v1833 = vmax.f32 %v1825, %v1829
      %v1834 = vmax.f32 %v1826, %v1830
      %v1835 = vmax.f32 %v1827, %v1831
      %vm1836 = vcmask 523264
      %1837 = vst.msk [vmem:[%s288] sm:$0xff] %vm1836, %v1832
      %1838 = vst.msk [vmem:[%s288 + $0x8] sm:$0xff] %vm1836, %v1833
      %1839 = vst.msk [vmem:[%s288 + $0x10] sm:$0xff] %vm1836, %v1834
      %1840 = vst.msk [vmem:[%s288 + $0x18] sm:$0xff] %vm1836, %v1835
      %p1841 = scmp.lt.s32.totalorder %s19, 1
      %s1842 = scalar_select %p1841, %s19, 1
      %s1843 = smul.addr %s1842, 8
      %s1844 = smul.addr %s1843, 8
      %s1845 = scalar_lea.vmem %s6, %s1844
      %p1846 = scmp.lt.s32.totalorder %s19, 1
      %s1847 = scalar_select %p1846, %s19, 1
      %s1848 = smul.addr %s1847, 4
      %s1849 = smul.addr %s1848, 8
      %s1850 = scalar_lea.vmem %s7, %s1849
      // Predicated region
      $region45: #{_lambda_.5} parent=43 // pred_check
        %p1851 = pneg %p168
      $region46: #{_lambda_.5} parent=43 // pred_check_branch
        %1853 = sbr.rel (%p1851) target = $region48
      $region47: #{_lambda_.5} parent=43 // pred_region
        _
      $region48: #{_lambda_.5} parent=43 // pred_fallthru
        _
      // Predicated region
      $region49: #{_lambda_.5} parent=43 // pred_check
        %p1854 = pneg %p194
      $region50: #{_lambda_.5} parent=43 // pred_check_branch
        %1856 = sbr.rel (%p1854) target = $region52
      $region51: #{_lambda_.5} parent=43 // pred_region
        _
      $region52: #{_lambda_.5} parent=43 // pred_fallthru
        _
    $region44: #{_lambda_.5} parent=5 // pred_fallthru
      _
    %p1857 = scmp.le.s32.totalorder 2, %s14
    // Predicated region
    $region53: #{_lambda_.5} parent=5 // pred_check
      %p1858 = pneg %p1857
    $region54: #{_lambda_.5} parent=5 // pred_check_branch
      %1860 = sbr.rel (%p1858) target = $region56
    $region55: #{_lambda_.5} parent=5 // pred_region
      %s1861 = ssub.s32 %s14, 2
      // Predicated region
      $region57: #{_lambda_.5} parent=55 // pred_check
        %p1862 = pneg %p174
      $region58: #{_lambda_.5} parent=55 // pred_check_branch
        %1864 = sbr.rel (%p1862) target = $region60
      $region59: #{_lambda_.5} parent=55 // pred_region
        %p1865 = scmp.lt.s32.totalorder %s20, 1
        %s1866 = scalar_select %p1865, %s20, 1
        %s1867 = smul.addr %s1866, 8
        %s1868 = smul.addr %s1867, 8
        %s1869 = scalar_lea.vmem %s6, %s1868
      $region60: #{_lambda_.5} parent=55 // pred_fallthru
        _
      // Predicated region
      $region61: #{_lambda_.5} parent=55 // pred_check
        %p1870 = pneg %p200
      $region62: #{_lambda_.5} parent=55 // pred_check_branch
        %1872 = sbr.rel (%p1870) target = $region64
      $region63: #{_lambda_.5} parent=55 // pred_region
        %p1873 = scmp.lt.s32.totalorder %s20, 1
        %s1874 = scalar_select %p1873, %s20, 1
        %s1875 = smul.addr %s1874, 4
        %s1876 = smul.addr %s1875, 8
        %s1877 = scalar_lea.vmem %s7, %s1876
      $region64: #{_lambda_.5} parent=55 // pred_fallthru
        _
    $region56: #{_lambda_.5} parent=5 // pred_fallthru
      _
  $region6: #{_lambda_.5} parent=0 // loop_footer
    %s18 = sadd.s32 1, %s14
  $region7: #{_lambda_.5} parent=0 // loop_footer_branch
    %13 = sbr.rel target = $region3
  $region8: #{_lambda_.5} parent=0 // loop_exit
    _

// kernel: _lambda_.8
$region0: #{_lambda_.8}
  #allocation0 [shape = 'u32[]', space=smem, size = 0x4, offset = 0x4, fixed_abs, tag = 'smem constant byte address 0x4 - core index']
  #allocation1 [shape = 'u32[144,128]{1,0:T(1,128)}', space=vmem, size = 0x12000, scoped, tag = 'internal scratch']
  %s0 = inlined_call_operand.vmem [shape: f32[2,64,64], index: 0, kind: input, shape index: {}]
  %s1 = inlined_call_operand.vmem [shape: f32[2,64,16], index: 1, kind: input, shape index: {}]
  %s2 = inlined_call_operand.vmem [shape: bf16[3,32,192], index: 2, kind: input, shape index: {}]
  %s3 = inlined_call_operand.vmem [shape: bf16[3,32,192], index: 3, kind: input, shape index: {}]
  %s4 = inlined_call_operand.vmem [shape: f32[32,1], index: 4, kind: input, shape index: {}]
  %s5 = inlined_call_operand.vmem [shape: bf16[3,32,96], index: 5, kind: input, shape index: {}]
  %s6 = inlined_call_operand.vmem [shape: f32[32,1], index: 6, kind: input, shape index: {}]
  %s7 = inlined_call_operand.vmem [shape: f32[16,64], index: 7, kind: input, shape index: {}]
  %s8 = inlined_call_operand.vmem [shape: f32[2,32,64], index: 8, kind: output, shape index: {}]
  %s9 = sld [smem:[#allocation0]]
  $region65: #{_lambda_.8} parent=0
    _
  %s11 = ssub.s32 1, %s9
  %s12 = scalar_select 0, %s11, %s9
  loop: start=0, step=1, limit=4
  $region2: #{_lambda_.8} parent=0 // loop_pre_header
    _
  $region3: #{_lambda_.8} parent=0 // loop_header
    %s14 = sphi 0, %s18
    %p15 = scmp.ge.s32.totalorder %s14, 4
    %s24 = sphi 0, %s26
    %s27 = sphi 0, %s24
    %s28 = sphi 0, %s27
    %s44 = sphi 0, %s28
    %s50 = sphi 0, %s52
    %s53 = sphi 0, %s50
    %s54 = sphi 0, %s53
    %s70 = sphi 0, %s54
    %s74 = sphi 0, %s74
    %s76 = sphi 0, %s74
    %s77 = sphi 0, %s76
    %s91 = sphi 0, %s77
    %s95 = sphi 0, %s95
    %s97 = sphi 0, %s95
    %s98 = sphi 0, %s97
    %s112 = sphi 0, %s98
    %s116 = sphi 0, %s116
    %s118 = sphi 0, %s116
    %s119 = sphi 0, %s118
    %s133 = sphi 0, %s119
    %s137 = sphi 0, %s137
    %s139 = sphi 0, %s137
    %s140 = sphi 0, %s139
    %s154 = sphi 0, %s140
    %s158 = sphi 0, %s158
    %s160 = sphi 0, %s158
    %s161 = sphi 0, %s160
    %s175 = sphi 0, %s161
    %s179 = sphi 0, %s179
    %s181 = sphi 0, %s179
    %s182 = sphi 0, %s181
    %s196 = sphi 0, %s182
    %s202 = sphi 0, %s204
    %s205 = sphi 0, %s202
    %s206 = sphi 0, %s205
    %s222 = sphi 0, %s206
  $region4: #{_lambda_.8} parent=0 // loop_header_branch
    %17 = sbr.rel (%p15) target = $region8
  $region5: #{_lambda_.8} parent=0 // loop_body
    %s19 = ssub.s32 %s14, 1
    %s20 = ssub.s32 %s14, 2
    %s21 = sadd.s32 %s14, 1
    %s22 = ssub.s32 %s14, %s21
    %p23 = scmp.eq.s32.totalorder %s22, 0
    %s25 = sadd.s32 %s24, 1
    %s26 = scalar_select %p23, %s24, %s25
    %p29 = pneg %p23
    %p30 = scmp.eq.s32.totalorder %s14, 1
    %p31 = por %p29, %p30
    %p32 = scmp.ne.s32.totalorder %s24, %s27
    %p33 = scmp.eq.s32.totalorder %s14, 0
    %p34 = por %p32, %p33
    %p35 = scmp.ne.s32.totalorder %s24, %s27
    %p36 = scmp.eq.s32.totalorder %s19, 1
    %p37 = por %p35, %p36
    %p38 = scmp.ne.s32.totalorder %s27, %s28
    %p39 = scmp.eq.s32.totalorder %s19, 0
    %p40 = por %p38, %p39
    %p41 = scmp.ne.s32.totalorder %s27, %s28
    %p42 = scmp.eq.s32.totalorder %s20, 1
    %p43 = por %p41, %p42
    %p45 = scmp.ne.s32.totalorder %s28, %s44
    %p46 = scmp.eq.s32.totalorder %s20, 0
    %p47 = por %p45, %p46
    %s48 = ssub.s32 %s14, %s21
    %p49 = scmp.eq.s32.totalorder %s48, 0
    %s51 = sadd.s32 %s50, 1
    %s52 = scalar_select %p49, %s50, %s51
    %p55 = pneg %p49
    %p56 = scmp.eq.s32.totalorder %s14, 1
    %p57 = por %p55, %p56
    %p58 = scmp.ne.s32.totalorder %s50, %s53
    %p59 = scmp.eq.s32.totalorder %s14, 0
    %p60 = por %p58, %p59
    %p61 = scmp.ne.s32.totalorder %s50, %s53
    %p62 = scmp.eq.s32.totalorder %s19, 1
    %p63 = por %p61, %p62
    %p64 = scmp.ne.s32.totalorder %s53, %s54
    %p65 = scmp.eq.s32.totalorder %s19, 0
    %p66 = por %p64, %p65
    %p67 = scmp.ne.s32.totalorder %s53, %s54
    %p68 = scmp.eq.s32.totalorder %s20, 1
    %p69 = por %p67, %p68
    %p71 = scmp.ne.s32.totalorder %s54, %s70
    %p72 = scmp.eq.s32.totalorder %s20, 0
    %p73 = por %p71, %p72
    %s75 = sadd.s32 %s74, 1
    %p78 = scmp.eq.s32.totalorder %s14, 1
    %p79 = scmp.ne.s32.totalorder %s74, %s76
    %p80 = scmp.eq.s32.totalorder %s14, 0
    %p81 = por %p79, %p80
    %p82 = scmp.ne.s32.totalorder %s74, %s76
    %p83 = scmp.eq.s32.totalorder %s19, 1
    %p84 = por %p82, %p83
    %p85 = scmp.ne.s32.totalorder %s76, %s77
    %p86 = scmp.eq.s32.totalorder %s19, 0
    %p87 = por %p85, %p86
    %p88 = scmp.ne.s32.totalorder %s76, %s77
    %p89 = scmp.eq.s32.totalorder %s20, 1
    %p90 = por %p88, %p89
    %p92 = scmp.ne.s32.totalorder %s77, %s91
    %p93 = scmp.eq.s32.totalorder %s20, 0
    %p94 = por %p92, %p93
    %s96 = sadd.s32 %s95, 1
    %p99 = scmp.eq.s32.totalorder %s14, 1
    %p100 = scmp.ne.s32.totalorder %s95, %s97
    %p101 = scmp.eq.s32.totalorder %s14, 0
    %p102 = por %p100, %p101
    %p103 = scmp.ne.s32.totalorder %s95, %s97
    %p104 = scmp.eq.s32.totalorder %s19, 1
    %p105 = por %p103, %p104
    %p106 = scmp.ne.s32.totalorder %s97, %s98
    %p107 = scmp.eq.s32.totalorder %s19, 0
    %p108 = por %p106, %p107
    %p109 = scmp.ne.s32.totalorder %s97, %s98
    %p110 = scmp.eq.s32.totalorder %s20, 1
    %p111 = por %p109, %p110
    %p113 = scmp.ne.s32.totalorder %s98, %s112
    %p114 = scmp.eq.s32.totalorder %s20, 0
    %p115 = por %p113, %p114
    %s117 = sadd.s32 %s116, 1
    %p120 = scmp.eq.s32.totalorder %s14, 1
    %p121 = scmp.ne.s32.totalorder %s116, %s118
    %p122 = scmp.eq.s32.totalorder %s14, 0
    %p123 = por %p121, %p122
    %p124 = scmp.ne.s32.totalorder %s116, %s118
    %p125 = scmp.eq.s32.totalorder %s19, 1
    %p126 = por %p124, %p125
    %p127 = scmp.ne.s32.totalorder %s118, %s119
    %p128 = scmp.eq.s32.totalorder %s19, 0
    %p129 = por %p127, %p128
    %p130 = scmp.ne.s32.totalorder %s118, %s119
    %p131 = scmp.eq.s32.totalorder %s20, 1
    %p132 = por %p130, %p131
    %p134 = scmp.ne.s32.totalorder %s119, %s133
    %p135 = scmp.eq.s32.totalorder %s20, 0
    %p136 = por %p134, %p135
    %s138 = sadd.s32 %s137, 1
    %p141 = scmp.eq.s32.totalorder %s14, 1
    %p142 = scmp.ne.s32.totalorder %s137, %s139
    %p143 = scmp.eq.s32.totalorder %s14, 0
    %p144 = por %p142, %p143
    %p145 = scmp.ne.s32.totalorder %s137, %s139
    %p146 = scmp.eq.s32.totalorder %s19, 1
    %p147 = por %p145, %p146
    %p148 = scmp.ne.s32.totalorder %s139, %s140
    %p149 = scmp.eq.s32.totalorder %s19, 0
    %p150 = por %p148, %p149
    %p151 = scmp.ne.s32.totalorder %s139, %s140
    %p152 = scmp.eq.s32.totalorder %s20, 1
    %p153 = por %p151, %p152
    %p155 = scmp.ne.s32.totalorder %s140, %s154
    %p156 = scmp.eq.s32.totalorder %s20, 0
    %p157 = por %p155, %p156
    %s159 = sadd.s32 %s158, 1
    %p162 = scmp.eq.s32.totalorder %s14, 1
    %p163 = scmp.ne.s32.totalorder %s158, %s160
    %p164 = scmp.eq.s32.totalorder %s14, 0
    %p165 = por %p163, %p164
    %p166 = scmp.ne.s32.totalorder %s158, %s160
    %p167 = scmp.eq.s32.totalorder %s19, 1
    %p168 = por %p166, %p167
    %p169 = scmp.ne.s32.totalorder %s160, %s161
    %p170 = scmp.eq.s32.totalorder %s19, 0
    %p171 = por %p169, %p170
    %p172 = scmp.ne.s32.totalorder %s160, %s161
    %p173 = scmp.eq.s32.totalorder %s20, 1
    %p174 = por %p172, %p173
    %p176 = scmp.ne.s32.totalorder %s161, %s175
    %p177 = scmp.eq.s32.totalorder %s20, 0
    %p178 = por %p176, %p177
    %s180 = sadd.s32 %s179, 1
    %p183 = scmp.eq.s32.totalorder %s14, 1
    %p184 = scmp.ne.s32.totalorder %s179, %s181
    %p185 = scmp.eq.s32.totalorder %s14, 0
    %p186 = por %p184, %p185
    %p187 = scmp.ne.s32.totalorder %s179, %s181
    %p188 = scmp.eq.s32.totalorder %s19, 1
    %p189 = por %p187, %p188
    %p190 = scmp.ne.s32.totalorder %s181, %s182
    %p191 = scmp.eq.s32.totalorder %s19, 0
    %p192 = por %p190, %p191
    %p193 = scmp.ne.s32.totalorder %s181, %s182
    %p194 = scmp.eq.s32.totalorder %s20, 1
    %p195 = por %p193, %p194
    %p197 = scmp.ne.s32.totalorder %s182, %s196
    %p198 = scmp.eq.s32.totalorder %s20, 0
    %p199 = por %p197, %p198
    %s200 = ssub.s32 %s14, %s21
    %p201 = scmp.eq.s32.totalorder %s200, 0
    %s203 = sadd.s32 %s202, 1
    %s204 = scalar_select %p201, %s202, %s203
    %p207 = pneg %p201
    %p208 = scmp.eq.s32.totalorder %s14, 1
    %p209 = por %p207, %p208
    %p210 = scmp.ne.s32.totalorder %s202, %s205
    %p211 = scmp.eq.s32.totalorder %s14, 0
    %p212 = por %p210, %p211
    %p213 = scmp.ne.s32.totalorder %s202, %s205
    %p214 = scmp.eq.s32.totalorder %s19, 1
    %p215 = por %p213, %p214
    %p216 = scmp.ne.s32.totalorder %s205, %s206
    %p217 = scmp.eq.s32.totalorder %s19, 0
    %p218 = por %p216, %p217
    %p219 = scmp.ne.s32.totalorder %s205, %s206
    %p220 = scmp.eq.s32.totalorder %s20, 1
    %p221 = por %p219, %p220
    %p223 = scmp.ne.s32.totalorder %s206, %s222
    %p224 = scmp.eq.s32.totalorder %s20, 0
    %p225 = por %p223, %p224
    %p226 = scmp.le.s32.totalorder 1, %s14
    %p227 = scmp.lt.s32.totalorder %s14, 3
    %p228 = pnand %p226, %p227
    %p229 = pneg %p228
    // Predicated region
    $region9: #{_lambda_.8} parent=5 // pred_check
      _
    $region10: #{_lambda_.8} parent=5 // pred_check_branch
      %231 = sbr.rel (%p228) target = $region12
    $region11: #{_lambda_.8} parent=5 // pred_region
      %s232 = ssub.s32 %s14, 1
      // Predicated region
      $region13: #{_lambda_.8} parent=11 // pred_check
        %p233 = pneg %p87
      $region14: #{_lambda_.8} parent=11 // pred_check_branch
        %235 = sbr.rel (%p233) target = $region16
      $region15: #{_lambda_.8} parent=11 // pred_region
        _
      $region16: #{_lambda_.8} parent=11 // pred_fallthru
        _
      // Predicated region
      $region17: #{_lambda_.8} parent=11 // pred_check
        %p236 = pneg %p108
      $region18: #{_lambda_.8} parent=11 // pred_check_branch
        %238 = sbr.rel (%p236) target = $region20
      $region19: #{_lambda_.8} parent=11 // pred_region
        _
      $region20: #{_lambda_.8} parent=11 // pred_fallthru
        _
      // Predicated region
      $region21: #{_lambda_.8} parent=11 // pred_check
        %p239 = pneg %p129
      $region22: #{_lambda_.8} parent=11 // pred_check_branch
        %241 = sbr.rel (%p239) target = $region24
      $region23: #{_lambda_.8} parent=11 // pred_region
        _
      $region24: #{_lambda_.8} parent=11 // pred_fallthru
        _
      // Predicated region
      $region25: #{_lambda_.8} parent=11 // pred_check
        %p242 = pneg %p150
      $region26: #{_lambda_.8} parent=11 // pred_check_branch
        %244 = sbr.rel (%p242) target = $region28
      $region27: #{_lambda_.8} parent=11 // pred_region
        _
      $region28: #{_lambda_.8} parent=11 // pred_fallthru
        _
      // Predicated region
      $region29: #{_lambda_.8} parent=11 // pred_check
        %p245 = pneg %p171
      $region30: #{_lambda_.8} parent=11 // pred_check_branch
        %247 = sbr.rel (%p245) target = $region32
      $region31: #{_lambda_.8} parent=11 // pred_region
        _
      $region32: #{_lambda_.8} parent=11 // pred_fallthru
        _
      // Predicated region
      $region33: #{_lambda_.8} parent=11 // pred_check
        %p248 = pneg %p192
      $region34: #{_lambda_.8} parent=11 // pred_check_branch
        %250 = sbr.rel (%p248) target = $region36
      $region35: #{_lambda_.8} parent=11 // pred_region
        _
      $region36: #{_lambda_.8} parent=11 // pred_fallthru
        _
    $region12: #{_lambda_.8} parent=5 // pred_fallthru
      _
    %p251 = scmp.lt.s32.totalorder %s14, 2
    // Predicated region
    $region37: #{_lambda_.8} parent=5 // pred_check
      %p252 = pneg %p251
    $region38: #{_lambda_.8} parent=5 // pred_check_branch
      %254 = sbr.rel (%p252) target = $region40
    $region39: #{_lambda_.8} parent=5 // pred_region
      // Predicated region
      $region41: #{_lambda_.8} parent=39 // pred_check
        %p255 = pneg %p34
      $region42: #{_lambda_.8} parent=39 // pred_check_branch
        %257 = sbr.rel (%p255) target = $region44
      $region43: #{_lambda_.8} parent=39 // pred_region
        %p258 = scmp.lt.s32.totalorder %s14, 1
        %s259 = scalar_select %p258, %s14, 1
        %s260 = smul.addr %s259, 8
        %s261 = smul.addr %s260, 8
        %s262 = scalar_lea.vmem %s0, %s261
      $region44: #{_lambda_.8} parent=39 // pred_fallthru
        _
      // Predicated region
      $region45: #{_lambda_.8} parent=39 // pred_check
        %p263 = pneg %p60
      $region46: #{_lambda_.8} parent=39 // pred_check_branch
        %265 = sbr.rel (%p263) target = $region48
      $region47: #{_lambda_.8} parent=39 // pred_region
        %p266 = scmp.lt.s32.totalorder %s14, 1
        %s267 = scalar_select %p266, %s14, 1
        %s268 = smul.addr %s267, 8
        %s269 = smul.addr %s268, 8
        %s270 = scalar_lea.vmem %s1, %s269
      $region48: #{_lambda_.8} parent=39 // pred_fallthru
        _
    $region40: #{_lambda_.8} parent=5 // pred_fallthru
      _
    %p271 = scmp.le.s32.totalorder 1, %s14
    %p272 = scmp.lt.s32.totalorder %s14, 3
    %p273 = pnand %p271, %p272
    %p274 = pneg %p273
    // Predicated region
    $region49: #{_lambda_.8} parent=5 // pred_check
      _
    $region50: #{_lambda_.8} parent=5 // pred_check_branch
      %276 = sbr.rel (%p273) target = $region52
    $region51: #{_lambda_.8} parent=5 // pred_region
      %s277 = ssub.s32 %s14, 1
      %p278 = scmp.lt.s32.totalorder %s19, 1
      %s279 = scalar_select %p278, %s19, 1
      %s280 = smul.addr %s279, 8
      %s281 = smul.addr %s280, 8
      %s282 = scalar_lea.vmem %s0, %s281
      %p283 = pneg %p40
      %p284 = pneg %p37
      %p285 = scmp.lt.s32.totalorder %s19, 1
      %s286 = scalar_select %p285, %s19, 1
      %s287 = smul.addr %s286, 8
      %s288 = smul.addr %s287, 8
      %s289 = scalar_lea.vmem %s1, %s288
      %p290 = pneg %p66
      %p291 = pneg %p63
      %p292 = pneg %p87
      %p293 = pneg %p84
      %p294 = pneg %p108
      %p295 = pneg %p105
      %p296 = pneg %p129
      %p297 = pneg %p126
      %p298 = pneg %p150
      %p299 = pneg %p147
      %p300 = pneg %p171
      %p301 = pneg %p168
      %p302 = pneg %p192
      %p303 = pneg %p189
      %p304 = pneg %p218
      %p305 = pneg %p215
      %p306 = scmp.lt.s32.totalorder %s19, 1
      %s307 = scalar_select %p306, %s19, 1
      %s308 = smul.addr %s307, 4
      %s309 = smul.addr %s308, 8
      %s310 = scalar_lea.vmem %s8, %s309
      %p311 = scmp.lt.s32.totalorder %s19, 1
      %s312 = scalar_select %p311, %s19, 1
      %s313 = smul.addr %s312, 8
      %s314 = smul.addr %s313, 8
      %s315 = scalar_lea.vmem %s0, %s314
      %p316 = scmp.lt.s32.totalorder %s19, 1
      %s317 = scalar_select %p316, %s19, 1
      %s318 = smul.addr %s317, 8
      %s319 = smul.addr %s318, 8
      %s320 = scalar_lea.vmem %s1, %s319
      %p321 = scmp.lt.s32.totalorder %s19, 1
      %s322 = scalar_select %p321, %s19, 1
      %s323 = smul.addr %s322, 4
      %s324 = smul.addr %s323, 8
      %s325 = scalar_lea.vmem %s8, %s324
      %v327 = vld [vmem:[%s315] sm:$0xff]
      %v328 = vld [vmem:[%s315 + $0x8] sm:$0xff]
      %v329 = vld [vmem:[%s315 + $0x10] sm:$0xff]
      %v330 = vld [vmem:[%s315 + $0x18] sm:$0xff]
      %v331 = vld [vmem:[%s315 + $0x20] sm:$0xff]
      %v332 = vld [vmem:[%s315 + $0x28] sm:$0xff]
      %v333 = vld [vmem:[%s315 + $0x30] sm:$0xff]
      %v334 = vld [vmem:[%s315 + $0x38] sm:$0xff]
      %v335 = vld [vmem:[%s320] sm:$0xff]
      %v336 = vld [vmem:[%s320 + $0x8] sm:$0xff]
      %v337 = vld [vmem:[%s320 + $0x10] sm:$0xff]
      %v338 = vld [vmem:[%s320 + $0x18] sm:$0xff]
      %v339 = vld [vmem:[%s320 + $0x20] sm:$0xff]
      %v340 = vld [vmem:[%s320 + $0x28] sm:$0xff]
      %v341 = vld [vmem:[%s320 + $0x30] sm:$0xff]
      %v342 = vld [vmem:[%s320 + $0x38] sm:$0xff]
      %v343 = vld [vmem:[%s7] sm:$0xff]
      %v344 = vld [vmem:[%s7 + $0x8] sm:$0xff]
      %vm345 = vcmask 130048
      %v347 = vsel %vm345, %v335, 0
      %v350 = vsel %vm345, %v336, 0
      %v353 = vsel %vm345, %v337, 0
      %v356 = vsel %vm345, %v338, 0
      %v359 = vsel %vm345, %v339, 0
      %v362 = vsel %vm345, %v340, 0
      %v365 = vsel %vm345, %v341, 0
      %v368 = vsel %vm345, %v342, 0
      %370 = vmatprep.subr.mxu0 0.0
      %371 = vmatpush1.msra.mxu0 %v343
      %372 = vmatprep.subr.mxu0 0.0
      %373 = vmatpush1.msra.mxu0 %v344
      %374 = vmatprep.subr.mxu0 0.0
      %375 = vmatpush1.msra.mxu0 0.0
      %376 = vmatprep.subr.mxu0 0.0
      %377 = vmatpush1.msra.mxu0 0.0
      %378 = vmatprep.subr.mxu0 0.0
      %379 = vmatpush1.msra.mxu0 0.0
      %380 = vmatprep.subr.mxu0 0.0
      %381 = vmatpush1.msra.mxu0 0.0
      %382 = vmatprep.subr.mxu0 0.0
      %383 = vmatpush1.msra.mxu0 0.0
      %384 = vmatprep.subr.mxu0 0.0
      %385 = vmatpush1.msra.mxu0 0.0
      %386 = vmatprep.subr.mxu0 0.0
      %387 = vmatpush1.msra.mxu0 0.0
      %388 = vmatprep.subr.mxu0 0.0
      %389 = vmatpush1.msra.mxu0 0.0
      %390 = vmatprep.subr.mxu0 0.0
      %391 = vmatpush1.msra.mxu0 0.0
      %392 = vmatprep.subr.mxu0 0.0
      %393 = vmatpush1.msra.mxu0 0.0
      %394 = vmatprep.subr.mxu0 0.0
      %395 = vmatpush1.msra.mxu0 0.0
      %396 = vmatprep.subr.mxu0 0.0
      %397 = vmatpush1.msra.mxu0 0.0
      %398 = vmatprep.subr.mxu0 0.0
      %399 = vmatpush1.msra.mxu0 0.0
      %400 = vmatprep.subr.mxu0 0.0
      %401 = vmatpush1.msra.mxu0 0.0
      %402 = vmatprep.subr.mxu0 0.0
      %403 = vmatpush1.msra.mxu0 0.0
      %404 = vmatprep.subr.mxu0 0.0
      %405 = vmatpush1.msra.mxu0 0.0
      %406 = vmatprep.subr.mxu0 0.0
      %407 = vmatpush1.msra.mxu0 0.0
      %408 = vmatprep.subr.mxu0 0.0
      %409 = vmatpush1.msra.mxu0 0.0
      %410 = vmatprep.subr.mxu0 0.0
      %411 = vmatpush1.msra.mxu0 0.0
      %412 = vmatprep.subr.mxu0 0.0
      %413 = vmatpush1.msra.mxu0 0.0
      %414 = vmatprep.subr.mxu0 0.0
      %415 = vmatpush1.msra.mxu0 0.0
      %416 = vmatprep.subr.mxu0 0.0
      %417 = vmatpush1.msra.mxu0 0.0
      %418 = vmatprep.subr.mxu0 0.0
      %419 = vmatpush1.msra.mxu0 0.0
      %420 = vmatprep.subr.mxu0 0.0
      %421 = vmatpush1.msra.mxu0 0.0
      %422 = vmatprep.subr.mxu0 0.0
      %423 = vmatpush1.msra.mxu0 0.0
      %424 = vmatprep.subr.mxu0 0.0
      %425 = vmatpush1.msra.mxu0 0.0
      %426 = vmatprep.subr.mxu0 0.0
      %427 = vmatpush1.msra.mxu0 0.0
      %428 = vmatprep.subr.mxu0 0.0
      %429 = vmatpush1.msra.mxu0 0.0
      %430 = vmatprep.subr.mxu0 0.0
      %431 = vmatpush1.msra.mxu0 0.0
      %432 = vmatprep.subr.mxu0 0.0
      %433 = vmatpush1.msra.mxu0 0.0
      %434 = vmatprep.mubr.f32.mxu0 0.0
      %435 = vmatmul.mubr.f32.gmra.mrb[0].mxu0 %v347
      %v436 = vpop.f32.mrb[0].mxu0
      %v437 = vadd.f32 0.0, %v436
      %v438 = vpop.f32.mrb[0].mxu0
      %439 = vmatprep.mubr.f32.mxu0 0.0
      %440 = vmatmul.mubr.f32.gmra.mrb[0].mxu0 %v350
      %v441 = vpop.f32.mrb[0].mxu0
      %v442 = vadd.f32 0.0, %v441
      %v443 = vpop.f32.mrb[0].mxu0
      %444 = vmatprep.mubr.f32.mxu0 0.0
      %445 = vmatmul.mubr.f32.gmra.mrb[0].mxu0 %v353
      %v446 = vpop.f32.mrb[0].mxu0
      %v447 = vadd.f32 0.0, %v446
      %v448 = vpop.f32.mrb[0].mxu0
      %449 = vmatprep.mubr.f32.mxu0 0.0
      %450 = vmatmul.mubr.f32.gmra.mrb[0].mxu0 %v356
      %v451 = vpop.f32.mrb[0].mxu0
      %v452 = vadd.f32 0.0, %v451
      %v453 = vpop.f32.mrb[0].mxu0
      %454 = vmatprep.mubr.f32.mxu0 0.0
      %455 = vmatmul.mubr.f32.gmra.mrb[0].mxu0 %v359
      %v456 = vpop.f32.mrb[0].mxu0
      %v457 = vadd.f32 0.0, %v456
      %v458 = vpop.f32.mrb[0].mxu0
      %459 = vmatprep.mubr.f32.mxu0 0.0
      %460 = vmatmul.mubr.f32.gmra.mrb[0].mxu0 %v362
      %v461 = vpop.f32.mrb[0].mxu0
      %v462 = vadd.f32 0.0, %v461
      %v463 = vpop.f32.mrb[0].mxu0
      %464 = vmatprep.mubr.f32.mxu0 0.0
      %465 = vmatmul.mubr.f32.gmra.mrb[0].mxu0 %v365
      %v466 = vpop.f32.mrb[0].mxu0
      %v467 = vadd.f32 0.0, %v466
      %v468 = vpop.f32.mrb[0].mxu0
      %469 = vmatprep.mubr.f32.mxu0 0.0
      %470 = vmatmul.mubr.f32.gmra.mrb[0].mxu0 %v368
      %v471 = vpop.f32.mrb[0].mxu0
      %v472 = vadd.f32 0.0, %v471
      %v473 = vpop.f32.mrb[0].mxu0
      %474 = vdwg.mxu0
      %v475 = vld [vmem:[%s2] sm:$0xff]
      %v476 = vld [vmem:[%s2 + $0x8] sm:$0xff]
      %v477 = vld [vmem:[%s2 + $0x10] sm:$0xff]
      %v478 = vld [vmem:[%s2 + $0x18] sm:$0xff]
      %v479 = vld [vmem:[%s2 + $0x20] sm:$0xff]
      %v480 = vld [vmem:[%s2 + $0x28] sm:$0xff]
      %v481 = vld [vmem:[%s2 + $0x30] sm:$0xff]
      %v482 = vld [vmem:[%s2 + $0x38] sm:$0xff]
      %v483 = vld [vmem:[%s2 + $0x40] sm:$0xff]
      %v484 = vld [vmem:[%s2 + $0x48] sm:$0xff]
      %v485 = vld [vmem:[%s2 + $0x50] sm:$0xff]
      %v486 = vld [vmem:[%s2 + $0x58] sm:$0xff]
      %v487 = vld [vmem:[%s3] sm:$0xff]
      %v488 = vld [vmem:[%s3 + $0x8] sm:$0xff]
      %v489 = vld [vmem:[%s3 + $0x10] sm:$0xff]
      %v490 = vld [vmem:[%s3 + $0x18] sm:$0xff]
      %v491 = vld [vmem:[%s3 + $0x20] sm:$0xff]
      %v492 = vld [vmem:[%s3 + $0x28] sm:$0xff]
      %v493 = vld [vmem:[%s3 + $0x30] sm:$0xff]
      %v494 = vld [vmem:[%s3 + $0x38] sm:$0xff]
      %v495 = vld [vmem:[%s3 + $0x40] sm:$0xff]
      %v496 = vld [vmem:[%s3 + $0x48] sm:$0xff]
      %v497 = vld [vmem:[%s3 + $0x50] sm:$0xff]
      %v498 = vld [vmem:[%s3 + $0x58] sm:$0xff]
      %v499 = vld [vmem:[%s4] sm:$0xff]
      %v500 = vld [vmem:[%s4 + $0x8] sm:$0xff]
      %v501 = vld [vmem:[%s4 + $0x10] sm:$0xff]
      %v502 = vld [vmem:[%s4 + $0x18] sm:$0xff]
      %v503 = vlaneseq
      %v504 = vand.u32 %v503, 127
      %vm505 = vcmp.lt.s32.totalorder %v504, 0
      %v506 = vsub.s32 0, %v504
      %v507 = vsel %vm505, %v506, %v504
      %v508 = vshrl.u32 %v507, 3
      %v509 = vand.u32 %v507, 7
      %v510 = vsub.s32 0, %v509
      %v511 = vsel %vm505, %v510, %v509
      %vm512 = vcmp.ne.s32.totalorder %v511, 0
      %vm513 = vcmp.lt.s32.totalorder %v511, 0
      %vm514 = vmand %vm513, %vm512
      %v515 = vadd.s32 %v511, 8
      %v516 = vsel %vm514, %v515, %v511
      %vm517 = vcmp.eq.s32.totalorder %v516, 0
      %526 = vrot.lane.b32.xlu0 %v327, 1
      %v527 = vpop.permute.xlu0 %526
      %528 = vrot.lane.b32.xlu0 %v328, 1
      %v529 = vpop.permute.xlu0 %528
      %530 = vrot.lane.b32.xlu0 %v329, 1
      %v531 = vpop.permute.xlu0 %530
      %532 = vrot.lane.b32.xlu0 %v330, 1
      %v533 = vpop.permute.xlu0 %532
      %534 = vrot.lane.b32.xlu0 %v331, 1
      %v535 = vpop.permute.xlu0 %534
      %536 = vrot.lane.b32.xlu0 %v332, 1
      %v537 = vpop.permute.xlu0 %536
      %538 = vrot.lane.b32.xlu0 %v333, 1
      %v539 = vpop.permute.xlu0 %538
      %540 = vrot.lane.b32.xlu0 %v334, 1
      %v541 = vpop.permute.xlu0 %540
      %vm550 = vcmask 7168
      %v551 = vsel %vm550, 0.0, %v527
      %v552 = vsel %vm550, 0.0, %v529
      %v553 = vsel %vm550, 0.0, %v531
      %v554 = vsel %vm550, 0.0, %v533
      %v555 = vsel %vm550, 0.0, %v535
      %v556 = vsel %vm550, 0.0, %v537
      %v557 = vsel %vm550, 0.0, %v539
      %v558 = vsel %vm550, 0.0, %v541
      %v559 = vsel %vm517, 1, 0
      %vm560 = vcmp.eq.s32.totalorder %v559, 1
      %v561 = vsel %vm560, 0.0, %v551
      %v562 = vsel %vm560, 0.0, %v552
      %v563 = vsel %vm560, 0.0, %v553
      %v564 = vsel %vm560, 0.0, %v554
      %v565 = vsel %vm560, 0.0, %v555
      %v566 = vsel %vm560, 0.0, %v556
      %v567 = vsel %vm560, 0.0, %v557
      %v568 = vsel %vm560, 0.0, %v558
      %vm569 = vcmp.eq.s32.totalorder %v516, 7
      %570 = vrot.lane.b32.xlu0 %v327, 127
      %v571 = vpop.permute.xlu0 %570
      %572 = vrot.lane.b32.xlu0 %v328, 127
      %v573 = vpop.permute.xlu0 %572
      %574 = vrot.lane.b32.xlu0 %v329, 127
      %v575 = vpop.permute.xlu0 %574
      %576 = vrot.lane.b32.xlu0 %v330, 127
      %v577 = vpop.permute.xlu0 %576
      %578 = vrot.lane.b32.xlu0 %v331, 127
      %v579 = vpop.permute.xlu0 %578
      %580 = vrot.lane.b32.xlu0 %v332, 127
      %v581 = vpop.permute.xlu0 %580
      %582 = vrot.lane.b32.xlu0 %v333, 127
      %v583 = vpop.permute.xlu0 %582
      %584 = vrot.lane.b32.xlu0 %v334, 127
      %v585 = vpop.permute.xlu0 %584
      %vm594 = vcmask 515072
      %v595 = vsel %vm594, %v571, 0.0
      %v596 = vsel %vm594, %v573, 0.0
      %v597 = vsel %vm594, %v575, 0.0
      %v598 = vsel %vm594, %v577, 0.0
      %v599 = vsel %vm594, %v579, 0.0
      %v600 = vsel %vm594, %v581, 0.0
      %v601 = vsel %vm594, %v583, 0.0
      %v602 = vsel %vm594, %v585, 0.0
      %v603 = vsel %vm569, 1, 0
      %vm604 = vcmp.eq.s32.totalorder %v603, 1
      %v605 = vsel %vm604, 0.0, %v595
      %v606 = vsel %vm604, 0.0, %v596
      %v607 = vsel %vm604, 0.0, %v597
      %v608 = vsel %vm604, 0.0, %v598
      %v609 = vsel %vm604, 0.0, %v599
      %v610 = vsel %vm604, 0.0, %v600
      %v611 = vsel %vm604, 0.0, %v601
      %v612 = vsel %vm604, 0.0, %v602
      %629 = vrot.lane.b32.xlu0 %v561, 8
      %v630 = vpop.permute.xlu0 %629
      %631 = vrot.lane.b32.xlu0 %v562, 8
      %v632 = vpop.permute.xlu0 %631
      %633 = vrot.lane.b32.xlu0 %v563, 8
      %v634 = vpop.permute.xlu0 %633
      %635 = vrot.lane.b32.xlu0 %v564, 8
      %v636 = vpop.permute.xlu0 %635
      %637 = vrot.lane.b32.xlu0 %v565, 8
      %v638 = vpop.permute.xlu0 %637
      %639 = vrot.lane.b32.xlu0 %v566, 8
      %v640 = vpop.permute.xlu0 %639
      %641 = vrot.lane.b32.xlu0 %v567, 8
      %v642 = vpop.permute.xlu0 %641
      %643 = vrot.lane.b32.xlu0 %v568, 8
      %v644 = vpop.permute.xlu0 %643
      %645 = vrot.lane.b32.xlu0 %v327, 8
      %v646 = vpop.permute.xlu0 %645
      %647 = vrot.lane.b32.xlu0 %v328, 8
      %v648 = vpop.permute.xlu0 %647
      %649 = vrot.lane.b32.xlu0 %v329, 8
      %v650 = vpop.permute.xlu0 %649
      %651 = vrot.lane.b32.xlu0 %v330, 8
      %v652 = vpop.permute.xlu0 %651
      %653 = vrot.lane.b32.xlu0 %v331, 8
      %v654 = vpop.permute.xlu0 %653
      %655 = vrot.lane.b32.xlu0 %v332, 8
      %v656 = vpop.permute.xlu0 %655
      %657 = vrot.lane.b32.xlu0 %v333, 8
      %v658 = vpop.permute.xlu0 %657
      %659 = vrot.lane.b32.xlu0 %v334, 8
      %v660 = vpop.permute.xlu0 %659
      %661 = vrot.lane.b32.xlu0 %v605, 8
      %v662 = vpop.permute.xlu0 %661
      %663 = vrot.lane.b32.xlu0 %v606, 8
      %v664 = vpop.permute.xlu0 %663
      %665 = vrot.lane.b32.xlu0 %v607, 8
      %v666 = vpop.permute.xlu0 %665
      %667 = vrot.lane.b32.xlu0 %v608, 8
      %v668 = vpop.permute.xlu0 %667
      %669 = vrot.lane.b32.xlu0 %v609, 8
      %v670 = vpop.permute.xlu0 %669
      %671 = vrot.lane.b32.xlu0 %v610, 8
      %v672 = vpop.permute.xlu0 %671
      %673 = vrot.lane.b32.xlu0 %v611, 8
      %v674 = vpop.permute.xlu0 %673
      %675 = vrot.lane.b32.xlu0 %v612, 8
      %v676 = vpop.permute.xlu0 %675
      %vm701 = vcmask 64512
      %v702 = vsel %vm701, 0.0, %v630
      %v703 = vsel %vm701, 0.0, %v632
      %v704 = vsel %vm701, 0.0, %v634
      %v705 = vsel %vm701, 0.0, %v636
      %v706 = vsel %vm701, 0.0, %v638
      %v707 = vsel %vm701, 0.0, %v640
      %v708 = vsel %vm701, 0.0, %v642
      %v709 = vsel %vm701, 0.0, %v644
      %v710 = vsel %vm701, 0.0, %v646
      %v711 = vsel %vm701, 0.0, %v648
      %v712 = vsel %vm701, 0.0, %v650
      %v713 = vsel %vm701, 0.0, %v652
      %v714 = vsel %vm701, 0.0, %v654
      %v715 = vsel %vm701, 0.0, %v656
      %v716 = vsel %vm701, 0.0, %v658
      %v717 = vsel %vm701, 0.0, %v660
      %v718 = vsel %vm701, 0.0, %v662
      %v719 = vsel %vm701, 0.0, %v664
      %v720 = vsel %vm701, 0.0, %v666
      %v721 = vsel %vm701, 0.0, %v668
      %v722 = vsel %vm701, 0.0, %v670
      %v723 = vsel %vm701, 0.0, %v672
      %v724 = vsel %vm701, 0.0, %v674
      %v725 = vsel %vm701, 0.0, %v676
      %vm726 = vcmask 588800
      %v727 = vsel %vm726, %v702, 0.0
      %v728 = vsel %vm726, %v703, 0.0
      %v729 = vsel %vm726, %v704, 0.0
      %v730 = vsel %vm726, %v705, 0.0
      %v731 = vsel %vm726, %v706, 0.0
      %v732 = vsel %vm726, %v707, 0.0
      %v733 = vsel %vm726, %v708, 0.0
      %v734 = vsel %vm726, %v709, 0.0
      %v735 = vsel %vm726, %v710, 0.0
      %v736 = vsel %vm726, %v711, 0.0
      %v737 = vsel %vm726, %v712, 0.0
      %v738 = vsel %vm726, %v713, 0.0
      %v739 = vsel %vm726, %v714, 0.0
      %v740 = vsel %vm726, %v715, 0.0
      %v741 = vsel %vm726, %v716, 0.0
      %v742 = vsel %vm726, %v717, 0.0
      %v743 = vsel %vm726, %v718, 0.0
      %v744 = vsel %vm726, %v719, 0.0
      %v745 = vsel %vm726, %v720, 0.0
      %v746 = vsel %vm726, %v721, 0.0
      %v747 = vsel %vm726, %v722, 0.0
      %v748 = vsel %vm726, %v723, 0.0
      %v749 = vsel %vm726, %v724, 0.0
      %v750 = vsel %vm726, %v725, 0.0
      %v751 = vpack.c.bf16 %v728, %v727
      %v752 = vpack.c.bf16 %v730, %v729
      %v753 = vpack.c.bf16 %v732, %v731
      %v754 = vpack.c.bf16 %v734, %v733
      %v755 = vpack.c.bf16 %v736, %v735
      %v756 = vpack.c.bf16 %v738, %v737
      %v757 = vpack.c.bf16 %v740, %v739
      %v758 = vpack.c.bf16 %v742, %v741
      %v759 = vpack.c.bf16 %v744, %v743
      %v760 = vpack.c.bf16 %v746, %v745
      %v761 = vpack.c.bf16 %v748, %v747
      %v762 = vpack.c.bf16 %v750, %v749
      %v767 = vunpack.c.l.b16 %v479
      %v768 = vunpack.c.h.b16 %v479
      %v769 = vunpack.c.l.b16 %v480
      %v770 = vunpack.c.h.b16 %v480
      %v771 = vunpack.c.l.b16 %v481
      %v772 = vunpack.c.h.b16 %v481
      %v773 = vunpack.c.l.b16 %v482
      %v774 = vunpack.c.h.b16 %v482
      %v775 = vpack.c.b16 %v769, %v767
      %v776 = vpack.c.b16 %v770, %v768
      %v777 = vpack.c.b16 %v773, %v771
      %v778 = vpack.c.b16 %v774, %v772
      %793 = vrot.lane.b32.xlu0 %v751, 120
      %v794 = vpop.permute.xlu0 %793
      %795 = vrot.lane.b32.xlu0 %v752, 120
      %v796 = vpop.permute.xlu0 %795
      %797 = vrot.lane.b32.xlu0 %v753, 120
      %v798 = vpop.permute.xlu0 %797
      %799 = vrot.lane.b32.xlu0 %v754, 120
      %v800 = vpop.permute.xlu0 %799
      %801 = vrot.lane.b32.xlu0 %v755, 120
      %v802 = vpop.permute.xlu0 %801
      %803 = vrot.lane.b32.xlu0 %v756, 120
      %v804 = vpop.permute.xlu0 %803
      %805 = vrot.lane.b32.xlu0 %v757, 120
      %v806 = vpop.permute.xlu0 %805
      %807 = vrot.lane.b32.xlu0 %v758, 120
      %v808 = vpop.permute.xlu0 %807
      %809 = vrot.lane.b32.xlu0 %v759, 120
      %v810 = vpop.permute.xlu0 %809
      %811 = vrot.lane.b32.xlu0 %v760, 120
      %v812 = vpop.permute.xlu0 %811
      %813 = vrot.lane.b32.xlu0 %v761, 120
      %v814 = vpop.permute.xlu0 %813
      %815 = vrot.lane.b32.xlu0 %v762, 120
      %v816 = vpop.permute.xlu0 %815
      %vm829 = vcmask 523264
      %v831 = vsel %vm829, %v776, 0
      %v834 = vsel %vm829, %v778, 0
      %836 = vmatprep.subr.bf16.mxu0 0
      %837 = vmatpush1.bf16.msra.mxu0 %v794
      %838 = vmatprep.subr.bf16.mxu0 0
      %839 = vmatpush1.bf16.msra.mxu0 %v796
      %840 = vmatprep.subr.bf16.mxu0 0
      %841 = vmatpush1.bf16.msra.mxu0 %v798
      %842 = vmatprep.subr.bf16.mxu0 0
      %843 = vmatpush1.bf16.msra.mxu0 %v800
      %844 = vmatprep.subr.bf16.mxu0 0
      %845 = vmatpush1.bf16.msra.mxu0 %v802
      %846 = vmatprep.subr.bf16.mxu0 0
      %847 = vmatpush1.bf16.msra.mxu0 %v804
      %848 = vmatprep.subr.bf16.mxu0 0
      %849 = vmatpush1.bf16.msra.mxu0 %v806
      %850 = vmatprep.subr.bf16.mxu0 0
      %851 = vmatpush1.bf16.msra.mxu0 %v808
      %852 = vmatprep.subr.bf16.mxu0 0
      %853 = vmatpush1.bf16.msra.mxu0 %v810
      %854 = vmatprep.subr.bf16.mxu0 0
      %855 = vmatpush1.bf16.msra.mxu0 %v812
      %856 = vmatprep.subr.bf16.mxu0 0
      %857 = vmatpush1.bf16.msra.mxu0 %v814
      %858 = vmatprep.subr.bf16.mxu0 0
      %859 = vmatpush1.bf16.msra.mxu0 %v816
      %860 = vmatprep.subr.bf16.mxu0 0
      %861 = vmatpush1.bf16.msra.mxu0 0
      %862 = vmatprep.subr.bf16.mxu0 0
      %863 = vmatpush1.bf16.msra.mxu0 0
      %864 = vmatprep.subr.bf16.mxu0 0
      %865 = vmatpush1.bf16.msra.mxu0 0
      %866 = vmatprep.subr.bf16.mxu0 0
      %867 = vmatpush1.bf16.msra.mxu0 0
      %868 = vmatprep.mubr.bf16.mxu0 %v831
      %869 = vmatmul.mubr.bf16.gmra.mrb[0].mxu0 %v775
      %v870 = vpop.f32.mrb[0].mxu0
      %v871 = vadd.f32 0.0, %v870
      %v872 = vpop.f32.mrb[0].mxu0
      %v873 = vpop.f32.mrb[0].mxu0
      %v874 = vadd.f32 0.0, %v873
      %v875 = vpop.f32.mrb[0].mxu0
      %876 = vmatprep.mubr.bf16.mxu0 %v834
      %877 = vmatmul.mubr.bf16.gmra.mrb[0].mxu0 %v777
      %v878 = vpop.f32.mrb[0].mxu0
      %v879 = vadd.f32 0.0, %v878
      %v880 = vpop.f32.mrb[0].mxu0
      %v881 = vpop.f32.mrb[0].mxu0
      %v882 = vadd.f32 0.0, %v881
      %v883 = vpop.f32.mrb[0].mxu0
      %884 = vdwg.mxu0
      %v889 = vunpack.c.l.b16 %v475
      %v890 = vunpack.c.h.b16 %v475
      %v891 = vunpack.c.l.b16 %v476
      %v892 = vunpack.c.h.b16 %v476
      %v893 = vunpack.c.l.b16 %v477
      %v894 = vunpack.c.h.b16 %v477
      %v895 = vunpack.c.l.b16 %v478
      %v896 = vunpack.c.h.b16 %v478
      %v897 = vpack.c.b16 %v891, %v889
      %v898 = vpack.c.b16 %v892, %v890
      %v899 = vpack.c.b16 %v895, %v893
      %v900 = vpack.c.b16 %v896, %v894
      %v904 = vsel %vm829, %v898, 0
      %v907 = vsel %vm829, %v900, 0
      %909 = vmatprep.subr.bf16.mxu0 0
      %910 = vmatpush1.bf16.msra.mxu0 %v751
      %911 = vmatprep.subr.bf16.mxu0 0
      %912 = vmatpush1.bf16.msra.mxu0 %v752
      %913 = vmatprep.subr.bf16.mxu0 0
      %914 = vmatpush1.bf16.msra.mxu0 %v753
      %915 = vmatprep.subr.bf16.mxu0 0
      %916 = vmatpush1.bf16.msra.mxu0 %v754
      %917 = vmatprep.subr.bf16.mxu0 0
      %918 = vmatpush1.bf16.msra.mxu0 %v755
      %919 = vmatprep.subr.bf16.mxu0 0
      %920 = vmatpush1.bf16.msra.mxu0 %v756
      %921 = vmatprep.subr.bf16.mxu0 0
      %922 = vmatpush1.bf16.msra.mxu0 %v757
      %923 = vmatprep.subr.bf16.mxu0 0
      %924 = vmatpush1.bf16.msra.mxu0 %v758
      %925 = vmatprep.subr.bf16.mxu0 0
      %926 = vmatpush1.bf16.msra.mxu0 %v759
      %927 = vmatprep.subr.bf16.mxu0 0
      %928 = vmatpush1.bf16.msra.mxu0 %v760
      %929 = vmatprep.subr.bf16.mxu0 0
      %930 = vmatpush1.bf16.msra.mxu0 %v761
      %931 = vmatprep.subr.bf16.mxu0 0
      %932 = vmatpush1.bf16.msra.mxu0 %v762
      %933 = vmatprep.subr.bf16.mxu0 0
      %934 = vmatpush1.bf16.msra.mxu0 0
      %935 = vmatprep.subr.bf16.mxu0 0
      %936 = vmatpush1.bf16.msra.mxu0 0
      %937 = vmatprep.subr.bf16.mxu0 0
      %938 = vmatpush1.bf16.msra.mxu0 0
      %939 = vmatprep.subr.bf16.mxu0 0
      %940 = vmatpush1.bf16.msra.mxu0 0
      %941 = vmatprep.mubr.bf16.mxu0 %v904
      %942 = vmatmul.mubr.bf16.gmra.mrb[0].mxu0 %v897
      %v943 = vpop.f32.mrb[0].mxu0
      %v944 = vadd.f32 %v871, %v943
      %v945 = vpop.f32.mrb[0].mxu0
      %v946 = vpop.f32.mrb[0].mxu0
      %v947 = vadd.f32 %v874, %v946
      %v948 = vpop.f32.mrb[0].mxu0
      %949 = vmatprep.mubr.bf16.mxu0 %v907
      %950 = vmatmul.mubr.bf16.gmra.mrb[0].mxu0 %v899
      %v951 = vpop.f32.mrb[0].mxu0
      %v952 = vadd.f32 %v879, %v951
      %v953 = vpop.f32.mrb[0].mxu0
      %v954 = vpop.f32.mrb[0].mxu0
      %v955 = vadd.f32 %v882, %v954
      %v956 = vpop.f32.mrb[0].mxu0
      %957 = vdwg.mxu0
      %v962 = vunpack.c.l.b16 %v483
      %v963 = vunpack.c.h.b16 %v483
      %v964 = vunpack.c.l.b16 %v484
      %v965 = vunpack.c.h.b16 %v484
      %v966 = vunpack.c.l.b16 %v485
      %v967 = vunpack.c.h.b16 %v485
      %v968 = vunpack.c.l.b16 %v486
      %v969 = vunpack.c.h.b16 %v486
      %v970 = vpack.c.b16 %v964, %v962
      %v971 = vpack.c.b16 %v965, %v963
      %v972 = vpack.c.b16 %v968, %v966
      %v973 = vpack.c.b16 %v969, %v967
      %976 = vrot.lane.b32.xlu0 %v751, 112
      %v977 = vpop.permute.xlu0 %976
      %978 = vrot.lane.b32.xlu0 %v752, 112
      %v979 = vpop.permute.xlu0 %978
      %980 = vrot.lane.b32.xlu0 %v753, 112
      %v981 = vpop.permute.xlu0 %980
      %982 = vrot.lane.b32.xlu0 %v754, 112
      %v983 = vpop.permute.xlu0 %982
      %984 = vrot.lane.b32.xlu0 %v755, 112
      %v985 = vpop.permute.xlu0 %984
      %986 = vrot.lane.b32.xlu0 %v756, 112
      %v987 = vpop.permute.xlu0 %986
      %988 = vrot.lane.b32.xlu0 %v757, 112
      %v989 = vpop.permute.xlu0 %988
      %990 = vrot.lane.b32.xlu0 %v758, 112
      %v991 = vpop.permute.xlu0 %990
      %992 = vrot.lane.b32.xlu0 %v759, 112
      %v993 = vpop.permute.xlu0 %992
      %994 = vrot.lane.b32.xlu0 %v760, 112
      %v995 = vpop.permute.xlu0 %994
      %996 = vrot.lane.b32.xlu0 %v761, 112
      %v997 = vpop.permute.xlu0 %996
      %998 = vrot.lane.b32.xlu0 %v762, 112
      %v999 = vpop.permute.xlu0 %998
      %v1013 = vsel %vm829, %v971, 0
      %v1016 = vsel %vm829, %v973, 0
      %1018 = vmatprep.subr.bf16.mxu0 0
      %1019 = vmatpush1.bf16.msra.mxu0 %v977
      %1020 = vmatprep.subr.bf16.mxu0 0
      %1021 = vmatpush1.bf16.msra.mxu0 %v979
      %1022 = vmatprep.subr.bf16.mxu0 0
      %1023 = vmatpush1.bf16.msra.mxu0 %v981
      %1024 = vmatprep.subr.bf16.mxu0 0
      %1025 = vmatpush1.bf16.msra.mxu0 %v983
      %1026 = vmatprep.subr.bf16.mxu0 0
      %1027 = vmatpush1.bf16.msra.mxu0 %v985
      %1028 = vmatprep.subr.bf16.mxu0 0
      %1029 = vmatpush1.bf16.msra.mxu0 %v987
      %1030 = vmatprep.subr.bf16.mxu0 0
      %1031 = vmatpush1.bf16.msra.mxu0 %v989
      %1032 = vmatprep.subr.bf16.mxu0 0
      %1033 = vmatpush1.bf16.msra.mxu0 %v991
      %1034 = vmatprep.subr.bf16.mxu0 0
      %1035 = vmatpush1.bf16.msra.mxu0 %v993
      %1036 = vmatprep.subr.bf16.mxu0 0
      %1037 = vmatpush1.bf16.msra.mxu0 %v995
      %1038 = vmatprep.subr.bf16.mxu0 0
      %1039 = vmatpush1.bf16.msra.mxu0 %v997
      %1040 = vmatprep.subr.bf16.mxu0 0
      %1041 = vmatpush1.bf16.msra.mxu0 %v999
      %1042 = vmatprep.subr.bf16.mxu0 0
      %1043 = vmatpush1.bf16.msra.mxu0 0
      %1044 = vmatprep.subr.bf16.mxu0 0
      %1045 = vmatpush1.bf16.msra.mxu0 0
      %1046 = vmatprep.subr.bf16.mxu0 0
      %1047 = vmatpush1.bf16.msra.mxu0 0
      %1048 = vmatprep.subr.bf16.mxu0 0
      %1049 = vmatpush1.bf16.msra.mxu0 0
      %1050 = vmatprep.mubr.bf16.mxu0 %v1013
      %1051 = vmatmul.mubr.bf16.gmra.mrb[0].mxu0 %v970
      %v1052 = vpop.f32.mrb[0].mxu0
      %v1053 = vadd.f32 0.0, %v1052
      %v1054 = vpop.f32.mrb[0].mxu0
      %v1055 = vpop.f32.mrb[0].mxu0
      %v1056 = vadd.f32 0.0, %v1055
      %v1057 = vpop.f32.mrb[0].mxu0
      %1058 = vmatprep.mubr.bf16.mxu0 %v1016
      %1059 = vmatmul.mubr.bf16.gmra.mrb[0].mxu0 %v972
      %v1060 = vpop.f32.mrb[0].mxu0
      %v1061 = vadd.f32 0.0, %v1060
      %v1062 = vpop.f32.mrb[0].mxu0
      %v1063 = vpop.f32.mrb[0].mxu0
      %v1064 = vadd.f32 0.0, %v1063
      %v1065 = vpop.f32.mrb[0].mxu0
      %1066 = vdwg.mxu0
      %v1067 = vadd.f32 %v944, %v1053
      %v1068 = vadd.f32 %v947, %v1056
      %v1069 = vadd.f32 %v952, %v1061
      %v1070 = vadd.f32 %v955, %v1064
      %1079 = vrot.lane.b32.xlu0 %v437, 1
      %v1080 = vpop.permute.xlu0 %1079
      %1081 = vrot.lane.b32.xlu0 %v442, 1
      %v1082 = vpop.permute.xlu0 %1081
      %1083 = vrot.lane.b32.xlu0 %v447, 1
      %v1084 = vpop.permute.xlu0 %1083
      %1085 = vrot.lane.b32.xlu0 %v452, 1
      %v1086 = vpop.permute.xlu0 %1085
      %1087 = vrot.lane.b32.xlu0 %v457, 1
      %v1088 = vpop.permute.xlu0 %1087
      %1089 = vrot.lane.b32.xlu0 %v462, 1
      %v1090 = vpop.permute.xlu0 %1089
      %1091 = vrot.lane.b32.xlu0 %v467, 1
      %v1092 = vpop.permute.xlu0 %1091
      %1093 = vrot.lane.b32.xlu0 %v472, 1
      %v1094 = vpop.permute.xlu0 %1093
      %v1103 = vsel %vm550, 0.0, %v1080
      %v1104 = vsel %vm550, 0.0, %v1082
      %v1105 = vsel %vm550, 0.0, %v1084
      %v1106 = vsel %vm550, 0.0, %v1086
      %v1107 = vsel %vm550, 0.0, %v1088
      %v1108 = vsel %vm550, 0.0, %v1090
      %v1109 = vsel %vm550, 0.0, %v1092
      %v1110 = vsel %vm550, 0.0, %v1094
      %v1111 = vsel %vm560, 0.0, %v1103
      %v1112 = vsel %vm560, 0.0, %v1104
      %v1113 = vsel %vm560, 0.0, %v1105
      %v1114 = vsel %vm560, 0.0, %v1106
      %v1115 = vsel %vm560, 0.0, %v1107
      %v1116 = vsel %vm560, 0.0, %v1108
      %v1117 = vsel %vm560, 0.0, %v1109
      %v1118 = vsel %vm560, 0.0, %v1110
      %1119 = vrot.lane.b32.xlu0 %v437, 127
      %v1120 = vpop.permute.xlu0 %1119
      %1121 = vrot.lane.b32.xlu0 %v442, 127
      %v1122 = vpop.permute.xlu0 %1121
      %1123 = vrot.lane.b32.xlu0 %v447, 127
      %v1124 = vpop.permute.xlu0 %1123
      %1125 = vrot.lane.b32.xlu0 %v452, 127
      %v1126 = vpop.permute.xlu0 %1125
      %1127 = vrot.lane.b32.xlu0 %v457, 127
      %v1128 = vpop.permute.xlu0 %1127
      %1129 = vrot.lane.b32.xlu0 %v462, 127
      %v1130 = vpop.permute.xlu0 %1129
      %1131 = vrot.lane.b32.xlu0 %v467, 127
      %v1132 = vpop.permute.xlu0 %1131
      %1133 = vrot.lane.b32.xlu0 %v472, 127
      %v1134 = vpop.permute.xlu0 %1133
      %v1143 = vsel %vm594, %v1120, 0.0
      %v1144 = vsel %vm594, %v1122, 0.0
      %v1145 = vsel %vm594, %v1124, 0.0
      %v1146 = vsel %vm594, %v1126, 0.0
      %v1147 = vsel %vm594, %v1128, 0.0
      %v1148 = vsel %vm594, %v1130, 0.0
      %v1149 = vsel %vm594, %v1132, 0.0
      %v1150 = vsel %vm594, %v1134, 0.0
      %v1151 = vsel %vm604, 0.0, %v1143
      %v1152 = vsel %vm604, 0.0, %v1144
      %v1153 = vsel %vm604, 0.0, %v1145
      %v1154 = vsel %vm604, 0.0, %v1146
      %v1155 = vsel %vm604, 0.0, %v1147
      %v1156 = vsel %vm604, 0.0, %v1148
      %v1157 = vsel %vm604, 0.0, %v1149
      %v1158 = vsel %vm604, 0.0, %v1150
      %1175 = vrot.lane.b32.xlu0 %v1111, 8
      %v1176 = vpop.permute.xlu0 %1175
      %1177 = vrot.lane.b32.xlu0 %v1112, 8
      %v1178 = vpop.permute.xlu0 %1177
      %1179 = vrot.lane.b32.xlu0 %v1113, 8
      %v1180 = vpop.permute.xlu0 %1179
      %1181 = vrot.lane.b32.xlu0 %v1114, 8
      %v1182 = vpop.permute.xlu0 %1181
      %1183 = vrot.lane.b32.xlu0 %v1115, 8
      %v1184 = vpop.permute.xlu0 %1183
      %1185 = vrot.lane.b32.xlu0 %v1116, 8
      %v1186 = vpop.permute.xlu0 %1185
      %1187 = vrot.lane.b32.xlu0 %v1117, 8
      %v1188 = vpop.permute.xlu0 %1187
      %1189 = vrot.lane.b32.xlu0 %v1118, 8
      %v1190 = vpop.permute.xlu0 %1189
      %1191 = vrot.lane.b32.xlu0 %v437, 8
      %v1192 = vpop.permute.xlu0 %1191
      %1193 = vrot.lane.b32.xlu0 %v442, 8
      %v1194 = vpop.permute.xlu0 %1193
      %1195 = vrot.lane.b32.xlu0 %v447, 8
      %v1196 = vpop.permute.xlu0 %1195
      %1197 = vrot.lane.b32.xlu0 %v452, 8
      %v1198 = vpop.permute.xlu0 %1197
      %1199 = vrot.lane.b32.xlu0 %v457, 8
      %v1200 = vpop.permute.xlu0 %1199
      %1201 = vrot.lane.b32.xlu0 %v462, 8
      %v1202 = vpop.permute.xlu0 %1201
      %1203 = vrot.lane.b32.xlu0 %v467, 8
      %v1204 = vpop.permute.xlu0 %1203
      %1205 = vrot.lane.b32.xlu0 %v472, 8
      %v1206 = vpop.permute.xlu0 %1205
      %1207 = vrot.lane.b32.xlu0 %v1151, 8
      %v1208 = vpop.permute.xlu0 %1207
      %1209 = vrot.lane.b32.xlu0 %v1152, 8
      %v1210 = vpop.permute.xlu0 %1209
      %1211 = vrot.lane.b32.xlu0 %v1153, 8
      %v1212 = vpop.permute.xlu0 %1211
      %1213 = vrot.lane.b32.xlu0 %v1154, 8
      %v1214 = vpop.permute.xlu0 %1213
      %1215 = vrot.lane.b32.xlu0 %v1155, 8
      %v1216 = vpop.permute.xlu0 %1215
      %1217 = vrot.lane.b32.xlu0 %v1156, 8
      %v1218 = vpop.permute.xlu0 %1217
      %1219 = vrot.lane.b32.xlu0 %v1157, 8
      %v1220 = vpop.permute.xlu0 %1219
      %1221 = vrot.lane.b32.xlu0 %v1158, 8
      %v1222 = vpop.permute.xlu0 %1221
      %v1247 = vsel %vm701, 0.0, %v1176
      %v1248 = vsel %vm701, 0.0, %v1178
      %v1249 = vsel %vm701, 0.0, %v1180
      %v1250 = vsel %vm701, 0.0, %v1182
      %v1251 = vsel %vm701, 0.0, %v1184
      %v1252 = vsel %vm701, 0.0, %v1186
      %v1253 = vsel %vm701, 0.0, %v1188
      %v1254 = vsel %vm701, 0.0, %v1190
      %v1255 = vsel %vm701, 0.0, %v1192
      %v1256 = vsel %vm701, 0.0, %v1194
      %v1257 = vsel %vm701, 0.0, %v1196
      %v1258 = vsel %vm701, 0.0, %v1198
      %v1259 = vsel %vm701, 0.0, %v1200
      %v1260 = vsel %vm701, 0.0, %v1202
      %v1261 = vsel %vm701, 0.0, %v1204
      %v1262 = vsel %vm701, 0.0, %v1206
      %v1263 = vsel %vm701, 0.0, %v1208
      %v1264 = vsel %vm701, 0.0, %v1210
      %v1265 = vsel %vm701, 0.0, %v1212
      %v1266 = vsel %vm701, 0.0, %v1214
      %v1267 = vsel %vm701, 0.0, %v1216
      %v1268 = vsel %vm701, 0.0, %v1218
      %v1269 = vsel %vm701, 0.0, %v1220
      %v1270 = vsel %vm701, 0.0, %v1222
      %v1271 = vsel %vm726, %v1247, 0.0
      %v1272 = vsel %vm726, %v1248, 0.0
      %v1273 = vsel %vm726, %v1249, 0.0
      %v1274 = vsel %vm726, %v1250, 0.0
      %v1275 = vsel %vm726, %v1251, 0.0
      %v1276 = vsel %vm726, %v1252, 0.0
      %v1277 = vsel %vm726, %v1253, 0.0
      %v1278 = vsel %vm726, %v1254, 0.0
      %v1279 = vsel %vm726, %v1255, 0.0
      %v1280 = vsel %vm726, %v1256, 0.0
      %v1281 = vsel %vm726, %v1257, 0.0
      %v1282 = vsel %vm726, %v1258, 0.0
      %v1283 = vsel %vm726, %v1259, 0.0
      %v1284 = vsel %vm726, %v1260, 0.0
      %v1285 = vsel %vm726, %v1261, 0.0
      %v1286 = vsel %vm726, %v1262, 0.0
      %v1287 = vsel %vm726, %v1263, 0.0
      %v1288 = vsel %vm726, %v1264, 0.0
      %v1289 = vsel %vm726, %v1265, 0.0
      %v1290 = vsel %vm726, %v1266, 0.0
      %v1291 = vsel %vm726, %v1267, 0.0
      %v1292 = vsel %vm726, %v1268, 0.0
      %v1293 = vsel %vm726, %v1269, 0.0
      %v1294 = vsel %vm726, %v1270, 0.0
      %v1295 = vpack.c.bf16 %v1272, %v1271
      %v1296 = vpack.c.bf16 %v1274, %v1273
      %v1297 = vpack.c.bf16 %v1276, %v1275
      %v1298 = vpack.c.bf16 %v1278, %v1277
      %v1299 = vpack.c.bf16 %v1280, %v1279
      %v1300 = vpack.c.bf16 %v1282, %v1281
      %v1301 = vpack.c.bf16 %v1284, %v1283
      %v1302 = vpack.c.bf16 %v1286, %v1285
      %v1303 = vpack.c.bf16 %v1288, %v1287
      %v1304 = vpack.c.bf16 %v1290, %v1289
      %v1305 = vpack.c.bf16 %v1292, %v1291
      %v1306 = vpack.c.bf16 %v1294, %v1293
      %v1311 = vunpack.c.l.b16 %v487
      %v1312 = vunpack.c.h.b16 %v487
      %v1313 = vunpack.c.l.b16 %v488
      %v1314 = vunpack.c.h.b16 %v488
      %v1315 = vunpack.c.l.b16 %v489
      %v1316 = vunpack.c.h.b16 %v489
      %v1317 = vunpack.c.l.b16 %v490
      %v1318 = vunpack.c.h.b16 %v490
      %v1319 = vpack.c.b16 %v1313, %v1311
      %v1320 = vpack.c.b16 %v1314, %v1312
      %v1321 = vpack.c.b16 %v1317, %v1315
      %v1322 = vpack.c.b16 %v1318, %v1316
      %v1326 = vsel %vm829, %v1320, 0
      %v1329 = vsel %vm829, %v1322, 0
      %1331 = vmatprep.subr.bf16.mxu0 0
      %1332 = vmatpush1.bf16.msra.mxu0 %v1295
      %1333 = vmatprep.subr.bf16.mxu0 0
      %1334 = vmatpush1.bf16.msra.mxu0 %v1296
      %1335 = vmatprep.subr.bf16.mxu0 0
      %1336 = vmatpush1.bf16.msra.mxu0 %v1297
      %1337 = vmatprep.subr.bf16.mxu0 0
      %1338 = vmatpush1.bf16.msra.mxu0 %v1298
      %1339 = vmatprep.subr.bf16.mxu0 0
      %1340 = vmatpush1.bf16.msra.mxu0 %v1299
      %1341 = vmatprep.subr.bf16.mxu0 0
      %1342 = vmatpush1.bf16.msra.mxu0 %v1300
      %1343 = vmatprep.subr.bf16.mxu0 0
      %1344 = vmatpush1.bf16.msra.mxu0 %v1301
      %1345 = vmatprep.subr.bf16.mxu0 0
      %1346 = vmatpush1.bf16.msra.mxu0 %v1302
      %1347 = vmatprep.subr.bf16.mxu0 0
      %1348 = vmatpush1.bf16.msra.mxu0 %v1303
      %1349 = vmatprep.subr.bf16.mxu0 0
      %1350 = vmatpush1.bf16.msra.mxu0 %v1304
      %1351 = vmatprep.subr.bf16.mxu0 0
      %1352 = vmatpush1.bf16.msra.mxu0 %v1305
      %1353 = vmatprep.subr.bf16.mxu0 0
      %1354 = vmatpush1.bf16.msra.mxu0 %v1306
      %1355 = vmatprep.subr.bf16.mxu0 0
      %1356 = vmatpush1.bf16.msra.mxu0 0
      %1357 = vmatprep.subr.bf16.mxu0 0
      %1358 = vmatpush1.bf16.msra.mxu0 0
      %1359 = vmatprep.subr.bf16.mxu0 0
      %1360 = vmatpush1.bf16.msra.mxu0 0
      %1361 = vmatprep.subr.bf16.mxu0 0
      %1362 = vmatpush1.bf16.msra.mxu0 0
      %1363 = vmatprep.mubr.bf16.mxu0 %v1326
      %1364 = vmatmul.mubr.bf16.gmra.mrb[0].mxu0 %v1319
      %v1365 = vpop.f32.mrb[0].mxu0
      %v1366 = vadd.f32 0.0, %v1365
      %v1367 = vpop.f32.mrb[0].mxu0
      %v1368 = vpop.f32.mrb[0].mxu0
      %v1369 = vadd.f32 0.0, %v1368
      %v1370 = vpop.f32.mrb[0].mxu0
      %1371 = vmatprep.mubr.bf16.mxu0 %v1329
      %1372 = vmatmul.mubr.bf16.gmra.mrb[0].mxu0 %v1321
      %v1373 = vpop.f32.mrb[0].mxu0
      %v1374 = vadd.f32 0.0, %v1373
      %v1375 = vpop.f32.mrb[0].mxu0
      %v1376 = vpop.f32.mrb[0].mxu0
      %v1377 = vadd.f32 0.0, %v1376
      %v1378 = vpop.f32.mrb[0].mxu0
      %1379 = vdwg.mxu0
      %v1380 = vadd.f32 %v1067, %v1366
      %v1381 = vadd.f32 %v1068, %v1369
      %v1382 = vadd.f32 %v1069, %v1374
      %v1383 = vadd.f32 %v1070, %v1377
      %v1388 = vunpack.c.l.b16 %v491
      %v1389 = vunpack.c.h.b16 %v491
      %v1390 = vunpack.c.l.b16 %v492
      %v1391 = vunpack.c.h.b16 %v492
      %v1392 = vunpack.c.l.b16 %v493
      %v1393 = vunpack.c.h.b16 %v493
      %v1394 = vunpack.c.l.b16 %v494
      %v1395 = vunpack.c.h.b16 %v494
      %v1396 = vpack.c.b16 %v1390, %v1388
      %v1397 = vpack.c.b16 %v1391, %v1389
      %v1398 = vpack.c.b16 %v1394, %v1392
      %v1399 = vpack.c.b16 %v1395, %v1393
      %1414 = vrot.lane.b32.xlu0 %v1295, 120
      %v1415 = vpop.permute.xlu0 %1414
      %1416 = vrot.lane.b32.xlu0 %v1296, 120
      %v1417 = vpop.permute.xlu0 %1416
      %1418 = vrot.lane.b32.xlu0 %v1297, 120
      %v1419 = vpop.permute.xlu0 %1418
      %1420 = vrot.lane.b32.xlu0 %v1298, 120
      %v1421 = vpop.permute.xlu0 %1420
      %1422 = vrot.lane.b32.xlu0 %v1299, 120
      %v1423 = vpop.permute.xlu0 %1422
      %1424 = vrot.lane.b32.xlu0 %v1300, 120
      %v1425 = vpop.permute.xlu0 %1424
      %1426 = vrot.lane.b32.xlu0 %v1301, 120
      %v1427 = vpop.permute.xlu0 %1426
      %1428 = vrot.lane.b32.xlu0 %v1302, 120
      %v1429 = vpop.permute.xlu0 %1428
      %1430 = vrot.lane.b32.xlu0 %v1303, 120
      %v1431 = vpop.permute.xlu0 %1430
      %1432 = vrot.lane.b32.xlu0 %v1304, 120
      %v1433 = vpop.permute.xlu0 %1432
      %1434 = vrot.lane.b32.xlu0 %v1305, 120
      %v1435 = vpop.permute.xlu0 %1434
      %1436 = vrot.lane.b32.xlu0 %v1306, 120
      %v1437 = vpop.permute.xlu0 %1436
      %v1451 = vsel %vm829, %v1397, 0
      %v1454 = vsel %vm829, %v1399, 0
      %1456 = vmatprep.subr.bf16.mxu0 0
      %1457 = vmatpush1.bf16.msra.mxu0 %v1415
      %1458 = vmatprep.subr.bf16.mxu0 0
      %1459 = vmatpush1.bf16.msra.mxu0 %v1417
      %1460 = vmatprep.subr.bf16.mxu0 0
      %1461 = vmatpush1.bf16.msra.mxu0 %v1419
      %1462 = vmatprep.subr.bf16.mxu0 0
      %1463 = vmatpush1.bf16.msra.mxu0 %v1421
      %1464 = vmatprep.subr.bf16.mxu0 0
      %1465 = vmatpush1.bf16.msra.mxu0 %v1423
      %1466 = vmatprep.subr.bf16.mxu0 0
      %1467 = vmatpush1.bf16.msra.mxu0 %v1425
      %1468 = vmatprep.subr.bf16.mxu0 0
      %1469 = vmatpush1.bf16.msra.mxu0 %v1427
      %1470 = vmatprep.subr.bf16.mxu0 0
      %1471 = vmatpush1.bf16.msra.mxu0 %v1429
      %1472 = vmatprep.subr.bf16.mxu0 0
      %1473 = vmatpush1.bf16.msra.mxu0 %v1431
      %1474 = vmatprep.subr.bf16.mxu0 0
      %1475 = vmatpush1.bf16.msra.mxu0 %v1433
      %1476 = vmatprep.subr.bf16.mxu0 0
      %1477 = vmatpush1.bf16.msra.mxu0 %v1435
      %1478 = vmatprep.subr.bf16.mxu0 0
      %1479 = vmatpush1.bf16.msra.mxu0 %v1437
      %1480 = vmatprep.subr.bf16.mxu0 0
      %1481 = vmatpush1.bf16.msra.mxu0 0
      %1482 = vmatprep.subr.bf16.mxu0 0
      %1483 = vmatpush1.bf16.msra.mxu0 0
      %1484 = vmatprep.subr.bf16.mxu0 0
      %1485 = vmatpush1.bf16.msra.mxu0 0
      %1486 = vmatprep.subr.bf16.mxu0 0
      %1487 = vmatpush1.bf16.msra.mxu0 0
      %1488 = vmatprep.mubr.bf16.mxu0 %v1451
      %1489 = vmatmul.mubr.bf16.gmra.mrb[0].mxu0 %v1396
      %v1490 = vpop.f32.mrb[0].mxu0
      %v1491 = vadd.f32 0.0, %v1490
      %v1492 = vpop.f32.mrb[0].mxu0
      %v1493 = vpop.f32.mrb[0].mxu0
      %v1494 = vadd.f32 0.0, %v1493
      %v1495 = vpop.f32.mrb[0].mxu0
      %1496 = vmatprep.mubr.bf16.mxu0 %v1454
      %1497 = vmatmul.mubr.bf16.gmra.mrb[0].mxu0 %v1398
      %v1498 = vpop.f32.mrb[0].mxu0
      %v1499 = vadd.f32 0.0, %v1498
      %v1500 = vpop.f32.mrb[0].mxu0
      %v1501 = vpop.f32.mrb[0].mxu0
      %v1502 = vadd.f32 0.0, %v1501
      %v1503 = vpop.f32.mrb[0].mxu0
      %1504 = vdwg.mxu0
      %v1505 = vadd.f32 %v1380, %v1491
      %v1506 = vadd.f32 %v1381, %v1494
      %v1507 = vadd.f32 %v1382, %v1499
      %v1508 = vadd.f32 %v1383, %v1502
      %v1513 = vunpack.c.l.b16 %v495
      %v1514 = vunpack.c.h.b16 %v495
      %v1515 = vunpack.c.l.b16 %v496
      %v1516 = vunpack.c.h.b16 %v496
      %v1517 = vunpack.c.l.b16 %v497
      %v1518 = vunpack.c.h.b16 %v497
      %v1519 = vunpack.c.l.b16 %v498
      %v1520 = vunpack.c.h.b16 %v498
      %v1521 = vpack.c.b16 %v1515, %v1513
      %v1522 = vpack.c.b16 %v1516, %v1514
      %v1523 = vpack.c.b16 %v1519, %v1517
      %v1524 = vpack.c.b16 %v1520, %v1518
      %1527 = vrot.lane.b32.xlu0 %v1295, 112
      %v1528 = vpop.permute.xlu0 %1527
      %1529 = vrot.lane.b32.xlu0 %v1296, 112
      %v1530 = vpop.permute.xlu0 %1529
      %1531 = vrot.lane.b32.xlu0 %v1297, 112
      %v1532 = vpop.permute.xlu0 %1531
      %1533 = vrot.lane.b32.xlu0 %v1298, 112
      %v1534 = vpop.permute.xlu0 %1533
      %1535 = vrot.lane.b32.xlu0 %v1299, 112
      %v1536 = vpop.permute.xlu0 %1535
      %1537 = vrot.lane.b32.xlu0 %v1300, 112
      %v1538 = vpop.permute.xlu0 %1537
      %1539 = vrot.lane.b32.xlu0 %v1301, 112
      %v1540 = vpop.permute.xlu0 %1539
      %1541 = vrot.lane.b32.xlu0 %v1302, 112
      %v1542 = vpop.permute.xlu0 %1541
      %1543 = vrot.lane.b32.xlu0 %v1303, 112
      %v1544 = vpop.permute.xlu0 %1543
      %1545 = vrot.lane.b32.xlu0 %v1304, 112
      %v1546 = vpop.permute.xlu0 %1545
      %1547 = vrot.lane.b32.xlu0 %v1305, 112
      %v1548 = vpop.permute.xlu0 %1547
      %1549 = vrot.lane.b32.xlu0 %v1306, 112
      %v1550 = vpop.permute.xlu0 %1549
      %v1564 = vsel %vm829, %v1522, 0
      %v1567 = vsel %vm829, %v1524, 0
      %1569 = vmatprep.subr.bf16.mxu0 0
      %1570 = vmatpush1.bf16.msra.mxu0 %v1528
      %1571 = vmatprep.subr.bf16.mxu0 0
      %1572 = vmatpush1.bf16.msra.mxu0 %v1530
      %1573 = vmatprep.subr.bf16.mxu0 0
      %1574 = vmatpush1.bf16.msra.mxu0 %v1532
      %1575 = vmatprep.subr.bf16.mxu0 0
      %1576 = vmatpush1.bf16.msra.mxu0 %v1534
      %1577 = vmatprep.subr.bf16.mxu0 0
      %1578 = vmatpush1.bf16.msra.mxu0 %v1536
      %1579 = vmatprep.subr.bf16.mxu0 0
      %1580 = vmatpush1.bf16.msra.mxu0 %v1538
      %1581 = vmatprep.subr.bf16.mxu0 0
      %1582 = vmatpush1.bf16.msra.mxu0 %v1540
      %1583 = vmatprep.subr.bf16.mxu0 0
      %1584 = vmatpush1.bf16.msra.mxu0 %v1542
      %1585 = vmatprep.subr.bf16.mxu0 0
      %1586 = vmatpush1.bf16.msra.mxu0 %v1544
      %1587 = vmatprep.subr.bf16.mxu0 0
      %1588 = vmatpush1.bf16.msra.mxu0 %v1546
      %1589 = vmatprep.subr.bf16.mxu0 0
      %1590 = vmatpush1.bf16.msra.mxu0 %v1548
      %1591 = vmatprep.subr.bf16.mxu0 0
      %1592 = vmatpush1.bf16.msra.mxu0 %v1550
      %1593 = vmatprep.subr.bf16.mxu0 0
      %1594 = vmatpush1.bf16.msra.mxu0 0
      %1595 = vmatprep.subr.bf16.mxu0 0
      %1596 = vmatpush1.bf16.msra.mxu0 0
      %1597 = vmatprep.subr.bf16.mxu0 0
      %1598 = vmatpush1.bf16.msra.mxu0 0
      %1599 = vmatprep.subr.bf16.mxu0 0
      %1600 = vmatpush1.bf16.msra.mxu0 0
      %1601 = vmatprep.mubr.bf16.mxu0 %v1564
      %1602 = vmatmul.mubr.bf16.gmra.mrb[0].mxu0 %v1521
      %v1603 = vpop.f32.mrb[0].mxu0
      %v1604 = vadd.f32 0.0, %v1603
      %v1605 = vpop.f32.mrb[0].mxu0
      %v1606 = vpop.f32.mrb[0].mxu0
      %v1607 = vadd.f32 0.0, %v1606
      %v1608 = vpop.f32.mrb[0].mxu0
      %1609 = vmatprep.mubr.bf16.mxu0 %v1567
      %1610 = vmatmul.mubr.bf16.gmra.mrb[0].mxu0 %v1523
      %v1611 = vpop.f32.mrb[0].mxu0
      %v1612 = vadd.f32 0.0, %v1611
      %v1613 = vpop.f32.mrb[0].mxu0
      %v1614 = vpop.f32.mrb[0].mxu0
      %v1615 = vadd.f32 0.0, %v1614
      %v1616 = vpop.f32.mrb[0].mxu0
      %1617 = vdwg.mxu0
      %v1618 = vadd.f32 %v1505, %v1604
      %v1619 = vadd.f32 %v1506, %v1607
      %v1620 = vadd.f32 %v1507, %v1612
      %v1621 = vadd.f32 %v1508, %v1615
      %1623 = vset.pattern.permute.xlu0 0
      %1624 = vperm.xlu0 %1623, %v499
      %v1625 = vpop.permute.xlu0 %1624
      %1628 = vset.pattern.permute.xlu0 0
      %1629 = vperm.xlu0 %1628, %v500
      %v1630 = vpop.permute.xlu0 %1629
      %1633 = vset.pattern.permute.xlu0 0
      %1634 = vperm.xlu0 %1633, %v501
      %v1635 = vpop.permute.xlu0 %1634
      %1638 = vset.pattern.permute.xlu0 0
      %1639 = vperm.xlu0 %1638, %v502
      %v1640 = vpop.permute.xlu0 %1639
      %v1642 = vadd.f32 %v1618, %v1625
      %v1643 = vadd.f32 %v1619, %v1630
      %v1644 = vadd.f32 %v1620, %v1635
      %v1645 = vadd.f32 %v1621, %v1640
      %v1646 = vmax.f32 %v1642, 0.0
      %v1647 = vmax.f32 %v1643, 0.0
      %v1648 = vmax.f32 %v1644, 0.0
      %v1649 = vmax.f32 %v1645, 0.0
      %v1650 = vld [vmem:[%s5] sm:$0xf]
      %v1651 = vld [vmem:[%s5 + $0x4] sm:$0xf]
      %v1652 = vld [vmem:[%s5 + $0x8] sm:$0xf]
      %v1653 = vld [vmem:[%s5 + $0xc] sm:$0xf]
      %v1654 = vld [vmem:[%s5 + $0x10] sm:$0xf]
      %v1655 = vld [vmem:[%s5 + $0x14] sm:$0xf]
      %v1656 = vld [vmem:[%s5 + $0x18] sm:$0xf]
      %v1657 = vld [vmem:[%s5 + $0x1c] sm:$0xf]
      %v1658 = vld [vmem:[%s5 + $0x20] sm:$0xf]
      %v1659 = vld [vmem:[%s5 + $0x24] sm:$0xf]
      %v1660 = vld [vmem:[%s5 + $0x28] sm:$0xf]
      %v1661 = vld [vmem:[%s5 + $0x2c] sm:$0xf]
      %v1662 = vld [vmem:[%s6] sm:$0xff]
      %v1663 = vld [vmem:[%s6 + $0x8] sm:$0xff]
      %v1664 = vld [vmem:[%s6 + $0x10] sm:$0xff]
      %v1665 = vld [vmem:[%s6 + $0x18] sm:$0xff]
      %1670 = vrot.lane.b32.xlu0 %v1646, 1
      %v1671 = vpop.permute.xlu0 %1670
      %1672 = vrot.lane.b32.xlu0 %v1647, 1
      %v1673 = vpop.permute.xlu0 %1672
      %1674 = vrot.lane.b32.xlu0 %v1648, 1
      %v1675 = vpop.permute.xlu0 %1674
      %1676 = vrot.lane.b32.xlu0 %v1649, 1
      %v1677 = vpop.permute.xlu0 %1676
      %v1682 = vsel %vm550, 0.0, %v1671
      %v1683 = vsel %vm550, 0.0, %v1673
      %v1684 = vsel %vm550, 0.0, %v1675
      %v1685 = vsel %vm550, 0.0, %v1677
      %v1686 = vsel %vm560, 0.0, %v1682
      %v1687 = vsel %vm560, 0.0, %v1683
      %v1688 = vsel %vm560, 0.0, %v1684
      %v1689 = vsel %vm560, 0.0, %v1685
      %1690 = vrot.lane.b32.xlu0 %v1646, 127
      %v1691 = vpop.permute.xlu0 %1690
      %1692 = vrot.lane.b32.xlu0 %v1647, 127
      %v1693 = vpop.permute.xlu0 %1692
      %1694 = vrot.lane.b32.xlu0 %v1648, 127
      %v1695 = vpop.permute.xlu0 %1694
      %1696 = vrot.lane.b32.xlu0 %v1649, 127
      %v1697 = vpop.permute.xlu0 %1696
      %v1702 = vsel %vm594, %v1691, 0.0
      %v1703 = vsel %vm594, %v1693, 0.0
      %v1704 = vsel %vm594, %v1695, 0.0
      %v1705 = vsel %vm594, %v1697, 0.0
      %v1706 = vsel %vm604, 0.0, %v1702
      %v1707 = vsel %vm604, 0.0, %v1703
      %v1708 = vsel %vm604, 0.0, %v1704
      %v1709 = vsel %vm604, 0.0, %v1705
      %1718 = vrot.lane.b32.xlu0 %v1686, 8
      %v1719 = vpop.permute.xlu0 %1718
      %1720 = vrot.lane.b32.xlu0 %v1687, 8
      %v1721 = vpop.permute.xlu0 %1720
      %1722 = vrot.lane.b32.xlu0 %v1688, 8
      %v1723 = vpop.permute.xlu0 %1722
      %1724 = vrot.lane.b32.xlu0 %v1689, 8
      %v1725 = vpop.permute.xlu0 %1724
      %1726 = vrot.lane.b32.xlu0 %v1646, 8
      %v1727 = vpop.permute.xlu0 %1726
      %1728 = vrot.lane.b32.xlu0 %v1647, 8
      %v1729 = vpop.permute.xlu0 %1728
      %1730 = vrot.lane.b32.xlu0 %v1648, 8
      %v1731 = vpop.permute.xlu0 %1730
      %1732 = vrot.lane.b32.xlu0 %v1649, 8
      %v1733 = vpop.permute.xlu0 %1732
      %1734 = vrot.lane.b32.xlu0 %v1706, 8
      %v1735 = vpop.permute.xlu0 %1734
      %1736 = vrot.lane.b32.xlu0 %v1707, 8
      %v1737 = vpop.permute.xlu0 %1736
      %1738 = vrot.lane.b32.xlu0 %v1708, 8
      %v1739 = vpop.permute.xlu0 %1738
      %1740 = vrot.lane.b32.xlu0 %v1709, 8
      %v1741 = vpop.permute.xlu0 %1740
      %v1754 = vsel %vm701, 0.0, %v1719
      %v1755 = vsel %vm701, 0.0, %v1721
      %v1756 = vsel %vm701, 0.0, %v1723
      %v1757 = vsel %vm701, 0.0, %v1725
      %v1758 = vsel %vm701, 0.0, %v1727
      %v1759 = vsel %vm701, 0.0, %v1729
      %v1760 = vsel %vm701, 0.0, %v1731
      %v1761 = vsel %vm701, 0.0, %v1733
      %v1762 = vsel %vm701, 0.0, %v1735
      %v1763 = vsel %vm701, 0.0, %v1737
      %v1764 = vsel %vm701, 0.0, %v1739
      %v1765 = vsel %vm701, 0.0, %v1741
      %v1766 = vsel %vm726, %v1754, 0.0
      %v1767 = vsel %vm726, %v1755, 0.0
      %v1768 = vsel %vm726, %v1756, 0.0
      %v1769 = vsel %vm726, %v1757, 0.0
      %v1770 = vsel %vm726, %v1758, 0.0
      %v1771 = vsel %vm726, %v1759, 0.0
      %v1772 = vsel %vm726, %v1760, 0.0
      %v1773 = vsel %vm726, %v1761, 0.0
      %v1774 = vsel %vm726, %v1762, 0.0
      %v1775 = vsel %vm726, %v1763, 0.0
      %v1776 = vsel %vm726, %v1764, 0.0
      %v1777 = vsel %vm726, %v1765, 0.0
      %v1778 = vpack.c.bf16 %v1767, %v1766
      %v1779 = vpack.c.bf16 %v1769, %v1768
      %v1780 = vpack.c.bf16 %v1771, %v1770
      %v1781 = vpack.c.bf16 %v1773, %v1772
      %v1782 = vpack.c.bf16 %v1775, %v1774
      %v1783 = vpack.c.bf16 %v1777, %v1776
      %v1788 = vunpack.c.l.b16 %v1654
      %v1789 = vunpack.c.l.b16 %v1655
      %v1790 = vunpack.c.l.b16 %v1656
      %v1791 = vunpack.c.l.b16 %v1657
      %v1792 = vpack.c.b16 %v1789, %v1788
      %v1793 = vpack.c.b16 %v1791, %v1790
      %1800 = vrot.lane.b32.xlu0 %v1778, 120
      %v1801 = vpop.permute.xlu0 %1800
      %1802 = vrot.lane.b32.xlu0 %v1779, 120
      %v1803 = vpop.permute.xlu0 %1802
      %1804 = vrot.lane.b32.xlu0 %v1780, 120
      %v1805 = vpop.permute.xlu0 %1804
      %1806 = vrot.lane.b32.xlu0 %v1781, 120
      %v1807 = vpop.permute.xlu0 %1806
      %1808 = vrot.lane.b32.xlu0 %v1782, 120
      %v1809 = vpop.permute.xlu0 %1808
      %1810 = vrot.lane.b32.xlu0 %v1783, 120
      %v1811 = vpop.permute.xlu0 %1810
      %vm1818 = vcmask 785408
      %v1820 = vsel %vm1818, %v1792, 0
      %v1823 = vsel %vm1818, %v1793, 0
      %1825 = vmatprep.subr.bf16.mxu0 0
      %1826 = vmatpush1.bf16.msra.mxu0 %v1801
      %1827 = vmatprep.subr.bf16.mxu0 0
      %1828 = vmatpush1.bf16.msra.mxu0 %v1803
      %1829 = vmatprep.subr.bf16.mxu0 0
      %1830 = vmatpush1.bf16.msra.mxu0 %v1805
      %1831 = vmatprep.subr.bf16.mxu0 0
      %1832 = vmatpush1.bf16.msra.mxu0 %v1807
      %1833 = vmatprep.subr.bf16.mxu0 0
      %1834 = vmatpush1.bf16.msra.mxu0 %v1809
      %1835 = vmatprep.subr.bf16.mxu0 0
      %1836 = vmatpush1.bf16.msra.mxu0 %v1811
      %1837 = vmatprep.subr.bf16.mxu0 0
      %1838 = vmatpush1.bf16.msra.mxu0 0
      %1839 = vmatprep.subr.bf16.mxu0 0
      %1840 = vmatpush1.bf16.msra.mxu0 0
      %1841 = vmatprep.subr.bf16.mxu0 0
      %1842 = vmatpush1.bf16.msra.mxu0 0
      %1843 = vmatprep.subr.bf16.mxu0 0
      %1844 = vmatpush1.bf16.msra.mxu0 0
      %1845 = vmatprep.subr.bf16.mxu0 0
      %1846 = vmatpush1.bf16.msra.mxu0 0
      %1847 = vmatprep.subr.bf16.mxu0 0
      %1848 = vmatpush1.bf16.msra.mxu0 0
      %1849 = vmatprep.subr.bf16.mxu0 0
      %1850 = vmatpush1.bf16.msra.mxu0 0
      %1851 = vmatprep.subr.bf16.mxu0 0
      %1852 = vmatpush1.bf16.msra.mxu0 0
      %1853 = vmatprep.subr.bf16.mxu0 0
      %1854 = vmatpush1.bf16.msra.mxu0 0
      %1855 = vmatprep.subr.bf16.mxu0 0
      %1856 = vmatpush1.bf16.msra.mxu0 0
      %1857 = vmatprep.mubr.bf16.mxu0 0
      %1858 = vmatmul.mubr.bf16.gmra.mrb[0].mxu0 %v1820
      %v1859 = vpop.f32.mrb[0].mxu0
      %v1860 = vadd.f32 0.0, %v1859
      %v1861 = vpop.f32.mrb[0].mxu0
      %v1862 = vpop.f32.mrb[0].mxu0
      %v1863 = vadd.f32 0.0, %v1862
      %v1864 = vpop.f32.mrb[0].mxu0
      %1865 = vmatprep.mubr.bf16.mxu0 0
      %1866 = vmatmul.mubr.bf16.gmra.mrb[0].mxu0 %v1823
      %v1867 = vpop.f32.mrb[0].mxu0
      %v1868 = vadd.f32 0.0, %v1867
      %v1869 = vpop.f32.mrb[0].mxu0
      %v1870 = vpop.f32.mrb[0].mxu0
      %v1871 = vadd.f32 0.0, %v1870
      %v1872 = vpop.f32.mrb[0].mxu0
      %1873 = vdwg.mxu0
      %v1878 = vunpack.c.l.b16 %v1650
      %v1879 = vunpack.c.l.b16 %v1651
      %v1880 = vunpack.c.l.b16 %v1652
      %v1881 = vunpack.c.l.b16 %v1653
      %v1882 = vpack.c.b16 %v1879, %v1878
      %v1883 = vpack.c.b16 %v1881, %v1880
      %v1885 = vsel %vm1818, %v1882, 0
      %v1888 = vsel %vm1818, %v1883, 0
      %1890 = vmatprep.subr.bf16.mxu0 0
      %1891 = vmatpush1.bf16.msra.mxu0 %v1778
      %1892 = vmatprep.subr.bf16.mxu0 0
      %1893 = vmatpush1.bf16.msra.mxu0 %v1779
      %1894 = vmatprep.subr.bf16.mxu0 0
      %1895 = vmatpush1.bf16.msra.mxu0 %v1780
      %1896 = vmatprep.subr.bf16.mxu0 0
      %1897 = vmatpush1.bf16.msra.mxu0 %v1781
      %1898 = vmatprep.subr.bf16.mxu0 0
      %1899 = vmatpush1.bf16.msra.mxu0 %v1782
      %1900 = vmatprep.subr.bf16.mxu0 0
      %1901 = vmatpush1.bf16.msra.mxu0 %v1783
      %1902 = vmatprep.subr.bf16.mxu0 0
      %1903 = vmatpush1.bf16.msra.mxu0 0
      %1904 = vmatprep.subr.bf16.mxu0 0
      %1905 = vmatpush1.bf16.msra.mxu0 0
      %1906 = vmatprep.subr.bf16.mxu0 0
      %1907 = vmatpush1.bf16.msra.mxu0 0
      %1908 = vmatprep.subr.bf16.mxu0 0
      %1909 = vmatpush1.bf16.msra.mxu0 0
      %1910 = vmatprep.subr.bf16.mxu0 0
      %1911 = vmatpush1.bf16.msra.mxu0 0
      %1912 = vmatprep.subr.bf16.mxu0 0
      %1913 = vmatpush1.bf16.msra.mxu0 0
      %1914 = vmatprep.subr.bf16.mxu0 0
      %1915 = vmatpush1.bf16.msra.mxu0 0
      %1916 = vmatprep.subr.bf16.mxu0 0
      %1917 = vmatpush1.bf16.msra.mxu0 0
      %1918 = vmatprep.subr.bf16.mxu0 0
      %1919 = vmatpush1.bf16.msra.mxu0 0
      %1920 = vmatprep.subr.bf16.mxu0 0
      %1921 = vmatpush1.bf16.msra.mxu0 0
      %1922 = vmatprep.mubr.bf16.mxu0 0
      %1923 = vmatmul.mubr.bf16.gmra.mrb[0].mxu0 %v1885
      %v1924 = vpop.f32.mrb[0].mxu0
      %v1925 = vadd.f32 %v1860, %v1924
      %v1926 = vpop.f32.mrb[0].mxu0
      %v1927 = vpop.f32.mrb[0].mxu0
      %v1928 = vadd.f32 %v1863, %v1927
      %v1929 = vpop.f32.mrb[0].mxu0
      %1930 = vmatprep.mubr.bf16.mxu0 0
      %1931 = vmatmul.mubr.bf16.gmra.mrb[0].mxu0 %v1888
      %v1932 = vpop.f32.mrb[0].mxu0
      %v1933 = vadd.f32 %v1868, %v1932
      %v1934 = vpop.f32.mrb[0].mxu0
      %v1935 = vpop.f32.mrb[0].mxu0
      %v1936 = vadd.f32 %v1871, %v1935
      %v1937 = vpop.f32.mrb[0].mxu0
      %1938 = vdwg.mxu0
      %v1943 = vunpack.c.l.b16 %v1658
      %v1944 = vunpack.c.l.b16 %v1659
      %v1945 = vunpack.c.l.b16 %v1660
      %v1946 = vunpack.c.l.b16 %v1661
      %v1947 = vpack.c.b16 %v1944, %v1943
      %v1948 = vpack.c.b16 %v1946, %v1945
      %1949 = vrot.lane.b32.xlu0 %v1778, 112
      %v1950 = vpop.permute.xlu0 %1949
      %1951 = vrot.lane.b32.xlu0 %v1779, 112
      %v1952 = vpop.permute.xlu0 %1951
      %1953 = vrot.lane.b32.xlu0 %v1780, 112
      %v1954 = vpop.permute.xlu0 %1953
      %1955 = vrot.lane.b32.xlu0 %v1781, 112
      %v1956 = vpop.permute.xlu0 %1955
      %1957 = vrot.lane.b32.xlu0 %v1782, 112
      %v1958 = vpop.permute.xlu0 %1957
      %1959 = vrot.lane.b32.xlu0 %v1783, 112
      %v1960 = vpop.permute.xlu0 %1959
      %v1968 = vsel %vm1818, %v1947, 0
      %v1971 = vsel %vm1818, %v1948, 0
      %1973 = vmatprep.subr.bf16.mxu0 0
      %1974 = vmatpush1.bf16.msra.mxu0 %v1950
      %1975 = vmatprep.subr.bf16.mxu0 0
      %1976 = vmatpush1.bf16.msra.mxu0 %v1952
      %1977 = vmatprep.subr.bf16.mxu0 0
      %1978 = vmatpush1.bf16.msra.mxu0 %v1954
      %1979 = vmatprep.subr.bf16.mxu0 0
      %1980 = vmatpush1.bf16.msra.mxu0 %v1956
      %1981 = vmatprep.subr.bf16.mxu0 0
      %1982 = vmatpush1.bf16.msra.mxu0 %v1958
      %1983 = vmatprep.subr.bf16.mxu0 0
      %1984 = vmatpush1.bf16.msra.mxu0 %v1960
      %1985 = vmatprep.subr.bf16.mxu0 0
      %1986 = vmatpush1.bf16.msra.mxu0 0
      %1987 = vmatprep.subr.bf16.mxu0 0
      %1988 = vmatpush1.bf16.msra.mxu0 0
      %1989 = vmatprep.subr.bf16.mxu0 0
      %1990 = vmatpush1.bf16.msra.mxu0 0
      %1991 = vmatprep.subr.bf16.mxu0 0
      %1992 = vmatpush1.bf16.msra.mxu0 0
      %1993 = vmatprep.subr.bf16.mxu0 0
      %1994 = vmatpush1.bf16.msra.mxu0 0
      %1995 = vmatprep.subr.bf16.mxu0 0
      %1996 = vmatpush1.bf16.msra.mxu0 0
      %1997 = vmatprep.subr.bf16.mxu0 0
      %1998 = vmatpush1.bf16.msra.mxu0 0
      %1999 = vmatprep.subr.bf16.mxu0 0
      %2000 = vmatpush1.bf16.msra.mxu0 0
      %2001 = vmatprep.subr.bf16.mxu0 0
      %2002 = vmatpush1.bf16.msra.mxu0 0
      %2003 = vmatprep.subr.bf16.mxu0 0
      %2004 = vmatpush1.bf16.msra.mxu0 0
      %2005 = vmatprep.mubr.bf16.mxu0 0
      %2006 = vmatmul.mubr.bf16.gmra.mrb[0].mxu0 %v1968
      %v2007 = vpop.f32.mrb[0].mxu0
      %v2008 = vadd.f32 0.0, %v2007
      %v2009 = vpop.f32.mrb[0].mxu0
      %v2010 = vpop.f32.mrb[0].mxu0
      %v2011 = vadd.f32 0.0, %v2010
      %v2012 = vpop.f32.mrb[0].mxu0
      %2013 = vmatprep.mubr.bf16.mxu0 0
      %2014 = vmatmul.mubr.bf16.gmra.mrb[0].mxu0 %v1971
      %v2015 = vpop.f32.mrb[0].mxu0
      %v2016 = vadd.f32 0.0, %v2015
      %v2017 = vpop.f32.mrb[0].mxu0
      %v2018 = vpop.f32.mrb[0].mxu0
      %v2019 = vadd.f32 0.0, %v2018
      %v2020 = vpop.f32.mrb[0].mxu0
      %2021 = vdwg.mxu0
      %v2022 = vadd.f32 %v1925, %v2008
      %v2023 = vadd.f32 %v1928, %v2011
      %v2024 = vadd.f32 %v1933, %v2016
      %v2025 = vadd.f32 %v1936, %v2019
      %2027 = vset.pattern.permute.xlu0 0
      %2028 = vperm.xlu0 %2027, %v1662
      %v2029 = vpop.permute.xlu0 %2028
      %2032 = vset.pattern.permute.xlu0 0
      %2033 = vperm.xlu0 %2032, %v1663
      %v2034 = vpop.permute.xlu0 %2033
      %2037 = vset.pattern.permute.xlu0 0
      %2038 = vperm.xlu0 %2037, %v1664
      %v2039 = vpop.permute.xlu0 %2038
      %2042 = vset.pattern.permute.xlu0 0
      %2043 = vperm.xlu0 %2042, %v1665
      %v2044 = vpop.permute.xlu0 %2043
      %v2046 = vadd.f32 %v2022, %v2029
      %v2047 = vadd.f32 %v2023, %v2034
      %v2048 = vadd.f32 %v2024, %v2039
      %v2049 = vadd.f32 %v2025, %v2044
      %v2050 = vmax.f32 %v2046, 0.0
      %v2051 = vmax.f32 %v2047, 0.0
      %v2052 = vmax.f32 %v2048, 0.0
      %v2053 = vmax.f32 %v2049, 0.0
      %2054 = vst.msk [vmem:[%s325] sm:$0xff] %vm829, %v2050
      %2055 = vst.msk [vmem:[%s325 + $0x8] sm:$0xff] %vm829, %v2051
      %2056 = vst.msk [vmem:[%s325 + $0x10] sm:$0xff] %vm829, %v2052
      %2057 = vst.msk [vmem:[%s325 + $0x18] sm:$0xff] %vm829, %v2053
      %p2058 = scmp.lt.s32.totalorder %s19, 1
      %s2059 = scalar_select %p2058, %s19, 1
      %s2060 = smul.addr %s2059, 4
      %s2061 = smul.addr %s2060, 8
      %s2062 = scalar_lea.vmem %s8, %s2061
      // Predicated region
      $region53: #{_lambda_.8} parent=51 // pred_check
        %p2063 = pneg %p215
      $region54: #{_lambda_.8} parent=51 // pred_check_branch
        %2065 = sbr.rel (%p2063) target = $region56
      $region55: #{_lambda_.8} parent=51 // pred_region
        _
      $region56: #{_lambda_.8} parent=51 // pred_fallthru
        _
    $region52: #{_lambda_.8} parent=5 // pred_fallthru
      _
    %p2066 = scmp.le.s32.totalorder 2, %s14
    // Predicated region
    $region57: #{_lambda_.8} parent=5 // pred_check
      %p2067 = pneg %p2066
    $region58: #{_lambda_.8} parent=5 // pred_check_branch
      %2069 = sbr.rel (%p2067) target = $region60
    $region59: #{_lambda_.8} parent=5 // pred_region
      %s2070 = ssub.s32 %s14, 2
      // Predicated region
      $region61: #{_lambda_.8} parent=59 // pred_check
        %p2071 = pneg %p221
      $region62: #{_lambda_.8} parent=59 // pred_check_branch
        %2073 = sbr.rel (%p2071) target = $region64
      $region63: #{_lambda_.8} parent=59 // pred_region
        %p2074 = scmp.lt.s32.totalorder %s20, 1
        %s2075 = scalar_select %p2074, %s20, 1
        %s2076 = smul.addr %s2075, 4
        %s2077 = smul.addr %s2076, 8
        %s2078 = scalar_lea.vmem %s8, %s2077
      $region64: #{_lambda_.8} parent=59 // pred_fallthru
        _
    $region60: #{_lambda_.8} parent=5 // pred_fallthru
      _
  $region6: #{_lambda_.8} parent=0 // loop_footer
    %s18 = sadd.s32 1, %s14
  $region7: #{_lambda_.8} parent=0 // loop_footer_branch
    %13 = sbr.rel target = $region3
  $region8: #{_lambda_.8} parent=0 // loop_exit
    _

// kernel: _lambda_.9
$region0: #{_lambda_.9}
  #allocation0 [shape = 'u32[]', space=smem, size = 0x4, offset = 0x4, fixed_abs, tag = 'smem constant byte address 0x4 - core index']
  #allocation1 [shape = 'u32[144,128]{1,0:T(1,128)}', space=vmem, size = 0x12000, scoped, tag = 'internal scratch']
  #allocation2 [shape = 'f32[1,1]{1,0:T(1,128)S(1)}', space=vmem, size = 0x200, scoped, tag = 'scoped memory for _lambda_.9']
  %s0 = inlined_call_operand.vmem [shape: f32[2,32,256], index: 0, kind: input, shape index: {}]
  %s1 = inlined_call_operand.vmem [shape: f32[2,32,64], index: 1, kind: input, shape index: {}]
  %s2 = inlined_call_operand.vmem [shape: bf16[3,32,96], index: 2, kind: input, shape index: {}]
  %s3 = inlined_call_operand.vmem [shape: bf16[3,32,96], index: 3, kind: input, shape index: {}]
  %s4 = inlined_call_operand.vmem [shape: f32[32,1], index: 4, kind: input, shape index: {}]
  %s5 = inlined_call_operand.vmem [shape: bf16[3,32,96], index: 5, kind: input, shape index: {}]
  %s6 = inlined_call_operand.vmem [shape: f32[32,1], index: 6, kind: input, shape index: {}]
  %s7 = inlined_call_operand.vmem [shape: f32[64,256], index: 7, kind: input, shape index: {}]
  %s8 = inlined_call_operand.vmem [shape: f32[1,32], index: 8, kind: input, shape index: {}]
  %s9 = inlined_call_operand.<no memory space> [shape: f32[1,1], index: 9, kind: input, shape index: {}]
  %s10 = inlined_call_operand.vmem [shape: f32[2,1,256], index: 10, kind: output, shape index: {}]
  %s11 = sld [smem:[#allocation0]]
  $region73: #{_lambda_.9} parent=0
    _
  %s13 = ssub.s32 1, %s11
  %s14 = scalar_select 0, %s13, %s11
  %v15 = vstv %s9
  %16 = vst [vmem:[#allocation2] sm:$0x1] %v15
  loop: start=0, step=1, limit=4
  $region2: #{_lambda_.9} parent=0 // loop_pre_header
    _
  $region3: #{_lambda_.9} parent=0 // loop_header
    %s18 = sphi 0, %s22
    %p19 = scmp.ge.s32.totalorder %s18, 4
    %s28 = sphi 0, %s30
    %s31 = sphi 0, %s28
    %s32 = sphi 0, %s31
    %s48 = sphi 0, %s32
    %s54 = sphi 0, %s56
    %s57 = sphi 0, %s54
    %s58 = sphi 0, %s57
    %s74 = sphi 0, %s58
    %s78 = sphi 0, %s78
    %s80 = sphi 0, %s78
    %s81 = sphi 0, %s80
    %s95 = sphi 0, %s81
    %s99 = sphi 0, %s99
    %s101 = sphi 0, %s99
    %s102 = sphi 0, %s101
    %s116 = sphi 0, %s102
    %s120 = sphi 0, %s120
    %s122 = sphi 0, %s120
    %s123 = sphi 0, %s122
    %s137 = sphi 0, %s123
    %s141 = sphi 0, %s141
    %s143 = sphi 0, %s141
    %s144 = sphi 0, %s143
    %s158 = sphi 0, %s144
    %s162 = sphi 0, %s162
    %s164 = sphi 0, %s162
    %s165 = sphi 0, %s164
    %s179 = sphi 0, %s165
    %s183 = sphi 0, %s183
    %s185 = sphi 0, %s183
    %s186 = sphi 0, %s185
    %s200 = sphi 0, %s186
    %s204 = sphi 0, %s204
    %s206 = sphi 0, %s204
    %s207 = sphi 0, %s206
    %s221 = sphi 0, %s207
    %s225 = sphi 0, %s225
    %s227 = sphi 0, %s225
    %s228 = sphi 0, %s227
    %s242 = sphi 0, %s228
    %s248 = sphi 0, %s250
    %s251 = sphi 0, %s248
    %s252 = sphi 0, %s251
    %s268 = sphi 0, %s252
  $region4: #{_lambda_.9} parent=0 // loop_header_branch
    %21 = sbr.rel (%p19) target = $region8
  $region5: #{_lambda_.9} parent=0 // loop_body
    %s23 = ssub.s32 %s18, 1
    %s24 = ssub.s32 %s18, 2
    %s25 = sadd.s32 %s18, 1
    %s26 = ssub.s32 %s18, %s25
    %p27 = scmp.eq.s32.totalorder %s26, 0
    %s29 = sadd.s32 %s28, 1
    %s30 = scalar_select %p27, %s28, %s29
    %p33 = pneg %p27
    %p34 = scmp.eq.s32.totalorder %s18, 1
    %p35 = por %p33, %p34
    %p36 = scmp.ne.s32.totalorder %s28, %s31
    %p37 = scmp.eq.s32.totalorder %s18, 0
    %p38 = por %p36, %p37
    %p39 = scmp.ne.s32.totalorder %s28, %s31
    %p40 = scmp.eq.s32.totalorder %s23, 1
    %p41 = por %p39, %p40
    %p42 = scmp.ne.s32.totalorder %s31, %s32
    %p43 = scmp.eq.s32.totalorder %s23, 0
    %p44 = por %p42, %p43
    %p45 = scmp.ne.s32.totalorder %s31, %s32
    %p46 = scmp.eq.s32.totalorder %s24, 1
    %p47 = por %p45, %p46
    %p49 = scmp.ne.s32.totalorder %s32, %s48
    %p50 = scmp.eq.s32.totalorder %s24, 0
    %p51 = por %p49, %p50
    %s52 = ssub.s32 %s18, %s25
    %p53 = scmp.eq.s32.totalorder %s52, 0
    %s55 = sadd.s32 %s54, 1
    %s56 = scalar_select %p53, %s54, %s55
    %p59 = pneg %p53
    %p60 = scmp.eq.s32.totalorder %s18, 1
    %p61 = por %p59, %p60
    %p62 = scmp.ne.s32.totalorder %s54, %s57
    %p63 = scmp.eq.s32.totalorder %s18, 0
    %p64 = por %p62, %p63
    %p65 = scmp.ne.s32.totalorder %s54, %s57
    %p66 = scmp.eq.s32.totalorder %s23, 1
    %p67 = por %p65, %p66
    %p68 = scmp.ne.s32.totalorder %s57, %s58
    %p69 = scmp.eq.s32.totalorder %s23, 0
    %p70 = por %p68, %p69
    %p71 = scmp.ne.s32.totalorder %s57, %s58
    %p72 = scmp.eq.s32.totalorder %s24, 1
    %p73 = por %p71, %p72
    %p75 = scmp.ne.s32.totalorder %s58, %s74
    %p76 = scmp.eq.s32.totalorder %s24, 0
    %p77 = por %p75, %p76
    %s79 = sadd.s32 %s78, 1
    %p82 = scmp.eq.s32.totalorder %s18, 1
    %p83 = scmp.ne.s32.totalorder %s78, %s80
    %p84 = scmp.eq.s32.totalorder %s18, 0
    %p85 = por %p83, %p84
    %p86 = scmp.ne.s32.totalorder %s78, %s80
    %p87 = scmp.eq.s32.totalorder %s23, 1
    %p88 = por %p86, %p87
    %p89 = scmp.ne.s32.totalorder %s80, %s81
    %p90 = scmp.eq.s32.totalorder %s23, 0
    %p91 = por %p89, %p90
    %p92 = scmp.ne.s32.totalorder %s80, %s81
    %p93 = scmp.eq.s32.totalorder %s24, 1
    %p94 = por %p92, %p93
    %p96 = scmp.ne.s32.totalorder %s81, %s95
    %p97 = scmp.eq.s32.totalorder %s24, 0
    %p98 = por %p96, %p97
    %s100 = sadd.s32 %s99, 1
    %p103 = scmp.eq.s32.totalorder %s18, 1
    %p104 = scmp.ne.s32.totalorder %s99, %s101
    %p105 = scmp.eq.s32.totalorder %s18, 0
    %p106 = por %p104, %p105
    %p107 = scmp.ne.s32.totalorder %s99, %s101
    %p108 = scmp.eq.s32.totalorder %s23, 1
    %p109 = por %p107, %p108
    %p110 = scmp.ne.s32.totalorder %s101, %s102
    %p111 = scmp.eq.s32.totalorder %s23, 0
    %p112 = por %p110, %p111
    %p113 = scmp.ne.s32.totalorder %s101, %s102
    %p114 = scmp.eq.s32.totalorder %s24, 1
    %p115 = por %p113, %p114
    %p117 = scmp.ne.s32.totalorder %s102, %s116
    %p118 = scmp.eq.s32.totalorder %s24, 0
    %p119 = por %p117, %p118
    %s121 = sadd.s32 %s120, 1
    %p124 = scmp.eq.s32.totalorder %s18, 1
    %p125 = scmp.ne.s32.totalorder %s120, %s122
    %p126 = scmp.eq.s32.totalorder %s18, 0
    %p127 = por %p125, %p126
    %p128 = scmp.ne.s32.totalorder %s120, %s122
    %p129 = scmp.eq.s32.totalorder %s23, 1
    %p130 = por %p128, %p129
    %p131 = scmp.ne.s32.totalorder %s122, %s123
    %p132 = scmp.eq.s32.totalorder %s23, 0
    %p133 = por %p131, %p132
    %p134 = scmp.ne.s32.totalorder %s122, %s123
    %p135 = scmp.eq.s32.totalorder %s24, 1
    %p136 = por %p134, %p135
    %p138 = scmp.ne.s32.totalorder %s123, %s137
    %p139 = scmp.eq.s32.totalorder %s24, 0
    %p140 = por %p138, %p139
    %s142 = sadd.s32 %s141, 1
    %p145 = scmp.eq.s32.totalorder %s18, 1
    %p146 = scmp.ne.s32.totalorder %s141, %s143
    %p147 = scmp.eq.s32.totalorder %s18, 0
    %p148 = por %p146, %p147
    %p149 = scmp.ne.s32.totalorder %s141, %s143
    %p150 = scmp.eq.s32.totalorder %s23, 1
    %p151 = por %p149, %p150
    %p152 = scmp.ne.s32.totalorder %s143, %s144
    %p153 = scmp.eq.s32.totalorder %s23, 0
    %p154 = por %p152, %p153
    %p155 = scmp.ne.s32.totalorder %s143, %s144
    %p156 = scmp.eq.s32.totalorder %s24, 1
    %p157 = por %p155, %p156
    %p159 = scmp.ne.s32.totalorder %s144, %s158
    %p160 = scmp.eq.s32.totalorder %s24, 0
    %p161 = por %p159, %p160
    %s163 = sadd.s32 %s162, 1
    %p166 = scmp.eq.s32.totalorder %s18, 1
    %p167 = scmp.ne.s32.totalorder %s162, %s164
    %p168 = scmp.eq.s32.totalorder %s18, 0
    %p169 = por %p167, %p168
    %p170 = scmp.ne.s32.totalorder %s162, %s164
    %p171 = scmp.eq.s32.totalorder %s23, 1
    %p172 = por %p170, %p171
    %p173 = scmp.ne.s32.totalorder %s164, %s165
    %p174 = scmp.eq.s32.totalorder %s23, 0
    %p175 = por %p173, %p174
    %p176 = scmp.ne.s32.totalorder %s164, %s165
    %p177 = scmp.eq.s32.totalorder %s24, 1
    %p178 = por %p176, %p177
    %p180 = scmp.ne.s32.totalorder %s165, %s179
    %p181 = scmp.eq.s32.totalorder %s24, 0
    %p182 = por %p180, %p181
    %s184 = sadd.s32 %s183, 1
    %p187 = scmp.eq.s32.totalorder %s18, 1
    %p188 = scmp.ne.s32.totalorder %s183, %s185
    %p189 = scmp.eq.s32.totalorder %s18, 0
    %p190 = por %p188, %p189
    %p191 = scmp.ne.s32.totalorder %s183, %s185
    %p192 = scmp.eq.s32.totalorder %s23, 1
    %p193 = por %p191, %p192
    %p194 = scmp.ne.s32.totalorder %s185, %s186
    %p195 = scmp.eq.s32.totalorder %s23, 0
    %p196 = por %p194, %p195
    %p197 = scmp.ne.s32.totalorder %s185, %s186
    %p198 = scmp.eq.s32.totalorder %s24, 1
    %p199 = por %p197, %p198
    %p201 = scmp.ne.s32.totalorder %s186, %s200
    %p202 = scmp.eq.s32.totalorder %s24, 0
    %p203 = por %p201, %p202
    %s205 = sadd.s32 %s204, 1
    %p208 = scmp.eq.s32.totalorder %s18, 1
    %p209 = scmp.ne.s32.totalorder %s204, %s206
    %p210 = scmp.eq.s32.totalorder %s18, 0
    %p211 = por %p209, %p210
    %p212 = scmp.ne.s32.totalorder %s204, %s206
    %p213 = scmp.eq.s32.totalorder %s23, 1
    %p214 = por %p212, %p213
    %p215 = scmp.ne.s32.totalorder %s206, %s207
    %p216 = scmp.eq.s32.totalorder %s23, 0
    %p217 = por %p215, %p216
    %p218 = scmp.ne.s32.totalorder %s206, %s207
    %p219 = scmp.eq.s32.totalorder %s24, 1
    %p220 = por %p218, %p219
    %p222 = scmp.ne.s32.totalorder %s207, %s221
    %p223 = scmp.eq.s32.totalorder %s24, 0
    %p224 = por %p222, %p223
    %s226 = sadd.s32 %s225, 1
    %p229 = scmp.eq.s32.totalorder %s18, 1
    %p230 = scmp.ne.s32.totalorder %s225, %s227
    %p231 = scmp.eq.s32.totalorder %s18, 0
    %p232 = por %p230, %p231
    %p233 = scmp.ne.s32.totalorder %s225, %s227
    %p234 = scmp.eq.s32.totalorder %s23, 1
    %p235 = por %p233, %p234
    %p236 = scmp.ne.s32.totalorder %s227, %s228
    %p237 = scmp.eq.s32.totalorder %s23, 0
    %p238 = por %p236, %p237
    %p239 = scmp.ne.s32.totalorder %s227, %s228
    %p240 = scmp.eq.s32.totalorder %s24, 1
    %p241 = por %p239, %p240
    %p243 = scmp.ne.s32.totalorder %s228, %s242
    %p244 = scmp.eq.s32.totalorder %s24, 0
    %p245 = por %p243, %p244
    %s246 = ssub.s32 %s18, %s25
    %p247 = scmp.eq.s32.totalorder %s246, 0
    %s249 = sadd.s32 %s248, 1
    %s250 = scalar_select %p247, %s248, %s249
    %p253 = pneg %p247
    %p254 = scmp.eq.s32.totalorder %s18, 1
    %p255 = por %p253, %p254
    %p256 = scmp.ne.s32.totalorder %s248, %s251
    %p257 = scmp.eq.s32.totalorder %s18, 0
    %p258 = por %p256, %p257
    %p259 = scmp.ne.s32.totalorder %s248, %s251
    %p260 = scmp.eq.s32.totalorder %s23, 1
    %p261 = por %p259, %p260
    %p262 = scmp.ne.s32.totalorder %s251, %s252
    %p263 = scmp.eq.s32.totalorder %s23, 0
    %p264 = por %p262, %p263
    %p265 = scmp.ne.s32.totalorder %s251, %s252
    %p266 = scmp.eq.s32.totalorder %s24, 1
    %p267 = por %p265, %p266
    %p269 = scmp.ne.s32.totalorder %s252, %s268
    %p270 = scmp.eq.s32.totalorder %s24, 0
    %p271 = por %p269, %p270
    %p272 = scmp.le.s32.totalorder 1, %s18
    %p273 = scmp.lt.s32.totalorder %s18, 3
    %p274 = pnand %p272, %p273
    %p275 = pneg %p274
    // Predicated region
    $region9: #{_lambda_.9} parent=5 // pred_check
      _
    $region10: #{_lambda_.9} parent=5 // pred_check_branch
      %277 = sbr.rel (%p274) target = $region12
    $region11: #{_lambda_.9} parent=5 // pred_region
      %s278 = ssub.s32 %s18, 1
      // Predicated region
      $region13: #{_lambda_.9} parent=11 // pred_check
        %p279 = pneg %p91
      $region14: #{_lambda_.9} parent=11 // pred_check_branch
        %281 = sbr.rel (%p279) target = $region16
      $region15: #{_lambda_.9} parent=11 // pred_region
        _
      $region16: #{_lambda_.9} parent=11 // pred_fallthru
        _
      // Predicated region
      $region17: #{_lambda_.9} parent=11 // pred_check
        %p282 = pneg %p112
      $region18: #{_lambda_.9} parent=11 // pred_check_branch
        %284 = sbr.rel (%p282) target = $region20
      $region19: #{_lambda_.9} parent=11 // pred_region
        _
      $region20: #{_lambda_.9} parent=11 // pred_fallthru
        _
      // Predicated region
      $region21: #{_lambda_.9} parent=11 // pred_check
        %p285 = pneg %p133
      $region22: #{_lambda_.9} parent=11 // pred_check_branch
        %287 = sbr.rel (%p285) target = $region24
      $region23: #{_lambda_.9} parent=11 // pred_region
        _
      $region24: #{_lambda_.9} parent=11 // pred_fallthru
        _
      // Predicated region
      $region25: #{_lambda_.9} parent=11 // pred_check
        %p288 = pneg %p154
      $region26: #{_lambda_.9} parent=11 // pred_check_branch
        %290 = sbr.rel (%p288) target = $region28
      $region27: #{_lambda_.9} parent=11 // pred_region
        _
      $region28: #{_lambda_.9} parent=11 // pred_fallthru
        _
      // Predicated region
      $region29: #{_lambda_.9} parent=11 // pred_check
        %p291 = pneg %p175
      $region30: #{_lambda_.9} parent=11 // pred_check_branch
        %293 = sbr.rel (%p291) target = $region32
      $region31: #{_lambda_.9} parent=11 // pred_region
        _
      $region32: #{_lambda_.9} parent=11 // pred_fallthru
        _
      // Predicated region
      $region33: #{_lambda_.9} parent=11 // pred_check
        %p294 = pneg %p196
      $region34: #{_lambda_.9} parent=11 // pred_check_branch
        %296 = sbr.rel (%p294) target = $region36
      $region35: #{_lambda_.9} parent=11 // pred_region
        _
      $region36: #{_lambda_.9} parent=11 // pred_fallthru
        _
      // Predicated region
      $region37: #{_lambda_.9} parent=11 // pred_check
        %p297 = pneg %p217
      $region38: #{_lambda_.9} parent=11 // pred_check_branch
        %299 = sbr.rel (%p297) target = $region40
      $region39: #{_lambda_.9} parent=11 // pred_region
        _
      $region40: #{_lambda_.9} parent=11 // pred_fallthru
        _
      // Predicated region
      $region41: #{_lambda_.9} parent=11 // pred_check
        %p300 = pneg %p238
      $region42: #{_lambda_.9} parent=11 // pred_check_branch
        %302 = sbr.rel (%p300) target = $region44
      $region43: #{_lambda_.9} parent=11 // pred_region
        _
      $region44: #{_lambda_.9} parent=11 // pred_fallthru
        _
    $region12: #{_lambda_.9} parent=5 // pred_fallthru
      _
    %p303 = scmp.lt.s32.totalorder %s18, 2
    // Predicated region
    $region45: #{_lambda_.9} parent=5 // pred_check
      %p304 = pneg %p303
    $region46: #{_lambda_.9} parent=5 // pred_check_branch
      %306 = sbr.rel (%p304) target = $region48
    $region47: #{_lambda_.9} parent=5 // pred_region
      // Predicated region
      $region49: #{_lambda_.9} parent=47 // pred_check
        %p307 = pneg %p38
      $region50: #{_lambda_.9} parent=47 // pred_check_branch
        %309 = sbr.rel (%p307) target = $region52
      $region51: #{_lambda_.9} parent=47 // pred_region
        %p310 = scmp.lt.s32.totalorder %s18, 1
        %s311 = scalar_select %p310, %s18, 1
        %s312 = smul.addr %s311, 8
        %s313 = smul.addr %s312, 8
        %s314 = scalar_lea.vmem %s0, %s313
      $region52: #{_lambda_.9} parent=47 // pred_fallthru
        _
      // Predicated region
      $region53: #{_lambda_.9} parent=47 // pred_check
        %p315 = pneg %p64
      $region54: #{_lambda_.9} parent=47 // pred_check_branch
        %317 = sbr.rel (%p315) target = $region56
      $region55: #{_lambda_.9} parent=47 // pred_region
        %p318 = scmp.lt.s32.totalorder %s18, 1
        %s319 = scalar_select %p318, %s18, 1
        %s320 = smul.addr %s319, 4
        %s321 = smul.addr %s320, 8
        %s322 = scalar_lea.vmem %s1, %s321
      $region56: #{_lambda_.9} parent=47 // pred_fallthru
        _
    $region48: #{_lambda_.9} parent=5 // pred_fallthru
      _
    %p323 = scmp.le.s32.totalorder 1, %s18
    %p324 = scmp.lt.s32.totalorder %s18, 3
    %p325 = pnand %p323, %p324
    %p326 = pneg %p325
    // Predicated region
    $region57: #{_lambda_.9} parent=5 // pred_check
      _
    $region58: #{_lambda_.9} parent=5 // pred_check_branch
      %328 = sbr.rel (%p325) target = $region60
    $region59: #{_lambda_.9} parent=5 // pred_region
      %s329 = ssub.s32 %s18, 1
      %p330 = scmp.lt.s32.totalorder %s23, 1
      %s331 = scalar_select %p330, %s23, 1
      %s332 = smul.addr %s331, 8
      %s333 = smul.addr %s332, 8
      %s334 = scalar_lea.vmem %s0, %s333
      %p335 = pneg %p44
      %p336 = pneg %p41
      %p337 = scmp.lt.s32.totalorder %s23, 1
      %s338 = scalar_select %p337, %s23, 1
      %s339 = smul.addr %s338, 4
      %s340 = smul.addr %s339, 8
      %s341 = scalar_lea.vmem %s1, %s340
      %p342 = pneg %p70
      %p343 = pneg %p67
      %p344 = pneg %p91
      %p345 = pneg %p88
      %p346 = pneg %p112
      %p347 = pneg %p109
      %p348 = pneg %p133
      %p349 = pneg %p130
      %p350 = pneg %p154
      %p351 = pneg %p151
      %p352 = pneg %p175
      %p353 = pneg %p172
      %p354 = pneg %p196
      %p355 = pneg %p193
      %p356 = pneg %p217
      %p357 = pneg %p214
      %p358 = pneg %p238
      %p359 = pneg %p235
      %p360 = pneg %p264
      %p361 = pneg %p261
      %p362 = scmp.lt.s32.totalorder %s23, 1
      %s363 = scalar_select %p362, %s23, 1
      %s364 = smul.addr %s363, 2
      %s365 = scalar_lea.vmem %s10, %s364
      %p366 = scmp.lt.s32.totalorder %s23, 1
      %s367 = scalar_select %p366, %s23, 1
      %s368 = smul.addr %s367, 8
      %s369 = smul.addr %s368, 8
      %s370 = scalar_lea.vmem %s0, %s369
      %p371 = scmp.lt.s32.totalorder %s23, 1
      %s372 = scalar_select %p371, %s23, 1
      %s373 = smul.addr %s372, 4
      %s374 = smul.addr %s373, 8
      %s375 = scalar_lea.vmem %s1, %s374
      %p376 = scmp.lt.s32.totalorder %s23, 1
      %s377 = scalar_select %p376, %s23, 1
      %s378 = smul.addr %s377, 2
      %s379 = scalar_lea.vmem %s10, %s378
      %v381 = vld [vmem:[%s370] sm:$0xff]
      %v382 = vld [vmem:[%s370 + $0x8] sm:$0xff]
      %v383 = vld [vmem:[%s370 + $0x10] sm:$0xff]
      %v384 = vld [vmem:[%s370 + $0x18] sm:$0xff]
      %v385 = vld [vmem:[%s370 + $0x20] sm:$0xff]
      %v386 = vld [vmem:[%s370 + $0x28] sm:$0xff]
      %v387 = vld [vmem:[%s370 + $0x30] sm:$0xff]
      %v388 = vld [vmem:[%s370 + $0x38] sm:$0xff]
      %v389 = vld [vmem:[%s375] sm:$0xff]
      %v390 = vld [vmem:[%s375 + $0x8] sm:$0xff]
      %v391 = vld [vmem:[%s375 + $0x10] sm:$0xff]
      %v392 = vld [vmem:[%s375 + $0x18] sm:$0xff]
      %v393 = vld [vmem:[%s7] sm:$0xff]
      %v394 = vld [vmem:[%s7 + $0x8] sm:$0xff]
      %v395 = vld [vmem:[%s7 + $0x10] sm:$0xff]
      %v396 = vld [vmem:[%s7 + $0x18] sm:$0xff]
      %v397 = vld [vmem:[%s7 + $0x20] sm:$0xff]
      %v398 = vld [vmem:[%s7 + $0x28] sm:$0xff]
      %v399 = vld [vmem:[%s7 + $0x30] sm:$0xff]
      %v400 = vld [vmem:[%s7 + $0x38] sm:$0xff]
      %v401 = vld [vmem:[%s7 + $0x40] sm:$0xff]
      %v402 = vld [vmem:[%s7 + $0x48] sm:$0xff]
      %v403 = vld [vmem:[%s7 + $0x50] sm:$0xff]
      %v404 = vld [vmem:[%s7 + $0x58] sm:$0xff]
      %v405 = vld [vmem:[%s7 + $0x60] sm:$0xff]
      %v406 = vld [vmem:[%s7 + $0x68] sm:$0xff]
      %v407 = vld [vmem:[%s7 + $0x70] sm:$0xff]
      %v408 = vld [vmem:[%s7 + $0x78] sm:$0xff]
      %vm409 = vcmask 523264
      %v411 = vsel %vm409, %v389, 0
      %v414 = vsel %vm409, %v390, 0
      %v417 = vsel %vm409, %v391, 0
      %v420 = vsel %vm409, %v392, 0
      %422 = vmatprep.subr.mxu0 %v394
      %423 = vmatpush1.msra.mxu0 %v393
      %424 = vmatprep.subr.mxu0 %v396
      %425 = vmatpush1.msra.mxu0 %v395
      %426 = vmatprep.subr.mxu0 %v398
      %427 = vmatpush1.msra.mxu0 %v397
      %428 = vmatprep.subr.mxu0 %v400
      %429 = vmatpush1.msra.mxu0 %v399
      %430 = vmatprep.subr.mxu0 %v402
      %431 = vmatpush1.msra.mxu0 %v401
      %432 = vmatprep.subr.mxu0 %v404
      %433 = vmatpush1.msra.mxu0 %v403
      %434 = vmatprep.subr.mxu0 %v406
      %435 = vmatpush1.msra.mxu0 %v405
      %436 = vmatprep.subr.mxu0 %v408
      %437 = vmatpush1.msra.mxu0 %v407
      %438 = vmatprep.subr.mxu0 0.0
      %439 = vmatpush1.msra.mxu0 0.0
      %440 = vmatprep.subr.mxu0 0.0
      %441 = vmatpush1.msra.mxu0 0.0
      %442 = vmatprep.subr.mxu0 0.0
      %443 = vmatpush1.msra.mxu0 0.0
      %444 = vmatprep.subr.mxu0 0.0
      %445 = vmatpush1.msra.mxu0 0.0
      %446 = vmatprep.subr.mxu0 0.0
      %447 = vmatpush1.msra.mxu0 0.0
      %448 = vmatprep.subr.mxu0 0.0
      %449 = vmatpush1.msra.mxu0 0.0
      %450 = vmatprep.subr.mxu0 0.0
      %451 = vmatpush1.msra.mxu0 0.0
      %452 = vmatprep.subr.mxu0 0.0
      %453 = vmatpush1.msra.mxu0 0.0
      %454 = vmatprep.subr.mxu0 0.0
      %455 = vmatpush1.msra.mxu0 0.0
      %456 = vmatprep.subr.mxu0 0.0
      %457 = vmatpush1.msra.mxu0 0.0
      %458 = vmatprep.subr.mxu0 0.0
      %459 = vmatpush1.msra.mxu0 0.0
      %460 = vmatprep.subr.mxu0 0.0
      %461 = vmatpush1.msra.mxu0 0.0
      %462 = vmatprep.subr.mxu0 0.0
      %463 = vmatpush1.msra.mxu0 0.0
      %464 = vmatprep.subr.mxu0 0.0
      %465 = vmatpush1.msra.mxu0 0.0
      %466 = vmatprep.subr.mxu0 0.0
      %467 = vmatpush1.msra.mxu0 0.0
      %468 = vmatprep.subr.mxu0 0.0
      %469 = vmatpush1.msra.mxu0 0.0
      %470 = vmatprep.subr.mxu0 0.0
      %471 = vmatpush1.msra.mxu0 0.0
      %472 = vmatprep.subr.mxu0 0.0
      %473 = vmatpush1.msra.mxu0 0.0
      %474 = vmatprep.subr.mxu0 0.0
      %475 = vmatpush1.msra.mxu0 0.0
      %476 = vmatprep.subr.mxu0 0.0
      %477 = vmatpush1.msra.mxu0 0.0
      %478 = vmatprep.subr.mxu0 0.0
      %479 = vmatpush1.msra.mxu0 0.0
      %480 = vmatprep.subr.mxu0 0.0
      %481 = vmatpush1.msra.mxu0 0.0
      %482 = vmatprep.subr.mxu0 0.0
      %483 = vmatpush1.msra.mxu0 0.0
      %484 = vmatprep.subr.mxu0 0.0
      %485 = vmatpush1.msra.mxu0 0.0
      %486 = vmatprep.mubr.f32.mxu0 0.0
      %487 = vmatmul.mubr.f32.gmra.mrb[0].mxu0 %v411
      %v488 = vpop.f32.mrb[0].mxu0
      %v489 = vadd.f32 0.0, %v488
      %v490 = vpop.f32.mrb[0].mxu0
      %v491 = vadd.f32 0.0, %v490
      %492 = vmatprep.mubr.f32.mxu0 0.0
      %493 = vmatmul.mubr.f32.gmra.mrb[0].mxu0 %v414
      %v494 = vpop.f32.mrb[0].mxu0
      %v495 = vadd.f32 0.0, %v494
      %v496 = vpop.f32.mrb[0].mxu0
      %v497 = vadd.f32 0.0, %v496
      %498 = vmatprep.mubr.f32.mxu0 0.0
      %499 = vmatmul.mubr.f32.gmra.mrb[0].mxu0 %v417
      %v500 = vpop.f32.mrb[0].mxu0
      %v501 = vadd.f32 0.0, %v500
      %v502 = vpop.f32.mrb[0].mxu0
      %v503 = vadd.f32 0.0, %v502
      %504 = vmatprep.mubr.f32.mxu0 0.0
      %505 = vmatmul.mubr.f32.gmra.mrb[0].mxu0 %v420
      %v506 = vpop.f32.mrb[0].mxu0
      %v507 = vadd.f32 0.0, %v506
      %v508 = vpop.f32.mrb[0].mxu0
      %v509 = vadd.f32 0.0, %v508
      %510 = vdwg.mxu0
      %v511 = vld [vmem:[%s2] sm:$0xf]
      %v512 = vld [vmem:[%s2 + $0x4] sm:$0xf]
      %v513 = vld [vmem:[%s2 + $0x8] sm:$0xf]
      %v514 = vld [vmem:[%s2 + $0xc] sm:$0xf]
      %v515 = vld [vmem:[%s2 + $0x10] sm:$0xf]
      %v516 = vld [vmem:[%s2 + $0x14] sm:$0xf]
      %v517 = vld [vmem:[%s2 + $0x18] sm:$0xf]
      %v518 = vld [vmem:[%s2 + $0x1c] sm:$0xf]
      %v519 = vld [vmem:[%s2 + $0x20] sm:$0xf]
      %v520 = vld [vmem:[%s2 + $0x24] sm:$0xf]
      %v521 = vld [vmem:[%s2 + $0x28] sm:$0xf]
      %v522 = vld [vmem:[%s2 + $0x2c] sm:$0xf]
      %v523 = vld [vmem:[%s3] sm:$0xf]
      %v524 = vld [vmem:[%s3 + $0x4] sm:$0xf]
      %v525 = vld [vmem:[%s3 + $0x8] sm:$0xf]
      %v526 = vld [vmem:[%s3 + $0xc] sm:$0xf]
      %v527 = vld [vmem:[%s3 + $0x10] sm:$0xf]
      %v528 = vld [vmem:[%s3 + $0x14] sm:$0xf]
      %v529 = vld [vmem:[%s3 + $0x18] sm:$0xf]
      %v530 = vld [vmem:[%s3 + $0x1c] sm:$0xf]
      %v531 = vld [vmem:[%s3 + $0x20] sm:$0xf]
      %v532 = vld [vmem:[%s3 + $0x24] sm:$0xf]
      %v533 = vld [vmem:[%s3 + $0x28] sm:$0xf]
      %v534 = vld [vmem:[%s3 + $0x2c] sm:$0xf]
      %v535 = vld [vmem:[%s4] sm:$0xff]
      %v536 = vld [vmem:[%s4 + $0x8] sm:$0xff]
      %v537 = vld [vmem:[%s4 + $0x10] sm:$0xff]
      %v538 = vld [vmem:[%s4 + $0x18] sm:$0xff]
      %v539 = vlaneseq
      %v540 = vand.u32 %v539, 127
      %v541 = vadd.s32 %v540, 128
      %vm542 = vcmp.lt.s32.totalorder %v540, 0
      %v543 = vsub.s32 0, %v540
      %v544 = vsel %vm542, %v543, %v540
      %v545 = vshrl.u32 %v544, 4
      %v546 = vand.u32 %v544, 15
      %v547 = vsub.s32 0, %v546
      %v548 = vsel %vm542, %v547, %v546
      %vm549 = vcmp.lt.s32.totalorder %v541, 0
      %v550 = vsub.s32 0, %v541
      %v551 = vsel %vm549, %v550, %v541
      %v552 = vshrl.u32 %v551, 4
      %v553 = vand.u32 %v551, 15
      %v554 = vsub.s32 0, %v553
      %v555 = vsel %vm549, %v554, %v553
      %vm556 = vcmp.ne.s32.totalorder %v548, 0
      %vm557 = vcmp.ne.s32.totalorder %v555, 0
      %vm558 = vcmp.lt.s32.totalorder %v548, 0
      %vm559 = vcmp.lt.s32.totalorder %v555, 0
      %vm560 = vmand %vm558, %vm556
      %vm561 = vmand %vm559, %vm557
      %v562 = vadd.s32 %v548, 16
      %v563 = vadd.s32 %v555, 16
      %v564 = vsel %vm560, %v562, %v548
      %v565 = vsel %vm561, %v563, %v555
      %vm566 = vcmp.eq.s32.totalorder %v564, 0
      %vm567 = vcmp.eq.s32.totalorder %v565, 0
      %576 = vrot.lane.b32.xlu0 %v381, 1
      %v577 = vpop.permute.xlu0 %576
      %578 = vrot.lane.b32.xlu0 %v382, 1
      %v579 = vpop.permute.xlu0 %578
      %580 = vrot.lane.b32.xlu0 %v383, 1
      %v581 = vpop.permute.xlu0 %580
      %582 = vrot.lane.b32.xlu0 %v384, 1
      %v583 = vpop.permute.xlu0 %582
      %584 = vrot.lane.b32.xlu0 %v385, 1
      %v585 = vpop.permute.xlu0 %584
      %586 = vrot.lane.b32.xlu0 %v386, 1
      %v587 = vpop.permute.xlu0 %586
      %588 = vrot.lane.b32.xlu0 %v387, 1
      %v589 = vpop.permute.xlu0 %588
      %590 = vrot.lane.b32.xlu0 %v388, 1
      %v591 = vpop.permute.xlu0 %590
      %vm592 = vcmask 7168
      %v593 = vsel %vm592, %v577, %v579
      %v594 = vsel %vm592, %v581, %v583
      %v595 = vsel %vm592, %v585, %v587
      %v596 = vsel %vm592, %v589, %v591
      %v605 = vsel %vm592, 0.0, %v577
      %v606 = vsel %vm592, 0.0, %v581
      %v607 = vsel %vm592, 0.0, %v585
      %v608 = vsel %vm592, 0.0, %v589
      %v609 = vsel %vm566, 1, 0
      %v610 = vsel %vm567, 1, 0
      %vm611 = vcmp.eq.s32.totalorder %v609, 1
      %vm612 = vcmp.eq.s32.totalorder %v610, 1
      %v613 = vsel %vm611, 0.0, %v605
      %v614 = vsel %vm612, 0.0, %v593
      %v615 = vsel %vm611, 0.0, %v606
      %v616 = vsel %vm612, 0.0, %v594
      %v617 = vsel %vm611, 0.0, %v607
      %v618 = vsel %vm612, 0.0, %v595
      %v619 = vsel %vm611, 0.0, %v608
      %v620 = vsel %vm612, 0.0, %v596
      %vm621 = vcmp.eq.s32.totalorder %v564, 15
      %vm622 = vcmp.eq.s32.totalorder %v565, 15
      %623 = vrot.lane.b32.xlu0 %v381, 127
      %v624 = vpop.permute.xlu0 %623
      %625 = vrot.lane.b32.xlu0 %v382, 127
      %v626 = vpop.permute.xlu0 %625
      %627 = vrot.lane.b32.xlu0 %v383, 127
      %v628 = vpop.permute.xlu0 %627
      %629 = vrot.lane.b32.xlu0 %v384, 127
      %v630 = vpop.permute.xlu0 %629
      %631 = vrot.lane.b32.xlu0 %v385, 127
      %v632 = vpop.permute.xlu0 %631
      %633 = vrot.lane.b32.xlu0 %v386, 127
      %v634 = vpop.permute.xlu0 %633
      %635 = vrot.lane.b32.xlu0 %v387, 127
      %v636 = vpop.permute.xlu0 %635
      %637 = vrot.lane.b32.xlu0 %v388, 127
      %v638 = vpop.permute.xlu0 %637
      %vm639 = vcmask 1039360
      %v640 = vsel %vm639, %v624, %v626
      %v641 = vsel %vm639, %v628, %v630
      %v642 = vsel %vm639, %v632, %v634
      %v643 = vsel %vm639, %v636, %v638
      %v652 = vsel %vm639, %v626, 0.0
      %v653 = vsel %vm639, %v630, 0.0
      %v654 = vsel %vm639, %v634, 0.0
      %v655 = vsel %vm639, %v638, 0.0
      %v656 = vsel %vm621, 1, 0
      %v657 = vsel %vm622, 1, 0
      %vm658 = vcmp.eq.s32.totalorder %v656, 1
      %vm659 = vcmp.eq.s32.totalorder %v657, 1
      %v660 = vsel %vm658, 0.0, %v640
      %v661 = vsel %vm659, 0.0, %v652
      %v662 = vsel %vm658, 0.0, %v641
      %v663 = vsel %vm659, 0.0, %v653
      %v664 = vsel %vm658, 0.0, %v642
      %v665 = vsel %vm659, 0.0, %v654
      %v666 = vsel %vm658, 0.0, %v643
      %v667 = vsel %vm659, 0.0, %v655
      %684 = vrot.lane.b32.xlu0 %v613, 16
      %v685 = vpop.permute.xlu0 %684
      %686 = vrot.lane.b32.xlu0 %v614, 16
      %v687 = vpop.permute.xlu0 %686
      %688 = vrot.lane.b32.xlu0 %v615, 16
      %v689 = vpop.permute.xlu0 %688
      %690 = vrot.lane.b32.xlu0 %v616, 16
      %v691 = vpop.permute.xlu0 %690
      %692 = vrot.lane.b32.xlu0 %v617, 16
      %v693 = vpop.permute.xlu0 %692
      %694 = vrot.lane.b32.xlu0 %v618, 16
      %v695 = vpop.permute.xlu0 %694
      %696 = vrot.lane.b32.xlu0 %v619, 16
      %v697 = vpop.permute.xlu0 %696
      %698 = vrot.lane.b32.xlu0 %v620, 16
      %v699 = vpop.permute.xlu0 %698
      %700 = vrot.lane.b32.xlu0 %v381, 16
      %v701 = vpop.permute.xlu0 %700
      %702 = vrot.lane.b32.xlu0 %v382, 16
      %v703 = vpop.permute.xlu0 %702
      %704 = vrot.lane.b32.xlu0 %v383, 16
      %v705 = vpop.permute.xlu0 %704
      %706 = vrot.lane.b32.xlu0 %v384, 16
      %v707 = vpop.permute.xlu0 %706
      %708 = vrot.lane.b32.xlu0 %v385, 16
      %v709 = vpop.permute.xlu0 %708
      %710 = vrot.lane.b32.xlu0 %v386, 16
      %v711 = vpop.permute.xlu0 %710
      %712 = vrot.lane.b32.xlu0 %v387, 16
      %v713 = vpop.permute.xlu0 %712
      %714 = vrot.lane.b32.xlu0 %v388, 16
      %v715 = vpop.permute.xlu0 %714
      %716 = vrot.lane.b32.xlu0 %v660, 16
      %v717 = vpop.permute.xlu0 %716
      %718 = vrot.lane.b32.xlu0 %v661, 16
      %v719 = vpop.permute.xlu0 %718
      %720 = vrot.lane.b32.xlu0 %v662, 16
      %v721 = vpop.permute.xlu0 %720
      %722 = vrot.lane.b32.xlu0 %v663, 16
      %v723 = vpop.permute.xlu0 %722
      %724 = vrot.lane.b32.xlu0 %v664, 16
      %v725 = vpop.permute.xlu0 %724
      %726 = vrot.lane.b32.xlu0 %v665, 16
      %v727 = vpop.permute.xlu0 %726
      %728 = vrot.lane.b32.xlu0 %v666, 16
      %v729 = vpop.permute.xlu0 %728
      %730 = vrot.lane.b32.xlu0 %v667, 16
      %v731 = vpop.permute.xlu0 %730
      %vm732 = vcmask 130048
      %v733 = vsel %vm732, %v685, %v687
      %v734 = vsel %vm732, %v689, %v691
      %v735 = vsel %vm732, %v693, %v695
      %v736 = vsel %vm732, %v697, %v699
      %v737 = vsel %vm732, %v701, %v703
      %v738 = vsel %vm732, %v705, %v707
      %v739 = vsel %vm732, %v709, %v711
      %v740 = vsel %vm732, %v713, %v715
      %v741 = vsel %vm732, %v717, %v719
      %v742 = vsel %vm732, %v721, %v723
      %v743 = vsel %vm732, %v725, %v727
      %v744 = vsel %vm732, %v729, %v731
      %v781 = vsel %vm732, 0.0, %v685
      %v782 = vsel %vm732, 0.0, %v689
      %v783 = vsel %vm732, 0.0, %v693
      %v784 = vsel %vm732, 0.0, %v697
      %v785 = vsel %vm732, 0.0, %v701
      %v786 = vsel %vm732, 0.0, %v705
      %v787 = vsel %vm732, 0.0, %v709
      %v788 = vsel %vm732, 0.0, %v713
      %v789 = vsel %vm732, 0.0, %v717
      %v790 = vsel %vm732, 0.0, %v721
      %v791 = vsel %vm732, 0.0, %v725
      %v792 = vsel %vm732, 0.0, %v729
      %v793 = vsel %vm732, %v687, 0.0
      %v794 = vsel %vm732, %v691, 0.0
      %v795 = vsel %vm732, %v695, 0.0
      %v796 = vsel %vm732, %v699, 0.0
      %v797 = vsel %vm732, %v703, 0.0
      %v798 = vsel %vm732, %v707, 0.0
      %v799 = vsel %vm732, %v711, 0.0
      %v800 = vsel %vm732, %v715, 0.0
      %v801 = vsel %vm732, %v719, 0.0
      %v802 = vsel %vm732, %v723, 0.0
      %v803 = vsel %vm732, %v727, 0.0
      %v804 = vsel %vm732, %v731, 0.0
      %v805 = vpack.c.bf16 %v782, %v781
      %v806 = vpack.c.bf16 %v734, %v733
      %v807 = vpack.c.bf16 %v794, %v793
      %v808 = vpack.c.bf16 %v784, %v783
      %v809 = vpack.c.bf16 %v736, %v735
      %v810 = vpack.c.bf16 %v796, %v795
      %v811 = vpack.c.bf16 %v786, %v785
      %v812 = vpack.c.bf16 %v738, %v737
      %v813 = vpack.c.bf16 %v798, %v797
      %v814 = vpack.c.bf16 %v788, %v787
      %v815 = vpack.c.bf16 %v740, %v739
      %v816 = vpack.c.bf16 %v800, %v799
      %v817 = vpack.c.bf16 %v790, %v789
      %v818 = vpack.c.bf16 %v742, %v741
      %v819 = vpack.c.bf16 %v802, %v801
      %v820 = vpack.c.bf16 %v792, %v791
      %v821 = vpack.c.bf16 %v744, %v743
      %v822 = vpack.c.bf16 %v804, %v803
      %v827 = vunpack.c.l.b16 %v515
      %v828 = vunpack.c.l.b16 %v516
      %v829 = vunpack.c.l.b16 %v517
      %v830 = vunpack.c.l.b16 %v518
      %v831 = vpack.c.b16 %v828, %v827
      %v832 = vpack.c.b16 %v830, %v829
      %851 = vrot.lane.b32.xlu0 %v805, 112
      %v852 = vpop.permute.xlu0 %851
      %853 = vrot.lane.b32.xlu0 %v806, 112
      %v854 = vpop.permute.xlu0 %853
      %855 = vrot.lane.b32.xlu0 %v807, 112
      %v856 = vpop.permute.xlu0 %855
      %857 = vrot.lane.b32.xlu0 %v808, 112
      %v858 = vpop.permute.xlu0 %857
      %859 = vrot.lane.b32.xlu0 %v809, 112
      %v860 = vpop.permute.xlu0 %859
      %861 = vrot.lane.b32.xlu0 %v810, 112
      %v862 = vpop.permute.xlu0 %861
      %863 = vrot.lane.b32.xlu0 %v811, 112
      %v864 = vpop.permute.xlu0 %863
      %865 = vrot.lane.b32.xlu0 %v812, 112
      %v866 = vpop.permute.xlu0 %865
      %867 = vrot.lane.b32.xlu0 %v813, 112
      %v868 = vpop.permute.xlu0 %867
      %869 = vrot.lane.b32.xlu0 %v814, 112
      %v870 = vpop.permute.xlu0 %869
      %871 = vrot.lane.b32.xlu0 %v815, 112
      %v872 = vpop.permute.xlu0 %871
      %873 = vrot.lane.b32.xlu0 %v816, 112
      %v874 = vpop.permute.xlu0 %873
      %875 = vrot.lane.b32.xlu0 %v817, 112
      %v876 = vpop.permute.xlu0 %875
      %877 = vrot.lane.b32.xlu0 %v818, 112
      %v878 = vpop.permute.xlu0 %877
      %879 = vrot.lane.b32.xlu0 %v819, 112
      %v880 = vpop.permute.xlu0 %879
      %881 = vrot.lane.b32.xlu0 %v820, 112
      %v882 = vpop.permute.xlu0 %881
      %883 = vrot.lane.b32.xlu0 %v821, 112
      %v884 = vpop.permute.xlu0 %883
      %885 = vrot.lane.b32.xlu0 %v822, 112
      %v886 = vpop.permute.xlu0 %885
      %vm887 = vcmask 916480
      %v888 = vsel %vm887, %v852, %v854
      %v889 = vsel %vm887, %v854, %v856
      %v890 = vsel %vm887, %v858, %v860
      %v891 = vsel %vm887, %v860, %v862
      %v892 = vsel %vm887, %v864, %v866
      %v893 = vsel %vm887, %v866, %v868
      %v894 = vsel %vm887, %v870, %v872
      %v895 = vsel %vm887, %v872, %v874
      %v896 = vsel %vm887, %v876, %v878
      %v897 = vsel %vm887, %v878, %v880
      %v898 = vsel %vm887, %v882, %v884
      %v899 = vsel %vm887, %v884, %v886
      %vm912 = vcmask 785408
      %v914 = vsel %vm912, %v831, 0
      %v917 = vsel %vm912, %v832, 0
      %919 = vmatprep.subr.bf16.mxu0 %v889
      %920 = vmatpush1.bf16.msra.mxu0 %v888
      %921 = vmatprep.subr.bf16.mxu0 %v891
      %922 = vmatpush1.bf16.msra.mxu0 %v890
      %923 = vmatprep.subr.bf16.mxu0 %v893
      %924 = vmatpush1.bf16.msra.mxu0 %v892
      %925 = vmatprep.subr.bf16.mxu0 %v895
      %926 = vmatpush1.bf16.msra.mxu0 %v894
      %927 = vmatprep.subr.bf16.mxu0 %v897
      %928 = vmatpush1.bf16.msra.mxu0 %v896
      %929 = vmatprep.subr.bf16.mxu0 %v899
      %930 = vmatpush1.bf16.msra.mxu0 %v898
      %931 = vmatprep.subr.bf16.mxu0 0
      %932 = vmatpush1.bf16.msra.mxu0 0
      %933 = vmatprep.subr.bf16.mxu0 0
      %934 = vmatpush1.bf16.msra.mxu0 0
      %935 = vmatprep.subr.bf16.mxu0 0
      %936 = vmatpush1.bf16.msra.mxu0 0
      %937 = vmatprep.subr.bf16.mxu0 0
      %938 = vmatpush1.bf16.msra.mxu0 0
      %939 = vmatprep.subr.bf16.mxu0 0
      %940 = vmatpush1.bf16.msra.mxu0 0
      %941 = vmatprep.subr.bf16.mxu0 0
      %942 = vmatpush1.bf16.msra.mxu0 0
      %943 = vmatprep.subr.bf16.mxu0 0
      %944 = vmatpush1.bf16.msra.mxu0 0
      %945 = vmatprep.subr.bf16.mxu0 0
      %946 = vmatpush1.bf16.msra.mxu0 0
      %947 = vmatprep.subr.bf16.mxu0 0
      %948 = vmatpush1.bf16.msra.mxu0 0
      %949 = vmatprep.subr.bf16.mxu0 0
      %950 = vmatpush1.bf16.msra.mxu0 0
      %951 = vmatprep.mubr.bf16.mxu0 0
      %952 = vmatmul.mubr.bf16.gmra.mrb[0].mxu0 %v914
      %v953 = vpop.f32.mrb[0].mxu0
      %v954 = vadd.f32 0.0, %v953
      %v955 = vpop.f32.mrb[0].mxu0
      %v956 = vadd.f32 0.0, %v955
      %v957 = vpop.f32.mrb[0].mxu0
      %v958 = vadd.f32 0.0, %v957
      %v959 = vpop.f32.mrb[0].mxu0
      %v960 = vadd.f32 0.0, %v959
      %961 = vmatprep.mubr.bf16.mxu0 0
      %962 = vmatmul.mubr.bf16.gmra.mrb[0].mxu0 %v917
      %v963 = vpop.f32.mrb[0].mxu0
      %v964 = vadd.f32 0.0, %v963
      %v965 = vpop.f32.mrb[0].mxu0
      %v966 = vadd.f32 0.0, %v965
      %v967 = vpop.f32.mrb[0].mxu0
      %v968 = vadd.f32 0.0, %v967
      %v969 = vpop.f32.mrb[0].mxu0
      %v970 = vadd.f32 0.0, %v969
      %971 = vdwg.mxu0
      %v976 = vunpack.c.l.b16 %v511
      %v977 = vunpack.c.l.b16 %v512
      %v978 = vunpack.c.l.b16 %v513
      %v979 = vunpack.c.l.b16 %v514
      %v980 = vpack.c.b16 %v977, %v976
      %v981 = vpack.c.b16 %v979, %v978
      %v983 = vsel %vm912, %v980, 0
      %v986 = vsel %vm912, %v981, 0
      %988 = vmatprep.subr.bf16.mxu0 %v806
      %989 = vmatpush1.bf16.msra.mxu0 %v805
      %990 = vmatprep.subr.bf16.mxu0 %v809
      %991 = vmatpush1.bf16.msra.mxu0 %v808
      %992 = vmatprep.subr.bf16.mxu0 %v812
      %993 = vmatpush1.bf16.msra.mxu0 %v811
      %994 = vmatprep.subr.bf16.mxu0 %v815
      %995 = vmatpush1.bf16.msra.mxu0 %v814
      %996 = vmatprep.subr.bf16.mxu0 %v818
      %997 = vmatpush1.bf16.msra.mxu0 %v817
      %998 = vmatprep.subr.bf16.mxu0 %v821
      %999 = vmatpush1.bf16.msra.mxu0 %v820
      %1000 = vmatprep.subr.bf16.mxu0 0
      %1001 = vmatpush1.bf16.msra.mxu0 0
      %1002 = vmatprep.subr.bf16.mxu0 0
      %1003 = vmatpush1.bf16.msra.mxu0 0
      %1004 = vmatprep.subr.bf16.mxu0 0
      %1005 = vmatpush1.bf16.msra.mxu0 0
      %1006 = vmatprep.subr.bf16.mxu0 0
      %1007 = vmatpush1.bf16.msra.mxu0 0
      %1008 = vmatprep.subr.bf16.mxu0 0
      %1009 = vmatpush1.bf16.msra.mxu0 0
      %1010 = vmatprep.subr.bf16.mxu0 0
      %1011 = vmatpush1.bf16.msra.mxu0 0
      %1012 = vmatprep.subr.bf16.mxu0 0
      %1013 = vmatpush1.bf16.msra.mxu0 0
      %1014 = vmatprep.subr.bf16.mxu0 0
      %1015 = vmatpush1.bf16.msra.mxu0 0
      %1016 = vmatprep.subr.bf16.mxu0 0
      %1017 = vmatpush1.bf16.msra.mxu0 0
      %1018 = vmatprep.subr.bf16.mxu0 0
      %1019 = vmatpush1.bf16.msra.mxu0 0
      %1020 = vmatprep.mubr.bf16.mxu0 0
      %1021 = vmatmul.mubr.bf16.gmra.mrb[0].mxu0 %v983
      %v1022 = vpop.f32.mrb[0].mxu0
      %v1023 = vadd.f32 %v954, %v1022
      %v1024 = vpop.f32.mrb[0].mxu0
      %v1025 = vadd.f32 %v956, %v1024
      %v1026 = vpop.f32.mrb[0].mxu0
      %v1027 = vadd.f32 %v958, %v1026
      %v1028 = vpop.f32.mrb[0].mxu0
      %v1029 = vadd.f32 %v960, %v1028
      %1030 = vmatprep.mubr.bf16.mxu0 0
      %1031 = vmatmul.mubr.bf16.gmra.mrb[0].mxu0 %v986
      %v1032 = vpop.f32.mrb[0].mxu0
      %v1033 = vadd.f32 %v964, %v1032
      %v1034 = vpop.f32.mrb[0].mxu0
      %v1035 = vadd.f32 %v966, %v1034
      %v1036 = vpop.f32.mrb[0].mxu0
      %v1037 = vadd.f32 %v968, %v1036
      %v1038 = vpop.f32.mrb[0].mxu0
      %v1039 = vadd.f32 %v970, %v1038
      %1040 = vdwg.mxu0
      %v1045 = vunpack.c.l.b16 %v519
      %v1046 = vunpack.c.l.b16 %v520
      %v1047 = vunpack.c.l.b16 %v521
      %v1048 = vunpack.c.l.b16 %v522
      %v1049 = vpack.c.b16 %v1046, %v1045
      %v1050 = vpack.c.b16 %v1048, %v1047
      %1051 = vrot.lane.b32.xlu0 %v805, 96
      %v1052 = vpop.permute.xlu0 %1051
      %1053 = vrot.lane.b32.xlu0 %v806, 96
      %v1054 = vpop.permute.xlu0 %1053
      %1055 = vrot.lane.b32.xlu0 %v807, 96
      %v1056 = vpop.permute.xlu0 %1055
      %1057 = vrot.lane.b32.xlu0 %v808, 96
      %v1058 = vpop.permute.xlu0 %1057
      %1059 = vrot.lane.b32.xlu0 %v809, 96
      %v1060 = vpop.permute.xlu0 %1059
      %1061 = vrot.lane.b32.xlu0 %v810, 96
      %v1062 = vpop.permute.xlu0 %1061
      %1063 = vrot.lane.b32.xlu0 %v811, 96
      %v1064 = vpop.permute.xlu0 %1063
      %1065 = vrot.lane.b32.xlu0 %v812, 96
      %v1066 = vpop.permute.xlu0 %1065
      %1067 = vrot.lane.b32.xlu0 %v813, 96
      %v1068 = vpop.permute.xlu0 %1067
      %1069 = vrot.lane.b32.xlu0 %v814, 96
      %v1070 = vpop.permute.xlu0 %1069
      %1071 = vrot.lane.b32.xlu0 %v815, 96
      %v1072 = vpop.permute.xlu0 %1071
      %1073 = vrot.lane.b32.xlu0 %v816, 96
      %v1074 = vpop.permute.xlu0 %1073
      %1075 = vrot.lane.b32.xlu0 %v817, 96
      %v1076 = vpop.permute.xlu0 %1075
      %1077 = vrot.lane.b32.xlu0 %v818, 96
      %v1078 = vpop.permute.xlu0 %1077
      %1079 = vrot.lane.b32.xlu0 %v819, 96
      %v1080 = vpop.permute.xlu0 %1079
      %1081 = vrot.lane.b32.xlu0 %v820, 96
      %v1082 = vpop.permute.xlu0 %1081
      %1083 = vrot.lane.b32.xlu0 %v821, 96
      %v1084 = vpop.permute.xlu0 %1083
      %1085 = vrot.lane.b32.xlu0 %v822, 96
      %v1086 = vpop.permute.xlu0 %1085
      %vm1087 = vcmask 785408
      %v1088 = vsel %vm1087, %v1052, %v1054
      %v1089 = vsel %vm1087, %v1054, %v1056
      %v1090 = vsel %vm1087, %v1058, %v1060
      %v1091 = vsel %vm1087, %v1060, %v1062
      %v1092 = vsel %vm1087, %v1064, %v1066
      %v1093 = vsel %vm1087, %v1066, %v1068
      %v1094 = vsel %vm1087, %v1070, %v1072
      %v1095 = vsel %vm1087, %v1072, %v1074
      %v1096 = vsel %vm1087, %v1076, %v1078
      %v1097 = vsel %vm1087, %v1078, %v1080
      %v1098 = vsel %vm1087, %v1082, %v1084
      %v1099 = vsel %vm1087, %v1084, %v1086
      %v1113 = vsel %vm912, %v1049, 0
      %v1116 = vsel %vm912, %v1050, 0
      %1118 = vmatprep.subr.bf16.mxu0 %v1089
      %1119 = vmatpush1.bf16.msra.mxu0 %v1088
      %1120 = vmatprep.subr.bf16.mxu0 %v1091
      %1121 = vmatpush1.bf16.msra.mxu0 %v1090
      %1122 = vmatprep.subr.bf16.mxu0 %v1093
      %1123 = vmatpush1.bf16.msra.mxu0 %v1092
      %1124 = vmatprep.subr.bf16.mxu0 %v1095
      %1125 = vmatpush1.bf16.msra.mxu0 %v1094
      %1126 = vmatprep.subr.bf16.mxu0 %v1097
      %1127 = vmatpush1.bf16.msra.mxu0 %v1096
      %1128 = vmatprep.subr.bf16.mxu0 %v1099
      %1129 = vmatpush1.bf16.msra.mxu0 %v1098
      %1130 = vmatprep.subr.bf16.mxu0 0
      %1131 = vmatpush1.bf16.msra.mxu0 0
      %1132 = vmatprep.subr.bf16.mxu0 0
      %1133 = vmatpush1.bf16.msra.mxu0 0
      %1134 = vmatprep.subr.bf16.mxu0 0
      %1135 = vmatpush1.bf16.msra.mxu0 0
      %1136 = vmatprep.subr.bf16.mxu0 0
      %1137 = vmatpush1.bf16.msra.mxu0 0
      %1138 = vmatprep.subr.bf16.mxu0 0
      %1139 = vmatpush1.bf16.msra.mxu0 0
      %1140 = vmatprep.subr.bf16.mxu0 0
      %1141 = vmatpush1.bf16.msra.mxu0 0
      %1142 = vmatprep.subr.bf16.mxu0 0
      %1143 = vmatpush1.bf16.msra.mxu0 0
      %1144 = vmatprep.subr.bf16.mxu0 0
      %1145 = vmatpush1.bf16.msra.mxu0 0
      %1146 = vmatprep.subr.bf16.mxu0 0
      %1147 = vmatpush1.bf16.msra.mxu0 0
      %1148 = vmatprep.subr.bf16.mxu0 0
      %1149 = vmatpush1.bf16.msra.mxu0 0
      %1150 = vmatprep.mubr.bf16.mxu0 0
      %1151 = vmatmul.mubr.bf16.gmra.mrb[0].mxu0 %v1113
      %v1152 = vpop.f32.mrb[0].mxu0
      %v1153 = vadd.f32 0.0, %v1152
      %v1154 = vpop.f32.mrb[0].mxu0
      %v1155 = vadd.f32 0.0, %v1154
      %v1156 = vpop.f32.mrb[0].mxu0
      %v1157 = vadd.f32 0.0, %v1156
      %v1158 = vpop.f32.mrb[0].mxu0
      %v1159 = vadd.f32 0.0, %v1158
      %1160 = vmatprep.mubr.bf16.mxu0 0
      %1161 = vmatmul.mubr.bf16.gmra.mrb[0].mxu0 %v1116
      %v1162 = vpop.f32.mrb[0].mxu0
      %v1163 = vadd.f32 0.0, %v1162
      %v1164 = vpop.f32.mrb[0].mxu0
      %v1165 = vadd.f32 0.0, %v1164
      %v1166 = vpop.f32.mrb[0].mxu0
      %v1167 = vadd.f32 0.0, %v1166
      %v1168 = vpop.f32.mrb[0].mxu0
      %v1169 = vadd.f32 0.0, %v1168
      %1170 = vdwg.mxu0
      %v1171 = vadd.f32 %v1023, %v1153
      %v1172 = vadd.f32 %v1025, %v1155
      %v1173 = vadd.f32 %v1027, %v1157
      %v1174 = vadd.f32 %v1029, %v1159
      %v1175 = vadd.f32 %v1033, %v1163
      %v1176 = vadd.f32 %v1035, %v1165
      %v1177 = vadd.f32 %v1037, %v1167
      %v1178 = vadd.f32 %v1039, %v1169
      %1187 = vrot.lane.b32.xlu0 %v489, 1
      %v1188 = vpop.permute.xlu0 %1187
      %1189 = vrot.lane.b32.xlu0 %v491, 1
      %v1190 = vpop.permute.xlu0 %1189
      %1191 = vrot.lane.b32.xlu0 %v495, 1
      %v1192 = vpop.permute.xlu0 %1191
      %1193 = vrot.lane.b32.xlu0 %v497, 1
      %v1194 = vpop.permute.xlu0 %1193
      %1195 = vrot.lane.b32.xlu0 %v501, 1
      %v1196 = vpop.permute.xlu0 %1195
      %1197 = vrot.lane.b32.xlu0 %v503, 1
      %v1198 = vpop.permute.xlu0 %1197
      %1199 = vrot.lane.b32.xlu0 %v507, 1
      %v1200 = vpop.permute.xlu0 %1199
      %1201 = vrot.lane.b32.xlu0 %v509, 1
      %v1202 = vpop.permute.xlu0 %1201
      %v1203 = vsel %vm592, %v1188, %v1190
      %v1204 = vsel %vm592, %v1192, %v1194
      %v1205 = vsel %vm592, %v1196, %v1198
      %v1206 = vsel %vm592, %v1200, %v1202
      %v1215 = vsel %vm592, 0.0, %v1188
      %v1216 = vsel %vm592, 0.0, %v1192
      %v1217 = vsel %vm592, 0.0, %v1196
      %v1218 = vsel %vm592, 0.0, %v1200
      %v1219 = vsel %vm611, 0.0, %v1215
      %v1220 = vsel %vm612, 0.0, %v1203
      %v1221 = vsel %vm611, 0.0, %v1216
      %v1222 = vsel %vm612, 0.0, %v1204
      %v1223 = vsel %vm611, 0.0, %v1217
      %v1224 = vsel %vm612, 0.0, %v1205
      %v1225 = vsel %vm611, 0.0, %v1218
      %v1226 = vsel %vm612, 0.0, %v1206
      %1227 = vrot.lane.b32.xlu0 %v489, 127
      %v1228 = vpop.permute.xlu0 %1227
      %1229 = vrot.lane.b32.xlu0 %v491, 127
      %v1230 = vpop.permute.xlu0 %1229
      %1231 = vrot.lane.b32.xlu0 %v495, 127
      %v1232 = vpop.permute.xlu0 %1231
      %1233 = vrot.lane.b32.xlu0 %v497, 127
      %v1234 = vpop.permute.xlu0 %1233
      %1235 = vrot.lane.b32.xlu0 %v501, 127
      %v1236 = vpop.permute.xlu0 %1235
      %1237 = vrot.lane.b32.xlu0 %v503, 127
      %v1238 = vpop.permute.xlu0 %1237
      %1239 = vrot.lane.b32.xlu0 %v507, 127
      %v1240 = vpop.permute.xlu0 %1239
      %1241 = vrot.lane.b32.xlu0 %v509, 127
      %v1242 = vpop.permute.xlu0 %1241
      %v1243 = vsel %vm639, %v1228, %v1230
      %v1244 = vsel %vm639, %v1232, %v1234
      %v1245 = vsel %vm639, %v1236, %v1238
      %v1246 = vsel %vm639, %v1240, %v1242
      %v1255 = vsel %vm639, %v1230, 0.0
      %v1256 = vsel %vm639, %v1234, 0.0
      %v1257 = vsel %vm639, %v1238, 0.0
      %v1258 = vsel %vm639, %v1242, 0.0
      %v1259 = vsel %vm658, 0.0, %v1243
      %v1260 = vsel %vm659, 0.0, %v1255
      %v1261 = vsel %vm658, 0.0, %v1244
      %v1262 = vsel %vm659, 0.0, %v1256
      %v1263 = vsel %vm658, 0.0, %v1245
      %v1264 = vsel %vm659, 0.0, %v1257
      %v1265 = vsel %vm658, 0.0, %v1246
      %v1266 = vsel %vm659, 0.0, %v1258
      %1283 = vrot.lane.b32.xlu0 %v1219, 16
      %v1284 = vpop.permute.xlu0 %1283
      %1285 = vrot.lane.b32.xlu0 %v1220, 16
      %v1286 = vpop.permute.xlu0 %1285
      %1287 = vrot.lane.b32.xlu0 %v1221, 16
      %v1288 = vpop.permute.xlu0 %1287
      %1289 = vrot.lane.b32.xlu0 %v1222, 16
      %v1290 = vpop.permute.xlu0 %1289
      %1291 = vrot.lane.b32.xlu0 %v1223, 16
      %v1292 = vpop.permute.xlu0 %1291
      %1293 = vrot.lane.b32.xlu0 %v1224, 16
      %v1294 = vpop.permute.xlu0 %1293
      %1295 = vrot.lane.b32.xlu0 %v1225, 16
      %v1296 = vpop.permute.xlu0 %1295
      %1297 = vrot.lane.b32.xlu0 %v1226, 16
      %v1298 = vpop.permute.xlu0 %1297
      %1299 = vrot.lane.b32.xlu0 %v489, 16
      %v1300 = vpop.permute.xlu0 %1299
      %1301 = vrot.lane.b32.xlu0 %v491, 16
      %v1302 = vpop.permute.xlu0 %1301
      %1303 = vrot.lane.b32.xlu0 %v495, 16
      %v1304 = vpop.permute.xlu0 %1303
      %1305 = vrot.lane.b32.xlu0 %v497, 16
      %v1306 = vpop.permute.xlu0 %1305
      %1307 = vrot.lane.b32.xlu0 %v501, 16
      %v1308 = vpop.permute.xlu0 %1307
      %1309 = vrot.lane.b32.xlu0 %v503, 16
      %v1310 = vpop.permute.xlu0 %1309
      %1311 = vrot.lane.b32.xlu0 %v507, 16
      %v1312 = vpop.permute.xlu0 %1311
      %1313 = vrot.lane.b32.xlu0 %v509, 16
      %v1314 = vpop.permute.xlu0 %1313
      %1315 = vrot.lane.b32.xlu0 %v1259, 16
      %v1316 = vpop.permute.xlu0 %1315
      %1317 = vrot.lane.b32.xlu0 %v1260, 16
      %v1318 = vpop.permute.xlu0 %1317
      %1319 = vrot.lane.b32.xlu0 %v1261, 16
      %v1320 = vpop.permute.xlu0 %1319
      %1321 = vrot.lane.b32.xlu0 %v1262, 16
      %v1322 = vpop.permute.xlu0 %1321
      %1323 = vrot.lane.b32.xlu0 %v1263, 16
      %v1324 = vpop.permute.xlu0 %1323
      %1325 = vrot.lane.b32.xlu0 %v1264, 16
      %v1326 = vpop.permute.xlu0 %1325
      %1327 = vrot.lane.b32.xlu0 %v1265, 16
      %v1328 = vpop.permute.xlu0 %1327
      %1329 = vrot.lane.b32.xlu0 %v1266, 16
      %v1330 = vpop.permute.xlu0 %1329
      %v1331 = vsel %vm732, %v1284, %v1286
      %v1332 = vsel %vm732, %v1288, %v1290
      %v1333 = vsel %vm732, %v1292, %v1294
      %v1334 = vsel %vm732, %v1296, %v1298
      %v1335 = vsel %vm732, %v1300, %v1302
      %v1336 = vsel %vm732, %v1304, %v1306
      %v1337 = vsel %vm732, %v1308, %v1310
      %v1338 = vsel %vm732, %v1312, %v1314
      %v1339 = vsel %vm732, %v1316, %v1318
      %v1340 = vsel %vm732, %v1320, %v1322
      %v1341 = vsel %vm732, %v1324, %v1326
      %v1342 = vsel %vm732, %v1328, %v1330
      %v1379 = vsel %vm732, 0.0, %v1284
      %v1380 = vsel %vm732, 0.0, %v1288
      %v1381 = vsel %vm732, 0.0, %v1292
      %v1382 = vsel %vm732, 0.0, %v1296
      %v1383 = vsel %vm732, 0.0, %v1300
      %v1384 = vsel %vm732, 0.0, %v1304
      %v1385 = vsel %vm732, 0.0, %v1308
      %v1386 = vsel %vm732, 0.0, %v1312
      %v1387 = vsel %vm732, 0.0, %v1316
      %v1388 = vsel %vm732, 0.0, %v1320
      %v1389 = vsel %vm732, 0.0, %v1324
      %v1390 = vsel %vm732, 0.0, %v1328
      %v1391 = vsel %vm732, %v1286, 0.0
      %v1392 = vsel %vm732, %v1290, 0.0
      %v1393 = vsel %vm732, %v1294, 0.0
      %v1394 = vsel %vm732, %v1298, 0.0
      %v1395 = vsel %vm732, %v1302, 0.0
      %v1396 = vsel %vm732, %v1306, 0.0
      %v1397 = vsel %vm732, %v1310, 0.0
      %v1398 = vsel %vm732, %v1314, 0.0
      %v1399 = vsel %vm732, %v1318, 0.0
      %v1400 = vsel %vm732, %v1322, 0.0
      %v1401 = vsel %vm732, %v1326, 0.0
      %v1402 = vsel %vm732, %v1330, 0.0
      %v1403 = vpack.c.bf16 %v1380, %v1379
      %v1404 = vpack.c.bf16 %v1332, %v1331
      %v1405 = vpack.c.bf16 %v1392, %v1391
      %v1406 = vpack.c.bf16 %v1382, %v1381
      %v1407 = vpack.c.bf16 %v1334, %v1333
      %v1408 = vpack.c.bf16 %v1394, %v1393
      %v1409 = vpack.c.bf16 %v1384, %v1383
      %v1410 = vpack.c.bf16 %v1336, %v1335
      %v1411 = vpack.c.bf16 %v1396, %v1395
      %v1412 = vpack.c.bf16 %v1386, %v1385
      %v1413 = vpack.c.bf16 %v1338, %v1337
      %v1414 = vpack.c.bf16 %v1398, %v1397
      %v1415 = vpack.c.bf16 %v1388, %v1387
      %v1416 = vpack.c.bf16 %v1340, %v1339
      %v1417 = vpack.c.bf16 %v1400, %v1399
      %v1418 = vpack.c.bf16 %v1390, %v1389
      %v1419 = vpack.c.bf16 %v1342, %v1341
      %v1420 = vpack.c.bf16 %v1402, %v1401
      %v1425 = vunpack.c.l.b16 %v523
      %v1426 = vunpack.c.l.b16 %v524
      %v1427 = vunpack.c.l.b16 %v525
      %v1428 = vunpack.c.l.b16 %v526
      %v1429 = vpack.c.b16 %v1426, %v1425
      %v1430 = vpack.c.b16 %v1428, %v1427
      %v1432 = vsel %vm912, %v1429, 0
      %v1435 = vsel %vm912, %v1430, 0
      %1437 = vmatprep.subr.bf16.mxu0 %v1404
      %1438 = vmatpush1.bf16.msra.mxu0 %v1403
      %1439 = vmatprep.subr.bf16.mxu0 %v1407
      %1440 = vmatpush1.bf16.msra.mxu0 %v1406
      %1441 = vmatprep.subr.bf16.mxu0 %v1410
      %1442 = vmatpush1.bf16.msra.mxu0 %v1409
      %1443 = vmatprep.subr.bf16.mxu0 %v1413
      %1444 = vmatpush1.bf16.msra.mxu0 %v1412
      %1445 = vmatprep.subr.bf16.mxu0 %v1416
      %1446 = vmatpush1.bf16.msra.mxu0 %v1415
      %1447 = vmatprep.subr.bf16.mxu0 %v1419
      %1448 = vmatpush1.bf16.msra.mxu0 %v1418
      %1449 = vmatprep.subr.bf16.mxu0 0
      %1450 = vmatpush1.bf16.msra.mxu0 0
      %1451 = vmatprep.subr.bf16.mxu0 0
      %1452 = vmatpush1.bf16.msra.mxu0 0
      %1453 = vmatprep.subr.bf16.mxu0 0
      %1454 = vmatpush1.bf16.msra.mxu0 0
      %1455 = vmatprep.subr.bf16.mxu0 0
      %1456 = vmatpush1.bf16.msra.mxu0 0
      %1457 = vmatprep.subr.bf16.mxu0 0
      %1458 = vmatpush1.bf16.msra.mxu0 0
      %1459 = vmatprep.subr.bf16.mxu0 0
      %1460 = vmatpush1.bf16.msra.mxu0 0
      %1461 = vmatprep.subr.bf16.mxu0 0
      %1462 = vmatpush1.bf16.msra.mxu0 0
      %1463 = vmatprep.subr.bf16.mxu0 0
      %1464 = vmatpush1.bf16.msra.mxu0 0
      %1465 = vmatprep.subr.bf16.mxu0 0
      %1466 = vmatpush1.bf16.msra.mxu0 0
      %1467 = vmatprep.subr.bf16.mxu0 0
      %1468 = vmatpush1.bf16.msra.mxu0 0
      %1469 = vmatprep.mubr.bf16.mxu0 0
      %1470 = vmatmul.mubr.bf16.gmra.mrb[0].mxu0 %v1432
      %v1471 = vpop.f32.mrb[0].mxu0
      %v1472 = vadd.f32 0.0, %v1471
      %v1473 = vpop.f32.mrb[0].mxu0
      %v1474 = vadd.f32 0.0, %v1473
      %v1475 = vpop.f32.mrb[0].mxu0
      %v1476 = vadd.f32 0.0, %v1475
      %v1477 = vpop.f32.mrb[0].mxu0
      %v1478 = vadd.f32 0.0, %v1477
      %1479 = vmatprep.mubr.bf16.mxu0 0
      %1480 = vmatmul.mubr.bf16.gmra.mrb[0].mxu0 %v1435
      %v1481 = vpop.f32.mrb[0].mxu0
      %v1482 = vadd.f32 0.0, %v1481
      %v1483 = vpop.f32.mrb[0].mxu0
      %v1484 = vadd.f32 0.0, %v1483
      %v1485 = vpop.f32.mrb[0].mxu0
      %v1486 = vadd.f32 0.0, %v1485
      %v1487 = vpop.f32.mrb[0].mxu0
      %v1488 = vadd.f32 0.0, %v1487
      %1489 = vdwg.mxu0
      %v1490 = vadd.f32 %v1171, %v1472
      %v1491 = vadd.f32 %v1172, %v1474
      %v1492 = vadd.f32 %v1173, %v1476
      %v1493 = vadd.f32 %v1174, %v1478
      %v1494 = vadd.f32 %v1175, %v1482
      %v1495 = vadd.f32 %v1176, %v1484
      %v1496 = vadd.f32 %v1177, %v1486
      %v1497 = vadd.f32 %v1178, %v1488
      %v1502 = vunpack.c.l.b16 %v527
      %v1503 = vunpack.c.l.b16 %v528
      %v1504 = vunpack.c.l.b16 %v529
      %v1505 = vunpack.c.l.b16 %v530
      %v1506 = vpack.c.b16 %v1503, %v1502
      %v1507 = vpack.c.b16 %v1505, %v1504
      %1526 = vrot.lane.b32.xlu0 %v1403, 112
      %v1527 = vpop.permute.xlu0 %1526
      %1528 = vrot.lane.b32.xlu0 %v1404, 112
      %v1529 = vpop.permute.xlu0 %1528
      %1530 = vrot.lane.b32.xlu0 %v1405, 112
      %v1531 = vpop.permute.xlu0 %1530
      %1532 = vrot.lane.b32.xlu0 %v1406, 112
      %v1533 = vpop.permute.xlu0 %1532
      %1534 = vrot.lane.b32.xlu0 %v1407, 112
      %v1535 = vpop.permute.xlu0 %1534
      %1536 = vrot.lane.b32.xlu0 %v1408, 112
      %v1537 = vpop.permute.xlu0 %1536
      %1538 = vrot.lane.b32.xlu0 %v1409, 112
      %v1539 = vpop.permute.xlu0 %1538
      %1540 = vrot.lane.b32.xlu0 %v1410, 112
      %v1541 = vpop.permute.xlu0 %1540
      %1542 = vrot.lane.b32.xlu0 %v1411, 112
      %v1543 = vpop.permute.xlu0 %1542
      %1544 = vrot.lane.b32.xlu0 %v1412, 112
      %v1545 = vpop.permute.xlu0 %1544
      %1546 = vrot.lane.b32.xlu0 %v1413, 112
      %v1547 = vpop.permute.xlu0 %1546
      %1548 = vrot.lane.b32.xlu0 %v1414, 112
      %v1549 = vpop.permute.xlu0 %1548
      %1550 = vrot.lane.b32.xlu0 %v1415, 112
      %v1551 = vpop.permute.xlu0 %1550
      %1552 = vrot.lane.b32.xlu0 %v1416, 112
      %v1553 = vpop.permute.xlu0 %1552
      %1554 = vrot.lane.b32.xlu0 %v1417, 112
      %v1555 = vpop.permute.xlu0 %1554
      %1556 = vrot.lane.b32.xlu0 %v1418, 112
      %v1557 = vpop.permute.xlu0 %1556
      %1558 = vrot.lane.b32.xlu0 %v1419, 112
      %v1559 = vpop.permute.xlu0 %1558
      %1560 = vrot.lane.b32.xlu0 %v1420, 112
      %v1561 = vpop.permute.xlu0 %1560
      %v1562 = vsel %vm887, %v1527, %v1529
      %v1563 = vsel %vm887, %v1529, %v1531
      %v1564 = vsel %vm887, %v1533, %v1535
      %v1565 = vsel %vm887, %v1535, %v1537
      %v1566 = vsel %vm887, %v1539, %v1541
      %v1567 = vsel %vm887, %v1541, %v1543
      %v1568 = vsel %vm887, %v1545, %v1547
      %v1569 = vsel %vm887, %v1547, %v1549
      %v1570 = vsel %vm887, %v1551, %v1553
      %v1571 = vsel %vm887, %v1553, %v1555
      %v1572 = vsel %vm887, %v1557, %v1559
      %v1573 = vsel %vm887, %v1559, %v1561
      %v1587 = vsel %vm912, %v1506, 0
      %v1590 = vsel %vm912, %v1507, 0
      %1592 = vmatprep.subr.bf16.mxu0 %v1563
      %1593 = vmatpush1.bf16.msra.mxu0 %v1562
      %1594 = vmatprep.subr.bf16.mxu0 %v1565
      %1595 = vmatpush1.bf16.msra.mxu0 %v1564
      %1596 = vmatprep.subr.bf16.mxu0 %v1567
      %1597 = vmatpush1.bf16.msra.mxu0 %v1566
      %1598 = vmatprep.subr.bf16.mxu0 %v1569
      %1599 = vmatpush1.bf16.msra.mxu0 %v1568
      %1600 = vmatprep.subr.bf16.mxu0 %v1571
      %1601 = vmatpush1.bf16.msra.mxu0 %v1570
      %1602 = vmatprep.subr.bf16.mxu0 %v1573
      %1603 = vmatpush1.bf16.msra.mxu0 %v1572
      %1604 = vmatprep.subr.bf16.mxu0 0
      %1605 = vmatpush1.bf16.msra.mxu0 0
      %1606 = vmatprep.subr.bf16.mxu0 0
      %1607 = vmatpush1.bf16.msra.mxu0 0
      %1608 = vmatprep.subr.bf16.mxu0 0
      %1609 = vmatpush1.bf16.msra.mxu0 0
      %1610 = vmatprep.subr.bf16.mxu0 0
      %1611 = vmatpush1.bf16.msra.mxu0 0
      %1612 = vmatprep.subr.bf16.mxu0 0
      %1613 = vmatpush1.bf16.msra.mxu0 0
      %1614 = vmatprep.subr.bf16.mxu0 0
      %1615 = vmatpush1.bf16.msra.mxu0 0
      %1616 = vmatprep.subr.bf16.mxu0 0
      %1617 = vmatpush1.bf16.msra.mxu0 0
      %1618 = vmatprep.subr.bf16.mxu0 0
      %1619 = vmatpush1.bf16.msra.mxu0 0
      %1620 = vmatprep.subr.bf16.mxu0 0
      %1621 = vmatpush1.bf16.msra.mxu0 0
      %1622 = vmatprep.subr.bf16.mxu0 0
      %1623 = vmatpush1.bf16.msra.mxu0 0
      %1624 = vmatprep.mubr.bf16.mxu0 0
      %1625 = vmatmul.mubr.bf16.gmra.mrb[0].mxu0 %v1587
      %v1626 = vpop.f32.mrb[0].mxu0
      %v1627 = vadd.f32 0.0, %v1626
      %v1628 = vpop.f32.mrb[0].mxu0
      %v1629 = vadd.f32 0.0, %v1628
      %v1630 = vpop.f32.mrb[0].mxu0
      %v1631 = vadd.f32 0.0, %v1630
      %v1632 = vpop.f32.mrb[0].mxu0
      %v1633 = vadd.f32 0.0, %v1632
      %1634 = vmatprep.mubr.bf16.mxu0 0
      %1635 = vmatmul.mubr.bf16.gmra.mrb[0].mxu0 %v1590
      %v1636 = vpop.f32.mrb[0].mxu0
      %v1637 = vadd.f32 0.0, %v1636
      %v1638 = vpop.f32.mrb[0].mxu0
      %v1639 = vadd.f32 0.0, %v1638
      %v1640 = vpop.f32.mrb[0].mxu0
      %v1641 = vadd.f32 0.0, %v1640
      %v1642 = vpop.f32.mrb[0].mxu0
      %v1643 = vadd.f32 0.0, %v1642
      %1644 = vdwg.mxu0
      %v1645 = vadd.f32 %v1490, %v1627
      %v1646 = vadd.f32 %v1491, %v1629
      %v1647 = vadd.f32 %v1492, %v1631
      %v1648 = vadd.f32 %v1493, %v1633
      %v1649 = vadd.f32 %v1494, %v1637
      %v1650 = vadd.f32 %v1495, %v1639
      %v1651 = vadd.f32 %v1496, %v1641
      %v1652 = vadd.f32 %v1497, %v1643
      %v1657 = vunpack.c.l.b16 %v531
      %v1658 = vunpack.c.l.b16 %v532
      %v1659 = vunpack.c.l.b16 %v533
      %v1660 = vunpack.c.l.b16 %v534
      %v1661 = vpack.c.b16 %v1658, %v1657
      %v1662 = vpack.c.b16 %v1660, %v1659
      %1663 = vrot.lane.b32.xlu0 %v1403, 96
      %v1664 = vpop.permute.xlu0 %1663
      %1665 = vrot.lane.b32.xlu0 %v1404, 96
      %v1666 = vpop.permute.xlu0 %1665
      %1667 = vrot.lane.b32.xlu0 %v1405, 96
      %v1668 = vpop.permute.xlu0 %1667
      %1669 = vrot.lane.b32.xlu0 %v1406, 96
      %v1670 = vpop.permute.xlu0 %1669
      %1671 = vrot.lane.b32.xlu0 %v1407, 96
      %v1672 = vpop.permute.xlu0 %1671
      %1673 = vrot.lane.b32.xlu0 %v1408, 96
      %v1674 = vpop.permute.xlu0 %1673
      %1675 = vrot.lane.b32.xlu0 %v1409, 96
      %v1676 = vpop.permute.xlu0 %1675
      %1677 = vrot.lane.b32.xlu0 %v1410, 96
      %v1678 = vpop.permute.xlu0 %1677
      %1679 = vrot.lane.b32.xlu0 %v1411, 96
      %v1680 = vpop.permute.xlu0 %1679
      %1681 = vrot.lane.b32.xlu0 %v1412, 96
      %v1682 = vpop.permute.xlu0 %1681
      %1683 = vrot.lane.b32.xlu0 %v1413, 96
      %v1684 = vpop.permute.xlu0 %1683
      %1685 = vrot.lane.b32.xlu0 %v1414, 96
      %v1686 = vpop.permute.xlu0 %1685
      %1687 = vrot.lane.b32.xlu0 %v1415, 96
      %v1688 = vpop.permute.xlu0 %1687
      %1689 = vrot.lane.b32.xlu0 %v1416, 96
      %v1690 = vpop.permute.xlu0 %1689
      %1691 = vrot.lane.b32.xlu0 %v1417, 96
      %v1692 = vpop.permute.xlu0 %1691
      %1693 = vrot.lane.b32.xlu0 %v1418, 96
      %v1694 = vpop.permute.xlu0 %1693
      %1695 = vrot.lane.b32.xlu0 %v1419, 96
      %v1696 = vpop.permute.xlu0 %1695
      %1697 = vrot.lane.b32.xlu0 %v1420, 96
      %v1698 = vpop.permute.xlu0 %1697
      %v1699 = vsel %vm1087, %v1664, %v1666
      %v1700 = vsel %vm1087, %v1666, %v1668
      %v1701 = vsel %vm1087, %v1670, %v1672
      %v1702 = vsel %vm1087, %v1672, %v1674
      %v1703 = vsel %vm1087, %v1676, %v1678
      %v1704 = vsel %vm1087, %v1678, %v1680
      %v1705 = vsel %vm1087, %v1682, %v1684
      %v1706 = vsel %vm1087, %v1684, %v1686
      %v1707 = vsel %vm1087, %v1688, %v1690
      %v1708 = vsel %vm1087, %v1690, %v1692
      %v1709 = vsel %vm1087, %v1694, %v1696
      %v1710 = vsel %vm1087, %v1696, %v1698
      %v1724 = vsel %vm912, %v1661, 0
      %v1727 = vsel %vm912, %v1662, 0
      %1729 = vmatprep.subr.bf16.mxu0 %v1700
      %1730 = vmatpush1.bf16.msra.mxu0 %v1699
      %1731 = vmatprep.subr.bf16.mxu0 %v1702
      %1732 = vmatpush1.bf16.msra.mxu0 %v1701
      %1733 = vmatprep.subr.bf16.mxu0 %v1704
      %1734 = vmatpush1.bf16.msra.mxu0 %v1703
      %1735 = vmatprep.subr.bf16.mxu0 %v1706
      %1736 = vmatpush1.bf16.msra.mxu0 %v1705
      %1737 = vmatprep.subr.bf16.mxu0 %v1708
      %1738 = vmatpush1.bf16.msra.mxu0 %v1707
      %1739 = vmatprep.subr.bf16.mxu0 %v1710
      %1740 = vmatpush1.bf16.msra.mxu0 %v1709
      %1741 = vmatprep.subr.bf16.mxu0 0
      %1742 = vmatpush1.bf16.msra.mxu0 0
      %1743 = vmatprep.subr.bf16.mxu0 0
      %1744 = vmatpush1.bf16.msra.mxu0 0
      %1745 = vmatprep.subr.bf16.mxu0 0
      %1746 = vmatpush1.bf16.msra.mxu0 0
      %1747 = vmatprep.subr.bf16.mxu0 0
      %1748 = vmatpush1.bf16.msra.mxu0 0
      %1749 = vmatprep.subr.bf16.mxu0 0
      %1750 = vmatpush1.bf16.msra.mxu0 0
      %1751 = vmatprep.subr.bf16.mxu0 0
      %1752 = vmatpush1.bf16.msra.mxu0 0
      %1753 = vmatprep.subr.bf16.mxu0 0
      %1754 = vmatpush1.bf16.msra.mxu0 0
      %1755 = vmatprep.subr.bf16.mxu0 0
      %1756 = vmatpush1.bf16.msra.mxu0 0
      %1757 = vmatprep.subr.bf16.mxu0 0
      %1758 = vmatpush1.bf16.msra.mxu0 0
      %1759 = vmatprep.subr.bf16.mxu0 0
      %1760 = vmatpush1.bf16.msra.mxu0 0
      %1761 = vmatprep.mubr.bf16.mxu0 0
      %1762 = vmatmul.mubr.bf16.gmra.mrb[0].mxu0 %v1724
      %v1763 = vpop.f32.mrb[0].mxu0
      %v1764 = vadd.f32 0.0, %v1763
      %v1765 = vpop.f32.mrb[0].mxu0
      %v1766 = vadd.f32 0.0, %v1765
      %v1767 = vpop.f32.mrb[0].mxu0
      %v1768 = vadd.f32 0.0, %v1767
      %v1769 = vpop.f32.mrb[0].mxu0
      %v1770 = vadd.f32 0.0, %v1769
      %1771 = vmatprep.mubr.bf16.mxu0 0
      %1772 = vmatmul.mubr.bf16.gmra.mrb[0].mxu0 %v1727
      %v1773 = vpop.f32.mrb[0].mxu0
      %v1774 = vadd.f32 0.0, %v1773
      %v1775 = vpop.f32.mrb[0].mxu0
      %v1776 = vadd.f32 0.0, %v1775
      %v1777 = vpop.f32.mrb[0].mxu0
      %v1778 = vadd.f32 0.0, %v1777
      %v1779 = vpop.f32.mrb[0].mxu0
      %v1780 = vadd.f32 0.0, %v1779
      %1781 = vdwg.mxu0
      %v1782 = vadd.f32 %v1645, %v1764
      %v1783 = vadd.f32 %v1646, %v1766
      %v1784 = vadd.f32 %v1647, %v1768
      %v1785 = vadd.f32 %v1648, %v1770
      %v1786 = vadd.f32 %v1649, %v1774
      %v1787 = vadd.f32 %v1650, %v1776
      %v1788 = vadd.f32 %v1651, %v1778
      %v1789 = vadd.f32 %v1652, %v1780
      %1791 = vset.pattern.permute.xlu0 0
      %1792 = vperm.xlu0 %1791, %v535
      %v1793 = vpop.permute.xlu0 %1792
      %1796 = vset.pattern.permute.xlu0 0
      %1797 = vperm.xlu0 %1796, %v536
      %v1798 = vpop.permute.xlu0 %1797
      %1801 = vset.pattern.permute.xlu0 0
      %1802 = vperm.xlu0 %1801, %v537
      %v1803 = vpop.permute.xlu0 %1802
      %1806 = vset.pattern.permute.xlu0 0
      %1807 = vperm.xlu0 %1806, %v538
      %v1808 = vpop.permute.xlu0 %1807
      %v1810 = vadd.f32 %v1782, %v1793
      %v1811 = vadd.f32 %v1783, %v1793
      %v1812 = vadd.f32 %v1784, %v1798
      %v1813 = vadd.f32 %v1785, %v1798
      %v1814 = vadd.f32 %v1786, %v1803
      %v1815 = vadd.f32 %v1787, %v1803
      %v1816 = vadd.f32 %v1788, %v1808
      %v1817 = vadd.f32 %v1789, %v1808
      %v1818 = vmax.f32 %v1810, 0.0
      %v1819 = vmax.f32 %v1811, 0.0
      %v1820 = vmax.f32 %v1812, 0.0
      %v1821 = vmax.f32 %v1813, 0.0
      %v1822 = vmax.f32 %v1814, 0.0
      %v1823 = vmax.f32 %v1815, 0.0
      %v1824 = vmax.f32 %v1816, 0.0
      %v1825 = vmax.f32 %v1817, 0.0
      %v1826 = vld [vmem:[%s5] sm:$0xf]
      %v1827 = vld [vmem:[%s5 + $0x4] sm:$0xf]
      %v1828 = vld [vmem:[%s5 + $0x8] sm:$0xf]
      %v1829 = vld [vmem:[%s5 + $0xc] sm:$0xf]
      %v1830 = vld [vmem:[%s5 + $0x10] sm:$0xf]
      %v1831 = vld [vmem:[%s5 + $0x14] sm:$0xf]
      %v1832 = vld [vmem:[%s5 + $0x18] sm:$0xf]
      %v1833 = vld [vmem:[%s5 + $0x1c] sm:$0xf]
      %v1834 = vld [vmem:[%s5 + $0x20] sm:$0xf]
      %v1835 = vld [vmem:[%s5 + $0x24] sm:$0xf]
      %v1836 = vld [vmem:[%s5 + $0x28] sm:$0xf]
      %v1837 = vld [vmem:[%s5 + $0x2c] sm:$0xf]
      %v1838 = vld [vmem:[%s6] sm:$0xff]
      %v1839 = vld [vmem:[%s6 + $0x8] sm:$0xff]
      %v1840 = vld [vmem:[%s6 + $0x10] sm:$0xff]
      %v1841 = vld [vmem:[%s6 + $0x18] sm:$0xff]
      %1850 = vrot.lane.b32.xlu0 %v1818, 1
      %v1851 = vpop.permute.xlu0 %1850
      %1852 = vrot.lane.b32.xlu0 %v1819, 1
      %v1853 = vpop.permute.xlu0 %1852
      %1854 = vrot.lane.b32.xlu0 %v1820, 1
      %v1855 = vpop.permute.xlu0 %1854
      %1856 = vrot.lane.b32.xlu0 %v1821, 1
      %v1857 = vpop.permute.xlu0 %1856
      %1858 = vrot.lane.b32.xlu0 %v1822, 1
      %v1859 = vpop.permute.xlu0 %1858
      %1860 = vrot.lane.b32.xlu0 %v1823, 1
      %v1861 = vpop.permute.xlu0 %1860
      %1862 = vrot.lane.b32.xlu0 %v1824, 1
      %v1863 = vpop.permute.xlu0 %1862
      %1864 = vrot.lane.b32.xlu0 %v1825, 1
      %v1865 = vpop.permute.xlu0 %1864
      %v1866 = vsel %vm592, %v1851, %v1853
      %v1867 = vsel %vm592, %v1855, %v1857
      %v1868 = vsel %vm592, %v1859, %v1861
      %v1869 = vsel %vm592, %v1863, %v1865
      %v1878 = vsel %vm592, 0.0, %v1851
      %v1879 = vsel %vm592, 0.0, %v1855
      %v1880 = vsel %vm592, 0.0, %v1859
      %v1881 = vsel %vm592, 0.0, %v1863
      %v1882 = vsel %vm611, 0.0, %v1878
      %v1883 = vsel %vm612, 0.0, %v1866
      %v1884 = vsel %vm611, 0.0, %v1879
      %v1885 = vsel %vm612, 0.0, %v1867
      %v1886 = vsel %vm611, 0.0, %v1880
      %v1887 = vsel %vm612, 0.0, %v1868
      %v1888 = vsel %vm611, 0.0, %v1881
      %v1889 = vsel %vm612, 0.0, %v1869
      %1890 = vrot.lane.b32.xlu0 %v1818, 127
      %v1891 = vpop.permute.xlu0 %1890
      %1892 = vrot.lane.b32.xlu0 %v1819, 127
      %v1893 = vpop.permute.xlu0 %1892
      %1894 = vrot.lane.b32.xlu0 %v1820, 127
      %v1895 = vpop.permute.xlu0 %1894
      %1896 = vrot.lane.b32.xlu0 %v1821, 127
      %v1897 = vpop.permute.xlu0 %1896
      %1898 = vrot.lane.b32.xlu0 %v1822, 127
      %v1899 = vpop.permute.xlu0 %1898
      %1900 = vrot.lane.b32.xlu0 %v1823, 127
      %v1901 = vpop.permute.xlu0 %1900
      %1902 = vrot.lane.b32.xlu0 %v1824, 127
      %v1903 = vpop.permute.xlu0 %1902
      %1904 = vrot.lane.b32.xlu0 %v1825, 127
      %v1905 = vpop.permute.xlu0 %1904
      %v1906 = vsel %vm639, %v1891, %v1893
      %v1907 = vsel %vm639, %v1895, %v1897
      %v1908 = vsel %vm639, %v1899, %v1901
      %v1909 = vsel %vm639, %v1903, %v1905
      %v1918 = vsel %vm639, %v1893, 0.0
      %v1919 = vsel %vm639, %v1897, 0.0
      %v1920 = vsel %vm639, %v1901, 0.0
      %v1921 = vsel %vm639, %v1905, 0.0
      %v1922 = vsel %vm658, 0.0, %v1906
      %v1923 = vsel %vm659, 0.0, %v1918
      %v1924 = vsel %vm658, 0.0, %v1907
      %v1925 = vsel %vm659, 0.0, %v1919
      %v1926 = vsel %vm658, 0.0, %v1908
      %v1927 = vsel %vm659, 0.0, %v1920
      %v1928 = vsel %vm658, 0.0, %v1909
      %v1929 = vsel %vm659, 0.0, %v1921
      %1946 = vrot.lane.b32.xlu0 %v1882, 16
      %v1947 = vpop.permute.xlu0 %1946
      %1948 = vrot.lane.b32.xlu0 %v1883, 16
      %v1949 = vpop.permute.xlu0 %1948
      %1950 = vrot.lane.b32.xlu0 %v1884, 16
      %v1951 = vpop.permute.xlu0 %1950
      %1952 = vrot.lane.b32.xlu0 %v1885, 16
      %v1953 = vpop.permute.xlu0 %1952
      %1954 = vrot.lane.b32.xlu0 %v1886, 16
      %v1955 = vpop.permute.xlu0 %1954
      %1956 = vrot.lane.b32.xlu0 %v1887, 16
      %v1957 = vpop.permute.xlu0 %1956
      %1958 = vrot.lane.b32.xlu0 %v1888, 16
      %v1959 = vpop.permute.xlu0 %1958
      %1960 = vrot.lane.b32.xlu0 %v1889, 16
      %v1961 = vpop.permute.xlu0 %1960
      %1962 = vrot.lane.b32.xlu0 %v1818, 16
      %v1963 = vpop.permute.xlu0 %1962
      %1964 = vrot.lane.b32.xlu0 %v1819, 16
      %v1965 = vpop.permute.xlu0 %1964
      %1966 = vrot.lane.b32.xlu0 %v1820, 16
      %v1967 = vpop.permute.xlu0 %1966
      %1968 = vrot.lane.b32.xlu0 %v1821, 16
      %v1969 = vpop.permute.xlu0 %1968
      %1970 = vrot.lane.b32.xlu0 %v1822, 16
      %v1971 = vpop.permute.xlu0 %1970
      %1972 = vrot.lane.b32.xlu0 %v1823, 16
      %v1973 = vpop.permute.xlu0 %1972
      %1974 = vrot.lane.b32.xlu0 %v1824, 16
      %v1975 = vpop.permute.xlu0 %1974
      %1976 = vrot.lane.b32.xlu0 %v1825, 16
      %v1977 = vpop.permute.xlu0 %1976
      %1978 = vrot.lane.b32.xlu0 %v1922, 16
      %v1979 = vpop.permute.xlu0 %1978
      %1980 = vrot.lane.b32.xlu0 %v1923, 16
      %v1981 = vpop.permute.xlu0 %1980
      %1982 = vrot.lane.b32.xlu0 %v1924, 16
      %v1983 = vpop.permute.xlu0 %1982
      %1984 = vrot.lane.b32.xlu0 %v1925, 16
      %v1985 = vpop.permute.xlu0 %1984
      %1986 = vrot.lane.b32.xlu0 %v1926, 16
      %v1987 = vpop.permute.xlu0 %1986
      %1988 = vrot.lane.b32.xlu0 %v1927, 16
      %v1989 = vpop.permute.xlu0 %1988
      %1990 = vrot.lane.b32.xlu0 %v1928, 16
      %v1991 = vpop.permute.xlu0 %1990
      %1992 = vrot.lane.b32.xlu0 %v1929, 16
      %v1993 = vpop.permute.xlu0 %1992
      %v1994 = vsel %vm732, %v1947, %v1949
      %v1995 = vsel %vm732, %v1951, %v1953
      %v1996 = vsel %vm732, %v1955, %v1957
      %v1997 = vsel %vm732, %v1959, %v1961
      %v1998 = vsel %vm732, %v1963, %v1965
      %v1999 = vsel %vm732, %v1967, %v1969
      %v2000 = vsel %vm732, %v1971, %v1973
      %v2001 = vsel %vm732, %v1975, %v1977
      %v2002 = vsel %vm732, %v1979, %v1981
      %v2003 = vsel %vm732, %v1983, %v1985
      %v2004 = vsel %vm732, %v1987, %v1989
      %v2005 = vsel %vm732, %v1991, %v1993
      %v2042 = vsel %vm732, 0.0, %v1947
      %v2043 = vsel %vm732, 0.0, %v1951
      %v2044 = vsel %vm732, 0.0, %v1955
      %v2045 = vsel %vm732, 0.0, %v1959
      %v2046 = vsel %vm732, 0.0, %v1963
      %v2047 = vsel %vm732, 0.0, %v1967
      %v2048 = vsel %vm732, 0.0, %v1971
      %v2049 = vsel %vm732, 0.0, %v1975
      %v2050 = vsel %vm732, 0.0, %v1979
      %v2051 = vsel %vm732, 0.0, %v1983
      %v2052 = vsel %vm732, 0.0, %v1987
      %v2053 = vsel %vm732, 0.0, %v1991
      %v2054 = vsel %vm732, %v1949, 0.0
      %v2055 = vsel %vm732, %v1953, 0.0
      %v2056 = vsel %vm732, %v1957, 0.0
      %v2057 = vsel %vm732, %v1961, 0.0
      %v2058 = vsel %vm732, %v1965, 0.0
      %v2059 = vsel %vm732, %v1969, 0.0
      %v2060 = vsel %vm732, %v1973, 0.0
      %v2061 = vsel %vm732, %v1977, 0.0
      %v2062 = vsel %vm732, %v1981, 0.0
      %v2063 = vsel %vm732, %v1985, 0.0
      %v2064 = vsel %vm732, %v1989, 0.0
      %v2065 = vsel %vm732, %v1993, 0.0
      %v2066 = vpack.c.bf16 %v2043, %v2042
      %v2067 = vpack.c.bf16 %v1995, %v1994
      %v2068 = vpack.c.bf16 %v2055, %v2054
      %v2069 = vpack.c.bf16 %v2045, %v2044
      %v2070 = vpack.c.bf16 %v1997, %v1996
      %v2071 = vpack.c.bf16 %v2057, %v2056
      %v2072 = vpack.c.bf16 %v2047, %v2046
      %v2073 = vpack.c.bf16 %v1999, %v1998
      %v2074 = vpack.c.bf16 %v2059, %v2058
      %v2075 = vpack.c.bf16 %v2049, %v2048
      %v2076 = vpack.c.bf16 %v2001, %v2000
      %v2077 = vpack.c.bf16 %v2061, %v2060
      %v2078 = vpack.c.bf16 %v2051, %v2050
      %v2079 = vpack.c.bf16 %v2003, %v2002
      %v2080 = vpack.c.bf16 %v2063, %v2062
      %v2081 = vpack.c.bf16 %v2053, %v2052
      %v2082 = vpack.c.bf16 %v2005, %v2004
      %v2083 = vpack.c.bf16 %v2065, %v2064
      %v2088 = vunpack.c.l.b16 %v1830
      %v2089 = vunpack.c.l.b16 %v1831
      %v2090 = vunpack.c.l.b16 %v1832
      %v2091 = vunpack.c.l.b16 %v1833
      %v2092 = vpack.c.b16 %v2089, %v2088
      %v2093 = vpack.c.b16 %v2091, %v2090
      %2112 = vrot.lane.b32.xlu0 %v2066, 112
      %v2113 = vpop.permute.xlu0 %2112
      %2114 = vrot.lane.b32.xlu0 %v2067, 112
      %v2115 = vpop.permute.xlu0 %2114
      %2116 = vrot.lane.b32.xlu0 %v2068, 112
      %v2117 = vpop.permute.xlu0 %2116
      %2118 = vrot.lane.b32.xlu0 %v2069, 112
      %v2119 = vpop.permute.xlu0 %2118
      %2120 = vrot.lane.b32.xlu0 %v2070, 112
      %v2121 = vpop.permute.xlu0 %2120
      %2122 = vrot.lane.b32.xlu0 %v2071, 112
      %v2123 = vpop.permute.xlu0 %2122
      %2124 = vrot.lane.b32.xlu0 %v2072, 112
      %v2125 = vpop.permute.xlu0 %2124
      %2126 = vrot.lane.b32.xlu0 %v2073, 112
      %v2127 = vpop.permute.xlu0 %2126
      %2128 = vrot.lane.b32.xlu0 %v2074, 112
      %v2129 = vpop.permute.xlu0 %2128
      %2130 = vrot.lane.b32.xlu0 %v2075, 112
      %v2131 = vpop.permute.xlu0 %2130
      %2132 = vrot.lane.b32.xlu0 %v2076, 112
      %v2133 = vpop.permute.xlu0 %2132
      %2134 = vrot.lane.b32.xlu0 %v2077, 112
      %v2135 = vpop.permute.xlu0 %2134
      %2136 = vrot.lane.b32.xlu0 %v2078, 112
      %v2137 = vpop.permute.xlu0 %2136
      %2138 = vrot.lane.b32.xlu0 %v2079, 112
      %v2139 = vpop.permute.xlu0 %2138
      %2140 = vrot.lane.b32.xlu0 %v2080, 112
      %v2141 = vpop.permute.xlu0 %2140
      %2142 = vrot.lane.b32.xlu0 %v2081, 112
      %v2143 = vpop.permute.xlu0 %2142
      %2144 = vrot.lane.b32.xlu0 %v2082, 112
      %v2145 = vpop.permute.xlu0 %2144
      %2146 = vrot.lane.b32.xlu0 %v2083, 112
      %v2147 = vpop.permute.xlu0 %2146
      %v2148 = vsel %vm887, %v2113, %v2115
      %v2149 = vsel %vm887, %v2115, %v2117
      %v2150 = vsel %vm887, %v2119, %v2121
      %v2151 = vsel %vm887, %v2121, %v2123
      %v2152 = vsel %vm887, %v2125, %v2127
      %v2153 = vsel %vm887, %v2127, %v2129
      %v2154 = vsel %vm887, %v2131, %v2133
      %v2155 = vsel %vm887, %v2133, %v2135
      %v2156 = vsel %vm887, %v2137, %v2139
      %v2157 = vsel %vm887, %v2139, %v2141
      %v2158 = vsel %vm887, %v2143, %v2145
      %v2159 = vsel %vm887, %v2145, %v2147
      %v2173 = vsel %vm912, %v2092, 0
      %v2176 = vsel %vm912, %v2093, 0
      %2178 = vmatprep.subr.bf16.mxu0 %v2149
      %2179 = vmatpush1.bf16.msra.mxu0 %v2148
      %2180 = vmatprep.subr.bf16.mxu0 %v2151
      %2181 = vmatpush1.bf16.msra.mxu0 %v2150
      %2182 = vmatprep.subr.bf16.mxu0 %v2153
      %2183 = vmatpush1.bf16.msra.mxu0 %v2152
      %2184 = vmatprep.subr.bf16.mxu0 %v2155
      %2185 = vmatpush1.bf16.msra.mxu0 %v2154
      %2186 = vmatprep.subr.bf16.mxu0 %v2157
      %2187 = vmatpush1.bf16.msra.mxu0 %v2156
      %2188 = vmatprep.subr.bf16.mxu0 %v2159
      %2189 = vmatpush1.bf16.msra.mxu0 %v2158
      %2190 = vmatprep.subr.bf16.mxu0 0
      %2191 = vmatpush1.bf16.msra.mxu0 0
      %2192 = vmatprep.subr.bf16.mxu0 0
      %2193 = vmatpush1.bf16.msra.mxu0 0
      %2194 = vmatprep.subr.bf16.mxu0 0
      %2195 = vmatpush1.bf16.msra.mxu0 0
      %2196 = vmatprep.subr.bf16.mxu0 0
      %2197 = vmatpush1.bf16.msra.mxu0 0
      %2198 = vmatprep.subr.bf16.mxu0 0
      %2199 = vmatpush1.bf16.msra.mxu0 0
      %2200 = vmatprep.subr.bf16.mxu0 0
      %2201 = vmatpush1.bf16.msra.mxu0 0
      %2202 = vmatprep.subr.bf16.mxu0 0
      %2203 = vmatpush1.bf16.msra.mxu0 0
      %2204 = vmatprep.subr.bf16.mxu0 0
      %2205 = vmatpush1.bf16.msra.mxu0 0
      %2206 = vmatprep.subr.bf16.mxu0 0
      %2207 = vmatpush1.bf16.msra.mxu0 0
      %2208 = vmatprep.subr.bf16.mxu0 0
      %2209 = vmatpush1.bf16.msra.mxu0 0
      %2210 = vmatprep.mubr.bf16.mxu0 0
      %2211 = vmatmul.mubr.bf16.gmra.mrb[0].mxu0 %v2173
      %v2212 = vpop.f32.mrb[0].mxu0
      %v2213 = vadd.f32 0.0, %v2212
      %v2214 = vpop.f32.mrb[0].mxu0
      %v2215 = vadd.f32 0.0, %v2214
      %v2216 = vpop.f32.mrb[0].mxu0
      %v2217 = vadd.f32 0.0, %v2216
      %v2218 = vpop.f32.mrb[0].mxu0
      %v2219 = vadd.f32 0.0, %v2218
      %2220 = vmatprep.mubr.bf16.mxu0 0
      %2221 = vmatmul.mubr.bf16.gmra.mrb[0].mxu0 %v2176
      %v2222 = vpop.f32.mrb[0].mxu0
      %v2223 = vadd.f32 0.0, %v2222
      %v2224 = vpop.f32.mrb[0].mxu0
      %v2225 = vadd.f32 0.0, %v2224
      %v2226 = vpop.f32.mrb[0].mxu0
      %v2227 = vadd.f32 0.0, %v2226
      %v2228 = vpop.f32.mrb[0].mxu0
      %v2229 = vadd.f32 0.0, %v2228
      %2230 = vdwg.mxu0
      %v2235 = vunpack.c.l.b16 %v1826
      %v2236 = vunpack.c.l.b16 %v1827
      %v2237 = vunpack.c.l.b16 %v1828
      %v2238 = vunpack.c.l.b16 %v1829
      %v2239 = vpack.c.b16 %v2236, %v2235
      %v2240 = vpack.c.b16 %v2238, %v2237
      %v2242 = vsel %vm912, %v2239, 0
      %v2245 = vsel %vm912, %v2240, 0
      %2247 = vmatprep.subr.bf16.mxu0 %v2067
      %2248 = vmatpush1.bf16.msra.mxu0 %v2066
      %2249 = vmatprep.subr.bf16.mxu0 %v2070
      %2250 = vmatpush1.bf16.msra.mxu0 %v2069
      %2251 = vmatprep.subr.bf16.mxu0 %v2073
      %2252 = vmatpush1.bf16.msra.mxu0 %v2072
      %2253 = vmatprep.subr.bf16.mxu0 %v2076
      %2254 = vmatpush1.bf16.msra.mxu0 %v2075
      %2255 = vmatprep.subr.bf16.mxu0 %v2079
      %2256 = vmatpush1.bf16.msra.mxu0 %v2078
      %2257 = vmatprep.subr.bf16.mxu0 %v2082
      %2258 = vmatpush1.bf16.msra.mxu0 %v2081
      %2259 = vmatprep.subr.bf16.mxu0 0
      %2260 = vmatpush1.bf16.msra.mxu0 0
      %2261 = vmatprep.subr.bf16.mxu0 0
      %2262 = vmatpush1.bf16.msra.mxu0 0
      %2263 = vmatprep.subr.bf16.mxu0 0
      %2264 = vmatpush1.bf16.msra.mxu0 0
      %2265 = vmatprep.subr.bf16.mxu0 0
      %2266 = vmatpush1.bf16.msra.mxu0 0
      %2267 = vmatprep.subr.bf16.mxu0 0
      %2268 = vmatpush1.bf16.msra.mxu0 0
      %2269 = vmatprep.subr.bf16.mxu0 0
      %2270 = vmatpush1.bf16.msra.mxu0 0
      %2271 = vmatprep.subr.bf16.mxu0 0
      %2272 = vmatpush1.bf16.msra.mxu0 0
      %2273 = vmatprep.subr.bf16.mxu0 0
      %2274 = vmatpush1.bf16.msra.mxu0 0
      %2275 = vmatprep.subr.bf16.mxu0 0
      %2276 = vmatpush1.bf16.msra.mxu0 0
      %2277 = vmatprep.subr.bf16.mxu0 0
      %2278 = vmatpush1.bf16.msra.mxu0 0
      %2279 = vmatprep.mubr.bf16.mxu0 0
      %2280 = vmatmul.mubr.bf16.gmra.mrb[0].mxu0 %v2242
      %v2281 = vpop.f32.mrb[0].mxu0
      %v2282 = vadd.f32 %v2213, %v2281
      %v2283 = vpop.f32.mrb[0].mxu0
      %v2284 = vadd.f32 %v2215, %v2283
      %v2285 = vpop.f32.mrb[0].mxu0
      %v2286 = vadd.f32 %v2217, %v2285
      %v2287 = vpop.f32.mrb[0].mxu0
      %v2288 = vadd.f32 %v2219, %v2287
      %2289 = vmatprep.mubr.bf16.mxu0 0
      %2290 = vmatmul.mubr.bf16.gmra.mrb[0].mxu0 %v2245
      %v2291 = vpop.f32.mrb[0].mxu0
      %v2292 = vadd.f32 %v2223, %v2291
      %v2293 = vpop.f32.mrb[0].mxu0
      %v2294 = vadd.f32 %v2225, %v2293
      %v2295 = vpop.f32.mrb[0].mxu0
      %v2296 = vadd.f32 %v2227, %v2295
      %v2297 = vpop.f32.mrb[0].mxu0
      %v2298 = vadd.f32 %v2229, %v2297
      %2299 = vdwg.mxu0
      %v2304 = vunpack.c.l.b16 %v1834
      %v2305 = vunpack.c.l.b16 %v1835
      %v2306 = vunpack.c.l.b16 %v1836
      %v2307 = vunpack.c.l.b16 %v1837
      %v2308 = vpack.c.b16 %v2305, %v2304
      %v2309 = vpack.c.b16 %v2307, %v2306
      %2310 = vrot.lane.b32.xlu0 %v2066, 96
      %v2311 = vpop.permute.xlu0 %2310
      %2312 = vrot.lane.b32.xlu0 %v2067, 96
      %v2313 = vpop.permute.xlu0 %2312
      %2314 = vrot.lane.b32.xlu0 %v2068, 96
      %v2315 = vpop.permute.xlu0 %2314
      %2316 = vrot.lane.b32.xlu0 %v2069, 96
      %v2317 = vpop.permute.xlu0 %2316
      %2318 = vrot.lane.b32.xlu0 %v2070, 96
      %v2319 = vpop.permute.xlu0 %2318
      %2320 = vrot.lane.b32.xlu0 %v2071, 96
      %v2321 = vpop.permute.xlu0 %2320
      %2322 = vrot.lane.b32.xlu0 %v2072, 96
      %v2323 = vpop.permute.xlu0 %2322
      %2324 = vrot.lane.b32.xlu0 %v2073, 96
      %v2325 = vpop.permute.xlu0 %2324
      %2326 = vrot.lane.b32.xlu0 %v2074, 96
      %v2327 = vpop.permute.xlu0 %2326
      %2328 = vrot.lane.b32.xlu0 %v2075, 96
      %v2329 = vpop.permute.xlu0 %2328
      %2330 = vrot.lane.b32.xlu0 %v2076, 96
      %v2331 = vpop.permute.xlu0 %2330
      %2332 = vrot.lane.b32.xlu0 %v2077, 96
      %v2333 = vpop.permute.xlu0 %2332
      %2334 = vrot.lane.b32.xlu0 %v2078, 96
      %v2335 = vpop.permute.xlu0 %2334
      %2336 = vrot.lane.b32.xlu0 %v2079, 96
      %v2337 = vpop.permute.xlu0 %2336
      %2338 = vrot.lane.b32.xlu0 %v2080, 96
      %v2339 = vpop.permute.xlu0 %2338
      %2340 = vrot.lane.b32.xlu0 %v2081, 96
      %v2341 = vpop.permute.xlu0 %2340
      %2342 = vrot.lane.b32.xlu0 %v2082, 96
      %v2343 = vpop.permute.xlu0 %2342
      %2344 = vrot.lane.b32.xlu0 %v2083, 96
      %v2345 = vpop.permute.xlu0 %2344
      %v2346 = vsel %vm1087, %v2311, %v2313
      %v2347 = vsel %vm1087, %v2313, %v2315
      %v2348 = vsel %vm1087, %v2317, %v2319
      %v2349 = vsel %vm1087, %v2319, %v2321
      %v2350 = vsel %vm1087, %v2323, %v2325
      %v2351 = vsel %vm1087, %v2325, %v2327
      %v2352 = vsel %vm1087, %v2329, %v2331
      %v2353 = vsel %vm1087, %v2331, %v2333
      %v2354 = vsel %vm1087, %v2335, %v2337
      %v2355 = vsel %vm1087, %v2337, %v2339
      %v2356 = vsel %vm1087, %v2341, %v2343
      %v2357 = vsel %vm1087, %v2343, %v2345
      %v2371 = vsel %vm912, %v2308, 0
      %v2374 = vsel %vm912, %v2309, 0
      %2376 = vmatprep.subr.bf16.mxu0 %v2347
      %2377 = vmatpush1.bf16.msra.mxu0 %v2346
      %2378 = vmatprep.subr.bf16.mxu0 %v2349
      %2379 = vmatpush1.bf16.msra.mxu0 %v2348
      %2380 = vmatprep.subr.bf16.mxu0 %v2351
      %2381 = vmatpush1.bf16.msra.mxu0 %v2350
      %2382 = vmatprep.subr.bf16.mxu0 %v2353
      %2383 = vmatpush1.bf16.msra.mxu0 %v2352
      %2384 = vmatprep.subr.bf16.mxu0 %v2355
      %2385 = vmatpush1.bf16.msra.mxu0 %v2354
      %2386 = vmatprep.subr.bf16.mxu0 %v2357
      %2387 = vmatpush1.bf16.msra.mxu0 %v2356
      %2388 = vmatprep.subr.bf16.mxu0 0
      %2389 = vmatpush1.bf16.msra.mxu0 0
      %2390 = vmatprep.subr.bf16.mxu0 0
      %2391 = vmatpush1.bf16.msra.mxu0 0
      %2392 = vmatprep.subr.bf16.mxu0 0
      %2393 = vmatpush1.bf16.msra.mxu0 0
      %2394 = vmatprep.subr.bf16.mxu0 0
      %2395 = vmatpush1.bf16.msra.mxu0 0
      %2396 = vmatprep.subr.bf16.mxu0 0
      %2397 = vmatpush1.bf16.msra.mxu0 0
      %2398 = vmatprep.subr.bf16.mxu0 0
      %2399 = vmatpush1.bf16.msra.mxu0 0
      %2400 = vmatprep.subr.bf16.mxu0 0
      %2401 = vmatpush1.bf16.msra.mxu0 0
      %2402 = vmatprep.subr.bf16.mxu0 0
      %2403 = vmatpush1.bf16.msra.mxu0 0
      %2404 = vmatprep.subr.bf16.mxu0 0
      %2405 = vmatpush1.bf16.msra.mxu0 0
      %2406 = vmatprep.subr.bf16.mxu0 0
      %2407 = vmatpush1.bf16.msra.mxu0 0
      %2408 = vmatprep.mubr.bf16.mxu0 0
      %2409 = vmatmul.mubr.bf16.gmra.mrb[0].mxu0 %v2371
      %v2410 = vpop.f32.mrb[0].mxu0
      %v2411 = vadd.f32 0.0, %v2410
      %v2412 = vpop.f32.mrb[0].mxu0
      %v2413 = vadd.f32 0.0, %v2412
      %v2414 = vpop.f32.mrb[0].mxu0
      %v2415 = vadd.f32 0.0, %v2414
      %v2416 = vpop.f32.mrb[0].mxu0
      %v2417 = vadd.f32 0.0, %v2416
      %2418 = vmatprep.mubr.bf16.mxu0 0
      %2419 = vmatmul.mubr.bf16.gmra.mrb[0].mxu0 %v2374
      %v2420 = vpop.f32.mrb[0].mxu0
      %v2421 = vadd.f32 0.0, %v2420
      %v2422 = vpop.f32.mrb[0].mxu0
      %v2423 = vadd.f32 0.0, %v2422
      %v2424 = vpop.f32.mrb[0].mxu0
      %v2425 = vadd.f32 0.0, %v2424
      %v2426 = vpop.f32.mrb[0].mxu0
      %v2427 = vadd.f32 0.0, %v2426
      %2428 = vdwg.mxu0
      %v2429 = vadd.f32 %v2282, %v2411
      %v2430 = vadd.f32 %v2284, %v2413
      %v2431 = vadd.f32 %v2286, %v2415
      %v2432 = vadd.f32 %v2288, %v2417
      %v2433 = vadd.f32 %v2292, %v2421
      %v2434 = vadd.f32 %v2294, %v2423
      %v2435 = vadd.f32 %v2296, %v2425
      %v2436 = vadd.f32 %v2298, %v2427
      %2438 = vset.pattern.permute.xlu0 0
      %2439 = vperm.xlu0 %2438, %v1838
      %v2440 = vpop.permute.xlu0 %2439
      %2443 = vset.pattern.permute.xlu0 0
      %2444 = vperm.xlu0 %2443, %v1839
      %v2445 = vpop.permute.xlu0 %2444
      %2448 = vset.pattern.permute.xlu0 0
      %2449 = vperm.xlu0 %2448, %v1840
      %v2450 = vpop.permute.xlu0 %2449
      %2453 = vset.pattern.permute.xlu0 0
      %2454 = vperm.xlu0 %2453, %v1841
      %v2455 = vpop.permute.xlu0 %2454
      %v2457 = vadd.f32 %v2429, %v2440
      %v2458 = vadd.f32 %v2430, %v2440
      %v2459 = vadd.f32 %v2431, %v2445
      %v2460 = vadd.f32 %v2432, %v2445
      %v2461 = vadd.f32 %v2433, %v2450
      %v2462 = vadd.f32 %v2434, %v2450
      %v2463 = vadd.f32 %v2435, %v2455
      %v2464 = vadd.f32 %v2436, %v2455
      %v2465 = vmax.f32 %v2457, 0.0
      %v2466 = vmax.f32 %v2458, 0.0
      %v2467 = vmax.f32 %v2459, 0.0
      %v2468 = vmax.f32 %v2460, 0.0
      %v2469 = vmax.f32 %v2461, 0.0
      %v2470 = vmax.f32 %v2462, 0.0
      %v2471 = vmax.f32 %v2463, 0.0
      %v2472 = vmax.f32 %v2464, 0.0
      %v2473 = vld [vmem:[%s8] sm:$0x1]
      %v2474 = vld [vmem:[#allocation2] sm:$0x1]
      %2476 = vset.pattern.permute.xlu0 0
      %2477 = vperm.xlu0 %2476, %v2474
      %v2478 = vpop.permute.xlu0 %2477
      %v2480 = vlaneseq
      %v2481 = vshrl.u32 %v2480, 7
      %v2482 = vsub.s32 0, %v2481
      %v2483 = vrot.slane %v2478, %v2482
      %vm2484 = vcmask 261120
      %v2486 = vsel %vm2484, %v2473, 0
      %2488 = vmatprep.subr.mxu0 %v2466
      %2489 = vmatpush1.msra.mxu0 %v2465
      %2490 = vmatprep.subr.mxu0 %v2468
      %2491 = vmatpush1.msra.mxu0 %v2467
      %2492 = vmatprep.subr.mxu0 %v2470
      %2493 = vmatpush1.msra.mxu0 %v2469
      %2494 = vmatprep.subr.mxu0 %v2472
      %2495 = vmatpush1.msra.mxu0 %v2471
      %2496 = vmatprep.subr.mxu0 0.0
      %2497 = vmatpush1.msra.mxu0 0.0
      %2498 = vmatprep.subr.mxu0 0.0
      %2499 = vmatpush1.msra.mxu0 0.0
      %2500 = vmatprep.subr.mxu0 0.0
      %2501 = vmatpush1.msra.mxu0 0.0
      %2502 = vmatprep.subr.mxu0 0.0
      %2503 = vmatpush1.msra.mxu0 0.0
      %2504 = vmatprep.subr.mxu0 0.0
      %2505 = vmatpush1.msra.mxu0 0.0
      %2506 = vmatprep.subr.mxu0 0.0
      %2507 = vmatpush1.msra.mxu0 0.0
      %2508 = vmatprep.subr.mxu0 0.0
      %2509 = vmatpush1.msra.mxu0 0.0
      %2510 = vmatprep.subr.mxu0 0.0
      %2511 = vmatpush1.msra.mxu0 0.0
      %2512 = vmatprep.subr.mxu0 0.0
      %2513 = vmatpush1.msra.mxu0 0.0
      %2514 = vmatprep.subr.mxu0 0.0
      %2515 = vmatpush1.msra.mxu0 0.0
      %2516 = vmatprep.subr.mxu0 0.0
      %2517 = vmatpush1.msra.mxu0 0.0
      %2518 = vmatprep.subr.mxu0 0.0
      %2519 = vmatpush1.msra.mxu0 0.0
      %2520 = vmatprep.subr.mxu0 0.0
      %2521 = vmatpush1.msra.mxu0 0.0
      %2522 = vmatprep.subr.mxu0 0.0
      %2523 = vmatpush1.msra.mxu0 0.0
      %2524 = vmatprep.subr.mxu0 0.0
      %2525 = vmatpush1.msra.mxu0 0.0
      %2526 = vmatprep.subr.mxu0 0.0
      %2527 = vmatpush1.msra.mxu0 0.0
      %2528 = vmatprep.subr.mxu0 0.0
      %2529 = vmatpush1.msra.mxu0 0.0
      %2530 = vmatprep.subr.mxu0 0.0
      %2531 = vmatpush1.msra.mxu0 0.0
      %2532 = vmatprep.subr.mxu0 0.0
      %2533 = vmatpush1.msra.mxu0 0.0
      %2534 = vmatprep.subr.mxu0 0.0
      %2535 = vmatpush1.msra.mxu0 0.0
      %2536 = vmatprep.subr.mxu0 0.0
      %2537 = vmatpush1.msra.mxu0 0.0
      %2538 = vmatprep.subr.mxu0 0.0
      %2539 = vmatpush1.msra.mxu0 0.0
      %2540 = vmatprep.subr.mxu0 0.0
      %2541 = vmatpush1.msra.mxu0 0.0
      %2542 = vmatprep.subr.mxu0 0.0
      %2543 = vmatpush1.msra.mxu0 0.0
      %2544 = vmatprep.subr.mxu0 0.0
      %2545 = vmatpush1.msra.mxu0 0.0
      %2546 = vmatprep.subr.mxu0 0.0
      %2547 = vmatpush1.msra.mxu0 0.0
      %2548 = vmatprep.subr.mxu0 0.0
      %2549 = vmatpush1.msra.mxu0 0.0
      %2550 = vmatprep.subr.mxu0 0.0
      %2551 = vmatpush1.msra.mxu0 0.0
      %2552 = vmatprep.mubr.f32.mxu0 0.0
      %2553 = vmatmul.mubr.f32.gmra.mrb[0].mxu0 %v2486
      %v2554 = vpop.f32.mrb[0].mxu0
      %v2555 = vadd.f32 %v2483, %v2554
      %v2556 = vpop.f32.mrb[0].mxu0
      %v2557 = vadd.f32 %v2483, %v2556
      %2558 = vdwg.mxu0
      %v2561 = vcombine.low %v2555, %v2557
      %v2563 = vunpack.c.l.s4 1966171168
      %v2564 = vunpack.c.0.s8 %v2563
      %v2565 = vlaneseq
      %v2566 = vshrl.u32 %v2565, 7
      %v2567 = vsub.s32 %v2564, %v2566
      %v2568 = vrot.slane %v2561, %v2567
      %v2570 = vunpack.c.l.s4 1966171168
      %v2571 = vunpack.c.0.s8 %v2570
      %v2572 = vlaneseq
      %v2573 = vshrl.u32 %v2572, 7
      %v2574 = vsub.s32 %v2571, %v2573
      %v2575 = vrot.slane %v2568, %v2574
      %v2577 = vlaneseq
      %vm2578 = vcmp.ge.s32.totalorder %v2577, 0
      %vm2579 = vcmp.lt.s32.totalorder %v2577, 256
      %vm2580 = vmand %vm2578, %vm2579
      %2581 = vst.msk [vmem:[%s379] sm:$0x3] %vm2580, %v2575
      %p2582 = scmp.lt.s32.totalorder %s23, 1
      %s2583 = scalar_select %p2582, %s23, 1
      %s2584 = smul.addr %s2583, 2
      %s2585 = scalar_lea.vmem %s10, %s2584
      // Predicated region
      $region61: #{_lambda_.9} parent=59 // pred_check
        %p2586 = pneg %p261
      $region62: #{_lambda_.9} parent=59 // pred_check_branch
        %2588 = sbr.rel (%p2586) target = $region64
      $region63: #{_lambda_.9} parent=59 // pred_region
        _
      $region64: #{_lambda_.9} parent=59 // pred_fallthru
        _
    $region60: #{_lambda_.9} parent=5 // pred_fallthru
      _
    %p2589 = scmp.le.s32.totalorder 2, %s18
    // Predicated region
    $region65: #{_lambda_.9} parent=5 // pred_check
      %p2590 = pneg %p2589
    $region66: #{_lambda_.9} parent=5 // pred_check_branch
      %2592 = sbr.rel (%p2590) target = $region68
    $region67: #{_lambda_.9} parent=5 // pred_region
      %s2593 = ssub.s32 %s18, 2
      // Predicated region
      $region69: #{_lambda_.9} parent=67 // pred_check
        %p2594 = pneg %p267
      $region70: #{_lambda_.9} parent=67 // pred_check_branch
        %2596 = sbr.rel (%p2594) target = $region72
      $region71: #{_lambda_.9} parent=67 // pred_region
        %p2597 = scmp.lt.s32.totalorder %s24, 1
        %s2598 = scalar_select %p2597, %s24, 1
        %s2599 = smul.addr %s2598, 2
        %s2600 = scalar_lea.vmem %s10, %s2599
      $region72: #{_lambda_.9} parent=67 // pred_fallthru
        _
    $region68: #{_lambda_.9} parent=5 // pred_fallthru
      _
  $region6: #{_lambda_.9} parent=0 // loop_footer
    %s22 = sadd.s32 1, %s18
  $region7: #{_lambda_.9} parent=0 // loop_footer_branch
    %17 = sbr.rel target = $region3
  $region8: #{_lambda_.9} parent=0 // loop_exit
    _

</llo_original>
